<compile_context>
chip_gen: v7x
topology: tpu7x:2x2x1
jax: 0.10.0
libtpu: 0.0.40
codegen_flags: <defaults>
</compile_context>

<pallas_src>
import jax
import jax.numpy as jnp
from jax import lax
from jax.experimental import pallas as pl
from jax.experimental.pallas import tpu as pltpu


def _make_residual_stack_kernel(H, W, Cin, Chid, num_layers, NBP, guard,
                                apply_out_relu):
    Wp = W + 2
    # Tap offsets in the padded-flat layout, (dh, dw)-major to match the HWIO
    # weight flattening used in the wrapper.
    offs = [(dh - 1) * Wp + (dw - 1) for dh in range(3) for dw in range(3)]

    def kernel(mask_ref, x_ref, w1_ref, w2_ref, out_ref, xs_ref, hs_ref):
        mask = mask_ref[...] > 0.5      # (1, NBP) True at real (non-pad) pixels
        x_cur = x_ref[...]              # (Cin, NBP) padded-flat activation

        # TODO(synk): switch to lax.fori_loop with dynamic w1_ref/w2_ref
        # indexing if num_layers grows beyond ~4 (bounds vreg live ranges).
        for layer in range(num_layers):
            # ---- conv1: Cin -> Chid (3x3 "same"), 9 accumulating MXU dots ---
            xs_ref[:, guard:guard + NBP] = x_cur
            acc1 = jnp.zeros((Chid, NBP), jnp.float32)
            for t, off in enumerate(offs):
                tap = xs_ref[:, pl.ds(guard + off, NBP)]          # (Cin, NBP)
                acc1 = acc1 + jnp.dot(w1_ref[layer, t], tap,
                                      preferred_element_type=jnp.float32)
            # ReLU, then force pad positions back to exact zero (the next conv
            # reads them as its zero padding).  jnp.where is NaN-safe.
            hid = jnp.where(mask, jnp.maximum(acc1, 0.0), 0.0)    # (Chid, NBP)

            # ---- conv2: Chid -> Cin (3x3 "same") + residual add -------------
            hs_ref[:, guard:guard + NBP] = hid
            acc2 = jnp.zeros((Cin, NBP), jnp.float32)
            for t, off in enumerate(offs):
                tap = hs_ref[:, pl.ds(guard + off, NBP)]          # (Chid, NBP)
                acc2 = acc2 + jnp.dot(w2_ref[layer, t], tap,
                                      preferred_element_type=jnp.float32)
            y = x_cur + acc2
            if layer < num_layers - 1 or apply_out_relu:
                y = jnp.maximum(y, 0.0)
            x_cur = jnp.where(mask, y, 0.0)

        out_ref[...] = x_cur            # lane-dense (Cin, NBP) store

    return kernel


def _pick_sub_batch(N):
    """Images per grid step: keep >= 2 grid steps (v7x has 2 TCs), cap scratch."""
    if N < 2 or N % 2 != 0:
        return 1
    nb = N // 2
    while nb > 16 and nb % 2 == 0:   # keep the hidden scratch small; nb | N
        nb //= 2
    return nb


def residual_stack_forward(x_nchw, params, out_activation="relu"):
    """ResidualStack.forward. x_nchw: (N, C, H, W). params: list of (w1, w2) HWIO."""
    x_nchw = x_nchw.astype(jnp.float32)
    N, Cin, H, W = x_nchw.shape
    L = len(params)
    Chid = params[0][0].shape[-1]

    Hp, Wp = H + 2, W + 2
    P = Hp * Wp                                   # padded image, flattened
    Ppad = ((P + 127) // 128) * 128               # round up to lane multiple
    NB = _pick_sub_batch(N)
    NBP = NB * Ppad
    guard = ((Wp + 1 + 127) // 128) * 128         # >= max |tap offset|, aligned

    # ---- wrapper-side data prep (tiny, one-time XLA work in HBM) ------------
    # Zero-pad each image to (H+2, W+2), flatten, round the flat length up to
    # Ppad, and lay the batch out along the lane axis: (Cin, N*Ppad).
    x_p = jnp.pad(x_nchw, ((0, 0), (0, 0), (1, 1), (1, 1)))      # (N,C,Hp,Wp)
    x_p = x_p.reshape(N, Cin, P)
    x_p = jnp.pad(x_p, ((0, 0), (0, 0), (0, Ppad - P)))          # (N,C,Ppad)
    x_flat = jnp.transpose(x_p, (1, 0, 2)).reshape(Cin, N * Ppad)

    # Mask of real pixel positions in the padded-flat layout.
    mask_img = jnp.zeros((Hp, Wp), jnp.float32).at[1:H + 1, 1:W + 1].set(1.0)
    mask_img = jnp.pad(mask_img.reshape(-1), (0, Ppad - P))      # (Ppad,)
    mask_full = jnp.tile(mask_img, (N,))[None, :]                # (1, N*Ppad)

    # Per-(layer, tap) weight slabs: (L, 9, Cout, Cin_of_conv), tap = dh*3+dw.
    w1_packed = jnp.stack(
        [jnp.transpose(w1, (0, 1, 3, 2)).reshape(9, Chid, Cin)
         for (w1, _) in params]).astype(jnp.float32)             # (L,9,Chid,Cin)
    w2_packed = jnp.stack(
        [jnp.transpose(w2, (0, 1, 3, 2)).reshape(9, Cin, Chid)
         for (_, w2) in params]).astype(jnp.float32)             # (L,9,Cin,Chid)

    apply_out_relu = (out_activation == "relu")
    kernel = _make_residual_stack_kernel(H, W, Cin, Chid, L, NBP, guard,
                                         apply_out_relu)

    out_flat = pl.pallas_call(
        kernel,
        out_shape=jax.ShapeDtypeStruct((Cin, N * Ppad), jnp.float32),
        grid_spec=pltpu.PrefetchScalarGridSpec(
            num_scalar_prefetch=0,
            grid=(N // NB,),     # >= 2 steps when N >= 2 -> both v7x TCs busy
            in_specs=[
                pl.BlockSpec((1, NBP), lambda n: (0, n)),                  # mask
                pl.BlockSpec((Cin, NBP), lambda n: (0, n)),                # x
                pl.BlockSpec((L, 9, Chid, Cin), lambda n: (0, 0, 0, 0)),   # w1 (resident)
                pl.BlockSpec((L, 9, Cin, Chid), lambda n: (0, 0, 0, 0)),   # w2 (resident)
            ],
            out_specs=pl.BlockSpec((Cin, NBP), lambda n: (0, n)),
            scratch_shapes=[
                pltpu.VMEM((Cin, 2 * guard + NBP), jnp.float32),   # guarded x
                pltpu.VMEM((Chid, 2 * guard + NBP), jnp.float32),  # guarded hid
            ],
        ),
        # ~100 KiB of VMEM per core at these sizes: far below the scoped
        # default on v5e/v6e/v7x, so no vmem_limit_bytes override is needed.
        compiler_params=pltpu.CompilerParams(
            dimension_semantics=("parallel",)),
    )(mask_full, x_flat, w1_packed, w2_packed)

    # Un-flatten / un-pad (cheap XLA slice in HBM).
    out = out_flat.reshape(Cin, N, Ppad).transpose(1, 0, 2)[:, :, :P]
    out = out.reshape(N, Cin, Hp, Wp)[:, :, 1:H + 1, 1:W + 1]
    return out


def init_params(key, in_channels, num_residual_layers, residual_hidden_dim):
    """Deterministic synthetic weights (HWIO layout), matching Conv2d shapes (bias=False)."""
    params = []
    for _ in range(num_residual_layers):
        key, k1, k2 = jax.random.split(key, 3)
        w1 = 0.1 * jax.random.normal(
            k1, (3, 3, in_channels, residual_hidden_dim), jnp.float32)
        w2 = 0.1 * jax.random.normal(
            k2, (3, 3, residual_hidden_dim, in_channels), jnp.float32)
        params.append((w1, w2))
    return params


def _reference_forward(x_nchw, params, out_activation="relu"):
    """Pure-JAX reference (lax conv) for correctness checking."""
    x = jnp.transpose(x_nchw, (0, 2, 3, 1))
    dn = ("NHWC", "HWIO", "NHWC")
    num_layers = len(params)
    for i, (w1, w2) in enumerate(params):
        h = lax.conv_general_dilated(x, w1, (1, 1), "SAME", dimension_numbers=dn)
        h = jnp.maximum(h, 0.0)
        h = lax.conv_general_dilated(h, w2, (1, 1), "SAME", dimension_numbers=dn)
        y = x + h
        if i < num_layers - 1 or out_activation == "relu":
            y = jnp.maximum(y, 0.0)
        x = y
    return jnp.transpose(x, (0, 3, 1, 2))


if __name__ == "__main__":
    key = jax.random.PRNGKey(0)
    key, xkey, pkey = jax.random.split(key, 3)

    # Small shapes consistent with the module's forward (NCHW conv input).
    N, C, H, W = 2, 4, 16, 16
    num_residual_layers = 2
    residual_hidden_dim = 32

    x = jax.random.normal(xkey, (N, C, H, W), jnp.float32)
    params = init_params(pkey, C, num_residual_layers, residual_hidden_dim)

    out = residual_stack_forward(x, params, out_activation="relu")
    out = jax.block_until_ready(out)

    ref = jax.block_until_ready(_reference_forward(x, params, out_activation="relu"))
    assert out.shape == (N, C, H, W)
    assert jnp.allclose(out, ref, atol=2e-4, rtol=2e-4), "mismatch vs reference conv"

    print("KERNEL_OK")
</pallas_src>

<mosaic_0001>
module attributes {stable_mosaic.version = 11 : i64} {
  func.func @kernel(%arg0: i32, %arg1: memref<1x384xf32, #tpu.memory_space<vmem>>, %arg2: memref<4x384xf32, #tpu.memory_space<vmem>>, %arg3: memref<2x9x32x4xf32, #tpu.memory_space<vmem>>, %arg4: memref<2x9x4x32xf32, #tpu.memory_space<vmem>>, %arg5: memref<4x384xf32, #tpu.memory_space<vmem>>, %arg6: memref<4x640xf32, #tpu.memory_space<vmem>>, %arg7: memref<32x640xf32, #tpu.memory_space<vmem>>) attributes {dimension_semantics = [#tpu.dimension_semantics<parallel>], iteration_bounds = array<i64: 2>, scalar_prefetch = 0 : i64, scratch_operands = 2 : i64, tpu.core_type = #tpu.core_type<tc>, window_params = [{transform_indices = @transform_0, window_bounds = array<i64: 1, 384>}, {transform_indices = @transform_1, window_bounds = array<i64: 4, 384>}, {pipeline_mode = #tpu.pipeline_mode<synchronous>, transform_indices = @transform_2, window_bounds = array<i64: 2, 9, 32, 4>}, {pipeline_mode = #tpu.pipeline_mode<synchronous>, transform_indices = @transform_3, window_bounds = array<i64: 2, 9, 4, 32>}, {transform_indices = @transform_4, window_bounds = array<i64: 4, 384>}]} {
    %c0 = arith.constant 0 : index
    %c0_0 = arith.constant 0 : index
    %0 = vector.load %arg1[%c0, %c0_0] : memref<1x384xf32, #tpu.memory_space<vmem>>, vector<1x384xf32>
    %cst = arith.constant 5.000000e-01 : f32
    %1 = vector.broadcast %cst : f32 to vector<1x384xf32>
    %2 = arith.cmpf ogt, %0, %1 : vector<1x384xf32>
    %c0_1 = arith.constant 0 : index
    %c0_2 = arith.constant 0 : index
    %3 = vector.load %arg2[%c0_1, %c0_2] : memref<4x384xf32, #tpu.memory_space<vmem>>, vector<4x384xf32>
    %c0_3 = arith.constant 0 : index
    %c128 = arith.constant 128 : index
    %4 = vector.load %arg6[%c0_3, %c128] : memref<4x640xf32, #tpu.memory_space<vmem>>, vector<4x384xf32>
    tpu.vector_store %arg6[%c0_3, %c128], %3 {strides = array<i32>} : memref<4x640xf32, #tpu.memory_space<vmem>>, vector<4x384xf32>,
    %cst_4 = arith.constant 0.000000e+00 : f32
    %5 = vector.broadcast %cst_4 : f32 to vector<32x384xf32>
    %c0_5 = arith.constant 0 : index
    %c109 = arith.constant 109 : index
    %6 = vector.load %arg6[%c0_5, %c109] : memref<4x640xf32, #tpu.memory_space<vmem>>, vector<4x384xf32>
    %c0_6 = arith.constant 0 : index
    %c0_7 = arith.constant 0 : index
    %c0_8 = arith.constant 0 : index
    %c0_9 = arith.constant 0 : index
    %7 = vector.load %arg3[%c0_6, %c0_7, %c0_8, %c0_9] : memref<2x9x32x4xf32, #tpu.memory_space<vmem>>, vector<1x1x32x4xf32>
    %8 = vector.shape_cast %7 : vector<1x1x32x4xf32> to vector<32x4xf32>
    %cst_10 = arith.constant dense<0.000000e+00> : vector<32x384xf32>
    %9 = tpu.matmul %8, %6, %cst_10 {dimension_numbers = #tpu.dot_dimension_numbers<[1], [0], [0], [1], [0, 0, 1, 1], [], []>} : vector<32x4xf32>, vector<4x384xf32>, vector<32x384xf32> -> vector<32x384xf32>
    %10 = arith.addf %5, %9 : vector<32x384xf32>
    %c0_11 = arith.constant 0 : index
    %c110 = arith.constant 110 : index
    %11 = vector.load %arg6[%c0_11, %c110] : memref<4x640xf32, #tpu.memory_space<vmem>>, vector<4x384xf32>
    %c0_12 = arith.constant 0 : index
    %c1 = arith.constant 1 : index
    %c0_13 = arith.constant 0 : index
    %c0_14 = arith.constant 0 : index
    %12 = vector.load %arg3[%c0_12, %c1, %c0_13, %c0_14] : memref<2x9x32x4xf32, #tpu.memory_space<vmem>>, vector<1x1x32x4xf32>
    %13 = vector.shape_cast %12 : vector<1x1x32x4xf32> to vector<32x4xf32>
    %cst_15 = arith.constant dense<0.000000e+00> : vector<32x384xf32>
    %14 = tpu.matmul %13, %11, %cst_15 {dimension_numbers = #tpu.dot_dimension_numbers<[1], [0], [0], [1], [0, 0, 1, 1], [], []>} : vector<32x4xf32>, vector<4x384xf32>, vector<32x384xf32> -> vector<32x384xf32>
    %15 = arith.addf %10, %14 : vector<32x384xf32>
    %c0_16 = arith.constant 0 : index
    %c111 = arith.constant 111 : index
    %16 = vector.load %arg6[%c0_16, %c111] : memref<4x640xf32, #tpu.memory_space<vmem>>, vector<4x384xf32>
    %c0_17 = arith.constant 0 : index
    %c2 = arith.constant 2 : index
    %c0_18 = arith.constant 0 : index
    %c0_19 = arith.constant 0 : index
    %17 = vector.load %arg3[%c0_17, %c2, %c0_18, %c0_19] : memref<2x9x32x4xf32, #tpu.memory_space<vmem>>, vector<1x1x32x4xf32>
    %18 = vector.shape_cast %17 : vector<1x1x32x4xf32> to vector<32x4xf32>
    %cst_20 = arith.constant dense<0.000000e+00> : vector<32x384xf32>
    %19 = tpu.matmul %18, %16, %cst_20 {dimension_numbers = #tpu.dot_dimension_numbers<[1], [0], [0], [1], [0, 0, 1, 1], [], []>} : vector<32x4xf32>, vector<4x384xf32>, vector<32x384xf32> -> vector<32x384xf32>
    %20 = arith.addf %15, %19 : vector<32x384xf32>
    %c0_21 = arith.constant 0 : index
    %c127 = arith.constant 127 : index
    %21 = vector.load %arg6[%c0_21, %c127] : memref<4x640xf32, #tpu.memory_space<vmem>>, vector<4x384xf32>
    %c0_22 = arith.constant 0 : index
    %c3 = arith.constant 3 : index
    %c0_23 = arith.constant 0 : index
    %c0_24 = arith.constant 0 : index
    %22 = vector.load %arg3[%c0_22, %c3, %c0_23, %c0_24] : memref<2x9x32x4xf32, #tpu.memory_space<vmem>>, vector<1x1x32x4xf32>
    %23 = vector.shape_cast %22 : vector<1x1x32x4xf32> to vector<32x4xf32>
    %cst_25 = arith.constant dense<0.000000e+00> : vector<32x384xf32>
    %24 = tpu.matmul %23, %21, %cst_25 {dimension_numbers = #tpu.dot_dimension_numbers<[1], [0], [0], [1], [0, 0, 1, 1], [], []>} : vector<32x4xf32>, vector<4x384xf32>, vector<32x384xf32> -> vector<32x384xf32>
    %25 = arith.addf %20, %24 : vector<32x384xf32>
    %c0_26 = arith.constant 0 : index
    %c128_27 = arith.constant 128 : index
    %26 = vector.load %arg6[%c0_26, %c128_27] : memref<4x640xf32, #tpu.memory_space<vmem>>, vector<4x384xf32>
    %c0_28 = arith.constant 0 : index
    %c4 = arith.constant 4 : index
    %c0_29 = arith.constant 0 : index
    %c0_30 = arith.constant 0 : index
    %27 = vector.load %arg3[%c0_28, %c4, %c0_29, %c0_30] : memref<2x9x32x4xf32, #tpu.memory_space<vmem>>, vector<1x1x32x4xf32>
    %28 = vector.shape_cast %27 : vector<1x1x32x4xf32> to vector<32x4xf32>
    %cst_31 = arith.constant dense<0.000000e+00> : vector<32x384xf32>
    %29 = tpu.matmul %28, %26, %cst_31 {dimension_numbers = #tpu.dot_dimension_numbers<[1], [0], [0], [1], [0, 0, 1, 1], [], []>} : vector<32x4xf32>, vector<4x384xf32>, vector<32x384xf32> -> vector<32x384xf32>
    %30 = arith.addf %25, %29 : vector<32x384xf32>
    %c0_32 = arith.constant 0 : index
    %c129 = arith.constant 129 : index
    %31 = vector.load %arg6[%c0_32, %c129] : memref<4x640xf32, #tpu.memory_space<vmem>>, vector<4x384xf32>
    %c0_33 = arith.constant 0 : index
    %c5 = arith.constant 5 : index
    %c0_34 = arith.constant 0 : index
    %c0_35 = arith.constant 0 : index
    %32 = vector.load %arg3[%c0_33, %c5, %c0_34, %c0_35] : memref<2x9x32x4xf32, #tpu.memory_space<vmem>>, vector<1x1x32x4xf32>
    %33 = vector.shape_cast %32 : vector<1x1x32x4xf32> to vector<32x4xf32>
    %cst_36 = arith.constant dense<0.000000e+00> : vector<32x384xf32>
    %34 = tpu.matmul %33, %31, %cst_36 {dimension_numbers = #tpu.dot_dimension_numbers<[1], [0], [0], [1], [0, 0, 1, 1], [], []>} : vector<32x4xf32>, vector<4x384xf32>, vector<32x384xf32> -> vector<32x384xf32>
    %35 = arith.addf %30, %34 : vector<32x384xf32>
    %c0_37 = arith.constant 0 : index
    %c145 = arith.constant 145 : index
    %36 = vector.load %arg6[%c0_37, %c145] : memref<4x640xf32, #tpu.memory_space<vmem>>, vector<4x384xf32>
    %c0_38 = arith.constant 0 : index
    %c6 = arith.constant 6 : index
    %c0_39 = arith.constant 0 : index
    %c0_40 = arith.constant 0 : index
    %37 = vector.load %arg3[%c0_38, %c6, %c0_39, %c0_40] : memref<2x9x32x4xf32, #tpu.memory_space<vmem>>, vector<1x1x32x4xf32>
    %38 = vector.shape_cast %37 : vector<1x1x32x4xf32> to vector<32x4xf32>
    %cst_41 = arith.constant dense<0.000000e+00> : vector<32x384xf32>
    %39 = tpu.matmul %38, %36, %cst_41 {dimension_numbers = #tpu.dot_dimension_numbers<[1], [0], [0], [1], [0, 0, 1, 1], [], []>} : vector<32x4xf32>, vector<4x384xf32>, vector<32x384xf32> -> vector<32x384xf32>
    %40 = arith.addf %35, %39 : vector<32x384xf32>
    %c0_42 = arith.constant 0 : index
    %c146 = arith.constant 146 : index
    %41 = vector.load %arg6[%c0_42, %c146] : memref<4x640xf32, #tpu.memory_space<vmem>>, vector<4x384xf32>
    %c0_43 = arith.constant 0 : index
    %c7 = arith.constant 7 : index
    %c0_44 = arith.constant 0 : index
    %c0_45 = arith.constant 0 : index
    %42 = vector.load %arg3[%c0_43, %c7, %c0_44, %c0_45] : memref<2x9x32x4xf32, #tpu.memory_space<vmem>>, vector<1x1x32x4xf32>
    %43 = vector.shape_cast %42 : vector<1x1x32x4xf32> to vector<32x4xf32>
    %cst_46 = arith.constant dense<0.000000e+00> : vector<32x384xf32>
    %44 = tpu.matmul %43, %41, %cst_46 {dimension_numbers = #tpu.dot_dimension_numbers<[1], [0], [0], [1], [0, 0, 1, 1], [], []>} : vector<32x4xf32>, vector<4x384xf32>, vector<32x384xf32> -> vector<32x384xf32>
    %45 = arith.addf %40, %44 : vector<32x384xf32>
    %c0_47 = arith.constant 0 : index
    %c147 = arith.constant 147 : index
    %46 = vector.load %arg6[%c0_47, %c147] : memref<4x640xf32, #tpu.memory_space<vmem>>, vector<4x384xf32>
    %c0_48 = arith.constant 0 : index
    %c8 = arith.constant 8 : index
    %c0_49 = arith.constant 0 : index
    %c0_50 = arith.constant 0 : index
    %47 = vector.load %arg3[%c0_48, %c8, %c0_49, %c0_50] : memref<2x9x32x4xf32, #tpu.memory_space<vmem>>, vector<1x1x32x4xf32>
    %48 = vector.shape_cast %47 : vector<1x1x32x4xf32> to vector<32x4xf32>
    %cst_51 = arith.constant dense<0.000000e+00> : vector<32x384xf32>
    %49 = tpu.matmul %48, %46, %cst_51 {dimension_numbers = #tpu.dot_dimension_numbers<[1], [0], [0], [1], [0, 0, 1, 1], [], []>} : vector<32x4xf32>, vector<4x384xf32>, vector<32x384xf32> -> vector<32x384xf32>
    %50 = arith.addf %45, %49 : vector<32x384xf32>
    %cst_52 = arith.constant 0.000000e+00 : f32
    %51 = vector.broadcast %cst_52 : f32 to vector<32x384xf32>
    %52 = arith.maximumf %50, %51 : vector<32x384xf32>
    %cst_53 = arith.constant 0.000000e+00 : f32
    %53 = vector.shape_cast %2 : vector<1x384xi1> to vector<1x384xi1>
    %54 = vector.broadcast %53 : vector<1x384xi1> to vector<32x384xi1>
    %55 = vector.broadcast %cst_53 : f32 to vector<32x384xf32>
    %56 = arith.select %54, %52, %55 : vector<32x384xi1>, vector<32x384xf32>
    %c0_54 = arith.constant 0 : index
    %c128_55 = arith.constant 128 : index
    %57 = vector.load %arg7[%c0_54, %c128_55] : memref<32x640xf32, #tpu.memory_space<vmem>>, vector<32x384xf32>
    tpu.vector_store %arg7[%c0_54, %c128_55], %56 {strides = array<i32>} : memref<32x640xf32, #tpu.memory_space<vmem>>, vector<32x384xf32>,
    %cst_56 = arith.constant 0.000000e+00 : f32
    %58 = vector.broadcast %cst_56 : f32 to vector<4x384xf32>
    %c0_57 = arith.constant 0 : index
    %c109_58 = arith.constant 109 : index
    %59 = vector.load %arg7[%c0_57, %c109_58] : memref<32x640xf32, #tpu.memory_space<vmem>>, vector<32x384xf32>
    %c0_59 = arith.constant 0 : index
    %c0_60 = arith.constant 0 : index
    %c0_61 = arith.constant 0 : index
    %c0_62 = arith.constant 0 : index
    %60 = vector.load %arg4[%c0_59, %c0_60, %c0_61, %c0_62] : memref<2x9x4x32xf32, #tpu.memory_space<vmem>>, vector<1x1x4x32xf32>
    %61 = vector.shape_cast %60 : vector<1x1x4x32xf32> to vector<4x32xf32>
    %cst_63 = arith.constant dense<0.000000e+00> : vector<4x384xf32>
    %62 = tpu.matmul %61, %59, %cst_63 {dimension_numbers = #tpu.dot_dimension_numbers<[1], [0], [0], [1], [0, 0, 1, 1], [], []>} : vector<4x32xf32>, vector<32x384xf32>, vector<4x384xf32> -> vector<4x384xf32>
    %63 = arith.addf %58, %62 : vector<4x384xf32>
    %c0_64 = arith.constant 0 : index
    %c110_65 = arith.constant 110 : index
    %64 = vector.load %arg7[%c0_64, %c110_65] : memref<32x640xf32, #tpu.memory_space<vmem>>, vector<32x384xf32>
    %c0_66 = arith.constant 0 : index
    %c1_67 = arith.constant 1 : index
    %c0_68 = arith.constant 0 : index
    %c0_69 = arith.constant 0 : index
    %65 = vector.load %arg4[%c0_66, %c1_67, %c0_68, %c0_69] : memref<2x9x4x32xf32, #tpu.memory_space<vmem>>, vector<1x1x4x32xf32>
    %66 = vector.shape_cast %65 : vector<1x1x4x32xf32> to vector<4x32xf32>
    %cst_70 = arith.constant dense<0.000000e+00> : vector<4x384xf32>
    %67 = tpu.matmul %66, %64, %cst_70 {dimension_numbers = #tpu.dot_dimension_numbers<[1], [0], [0], [1], [0, 0, 1, 1], [], []>} : vector<4x32xf32>, vector<32x384xf32>, vector<4x384xf32> -> vector<4x384xf32>
    %68 = arith.addf %63, %67 : vector<4x384xf32>
    %c0_71 = arith.constant 0 : index
    %c111_72 = arith.constant 111 : index
    %69 = vector.load %arg7[%c0_71, %c111_72] : memref<32x640xf32, #tpu.memory_space<vmem>>, vector<32x384xf32>
    %c0_73 = arith.constant 0 : index
    %c2_74 = arith.constant 2 : index
    %c0_75 = arith.constant 0 : index
    %c0_76 = arith.constant 0 : index
    %70 = vector.load %arg4[%c0_73, %c2_74, %c0_75, %c0_76] : memref<2x9x4x32xf32, #tpu.memory_space<vmem>>, vector<1x1x4x32xf32>
    %71 = vector.shape_cast %70 : vector<1x1x4x32xf32> to vector<4x32xf32>
    %cst_77 = arith.constant dense<0.000000e+00> : vector<4x384xf32>
    %72 = tpu.matmul %71, %69, %cst_77 {dimension_numbers = #tpu.dot_dimension_numbers<[1], [0], [0], [1], [0, 0, 1, 1], [], []>} : vector<4x32xf32>, vector<32x384xf32>, vector<4x384xf32> -> vector<4x384xf32>
    %73 = arith.addf %68, %72 : vector<4x384xf32>
    %c0_78 = arith.constant 0 : index
    %c127_79 = arith.constant 127 : index
    %74 = vector.load %arg7[%c0_78, %c127_79] : memref<32x640xf32, #tpu.memory_space<vmem>>, vector<32x384xf32>
    %c0_80 = arith.constant 0 : index
    %c3_81 = arith.constant 3 : index
    %c0_82 = arith.constant 0 : index
    %c0_83 = arith.constant 0 : index
    %75 = vector.load %arg4[%c0_80, %c3_81, %c0_82, %c0_83] : memref<2x9x4x32xf32, #tpu.memory_space<vmem>>, vector<1x1x4x32xf32>
    %76 = vector.shape_cast %75 : vector<1x1x4x32xf32> to vector<4x32xf32>
    %cst_84 = arith.constant dense<0.000000e+00> : vector<4x384xf32>
    %77 = tpu.matmul %76, %74, %cst_84 {dimension_numbers = #tpu.dot_dimension_numbers<[1], [0], [0], [1], [0, 0, 1, 1], [], []>} : vector<4x32xf32>, vector<32x384xf32>, vector<4x384xf32> -> vector<4x384xf32>
    %78 = arith.addf %73, %77 : vector<4x384xf32>
    %c0_85 = arith.constant 0 : index
    %c128_86 = arith.constant 128 : index
    %79 = vector.load %arg7[%c0_85, %c128_86] : memref<32x640xf32, #tpu.memory_space<vmem>>, vector<32x384xf32>
    %c0_87 = arith.constant 0 : index
    %c4_88 = arith.constant 4 : index
    %c0_89 = arith.constant 0 : index
    %c0_90 = arith.constant 0 : index
    %80 = vector.load %arg4[%c0_87, %c4_88, %c0_89, %c0_90] : memref<2x9x4x32xf32, #tpu.memory_space<vmem>>, vector<1x1x4x32xf32>
    %81 = vector.shape_cast %80 : vector<1x1x4x32xf32> to vector<4x32xf32>
    %cst_91 = arith.constant dense<0.000000e+00> : vector<4x384xf32>
    %82 = tpu.matmul %81, %79, %cst_91 {dimension_numbers = #tpu.dot_dimension_numbers<[1], [0], [0], [1], [0, 0, 1, 1], [], []>} : vector<4x32xf32>, vector<32x384xf32>, vector<4x384xf32> -> vector<4x384xf32>
    %83 = arith.addf %78, %82 : vector<4x384xf32>
    %c0_92 = arith.constant 0 : index
    %c129_93 = arith.constant 129 : index
    %84 = vector.load %arg7[%c0_92, %c129_93] : memref<32x640xf32, #tpu.memory_space<vmem>>, vector<32x384xf32>
    %c0_94 = arith.constant 0 : index
    %c5_95 = arith.constant 5 : index
    %c0_96 = arith.constant 0 : index
    %c0_97 = arith.constant 0 : index
    %85 = vector.load %arg4[%c0_94, %c5_95, %c0_96, %c0_97] : memref<2x9x4x32xf32, #tpu.memory_space<vmem>>, vector<1x1x4x32xf32>
    %86 = vector.shape_cast %85 : vector<1x1x4x32xf32> to vector<4x32xf32>
    %cst_98 = arith.constant dense<0.000000e+00> : vector<4x384xf32>
    %87 = tpu.matmul %86, %84, %cst_98 {dimension_numbers = #tpu.dot_dimension_numbers<[1], [0], [0], [1], [0, 0, 1, 1], [], []>} : vector<4x32xf32>, vector<32x384xf32>, vector<4x384xf32> -> vector<4x384xf32>
    %88 = arith.addf %83, %87 : vector<4x384xf32>
    %c0_99 = arith.constant 0 : index
    %c145_100 = arith.constant 145 : index
    %89 = vector.load %arg7[%c0_99, %c145_100] : memref<32x640xf32, #tpu.memory_space<vmem>>, vector<32x384xf32>
    %c0_101 = arith.constant 0 : index
    %c6_102 = arith.constant 6 : index
    %c0_103 = arith.constant 0 : index
    %c0_104 = arith.constant 0 : index
    %90 = vector.load %arg4[%c0_101, %c6_102, %c0_103, %c0_104] : memref<2x9x4x32xf32, #tpu.memory_space<vmem>>, vector<1x1x4x32xf32>
    %91 = vector.shape_cast %90 : vector<1x1x4x32xf32> to vector<4x32xf32>
    %cst_105 = arith.constant dense<0.000000e+00> : vector<4x384xf32>
    %92 = tpu.matmul %91, %89, %cst_105 {dimension_numbers = #tpu.dot_dimension_numbers<[1], [0], [0], [1], [0, 0, 1, 1], [], []>} : vector<4x32xf32>, vector<32x384xf32>, vector<4x384xf32> -> vector<4x384xf32>
    %93 = arith.addf %88, %92 : vector<4x384xf32>
    %c0_106 = arith.constant 0 : index
    %c146_107 = arith.constant 146 : index
    %94 = vector.load %arg7[%c0_106, %c146_107] : memref<32x640xf32, #tpu.memory_space<vmem>>, vector<32x384xf32>
    %c0_108 = arith.constant 0 : index
    %c7_109 = arith.constant 7 : index
    %c0_110 = arith.constant 0 : index
    %c0_111 = arith.constant 0 : index
    %95 = vector.load %arg4[%c0_108, %c7_109, %c0_110, %c0_111] : memref<2x9x4x32xf32, #tpu.memory_space<vmem>>, vector<1x1x4x32xf32>
    %96 = vector.shape_cast %95 : vector<1x1x4x32xf32> to vector<4x32xf32>
    %cst_112 = arith.constant dense<0.000000e+00> : vector<4x384xf32>
    %97 = tpu.matmul %96, %94, %cst_112 {dimension_numbers = #tpu.dot_dimension_numbers<[1], [0], [0], [1], [0, 0, 1, 1], [], []>} : vector<4x32xf32>, vector<32x384xf32>, vector<4x384xf32> -> vector<4x384xf32>
    %98 = arith.addf %93, %97 : vector<4x384xf32>
    %c0_113 = arith.constant 0 : index
    %c147_114 = arith.constant 147 : index
    %99 = vector.load %arg7[%c0_113, %c147_114] : memref<32x640xf32, #tpu.memory_space<vmem>>, vector<32x384xf32>
    %c0_115 = arith.constant 0 : index
    %c8_116 = arith.constant 8 : index
    %c0_117 = arith.constant 0 : index
    %c0_118 = arith.constant 0 : index
    %100 = vector.load %arg4[%c0_115, %c8_116, %c0_117, %c0_118] : memref<2x9x4x32xf32, #tpu.memory_space<vmem>>, vector<1x1x4x32xf32>
    %101 = vector.shape_cast %100 : vector<1x1x4x32xf32> to vector<4x32xf32>
    %cst_119 = arith.constant dense<0.000000e+00> : vector<4x384xf32>
    %102 = tpu.matmul %101, %99, %cst_119 {dimension_numbers = #tpu.dot_dimension_numbers<[1], [0], [0], [1], [0, 0, 1, 1], [], []>} : vector<4x32xf32>, vector<32x384xf32>, vector<4x384xf32> -> vector<4x384xf32>
    %103 = arith.addf %98, %102 : vector<4x384xf32>
    %104 = arith.addf %3, %103 : vector<4x384xf32>
    %cst_120 = arith.constant 0.000000e+00 : f32
    %105 = vector.broadcast %cst_120 : f32 to vector<4x384xf32>
    %106 = arith.maximumf %104, %105 : vector<4x384xf32>
    %cst_121 = arith.constant 0.000000e+00 : f32
    %107 = vector.shape_cast %2 : vector<1x384xi1> to vector<1x384xi1>
    %108 = vector.broadcast %107 : vector<1x384xi1> to vector<4x384xi1>
    %109 = vector.broadcast %cst_121 : f32 to vector<4x384xf32>
    %110 = arith.select %108, %106, %109 : vector<4x384xi1>, vector<4x384xf32>
    %c0_122 = arith.constant 0 : index
    %c128_123 = arith.constant 128 : index
    %111 = vector.load %arg6[%c0_122, %c128_123] : memref<4x640xf32, #tpu.memory_space<vmem>>, vector<4x384xf32>
    tpu.vector_store %arg6[%c0_122, %c128_123], %110 {strides = array<i32>} : memref<4x640xf32, #tpu.memory_space<vmem>>, vector<4x384xf32>,
    %cst_124 = arith.constant 0.000000e+00 : f32
    %112 = vector.broadcast %cst_124 : f32 to vector<32x384xf32>
    %c0_125 = arith.constant 0 : index
    %c109_126 = arith.constant 109 : index
    %113 = vector.load %arg6[%c0_125, %c109_126] : memref<4x640xf32, #tpu.memory_space<vmem>>, vector<4x384xf32>
    %c1_127 = arith.constant 1 : index
    %c0_128 = arith.constant 0 : index
    %c0_129 = arith.constant 0 : index
    %c0_130 = arith.constant 0 : index
    %114 = vector.load %arg3[%c1_127, %c0_128, %c0_129, %c0_130] : memref<2x9x32x4xf32, #tpu.memory_space<vmem>>, vector<1x1x32x4xf32>
    %115 = vector.shape_cast %114 : vector<1x1x32x4xf32> to vector<32x4xf32>
    %cst_131 = arith.constant dense<0.000000e+00> : vector<32x384xf32>
    %116 = tpu.matmul %115, %113, %cst_131 {dimension_numbers = #tpu.dot_dimension_numbers<[1], [0], [0], [1], [0, 0, 1, 1], [], []>} : vector<32x4xf32>, vector<4x384xf32>, vector<32x384xf32> -> vector<32x384xf32>
    %117 = arith.addf %112, %116 : vector<32x384xf32>
    %c0_132 = arith.constant 0 : index
    %c110_133 = arith.constant 110 : index
    %118 = vector.load %arg6[%c0_132, %c110_133] : memref<4x640xf32, #tpu.memory_space<vmem>>, vector<4x384xf32>
    %c1_134 = arith.constant 1 : index
    %c1_135 = arith.constant 1 : index
    %c0_136 = arith.constant 0 : index
    %c0_137 = arith.constant 0 : index
    %119 = vector.load %arg3[%c1_134, %c1_135, %c0_136, %c0_137] : memref<2x9x32x4xf32, #tpu.memory_space<vmem>>, vector<1x1x32x4xf32>
    %120 = vector.shape_cast %119 : vector<1x1x32x4xf32> to vector<32x4xf32>
    %cst_138 = arith.constant dense<0.000000e+00> : vector<32x384xf32>
    %121 = tpu.matmul %120, %118, %cst_138 {dimension_numbers = #tpu.dot_dimension_numbers<[1], [0], [0], [1], [0, 0, 1, 1], [], []>} : vector<32x4xf32>, vector<4x384xf32>, vector<32x384xf32> -> vector<32x384xf32>
    %122 = arith.addf %117, %121 : vector<32x384xf32>
    %c0_139 = arith.constant 0 : index
    %c111_140 = arith.constant 111 : index
    %123 = vector.load %arg6[%c0_139, %c111_140] : memref<4x640xf32, #tpu.memory_space<vmem>>, vector<4x384xf32>
    %c1_141 = arith.constant 1 : index
    %c2_142 = arith.constant 2 : index
    %c0_143 = arith.constant 0 : index
    %c0_144 = arith.constant 0 : index
    %124 = vector.load %arg3[%c1_141, %c2_142, %c0_143, %c0_144] : memref<2x9x32x4xf32, #tpu.memory_space<vmem>>, vector<1x1x32x4xf32>
    %125 = vector.shape_cast %124 : vector<1x1x32x4xf32> to vector<32x4xf32>
    %cst_145 = arith.constant dense<0.000000e+00> : vector<32x384xf32>
    %126 = tpu.matmul %125, %123, %cst_145 {dimension_numbers = #tpu.dot_dimension_numbers<[1], [0], [0], [1], [0, 0, 1, 1], [], []>} : vector<32x4xf32>, vector<4x384xf32>, vector<32x384xf32> -> vector<32x384xf32>
    %127 = arith.addf %122, %126 : vector<32x384xf32>
    %c0_146 = arith.constant 0 : index
    %c127_147 = arith.constant 127 : index
    %128 = vector.load %arg6[%c0_146, %c127_147] : memref<4x640xf32, #tpu.memory_space<vmem>>, vector<4x384xf32>
    %c1_148 = arith.constant 1 : index
    %c3_149 = arith.constant 3 : index
    %c0_150 = arith.constant 0 : index
    %c0_151 = arith.constant 0 : index
    %129 = vector.load %arg3[%c1_148, %c3_149, %c0_150, %c0_151] : memref<2x9x32x4xf32, #tpu.memory_space<vmem>>, vector<1x1x32x4xf32>
    %130 = vector.shape_cast %129 : vector<1x1x32x4xf32> to vector<32x4xf32>
    %cst_152 = arith.constant dense<0.000000e+00> : vector<32x384xf32>
    %131 = tpu.matmul %130, %128, %cst_152 {dimension_numbers = #tpu.dot_dimension_numbers<[1], [0], [0], [1], [0, 0, 1, 1], [], []>} : vector<32x4xf32>, vector<4x384xf32>, vector<32x384xf32> -> vector<32x384xf32>
    %132 = arith.addf %127, %131 : vector<32x384xf32>
    %c0_153 = arith.constant 0 : index
    %c128_154 = arith.constant 128 : index
    %133 = vector.load %arg6[%c0_153, %c128_154] : memref<4x640xf32, #tpu.memory_space<vmem>>, vector<4x384xf32>
    %c1_155 = arith.constant 1 : index
    %c4_156 = arith.constant 4 : index
    %c0_157 = arith.constant 0 : index
    %c0_158 = arith.constant 0 : index
    %134 = vector.load %arg3[%c1_155, %c4_156, %c0_157, %c0_158] : memref<2x9x32x4xf32, #tpu.memory_space<vmem>>, vector<1x1x32x4xf32>
    %135 = vector.shape_cast %134 : vector<1x1x32x4xf32> to vector<32x4xf32>
    %cst_159 = arith.constant dense<0.000000e+00> : vector<32x384xf32>
    %136 = tpu.matmul %135, %133, %cst_159 {dimension_numbers = #tpu.dot_dimension_numbers<[1], [0], [0], [1], [0, 0, 1, 1], [], []>} : vector<32x4xf32>, vector<4x384xf32>, vector<32x384xf32> -> vector<32x384xf32>
    %137 = arith.addf %132, %136 : vector<32x384xf32>
    %c0_160 = arith.constant 0 : index
    %c129_161 = arith.constant 129 : index
    %138 = vector.load %arg6[%c0_160, %c129_161] : memref<4x640xf32, #tpu.memory_space<vmem>>, vector<4x384xf32>
    %c1_162 = arith.constant 1 : index
    %c5_163 = arith.constant 5 : index
    %c0_164 = arith.constant 0 : index
    %c0_165 = arith.constant 0 : index
    %139 = vector.load %arg3[%c1_162, %c5_163, %c0_164, %c0_165] : memref<2x9x32x4xf32, #tpu.memory_space<vmem>>, vector<1x1x32x4xf32>
    %140 = vector.shape_cast %139 : vector<1x1x32x4xf32> to vector<32x4xf32>
    %cst_166 = arith.constant dense<0.000000e+00> : vector<32x384xf32>
    %141 = tpu.matmul %140, %138, %cst_166 {dimension_numbers = #tpu.dot_dimension_numbers<[1], [0], [0], [1], [0, 0, 1, 1], [], []>} : vector<32x4xf32>, vector<4x384xf32>, vector<32x384xf32> -> vector<32x384xf32>
    %142 = arith.addf %137, %141 : vector<32x384xf32>
    %c0_167 = arith.constant 0 : index
    %c145_168 = arith.constant 145 : index
    %143 = vector.load %arg6[%c0_167, %c145_168] : memref<4x640xf32, #tpu.memory_space<vmem>>, vector<4x384xf32>
    %c1_169 = arith.constant 1 : index
    %c6_170 = arith.constant 6 : index
    %c0_171 = arith.constant 0 : index
    %c0_172 = arith.constant 0 : index
    %144 = vector.load %arg3[%c1_169, %c6_170, %c0_171, %c0_172] : memref<2x9x32x4xf32, #tpu.memory_space<vmem>>, vector<1x1x32x4xf32>
    %145 = vector.shape_cast %144 : vector<1x1x32x4xf32> to vector<32x4xf32>
    %cst_173 = arith.constant dense<0.000000e+00> : vector<32x384xf32>
    %146 = tpu.matmul %145, %143, %cst_173 {dimension_numbers = #tpu.dot_dimension_numbers<[1], [0], [0], [1], [0, 0, 1, 1], [], []>} : vector<32x4xf32>, vector<4x384xf32>, vector<32x384xf32> -> vector<32x384xf32>
    %147 = arith.addf %142, %146 : vector<32x384xf32>
    %c0_174 = arith.constant 0 : index
    %c146_175 = arith.constant 146 : index
    %148 = vector.load %arg6[%c0_174, %c146_175] : memref<4x640xf32, #tpu.memory_space<vmem>>, vector<4x384xf32>
    %c1_176 = arith.constant 1 : index
    %c7_177 = arith.constant 7 : index
    %c0_178 = arith.constant 0 : index
    %c0_179 = arith.constant 0 : index
    %149 = vector.load %arg3[%c1_176, %c7_177, %c0_178, %c0_179] : memref<2x9x32x4xf32, #tpu.memory_space<vmem>>, vector<1x1x32x4xf32>
    %150 = vector.shape_cast %149 : vector<1x1x32x4xf32> to vector<32x4xf32>
    %cst_180 = arith.constant dense<0.000000e+00> : vector<32x384xf32>
    %151 = tpu.matmul %150, %148, %cst_180 {dimension_numbers = #tpu.dot_dimension_numbers<[1], [0], [0], [1], [0, 0, 1, 1], [], []>} : vector<32x4xf32>, vector<4x384xf32>, vector<32x384xf32> -> vector<32x384xf32>
    %152 = arith.addf %147, %151 : vector<32x384xf32>
    %c0_181 = arith.constant 0 : index
    %c147_182 = arith.constant 147 : index
    %153 = vector.load %arg6[%c0_181, %c147_182] : memref<4x640xf32, #tpu.memory_space<vmem>>, vector<4x384xf32>
    %c1_183 = arith.constant 1 : index
    %c8_184 = arith.constant 8 : index
    %c0_185 = arith.constant 0 : index
    %c0_186 = arith.constant 0 : index
    %154 = vector.load %arg3[%c1_183, %c8_184, %c0_185, %c0_186] : memref<2x9x32x4xf32, #tpu.memory_space<vmem>>, vector<1x1x32x4xf32>
    %155 = vector.shape_cast %154 : vector<1x1x32x4xf32> to vector<32x4xf32>
    %cst_187 = arith.constant dense<0.000000e+00> : vector<32x384xf32>
    %156 = tpu.matmul %155, %153, %cst_187 {dimension_numbers = #tpu.dot_dimension_numbers<[1], [0], [0], [1], [0, 0, 1, 1], [], []>} : vector<32x4xf32>, vector<4x384xf32>, vector<32x384xf32> -> vector<32x384xf32>
    %157 = arith.addf %152, %156 : vector<32x384xf32>
    %cst_188 = arith.constant 0.000000e+00 : f32
    %158 = vector.broadcast %cst_188 : f32 to vector<32x384xf32>
    %159 = arith.maximumf %157, %158 : vector<32x384xf32>
    %cst_189 = arith.constant 0.000000e+00 : f32
    %160 = vector.shape_cast %2 : vector<1x384xi1> to vector<1x384xi1>
    %161 = vector.broadcast %160 : vector<1x384xi1> to vector<32x384xi1>
    %162 = vector.broadcast %cst_189 : f32 to vector<32x384xf32>
    %163 = arith.select %161, %159, %162 : vector<32x384xi1>, vector<32x384xf32>
    %c0_190 = arith.constant 0 : index
    %c128_191 = arith.constant 128 : index
    %164 = vector.load %arg7[%c0_190, %c128_191] : memref<32x640xf32, #tpu.memory_space<vmem>>, vector<32x384xf32>
    tpu.vector_store %arg7[%c0_190, %c128_191], %163 {strides = array<i32>} : memref<32x640xf32, #tpu.memory_space<vmem>>, vector<32x384xf32>,
    %cst_192 = arith.constant 0.000000e+00 : f32
    %165 = vector.broadcast %cst_192 : f32 to vector<4x384xf32>
    %c0_193 = arith.constant 0 : index
    %c109_194 = arith.constant 109 : index
    %166 = vector.load %arg7[%c0_193, %c109_194] : memref<32x640xf32, #tpu.memory_space<vmem>>, vector<32x384xf32>
    %c1_195 = arith.constant 1 : index
    %c0_196 = arith.constant 0 : index
    %c0_197 = arith.constant 0 : index
    %c0_198 = arith.constant 0 : index
    %167 = vector.load %arg4[%c1_195, %c0_196, %c0_197, %c0_198] : memref<2x9x4x32xf32, #tpu.memory_space<vmem>>, vector<1x1x4x32xf32>
    %168 = vector.shape_cast %167 : vector<1x1x4x32xf32> to vector<4x32xf32>
    %cst_199 = arith.constant dense<0.000000e+00> : vector<4x384xf32>
    %169 = tpu.matmul %168, %166, %cst_199 {dimension_numbers = #tpu.dot_dimension_numbers<[1], [0], [0], [1], [0, 0, 1, 1], [], []>} : vector<4x32xf32>, vector<32x384xf32>, vector<4x384xf32> -> vector<4x384xf32>
    %170 = arith.addf %165, %169 : vector<4x384xf32>
    %c0_200 = arith.constant 0 : index
    %c110_201 = arith.constant 110 : index
    %171 = vector.load %arg7[%c0_200, %c110_201] : memref<32x640xf32, #tpu.memory_space<vmem>>, vector<32x384xf32>
    %c1_202 = arith.constant 1 : index
    %c1_203 = arith.constant 1 : index
    %c0_204 = arith.constant 0 : index
    %c0_205 = arith.constant 0 : index
    %172 = vector.load %arg4[%c1_202, %c1_203, %c0_204, %c0_205] : memref<2x9x4x32xf32, #tpu.memory_space<vmem>>, vector<1x1x4x32xf32>
    %173 = vector.shape_cast %172 : vector<1x1x4x32xf32> to vector<4x32xf32>
    %cst_206 = arith.constant dense<0.000000e+00> : vector<4x384xf32>
    %174 = tpu.matmul %173, %171, %cst_206 {dimension_numbers = #tpu.dot_dimension_numbers<[1], [0], [0], [1], [0, 0, 1, 1], [], []>} : vector<4x32xf32>, vector<32x384xf32>, vector<4x384xf32> -> vector<4x384xf32>
    %175 = arith.addf %170, %174 : vector<4x384xf32>
    %c0_207 = arith.constant 0 : index
    %c111_208 = arith.constant 111 : index
    %176 = vector.load %arg7[%c0_207, %c111_208] : memref<32x640xf32, #tpu.memory_space<vmem>>, vector<32x384xf32>
    %c1_209 = arith.constant 1 : index
    %c2_210 = arith.constant 2 : index
    %c0_211 = arith.constant 0 : index
    %c0_212 = arith.constant 0 : index
    %177 = vector.load %arg4[%c1_209, %c2_210, %c0_211, %c0_212] : memref<2x9x4x32xf32, #tpu.memory_space<vmem>>, vector<1x1x4x32xf32>
    %178 = vector.shape_cast %177 : vector<1x1x4x32xf32> to vector<4x32xf32>
    %cst_213 = arith.constant dense<0.000000e+00> : vector<4x384xf32>
    %179 = tpu.matmul %178, %176, %cst_213 {dimension_numbers = #tpu.dot_dimension_numbers<[1], [0], [0], [1], [0, 0, 1, 1], [], []>} : vector<4x32xf32>, vector<32x384xf32>, vector<4x384xf32> -> vector<4x384xf32>
    %180 = arith.addf %175, %179 : vector<4x384xf32>
    %c0_214 = arith.constant 0 : index
    %c127_215 = arith.constant 127 : index
    %181 = vector.load %arg7[%c0_214, %c127_215] : memref<32x640xf32, #tpu.memory_space<vmem>>, vector<32x384xf32>
    %c1_216 = arith.constant 1 : index
    %c3_217 = arith.constant 3 : index
    %c0_218 = arith.constant 0 : index
    %c0_219 = arith.constant 0 : index
    %182 = vector.load %arg4[%c1_216, %c3_217, %c0_218, %c0_219] : memref<2x9x4x32xf32, #tpu.memory_space<vmem>>, vector<1x1x4x32xf32>
    %183 = vector.shape_cast %182 : vector<1x1x4x32xf32> to vector<4x32xf32>
    %cst_220 = arith.constant dense<0.000000e+00> : vector<4x384xf32>
    %184 = tpu.matmul %183, %181, %cst_220 {dimension_numbers = #tpu.dot_dimension_numbers<[1], [0], [0], [1], [0, 0, 1, 1], [], []>} : vector<4x32xf32>, vector<32x384xf32>, vector<4x384xf32> -> vector<4x384xf32>
    %185 = arith.addf %180, %184 : vector<4x384xf32>
    %c0_221 = arith.constant 0 : index
    %c128_222 = arith.constant 128 : index
    %186 = vector.load %arg7[%c0_221, %c128_222] : memref<32x640xf32, #tpu.memory_space<vmem>>, vector<32x384xf32>
    %c1_223 = arith.constant 1 : index
    %c4_224 = arith.constant 4 : index
    %c0_225 = arith.constant 0 : index
    %c0_226 = arith.constant 0 : index
    %187 = vector.load %arg4[%c1_223, %c4_224, %c0_225, %c0_226] : memref<2x9x4x32xf32, #tpu.memory_space<vmem>>, vector<1x1x4x32xf32>
    %188 = vector.shape_cast %187 : vector<1x1x4x32xf32> to vector<4x32xf32>
    %cst_227 = arith.constant dense<0.000000e+00> : vector<4x384xf32>
    %189 = tpu.matmul %188, %186, %cst_227 {dimension_numbers = #tpu.dot_dimension_numbers<[1], [0], [0], [1], [0, 0, 1, 1], [], []>} : vector<4x32xf32>, vector<32x384xf32>, vector<4x384xf32> -> vector<4x384xf32>
    %190 = arith.addf %185, %189 : vector<4x384xf32>
    %c0_228 = arith.constant 0 : index
    %c129_229 = arith.constant 129 : index
    %191 = vector.load %arg7[%c0_228, %c129_229] : memref<32x640xf32, #tpu.memory_space<vmem>>, vector<32x384xf32>
    %c1_230 = arith.constant 1 : index
    %c5_231 = arith.constant 5 : index
    %c0_232 = arith.constant 0 : index
    %c0_233 = arith.constant 0 : index
    %192 = vector.load %arg4[%c1_230, %c5_231, %c0_232, %c0_233] : memref<2x9x4x32xf32, #tpu.memory_space<vmem>>, vector<1x1x4x32xf32>
    %193 = vector.shape_cast %192 : vector<1x1x4x32xf32> to vector<4x32xf32>
    %cst_234 = arith.constant dense<0.000000e+00> : vector<4x384xf32>
    %194 = tpu.matmul %193, %191, %cst_234 {dimension_numbers = #tpu.dot_dimension_numbers<[1], [0], [0], [1], [0, 0, 1, 1], [], []>} : vector<4x32xf32>, vector<32x384xf32>, vector<4x384xf32> -> vector<4x384xf32>
    %195 = arith.addf %190, %194 : vector<4x384xf32>
    %c0_235 = arith.constant 0 : index
    %c145_236 = arith.constant 145 : index
    %196 = vector.load %arg7[%c0_235, %c145_236] : memref<32x640xf32, #tpu.memory_space<vmem>>, vector<32x384xf32>
    %c1_237 = arith.constant 1 : index
    %c6_238 = arith.constant 6 : index
    %c0_239 = arith.constant 0 : index
    %c0_240 = arith.constant 0 : index
    %197 = vector.load %arg4[%c1_237, %c6_238, %c0_239, %c0_240] : memref<2x9x4x32xf32, #tpu.memory_space<vmem>>, vector<1x1x4x32xf32>
    %198 = vector.shape_cast %197 : vector<1x1x4x32xf32> to vector<4x32xf32>
    %cst_241 = arith.constant dense<0.000000e+00> : vector<4x384xf32>
    %199 = tpu.matmul %198, %196, %cst_241 {dimension_numbers = #tpu.dot_dimension_numbers<[1], [0], [0], [1], [0, 0, 1, 1], [], []>} : vector<4x32xf32>, vector<32x384xf32>, vector<4x384xf32> -> vector<4x384xf32>
    %200 = arith.addf %195, %199 : vector<4x384xf32>
    %c0_242 = arith.constant 0 : index
    %c146_243 = arith.constant 146 : index
    %201 = vector.load %arg7[%c0_242, %c146_243] : memref<32x640xf32, #tpu.memory_space<vmem>>, vector<32x384xf32>
    %c1_244 = arith.constant 1 : index
    %c7_245 = arith.constant 7 : index
    %c0_246 = arith.constant 0 : index
    %c0_247 = arith.constant 0 : index
    %202 = vector.load %arg4[%c1_244, %c7_245, %c0_246, %c0_247] : memref<2x9x4x32xf32, #tpu.memory_space<vmem>>, vector<1x1x4x32xf32>
    %203 = vector.shape_cast %202 : vector<1x1x4x32xf32> to vector<4x32xf32>
    %cst_248 = arith.constant dense<0.000000e+00> : vector<4x384xf32>
    %204 = tpu.matmul %203, %201, %cst_248 {dimension_numbers = #tpu.dot_dimension_numbers<[1], [0], [0], [1], [0, 0, 1, 1], [], []>} : vector<4x32xf32>, vector<32x384xf32>, vector<4x384xf32> -> vector<4x384xf32>
    %205 = arith.addf %200, %204 : vector<4x384xf32>
    %c0_249 = arith.constant 0 : index
    %c147_250 = arith.constant 147 : index
    %206 = vector.load %arg7[%c0_249, %c147_250] : memref<32x640xf32, #tpu.memory_space<vmem>>, vector<32x384xf32>
    %c1_251 = arith.constant 1 : index
    %c8_252 = arith.constant 8 : index
    %c0_253 = arith.constant 0 : index
    %c0_254 = arith.constant 0 : index
    %207 = vector.load %arg4[%c1_251, %c8_252, %c0_253, %c0_254] : memref<2x9x4x32xf32, #tpu.memory_space<vmem>>, vector<1x1x4x32xf32>
    %208 = vector.shape_cast %207 : vector<1x1x4x32xf32> to vector<4x32xf32>
    %cst_255 = arith.constant dense<0.000000e+00> : vector<4x384xf32>
    %209 = tpu.matmul %208, %206, %cst_255 {dimension_numbers = #tpu.dot_dimension_numbers<[1], [0], [0], [1], [0, 0, 1, 1], [], []>} : vector<4x32xf32>, vector<32x384xf32>, vector<4x384xf32> -> vector<4x384xf32>
    %210 = arith.addf %205, %209 : vector<4x384xf32>
    %211 = arith.addf %110, %210 : vector<4x384xf32>
    %cst_256 = arith.constant 0.000000e+00 : f32
    %212 = vector.broadcast %cst_256 : f32 to vector<4x384xf32>
    %213 = arith.maximumf %211, %212 : vector<4x384xf32>
    %cst_257 = arith.constant 0.000000e+00 : f32
    %214 = vector.shape_cast %2 : vector<1x384xi1> to vector<1x384xi1>
    %215 = vector.broadcast %214 : vector<1x384xi1> to vector<4x384xi1>
    %216 = vector.broadcast %cst_257 : f32 to vector<4x384xf32>
    %217 = arith.select %215, %213, %216 : vector<4x384xi1>, vector<4x384xf32>
    %c0_258 = arith.constant 0 : index
    %c0_259 = arith.constant 0 : index
    %218 = vector.load %arg5[%c0_258, %c0_259] : memref<4x384xf32, #tpu.memory_space<vmem>>, vector<4x384xf32>
    tpu.vector_store %arg5[%c0_258, %c0_259], %217 {strides = array<i32>} : memref<4x384xf32, #tpu.memory_space<vmem>>, vector<4x384xf32>,
    return
  }
  func.func @transform_0(%arg0: i32) -> (i32, i32) {
    %c0_i32 = arith.constant 0 : i32
    %c0_i32_0 = arith.constant 0 : i32
    return %c0_i32, %arg0 : i32, i32
  }
  func.func @transform_1(%arg0: i32) -> (i32, i32) {
    %c0_i32 = arith.constant 0 : i32
    %c0_i32_0 = arith.constant 0 : i32
    return %c0_i32, %arg0 : i32, i32
  }
  func.func @transform_2(%arg0: i32) -> (i32, i32, i32, i32) {
    %c0_i32 = arith.constant 0 : i32
    %c0_i32_0 = arith.constant 0 : i32
    %c0_i32_1 = arith.constant 0 : i32
    %c0_i32_2 = arith.constant 0 : i32
    %c0_i32_3 = arith.constant 0 : i32
    return %c0_i32, %c0_i32_0, %c0_i32_1, %c0_i32_2 : i32, i32, i32, i32
  }
  func.func @transform_3(%arg0: i32) -> (i32, i32, i32, i32) {
    %c0_i32 = arith.constant 0 : i32
    %c0_i32_0 = arith.constant 0 : i32
    %c0_i32_1 = arith.constant 0 : i32
    %c0_i32_2 = arith.constant 0 : i32
    %c0_i32_3 = arith.constant 0 : i32
    return %c0_i32, %c0_i32_0, %c0_i32_1, %c0_i32_2 : i32, i32, i32, i32
  }
  func.func @transform_4(%arg0: i32) -> (i32, i32) {
    %c0_i32 = arith.constant 0 : i32
    %c0_i32_0 = arith.constant 0 : i32
    return %c0_i32, %arg0 : i32, i32
  }
}

</mosaic_0001>

<llo_original>
// kernel: tpu_custom_call.1
$region0: #{tpu_custom_call.1}
  #allocation0 [shape = 'u32[]', space=smem, size = 0x4, offset = 0x4, fixed_abs, tag = 'smem constant byte address 0x4 - core index']
  #allocation1 [shape = 'u32[144,128]{1,0:T(1,128)}', space=vmem, size = 0x12000, scoped, tag = 'internal scratch']
  #allocation2 [shape = 'f32[4,640]{1,0:T(4,128)}', space=vmem, size = 0x2800, scoped, tag = 'scratch operand']
  #allocation3 [shape = 'f32[32,640]{1,0:T(8,128)}', space=vmem, size = 0x14000, scoped, tag = 'scratch operand']
  %s0 = inlined_call_operand.vmem [shape: f32[1,768], index: 0, kind: input, shape index: {}]
  %s1 = inlined_call_operand.vmem [shape: f32[4,768], index: 1, kind: input, shape index: {}]
  %s2 = inlined_call_operand.vmem [shape: f32[2,9,32,4], index: 2, kind: input, shape index: {}]
  %s3 = inlined_call_operand.vmem [shape: f32[2,9,4,32], index: 3, kind: input, shape index: {}]
  %s4 = inlined_call_operand.hbm [shape: f32[4,768], index: 4, kind: output, shape index: {}]
  %s5 = sld [smem:[#allocation0]]
  $region49: #{tpu_custom_call.1} parent=0
    _
  %s7 = ssub.s32 1, %s5
  %s8 = scalar_select 0, %s7, %s5
  $region1: #{tpu_custom_call.1} parent=0
    #allocation4 [shape = 'u8[12288]{0}', space=vmem, size = 0x3000, scoped, tag = 'output window, operand 0']
    #allocation5 [shape = 's32[2]{0}', space=sflag, size = 0x8, scoped, tag = 'scoped memory for tpu_custom_call.1']
    %9 = vsyncpa [#allocation5], 0
    %s10 = scalar_lea.sflag [#allocation5], 1
    %11 = vsyncpa %s10, 0
    loop: start=0, step=1, limit=4
    $region2: #{tpu_custom_call.1} parent=1 // loop_pre_header
      _
    $region3: #{tpu_custom_call.1} parent=1 // loop_header
      %s13 = sphi 0, %s17
      %p14 = scmp.ge.s32.totalorder %s13, 4
      %s23 = sphi 0, %s25
      %s26 = sphi 0, %s23
      %s27 = sphi 0, %s26
      %s43 = sphi 0, %s27
      %s49 = sphi 0, %s51
      %s52 = sphi 0, %s49
      %s53 = sphi 0, %s52
      %s69 = sphi 0, %s53
      %s73 = sphi 0, %s73
      %s75 = sphi 0, %s73
      %s76 = sphi 0, %s75
      %s90 = sphi 0, %s76
      %s94 = sphi 0, %s94
      %s96 = sphi 0, %s94
      %s97 = sphi 0, %s96
      %s111 = sphi 0, %s97
      %s117 = sphi 0, %s119
      %s120 = sphi 0, %s117
      %s121 = sphi 0, %s120
      %s137 = sphi 0, %s121
    $region4: #{tpu_custom_call.1} parent=1 // loop_header_branch
      %16 = sbr.rel (%p14) target = $region8
    $region5: #{tpu_custom_call.1} parent=1 // loop_body
      %s18 = ssub.s32 %s13, 1
      %s19 = ssub.s32 %s13, 2
      %s20 = sadd.s32 %s13, 1
      %s21 = ssub.s32 %s13, %s20
      %p22 = scmp.eq.s32.totalorder %s21, 0
      %s24 = sadd.s32 %s23, 1
      %s25 = scalar_select %p22, %s23, %s24
      %p28 = pneg %p22
      %p29 = scmp.eq.s32.totalorder %s13, 1
      %p30 = por %p28, %p29
      %p31 = scmp.ne.s32.totalorder %s23, %s26
      %p32 = scmp.eq.s32.totalorder %s13, 0
      %p33 = por %p31, %p32
      %p34 = scmp.ne.s32.totalorder %s23, %s26
      %p35 = scmp.eq.s32.totalorder %s18, 1
      %p36 = por %p34, %p35
      %p37 = scmp.ne.s32.totalorder %s26, %s27
      %p38 = scmp.eq.s32.totalorder %s18, 0
      %p39 = por %p37, %p38
      %p40 = scmp.ne.s32.totalorder %s26, %s27
      %p41 = scmp.eq.s32.totalorder %s19, 1
      %p42 = por %p40, %p41
      %p44 = scmp.ne.s32.totalorder %s27, %s43
      %p45 = scmp.eq.s32.totalorder %s19, 0
      %p46 = por %p44, %p45
      %s47 = ssub.s32 %s13, %s20
      %p48 = scmp.eq.s32.totalorder %s47, 0
      %s50 = sadd.s32 %s49, 1
      %s51 = scalar_select %p48, %s49, %s50
      %p54 = pneg %p48
      %p55 = scmp.eq.s32.totalorder %s13, 1
      %p56 = por %p54, %p55
      %p57 = scmp.ne.s32.totalorder %s49, %s52
      %p58 = scmp.eq.s32.totalorder %s13, 0
      %p59 = por %p57, %p58
      %p60 = scmp.ne.s32.totalorder %s49, %s52
      %p61 = scmp.eq.s32.totalorder %s18, 1
      %p62 = por %p60, %p61
      %p63 = scmp.ne.s32.totalorder %s52, %s53
      %p64 = scmp.eq.s32.totalorder %s18, 0
      %p65 = por %p63, %p64
      %p66 = scmp.ne.s32.totalorder %s52, %s53
      %p67 = scmp.eq.s32.totalorder %s19, 1
      %p68 = por %p66, %p67
      %p70 = scmp.ne.s32.totalorder %s53, %s69
      %p71 = scmp.eq.s32.totalorder %s19, 0
      %p72 = por %p70, %p71
      %s74 = sadd.s32 %s73, 1
      %p77 = scmp.eq.s32.totalorder %s13, 1
      %p78 = scmp.ne.s32.totalorder %s73, %s75
      %p79 = scmp.eq.s32.totalorder %s13, 0
      %p80 = por %p78, %p79
      %p81 = scmp.ne.s32.totalorder %s73, %s75
      %p82 = scmp.eq.s32.totalorder %s18, 1
      %p83 = por %p81, %p82
      %p84 = scmp.ne.s32.totalorder %s75, %s76
      %p85 = scmp.eq.s32.totalorder %s18, 0
      %p86 = por %p84, %p85
      %p87 = scmp.ne.s32.totalorder %s75, %s76
      %p88 = scmp.eq.s32.totalorder %s19, 1
      %p89 = por %p87, %p88
      %p91 = scmp.ne.s32.totalorder %s76, %s90
      %p92 = scmp.eq.s32.totalorder %s19, 0
      %p93 = por %p91, %p92
      %s95 = sadd.s32 %s94, 1
      %p98 = scmp.eq.s32.totalorder %s13, 1
      %p99 = scmp.ne.s32.totalorder %s94, %s96
      %p100 = scmp.eq.s32.totalorder %s13, 0
      %p101 = por %p99, %p100
      %p102 = scmp.ne.s32.totalorder %s94, %s96
      %p103 = scmp.eq.s32.totalorder %s18, 1
      %p104 = por %p102, %p103
      %p105 = scmp.ne.s32.totalorder %s96, %s97
      %p106 = scmp.eq.s32.totalorder %s18, 0
      %p107 = por %p105, %p106
      %p108 = scmp.ne.s32.totalorder %s96, %s97
      %p109 = scmp.eq.s32.totalorder %s19, 1
      %p110 = por %p108, %p109
      %p112 = scmp.ne.s32.totalorder %s97, %s111
      %p113 = scmp.eq.s32.totalorder %s19, 0
      %p114 = por %p112, %p113
      %s115 = ssub.s32 %s13, %s20
      %p116 = scmp.eq.s32.totalorder %s115, 0
      %s118 = sadd.s32 %s117, 1
      %s119 = scalar_select %p116, %s117, %s118
      %p122 = pneg %p116
      %p123 = scmp.eq.s32.totalorder %s13, 1
      %p124 = por %p122, %p123
      %p125 = scmp.ne.s32.totalorder %s117, %s120
      %p126 = scmp.eq.s32.totalorder %s13, 0
      %p127 = por %p125, %p126
      %p128 = scmp.ne.s32.totalorder %s117, %s120
      %p129 = scmp.eq.s32.totalorder %s18, 1
      %p130 = por %p128, %p129
      %p131 = scmp.ne.s32.totalorder %s120, %s121
      %p132 = scmp.eq.s32.totalorder %s18, 0
      %p133 = por %p131, %p132
      %p134 = scmp.ne.s32.totalorder %s120, %s121
      %p135 = scmp.eq.s32.totalorder %s19, 1
      %p136 = por %p134, %p135
      %p138 = scmp.ne.s32.totalorder %s121, %s137
      %p139 = scmp.eq.s32.totalorder %s19, 0
      %p140 = por %p138, %p139
      %p141 = scmp.le.s32.totalorder 1, %s13
      %p142 = scmp.lt.s32.totalorder %s13, 3
      %p143 = pnand %p141, %p142
      %p144 = pneg %p143
      // Predicated region
      $region9: #{tpu_custom_call.1} parent=5 // pred_check
        _
      $region10: #{tpu_custom_call.1} parent=5 // pred_check_branch
        %146 = sbr.rel (%p143) target = $region12
      $region11: #{tpu_custom_call.1} parent=5 // pred_region
        %s147 = ssub.s32 %s13, 1
        // Predicated region
        $region13: #{tpu_custom_call.1} parent=11 // pred_check
          %p148 = pneg %p86
        $region14: #{tpu_custom_call.1} parent=11 // pred_check_branch
          %150 = sbr.rel (%p148) target = $region16
        $region15: #{tpu_custom_call.1} parent=11 // pred_region
          _
        $region16: #{tpu_custom_call.1} parent=11 // pred_fallthru
          _
        // Predicated region
        $region17: #{tpu_custom_call.1} parent=11 // pred_check
          %p151 = pneg %p107
        $region18: #{tpu_custom_call.1} parent=11 // pred_check_branch
          %153 = sbr.rel (%p151) target = $region20
        $region19: #{tpu_custom_call.1} parent=11 // pred_region
          _
        $region20: #{tpu_custom_call.1} parent=11 // pred_fallthru
          _
      $region12: #{tpu_custom_call.1} parent=5 // pred_fallthru
        _
      %p154 = scmp.lt.s32.totalorder %s13, 2
      // Predicated region
      $region21: #{tpu_custom_call.1} parent=5 // pred_check
        %p155 = pneg %p154
      $region22: #{tpu_custom_call.1} parent=5 // pred_check_branch
        %157 = sbr.rel (%p155) target = $region24
      $region23: #{tpu_custom_call.1} parent=5 // pred_region
        // Predicated region
        $region25: #{tpu_custom_call.1} parent=23 // pred_check
          %p158 = pneg %p33
        $region26: #{tpu_custom_call.1} parent=23 // pred_check_branch
          %160 = sbr.rel (%p158) target = $region28
        $region27: #{tpu_custom_call.1} parent=23 // pred_region
          %s161 = smul.u32 3, %s13
          %p162 = scmp.lt.s32.totalorder %s161, 5
          %s163 = scalar_select %p162, %s161, 5
          %s164 = scalar_lea.vmem %s0, %s163
          %s165 = smul.u32 3, %s13
        $region28: #{tpu_custom_call.1} parent=23 // pred_fallthru
          _
        // Predicated region
        $region29: #{tpu_custom_call.1} parent=23 // pred_check
          %p166 = pneg %p59
        $region30: #{tpu_custom_call.1} parent=23 // pred_check_branch
          %168 = sbr.rel (%p166) target = $region32
        $region31: #{tpu_custom_call.1} parent=23 // pred_region
          %s169 = smul.u32 3, %s13
          %p170 = scmp.lt.s32.totalorder %s169, 5
          %s171 = scalar_select %p170, %s169, 5
          %s172 = smul.addr %s171, 4
          %s173 = scalar_lea.vmem %s1, %s172
          %s174 = smul.u32 3, %s13
        $region32: #{tpu_custom_call.1} parent=23 // pred_fallthru
          _
      $region24: #{tpu_custom_call.1} parent=5 // pred_fallthru
        _
      %p175 = scmp.le.s32.totalorder 1, %s13
      %p176 = scmp.lt.s32.totalorder %s13, 3
      %p177 = pnand %p175, %p176
      %p178 = pneg %p177
      // Predicated region
      $region33: #{tpu_custom_call.1} parent=5 // pred_check
        _
      $region34: #{tpu_custom_call.1} parent=5 // pred_check_branch
        %180 = sbr.rel (%p177) target = $region36
      $region35: #{tpu_custom_call.1} parent=5 // pred_region
        %s181 = ssub.s32 %s13, 1
        %s182 = smul.u32 3, %s18
        %p183 = scmp.lt.s32.totalorder %s182, 5
        %s184 = scalar_select %p183, %s182, 5
        %s185 = scalar_lea.vmem %s0, %s184
        %p186 = pneg %p39
        %p187 = pneg %p36
        %s188 = smul.u32 3, %s18
        %p189 = scmp.lt.s32.totalorder %s188, 5
        %s190 = scalar_select %p189, %s188, 5
        %s191 = smul.addr %s190, 4
        %s192 = scalar_lea.vmem %s1, %s191
        %p193 = pneg %p65
        %p194 = pneg %p62
        %p195 = pneg %p86
        %p196 = pneg %p83
        %p197 = pneg %p107
        %p198 = pneg %p104
        %p199 = pneg %p133
        %p200 = pneg %p130
        %s201 = sand.u32 %s120, 1
        %s202 = scalar_lea.sflag [#allocation5], %s201
        %s203 = sand.u32 %s120, 1
        %s204 = smul.addr %s203, 12
        %s205 = scalar_lea.vmem [#allocation4], %s204
        %s206 = smul.u32 3, %s18
        %p207 = scmp.lt.s32.totalorder %s206, 5
        %s208 = scalar_select %p207, %s206, 5
        %s209 = scalar_lea.vmem %s0, %s208
        %s210 = smul.u32 3, %s18
        %s211 = smul.u32 3, %s18
        %p212 = scmp.lt.s32.totalorder %s211, 5
        %s213 = scalar_select %p212, %s211, 5
        %s214 = smul.addr %s213, 4
        %s215 = scalar_lea.vmem %s1, %s214
        %s216 = smul.u32 3, %s18
        %s217 = smul.u32 3, %s18
        %v218 = vld [vmem:[%s209] sm:$0x7]
        %vm219 = vcmp.gt.f32.partialorder %v218, 0.5
        %v220 = vld [vmem:[%s215] sm:$0xff]
        %v221 = vld [vmem:[%s215 + $0x8] sm:$0xf]
        %222 = vst [vmem:[#allocation2 + $0x4] sm:$0xff] %v220
        %223 = vst [vmem:[#allocation2 + $0xc] sm:$0xf] %v221
        %v224 = vld [vmem:[#allocation2] sm:$0xff]
        %v225 = vld [vmem:[#allocation2 + $0x8] sm:$0xff]
        %v226 = vld [vmem:[%s2] sm:$0xff]
        %v227 = vld [vmem:[%s2 + $0x8] sm:$0xff]
        %v228 = vld [vmem:[%s2 + $0x10] sm:$0xff]
        %v229 = vld [vmem:[%s2 + $0x18] sm:$0xff]
        %s230 = scalar_lea.vmem %s2, 32
        %v231 = vld [vmem:[%s230] sm:$0xff]
        %v232 = vld [vmem:[%s230 + $0x8] sm:$0xff]
        %v233 = vld [vmem:[%s230 + $0x10] sm:$0xff]
        %v234 = vld [vmem:[%s230 + $0x18] sm:$0xff]
        %v237 = vcombine.high %v224, %v224
        %v238 = vcombine.high %v225, %v225
        %239 = vrot.lane.b32.xlu0 %v224, 18
        %v240 = vpop.permute.xlu0 %239
        %241 = vrot.lane.b32.xlu0 %v237, 18
        %v242 = vpop.permute.xlu0 %241
        %243 = vrot.lane.b32.xlu0 %v225, 18
        %v244 = vpop.permute.xlu0 %243
        %245 = vrot.lane.b32.xlu0 %v238, 18
        %v246 = vpop.permute.xlu0 %245
        %vm247 = vcmask 146432
        %v248 = vsel %vm247, %v240, %v242
        %v249 = vsel %vm247, %v242, %v244
        %v250 = vsel %vm247, %v244, %v246
        %vm251 = vcmask 31744
        %v253 = vsel %vm251, %v231, 0
        %v256 = vsel %vm251, %v232, 0
        %v259 = vsel %vm251, %v233, 0
        %v262 = vsel %vm251, %v234, 0
        %vm264 = vcmask 1043456
        %v265 = vsel %vm264, %v248, 0
        %v267 = vsel %vm264, %v249, 0
        %v269 = vsel %vm264, %v250, 0
        %271 = vmatprep.subr.mxu0 %v267
        %272 = vmatpush1.msra.mxu0 %v265
        %273 = vmatprep.subr.mxu0 0.0
        %274 = vmatpush1.msra.mxu0 0.0
        %275 = vmatprep.subr.mxu0 0.0
        %276 = vmatpush1.msra.mxu0 0.0
        %277 = vmatprep.subr.mxu0 0.0
        %278 = vmatpush1.msra.mxu0 0.0
        %279 = vmatprep.subr.mxu0 0.0
        %280 = vmatpush1.msra.mxu0 0.0
        %281 = vmatprep.subr.mxu0 0.0
        %282 = vmatpush1.msra.mxu0 0.0
        %283 = vmatprep.subr.mxu0 0.0
        %284 = vmatpush1.msra.mxu0 0.0
        %285 = vmatprep.subr.mxu0 0.0
        %286 = vmatpush1.msra.mxu0 0.0
        %287 = vmatprep.subr.mxu0 0.0
        %288 = vmatpush1.msra.mxu0 0.0
        %289 = vmatprep.subr.mxu0 0.0
        %290 = vmatpush1.msra.mxu0 0.0
        %291 = vmatprep.subr.mxu0 0.0
        %292 = vmatpush1.msra.mxu0 0.0
        %293 = vmatprep.subr.mxu0 0.0
        %294 = vmatpush1.msra.mxu0 0.0
        %295 = vmatprep.subr.mxu0 0.0
        %296 = vmatpush1.msra.mxu0 0.0
        %297 = vmatprep.subr.mxu0 0.0
        %298 = vmatpush1.msra.mxu0 0.0
        %299 = vmatprep.subr.mxu0 0.0
        %300 = vmatpush1.msra.mxu0 0.0
        %301 = vmatprep.subr.mxu0 0.0
        %302 = vmatpush1.msra.mxu0 0.0
        %303 = vmatprep.subr.mxu0 0.0
        %304 = vmatpush1.msra.mxu0 0.0
        %305 = vmatprep.subr.mxu0 0.0
        %306 = vmatpush1.msra.mxu0 0.0
        %307 = vmatprep.subr.mxu0 0.0
        %308 = vmatpush1.msra.mxu0 0.0
        %309 = vmatprep.subr.mxu0 0.0
        %310 = vmatpush1.msra.mxu0 0.0
        %311 = vmatprep.subr.mxu0 0.0
        %312 = vmatpush1.msra.mxu0 0.0
        %313 = vmatprep.subr.mxu0 0.0
        %314 = vmatpush1.msra.mxu0 0.0
        %315 = vmatprep.subr.mxu0 0.0
        %316 = vmatpush1.msra.mxu0 0.0
        %317 = vmatprep.subr.mxu0 0.0
        %318 = vmatpush1.msra.mxu0 0.0
        %319 = vmatprep.subr.mxu0 0.0
        %320 = vmatpush1.msra.mxu0 0.0
        %321 = vmatprep.subr.mxu0 0.0
        %322 = vmatpush1.msra.mxu0 0.0
        %323 = vmatprep.subr.mxu0 0.0
        %324 = vmatpush1.msra.mxu0 0.0
        %325 = vmatprep.subr.mxu0 0.0
        %326 = vmatpush1.msra.mxu0 0.0
        %327 = vmatprep.subr.mxu0 0.0
        %328 = vmatpush1.msra.mxu0 0.0
        %329 = vmatprep.subr.mxu0 0.0
        %330 = vmatpush1.msra.mxu0 0.0
        %331 = vmatprep.subr.mxu0 0.0
        %332 = vmatpush1.msra.mxu0 0.0
        %333 = vmatprep.subr.mxu0 0.0
        %334 = vmatpush1.msra.mxu0 0.0
        %335 = vmatprep.mubr.f32.mxu0 0.0
        %336 = vmatmul.mubr.f32.gmra.mrb[0].mxu0 %v253
        %v337 = vpop.f32.mrb[0].mxu0
        %v338 = vadd.f32 0.0, %v337
        %v339 = vpop.f32.mrb[0].mxu0
        %v340 = vadd.f32 0.0, %v339
        %341 = vmatprep.mubr.f32.mxu0 0.0
        %342 = vmatmul.mubr.f32.gmra.mrb[0].mxu0 %v256
        %v343 = vpop.f32.mrb[0].mxu0
        %v344 = vadd.f32 0.0, %v343
        %v345 = vpop.f32.mrb[0].mxu0
        %v346 = vadd.f32 0.0, %v345
        %347 = vmatprep.mubr.f32.mxu0 0.0
        %348 = vmatmul.mubr.f32.gmra.mrb[0].mxu0 %v259
        %v349 = vpop.f32.mrb[0].mxu0
        %v350 = vadd.f32 0.0, %v349
        %v351 = vpop.f32.mrb[0].mxu0
        %v352 = vadd.f32 0.0, %v351
        %353 = vmatprep.mubr.f32.mxu0 0.0
        %354 = vmatmul.mubr.f32.gmra.mrb[0].mxu0 %v262
        %v355 = vpop.f32.mrb[0].mxu0
        %v356 = vadd.f32 0.0, %v355
        %v357 = vpop.f32.mrb[0].mxu0
        %v358 = vadd.f32 0.0, %v357
        %359 = vdwg.mxu0
        %360 = vmatprep.subr.mxu0 0.0
        %361 = vmatpush1.msra.mxu0 %v269
        %362 = vmatprep.subr.mxu0 0.0
        %363 = vmatpush1.msra.mxu0 0.0
        %364 = vmatprep.subr.mxu0 0.0
        %365 = vmatpush1.msra.mxu0 0.0
        %366 = vmatprep.subr.mxu0 0.0
        %367 = vmatpush1.msra.mxu0 0.0
        %368 = vmatprep.subr.mxu0 0.0
        %369 = vmatpush1.msra.mxu0 0.0
        %370 = vmatprep.subr.mxu0 0.0
        %371 = vmatpush1.msra.mxu0 0.0
        %372 = vmatprep.subr.mxu0 0.0
        %373 = vmatpush1.msra.mxu0 0.0
        %374 = vmatprep.subr.mxu0 0.0
        %375 = vmatpush1.msra.mxu0 0.0
        %376 = vmatprep.subr.mxu0 0.0
        %377 = vmatpush1.msra.mxu0 0.0
        %378 = vmatprep.subr.mxu0 0.0
        %379 = vmatpush1.msra.mxu0 0.0
        %380 = vmatprep.subr.mxu0 0.0
        %381 = vmatpush1.msra.mxu0 0.0
        %382 = vmatprep.subr.mxu0 0.0
        %383 = vmatpush1.msra.mxu0 0.0
        %384 = vmatprep.subr.mxu0 0.0
        %385 = vmatpush1.msra.mxu0 0.0
        %386 = vmatprep.subr.mxu0 0.0
        %387 = vmatpush1.msra.mxu0 0.0
        %388 = vmatprep.subr.mxu0 0.0
        %389 = vmatpush1.msra.mxu0 0.0
        %390 = vmatprep.subr.mxu0 0.0
        %391 = vmatpush1.msra.mxu0 0.0
        %392 = vmatprep.subr.mxu0 0.0
        %393 = vmatpush1.msra.mxu0 0.0
        %394 = vmatprep.subr.mxu0 0.0
        %395 = vmatpush1.msra.mxu0 0.0
        %396 = vmatprep.subr.mxu0 0.0
        %397 = vmatpush1.msra.mxu0 0.0
        %398 = vmatprep.subr.mxu0 0.0
        %399 = vmatpush1.msra.mxu0 0.0
        %400 = vmatprep.subr.mxu0 0.0
        %401 = vmatpush1.msra.mxu0 0.0
        %402 = vmatprep.subr.mxu0 0.0
        %403 = vmatpush1.msra.mxu0 0.0
        %404 = vmatprep.subr.mxu0 0.0
        %405 = vmatpush1.msra.mxu0 0.0
        %406 = vmatprep.subr.mxu0 0.0
        %407 = vmatpush1.msra.mxu0 0.0
        %408 = vmatprep.subr.mxu0 0.0
        %409 = vmatpush1.msra.mxu0 0.0
        %410 = vmatprep.subr.mxu0 0.0
        %411 = vmatpush1.msra.mxu0 0.0
        %412 = vmatprep.subr.mxu0 0.0
        %413 = vmatpush1.msra.mxu0 0.0
        %414 = vmatprep.subr.mxu0 0.0
        %415 = vmatpush1.msra.mxu0 0.0
        %416 = vmatprep.subr.mxu0 0.0
        %417 = vmatpush1.msra.mxu0 0.0
        %418 = vmatprep.subr.mxu0 0.0
        %419 = vmatpush1.msra.mxu0 0.0
        %420 = vmatprep.subr.mxu0 0.0
        %421 = vmatpush1.msra.mxu0 0.0
        %422 = vmatprep.subr.mxu0 0.0
        %423 = vmatpush1.msra.mxu0 0.0
        %424 = vmatprep.mubr.f32.mxu0 0.0
        %425 = vmatmul.mubr.f32.gmra.mrb[0].mxu0 %v253
        %v426 = vpop.f32.mrb[0].mxu0
        %v427 = vadd.f32 0.0, %v426
        %v428 = vpop.f32.mrb[0].mxu0
        %429 = vmatprep.mubr.f32.mxu0 0.0
        %430 = vmatmul.mubr.f32.gmra.mrb[0].mxu0 %v256
        %v431 = vpop.f32.mrb[0].mxu0
        %v432 = vadd.f32 0.0, %v431
        %v433 = vpop.f32.mrb[0].mxu0
        %434 = vmatprep.mubr.f32.mxu0 0.0
        %435 = vmatmul.mubr.f32.gmra.mrb[0].mxu0 %v259
        %v436 = vpop.f32.mrb[0].mxu0
        %v437 = vadd.f32 0.0, %v436
        %v438 = vpop.f32.mrb[0].mxu0
        %439 = vmatprep.mubr.f32.mxu0 0.0
        %440 = vmatmul.mubr.f32.gmra.mrb[0].mxu0 %v262
        %v441 = vpop.f32.mrb[0].mxu0
        %v442 = vadd.f32 0.0, %v441
        %v443 = vpop.f32.mrb[0].mxu0
        %444 = vdwg.mxu0
        %445 = vrot.lane.b32.xlu0 %v224, 19
        %v446 = vpop.permute.xlu0 %445
        %447 = vrot.lane.b32.xlu0 %v237, 19
        %v448 = vpop.permute.xlu0 %447
        %449 = vrot.lane.b32.xlu0 %v225, 19
        %v450 = vpop.permute.xlu0 %449
        %451 = vrot.lane.b32.xlu0 %v238, 19
        %v452 = vpop.permute.xlu0 %451
        %vm453 = vcmask 154624
        %v454 = vsel %vm453, %v446, %v448
        %v455 = vsel %vm453, %v448, %v450
        %v456 = vsel %vm453, %v450, %v452
        %v458 = vsel %vm251, %v226, 0
        %v461 = vsel %vm251, %v227, 0
        %v464 = vsel %vm251, %v228, 0
        %v467 = vsel %vm251, %v229, 0
        %v469 = vsel %vm264, %v454, 0
        %v471 = vsel %vm264, %v455, 0
        %v473 = vsel %vm264, %v456, 0
        %475 = vmatprep.subr.mxu0 %v471
        %476 = vmatpush1.msra.mxu0 %v469
        %477 = vmatprep.subr.mxu0 0.0
        %478 = vmatpush1.msra.mxu0 0.0
        %479 = vmatprep.subr.mxu0 0.0
        %480 = vmatpush1.msra.mxu0 0.0
        %481 = vmatprep.subr.mxu0 0.0
        %482 = vmatpush1.msra.mxu0 0.0
        %483 = vmatprep.subr.mxu0 0.0
        %484 = vmatpush1.msra.mxu0 0.0
        %485 = vmatprep.subr.mxu0 0.0
        %486 = vmatpush1.msra.mxu0 0.0
        %487 = vmatprep.subr.mxu0 0.0
        %488 = vmatpush1.msra.mxu0 0.0
        %489 = vmatprep.subr.mxu0 0.0
        %490 = vmatpush1.msra.mxu0 0.0
        %491 = vmatprep.subr.mxu0 0.0
        %492 = vmatpush1.msra.mxu0 0.0
        %493 = vmatprep.subr.mxu0 0.0
        %494 = vmatpush1.msra.mxu0 0.0
        %495 = vmatprep.subr.mxu0 0.0
        %496 = vmatpush1.msra.mxu0 0.0
        %497 = vmatprep.subr.mxu0 0.0
        %498 = vmatpush1.msra.mxu0 0.0
        %499 = vmatprep.subr.mxu0 0.0
        %500 = vmatpush1.msra.mxu0 0.0
        %501 = vmatprep.subr.mxu0 0.0
        %502 = vmatpush1.msra.mxu0 0.0
        %503 = vmatprep.subr.mxu0 0.0
        %504 = vmatpush1.msra.mxu0 0.0
        %505 = vmatprep.subr.mxu0 0.0
        %506 = vmatpush1.msra.mxu0 0.0
        %507 = vmatprep.subr.mxu0 0.0
        %508 = vmatpush1.msra.mxu0 0.0
        %509 = vmatprep.subr.mxu0 0.0
        %510 = vmatpush1.msra.mxu0 0.0
        %511 = vmatprep.subr.mxu0 0.0
        %512 = vmatpush1.msra.mxu0 0.0
        %513 = vmatprep.subr.mxu0 0.0
        %514 = vmatpush1.msra.mxu0 0.0
        %515 = vmatprep.subr.mxu0 0.0
        %516 = vmatpush1.msra.mxu0 0.0
        %517 = vmatprep.subr.mxu0 0.0
        %518 = vmatpush1.msra.mxu0 0.0
        %519 = vmatprep.subr.mxu0 0.0
        %520 = vmatpush1.msra.mxu0 0.0
        %521 = vmatprep.subr.mxu0 0.0
        %522 = vmatpush1.msra.mxu0 0.0
        %523 = vmatprep.subr.mxu0 0.0
        %524 = vmatpush1.msra.mxu0 0.0
        %525 = vmatprep.subr.mxu0 0.0
        %526 = vmatpush1.msra.mxu0 0.0
        %527 = vmatprep.subr.mxu0 0.0
        %528 = vmatpush1.msra.mxu0 0.0
        %529 = vmatprep.subr.mxu0 0.0
        %530 = vmatpush1.msra.mxu0 0.0
        %531 = vmatprep.subr.mxu0 0.0
        %532 = vmatpush1.msra.mxu0 0.0
        %533 = vmatprep.subr.mxu0 0.0
        %534 = vmatpush1.msra.mxu0 0.0
        %535 = vmatprep.subr.mxu0 0.0
        %536 = vmatpush1.msra.mxu0 0.0
        %537 = vmatprep.subr.mxu0 0.0
        %538 = vmatpush1.msra.mxu0 0.0
        %539 = vmatprep.mubr.f32.mxu0 0.0
        %540 = vmatmul.mubr.f32.gmra.mrb[0].mxu0 %v458
        %v541 = vpop.f32.mrb[0].mxu0
        %v542 = vadd.f32 %v338, %v541
        %v543 = vpop.f32.mrb[0].mxu0
        %v544 = vadd.f32 %v340, %v543
        %545 = vmatprep.mubr.f32.mxu0 0.0
        %546 = vmatmul.mubr.f32.gmra.mrb[0].mxu0 %v461
        %v547 = vpop.f32.mrb[0].mxu0
        %v548 = vadd.f32 %v344, %v547
        %v549 = vpop.f32.mrb[0].mxu0
        %v550 = vadd.f32 %v346, %v549
        %551 = vmatprep.mubr.f32.mxu0 0.0
        %552 = vmatmul.mubr.f32.gmra.mrb[0].mxu0 %v464
        %v553 = vpop.f32.mrb[0].mxu0
        %v554 = vadd.f32 %v350, %v553
        %v555 = vpop.f32.mrb[0].mxu0
        %v556 = vadd.f32 %v352, %v555
        %557 = vmatprep.mubr.f32.mxu0 0.0
        %558 = vmatmul.mubr.f32.gmra.mrb[0].mxu0 %v467
        %v559 = vpop.f32.mrb[0].mxu0
        %v560 = vadd.f32 %v356, %v559
        %v561 = vpop.f32.mrb[0].mxu0
        %v562 = vadd.f32 %v358, %v561
        %563 = vdwg.mxu0
        %564 = vmatprep.subr.mxu0 0.0
        %565 = vmatpush1.msra.mxu0 %v473
        %566 = vmatprep.subr.mxu0 0.0
        %567 = vmatpush1.msra.mxu0 0.0
        %568 = vmatprep.subr.mxu0 0.0
        %569 = vmatpush1.msra.mxu0 0.0
        %570 = vmatprep.subr.mxu0 0.0
        %571 = vmatpush1.msra.mxu0 0.0
        %572 = vmatprep.subr.mxu0 0.0
        %573 = vmatpush1.msra.mxu0 0.0
        %574 = vmatprep.subr.mxu0 0.0
        %575 = vmatpush1.msra.mxu0 0.0
        %576 = vmatprep.subr.mxu0 0.0
        %577 = vmatpush1.msra.mxu0 0.0
        %578 = vmatprep.subr.mxu0 0.0
        %579 = vmatpush1.msra.mxu0 0.0
        %580 = vmatprep.subr.mxu0 0.0
        %581 = vmatpush1.msra.mxu0 0.0
        %582 = vmatprep.subr.mxu0 0.0
        %583 = vmatpush1.msra.mxu0 0.0
        %584 = vmatprep.subr.mxu0 0.0
        %585 = vmatpush1.msra.mxu0 0.0
        %586 = vmatprep.subr.mxu0 0.0
        %587 = vmatpush1.msra.mxu0 0.0
        %588 = vmatprep.subr.mxu0 0.0
        %589 = vmatpush1.msra.mxu0 0.0
        %590 = vmatprep.subr.mxu0 0.0
        %591 = vmatpush1.msra.mxu0 0.0
        %592 = vmatprep.subr.mxu0 0.0
        %593 = vmatpush1.msra.mxu0 0.0
        %594 = vmatprep.subr.mxu0 0.0
        %595 = vmatpush1.msra.mxu0 0.0
        %596 = vmatprep.subr.mxu0 0.0
        %597 = vmatpush1.msra.mxu0 0.0
        %598 = vmatprep.subr.mxu0 0.0
        %599 = vmatpush1.msra.mxu0 0.0
        %600 = vmatprep.subr.mxu0 0.0
        %601 = vmatpush1.msra.mxu0 0.0
        %602 = vmatprep.subr.mxu0 0.0
        %603 = vmatpush1.msra.mxu0 0.0
        %604 = vmatprep.subr.mxu0 0.0
        %605 = vmatpush1.msra.mxu0 0.0
        %606 = vmatprep.subr.mxu0 0.0
        %607 = vmatpush1.msra.mxu0 0.0
        %608 = vmatprep.subr.mxu0 0.0
        %609 = vmatpush1.msra.mxu0 0.0
        %610 = vmatprep.subr.mxu0 0.0
        %611 = vmatpush1.msra.mxu0 0.0
        %612 = vmatprep.subr.mxu0 0.0
        %613 = vmatpush1.msra.mxu0 0.0
        %614 = vmatprep.subr.mxu0 0.0
        %615 = vmatpush1.msra.mxu0 0.0
        %616 = vmatprep.subr.mxu0 0.0
        %617 = vmatpush1.msra.mxu0 0.0
        %618 = vmatprep.subr.mxu0 0.0
        %619 = vmatpush1.msra.mxu0 0.0
        %620 = vmatprep.subr.mxu0 0.0
        %621 = vmatpush1.msra.mxu0 0.0
        %622 = vmatprep.subr.mxu0 0.0
        %623 = vmatpush1.msra.mxu0 0.0
        %624 = vmatprep.subr.mxu0 0.0
        %625 = vmatpush1.msra.mxu0 0.0
        %626 = vmatprep.subr.mxu0 0.0
        %627 = vmatpush1.msra.mxu0 0.0
        %628 = vmatprep.mubr.f32.mxu0 0.0
        %629 = vmatmul.mubr.f32.gmra.mrb[0].mxu0 %v458
        %v630 = vpop.f32.mrb[0].mxu0
        %v631 = vadd.f32 %v427, %v630
        %v632 = vpop.f32.mrb[0].mxu0
        %633 = vmatprep.mubr.f32.mxu0 0.0
        %634 = vmatmul.mubr.f32.gmra.mrb[0].mxu0 %v461
        %v635 = vpop.f32.mrb[0].mxu0
        %v636 = vadd.f32 %v432, %v635
        %v637 = vpop.f32.mrb[0].mxu0
        %638 = vmatprep.mubr.f32.mxu0 0.0
        %639 = vmatmul.mubr.f32.gmra.mrb[0].mxu0 %v464
        %v640 = vpop.f32.mrb[0].mxu0
        %v641 = vadd.f32 %v437, %v640
        %v642 = vpop.f32.mrb[0].mxu0
        %643 = vmatprep.mubr.f32.mxu0 0.0
        %644 = vmatmul.mubr.f32.gmra.mrb[0].mxu0 %v467
        %v645 = vpop.f32.mrb[0].mxu0
        %v646 = vadd.f32 %v442, %v645
        %v647 = vpop.f32.mrb[0].mxu0
        %648 = vdwg.mxu0
        %v649 = vld [vmem:[#allocation2] sm:$0xff]
        %v650 = vld [vmem:[#allocation2 + $0x8] sm:$0xff]
        %s651 = scalar_lea.vmem %s2, 64
        %v652 = vld [vmem:[%s651] sm:$0xff]
        %v653 = vld [vmem:[%s651 + $0x8] sm:$0xff]
        %v654 = vld [vmem:[%s651 + $0x10] sm:$0xff]
        %v655 = vld [vmem:[%s651 + $0x18] sm:$0xff]
        %v658 = vcombine.high %v649, %v649
        %v659 = vcombine.high %v650, %v650
        %660 = vrot.lane.b32.xlu0 %v649, 17
        %v661 = vpop.permute.xlu0 %660
        %662 = vrot.lane.b32.xlu0 %v658, 17
        %v663 = vpop.permute.xlu0 %662
        %664 = vrot.lane.b32.xlu0 %v650, 17
        %v665 = vpop.permute.xlu0 %664
        %666 = vrot.lane.b32.xlu0 %v659, 17
        %v667 = vpop.permute.xlu0 %666
        %vm668 = vcmask 138240
        %v669 = vsel %vm668, %v661, %v663
        %v670 = vsel %vm668, %v663, %v665
        %v671 = vsel %vm668, %v665, %v667
        %v673 = vsel %vm251, %v652, 0
        %v676 = vsel %vm251, %v653, 0
        %v679 = vsel %vm251, %v654, 0
        %v682 = vsel %vm251, %v655, 0
        %v684 = vsel %vm264, %v669, 0
        %v686 = vsel %vm264, %v670, 0
        %v688 = vsel %vm264, %v671, 0
        %690 = vmatprep.subr.mxu0 %v686
        %691 = vmatpush1.msra.mxu0 %v684
        %692 = vmatprep.subr.mxu0 0.0
        %693 = vmatpush1.msra.mxu0 0.0
        %694 = vmatprep.subr.mxu0 0.0
        %695 = vmatpush1.msra.mxu0 0.0
        %696 = vmatprep.subr.mxu0 0.0
        %697 = vmatpush1.msra.mxu0 0.0
        %698 = vmatprep.subr.mxu0 0.0
        %699 = vmatpush1.msra.mxu0 0.0
        %700 = vmatprep.subr.mxu0 0.0
        %701 = vmatpush1.msra.mxu0 0.0
        %702 = vmatprep.subr.mxu0 0.0
        %703 = vmatpush1.msra.mxu0 0.0
        %704 = vmatprep.subr.mxu0 0.0
        %705 = vmatpush1.msra.mxu0 0.0
        %706 = vmatprep.subr.mxu0 0.0
        %707 = vmatpush1.msra.mxu0 0.0
        %708 = vmatprep.subr.mxu0 0.0
        %709 = vmatpush1.msra.mxu0 0.0
        %710 = vmatprep.subr.mxu0 0.0
        %711 = vmatpush1.msra.mxu0 0.0
        %712 = vmatprep.subr.mxu0 0.0
        %713 = vmatpush1.msra.mxu0 0.0
        %714 = vmatprep.subr.mxu0 0.0
        %715 = vmatpush1.msra.mxu0 0.0
        %716 = vmatprep.subr.mxu0 0.0
        %717 = vmatpush1.msra.mxu0 0.0
        %718 = vmatprep.subr.mxu0 0.0
        %719 = vmatpush1.msra.mxu0 0.0
        %720 = vmatprep.subr.mxu0 0.0
        %721 = vmatpush1.msra.mxu0 0.0
        %722 = vmatprep.subr.mxu0 0.0
        %723 = vmatpush1.msra.mxu0 0.0
        %724 = vmatprep.subr.mxu0 0.0
        %725 = vmatpush1.msra.mxu0 0.0
        %726 = vmatprep.subr.mxu0 0.0
        %727 = vmatpush1.msra.mxu0 0.0
        %728 = vmatprep.subr.mxu0 0.0
        %729 = vmatpush1.msra.mxu0 0.0
        %730 = vmatprep.subr.mxu0 0.0
        %731 = vmatpush1.msra.mxu0 0.0
        %732 = vmatprep.subr.mxu0 0.0
        %733 = vmatpush1.msra.mxu0 0.0
        %734 = vmatprep.subr.mxu0 0.0
        %735 = vmatpush1.msra.mxu0 0.0
        %736 = vmatprep.subr.mxu0 0.0
        %737 = vmatpush1.msra.mxu0 0.0
        %738 = vmatprep.subr.mxu0 0.0
        %739 = vmatpush1.msra.mxu0 0.0
        %740 = vmatprep.subr.mxu0 0.0
        %741 = vmatpush1.msra.mxu0 0.0
        %742 = vmatprep.subr.mxu0 0.0
        %743 = vmatpush1.msra.mxu0 0.0
        %744 = vmatprep.subr.mxu0 0.0
        %745 = vmatpush1.msra.mxu0 0.0
        %746 = vmatprep.subr.mxu0 0.0
        %747 = vmatpush1.msra.mxu0 0.0
        %748 = vmatprep.subr.mxu0 0.0
        %749 = vmatpush1.msra.mxu0 0.0
        %750 = vmatprep.subr.mxu0 0.0
        %751 = vmatpush1.msra.mxu0 0.0
        %752 = vmatprep.subr.mxu0 0.0
        %753 = vmatpush1.msra.mxu0 0.0
        %754 = vmatprep.mubr.f32.mxu0 0.0
        %755 = vmatmul.mubr.f32.gmra.mrb[0].mxu0 %v673
        %v756 = vpop.f32.mrb[0].mxu0
        %v757 = vadd.f32 0.0, %v756
        %v758 = vpop.f32.mrb[0].mxu0
        %v759 = vadd.f32 0.0, %v758
        %760 = vmatprep.mubr.f32.mxu0 0.0
        %761 = vmatmul.mubr.f32.gmra.mrb[0].mxu0 %v676
        %v762 = vpop.f32.mrb[0].mxu0
        %v763 = vadd.f32 0.0, %v762
        %v764 = vpop.f32.mrb[0].mxu0
        %v765 = vadd.f32 0.0, %v764
        %766 = vmatprep.mubr.f32.mxu0 0.0
        %767 = vmatmul.mubr.f32.gmra.mrb[0].mxu0 %v679
        %v768 = vpop.f32.mrb[0].mxu0
        %v769 = vadd.f32 0.0, %v768
        %v770 = vpop.f32.mrb[0].mxu0
        %v771 = vadd.f32 0.0, %v770
        %772 = vmatprep.mubr.f32.mxu0 0.0
        %773 = vmatmul.mubr.f32.gmra.mrb[0].mxu0 %v682
        %v774 = vpop.f32.mrb[0].mxu0
        %v775 = vadd.f32 0.0, %v774
        %v776 = vpop.f32.mrb[0].mxu0
        %v777 = vadd.f32 0.0, %v776
        %778 = vdwg.mxu0
        %779 = vmatprep.subr.mxu0 0.0
        %780 = vmatpush1.msra.mxu0 %v688
        %781 = vmatprep.subr.mxu0 0.0
        %782 = vmatpush1.msra.mxu0 0.0
        %783 = vmatprep.subr.mxu0 0.0
        %784 = vmatpush1.msra.mxu0 0.0
        %785 = vmatprep.subr.mxu0 0.0
        %786 = vmatpush1.msra.mxu0 0.0
        %787 = vmatprep.subr.mxu0 0.0
        %788 = vmatpush1.msra.mxu0 0.0
        %789 = vmatprep.subr.mxu0 0.0
        %790 = vmatpush1.msra.mxu0 0.0
        %791 = vmatprep.subr.mxu0 0.0
        %792 = vmatpush1.msra.mxu0 0.0
        %793 = vmatprep.subr.mxu0 0.0
        %794 = vmatpush1.msra.mxu0 0.0
        %795 = vmatprep.subr.mxu0 0.0
        %796 = vmatpush1.msra.mxu0 0.0
        %797 = vmatprep.subr.mxu0 0.0
        %798 = vmatpush1.msra.mxu0 0.0
        %799 = vmatprep.subr.mxu0 0.0
        %800 = vmatpush1.msra.mxu0 0.0
        %801 = vmatprep.subr.mxu0 0.0
        %802 = vmatpush1.msra.mxu0 0.0
        %803 = vmatprep.subr.mxu0 0.0
        %804 = vmatpush1.msra.mxu0 0.0
        %805 = vmatprep.subr.mxu0 0.0
        %806 = vmatpush1.msra.mxu0 0.0
        %807 = vmatprep.subr.mxu0 0.0
        %808 = vmatpush1.msra.mxu0 0.0
        %809 = vmatprep.subr.mxu0 0.0
        %810 = vmatpush1.msra.mxu0 0.0
        %811 = vmatprep.subr.mxu0 0.0
        %812 = vmatpush1.msra.mxu0 0.0
        %813 = vmatprep.subr.mxu0 0.0
        %814 = vmatpush1.msra.mxu0 0.0
        %815 = vmatprep.subr.mxu0 0.0
        %816 = vmatpush1.msra.mxu0 0.0
        %817 = vmatprep.subr.mxu0 0.0
        %818 = vmatpush1.msra.mxu0 0.0
        %819 = vmatprep.subr.mxu0 0.0
        %820 = vmatpush1.msra.mxu0 0.0
        %821 = vmatprep.subr.mxu0 0.0
        %822 = vmatpush1.msra.mxu0 0.0
        %823 = vmatprep.subr.mxu0 0.0
        %824 = vmatpush1.msra.mxu0 0.0
        %825 = vmatprep.subr.mxu0 0.0
        %826 = vmatpush1.msra.mxu0 0.0
        %827 = vmatprep.subr.mxu0 0.0
        %828 = vmatpush1.msra.mxu0 0.0
        %829 = vmatprep.subr.mxu0 0.0
        %830 = vmatpush1.msra.mxu0 0.0
        %831 = vmatprep.subr.mxu0 0.0
        %832 = vmatpush1.msra.mxu0 0.0
        %833 = vmatprep.subr.mxu0 0.0
        %834 = vmatpush1.msra.mxu0 0.0
        %835 = vmatprep.subr.mxu0 0.0
        %836 = vmatpush1.msra.mxu0 0.0
        %837 = vmatprep.subr.mxu0 0.0
        %838 = vmatpush1.msra.mxu0 0.0
        %839 = vmatprep.subr.mxu0 0.0
        %840 = vmatpush1.msra.mxu0 0.0
        %841 = vmatprep.subr.mxu0 0.0
        %842 = vmatpush1.msra.mxu0 0.0
        %843 = vmatprep.mubr.f32.mxu0 0.0
        %844 = vmatmul.mubr.f32.gmra.mrb[0].mxu0 %v673
        %v845 = vpop.f32.mrb[0].mxu0
        %v846 = vadd.f32 0.0, %v845
        %v847 = vpop.f32.mrb[0].mxu0
        %848 = vmatprep.mubr.f32.mxu0 0.0
        %849 = vmatmul.mubr.f32.gmra.mrb[0].mxu0 %v676
        %v850 = vpop.f32.mrb[0].mxu0
        %v851 = vadd.f32 0.0, %v850
        %v852 = vpop.f32.mrb[0].mxu0
        %853 = vmatprep.mubr.f32.mxu0 0.0
        %854 = vmatmul.mubr.f32.gmra.mrb[0].mxu0 %v679
        %v855 = vpop.f32.mrb[0].mxu0
        %v856 = vadd.f32 0.0, %v855
        %v857 = vpop.f32.mrb[0].mxu0
        %858 = vmatprep.mubr.f32.mxu0 0.0
        %859 = vmatmul.mubr.f32.gmra.mrb[0].mxu0 %v682
        %v860 = vpop.f32.mrb[0].mxu0
        %v861 = vadd.f32 0.0, %v860
        %v862 = vpop.f32.mrb[0].mxu0
        %863 = vdwg.mxu0
        %v864 = vadd.f32 %v542, %v757
        %v865 = vadd.f32 %v544, %v759
        %v866 = vadd.f32 %v631, %v846
        %v867 = vadd.f32 %v548, %v763
        %v868 = vadd.f32 %v550, %v765
        %v869 = vadd.f32 %v636, %v851
        %v870 = vadd.f32 %v554, %v769
        %v871 = vadd.f32 %v556, %v771
        %v872 = vadd.f32 %v641, %v856
        %v873 = vadd.f32 %v560, %v775
        %v874 = vadd.f32 %v562, %v777
        %v875 = vadd.f32 %v646, %v861
        %v876 = vld [vmem:[#allocation2] sm:$0xff]
        %v877 = vld [vmem:[#allocation2 + $0x8] sm:$0xff]
        %s878 = scalar_lea.vmem %s2, 96
        %v879 = vld [vmem:[%s878] sm:$0xff]
        %v880 = vld [vmem:[%s878 + $0x8] sm:$0xff]
        %v881 = vld [vmem:[%s878 + $0x10] sm:$0xff]
        %v882 = vld [vmem:[%s878 + $0x18] sm:$0xff]
        %v885 = vcombine.high %v876, %v876
        %v886 = vcombine.high %v877, %v877
        %887 = vrot.lane.b32.xlu0 %v876, 1
        %v888 = vpop.permute.xlu0 %887
        %889 = vrot.lane.b32.xlu0 %v885, 1
        %v890 = vpop.permute.xlu0 %889
        %891 = vrot.lane.b32.xlu0 %v877, 1
        %v892 = vpop.permute.xlu0 %891
        %893 = vrot.lane.b32.xlu0 %v886, 1
        %v894 = vpop.permute.xlu0 %893
        %vm895 = vcmask 7168
        %v896 = vsel %vm895, %v888, %v890
        %v897 = vsel %vm895, %v890, %v892
        %v898 = vsel %vm895, %v892, %v894
        %v900 = vsel %vm251, %v879, 0
        %v903 = vsel %vm251, %v880, 0
        %v906 = vsel %vm251, %v881, 0
        %v909 = vsel %vm251, %v882, 0
        %v911 = vsel %vm264, %v896, 0
        %v913 = vsel %vm264, %v897, 0
        %v915 = vsel %vm264, %v898, 0
        %917 = vmatprep.subr.mxu0 %v913
        %918 = vmatpush1.msra.mxu0 %v911
        %919 = vmatprep.subr.mxu0 0.0
        %920 = vmatpush1.msra.mxu0 0.0
        %921 = vmatprep.subr.mxu0 0.0
        %922 = vmatpush1.msra.mxu0 0.0
        %923 = vmatprep.subr.mxu0 0.0
        %924 = vmatpush1.msra.mxu0 0.0
        %925 = vmatprep.subr.mxu0 0.0
        %926 = vmatpush1.msra.mxu0 0.0
        %927 = vmatprep.subr.mxu0 0.0
        %928 = vmatpush1.msra.mxu0 0.0
        %929 = vmatprep.subr.mxu0 0.0
        %930 = vmatpush1.msra.mxu0 0.0
        %931 = vmatprep.subr.mxu0 0.0
        %932 = vmatpush1.msra.mxu0 0.0
        %933 = vmatprep.subr.mxu0 0.0
        %934 = vmatpush1.msra.mxu0 0.0
        %935 = vmatprep.subr.mxu0 0.0
        %936 = vmatpush1.msra.mxu0 0.0
        %937 = vmatprep.subr.mxu0 0.0
        %938 = vmatpush1.msra.mxu0 0.0
        %939 = vmatprep.subr.mxu0 0.0
        %940 = vmatpush1.msra.mxu0 0.0
        %941 = vmatprep.subr.mxu0 0.0
        %942 = vmatpush1.msra.mxu0 0.0
        %943 = vmatprep.subr.mxu0 0.0
        %944 = vmatpush1.msra.mxu0 0.0
        %945 = vmatprep.subr.mxu0 0.0
        %946 = vmatpush1.msra.mxu0 0.0
        %947 = vmatprep.subr.mxu0 0.0
        %948 = vmatpush1.msra.mxu0 0.0
        %949 = vmatprep.subr.mxu0 0.0
        %950 = vmatpush1.msra.mxu0 0.0
        %951 = vmatprep.subr.mxu0 0.0
        %952 = vmatpush1.msra.mxu0 0.0
        %953 = vmatprep.subr.mxu0 0.0
        %954 = vmatpush1.msra.mxu0 0.0
        %955 = vmatprep.subr.mxu0 0.0
        %956 = vmatpush1.msra.mxu0 0.0
        %957 = vmatprep.subr.mxu0 0.0
        %958 = vmatpush1.msra.mxu0 0.0
        %959 = vmatprep.subr.mxu0 0.0
        %960 = vmatpush1.msra.mxu0 0.0
        %961 = vmatprep.subr.mxu0 0.0
        %962 = vmatpush1.msra.mxu0 0.0
        %963 = vmatprep.subr.mxu0 0.0
        %964 = vmatpush1.msra.mxu0 0.0
        %965 = vmatprep.subr.mxu0 0.0
        %966 = vmatpush1.msra.mxu0 0.0
        %967 = vmatprep.subr.mxu0 0.0
        %968 = vmatpush1.msra.mxu0 0.0
        %969 = vmatprep.subr.mxu0 0.0
        %970 = vmatpush1.msra.mxu0 0.0
        %971 = vmatprep.subr.mxu0 0.0
        %972 = vmatpush1.msra.mxu0 0.0
        %973 = vmatprep.subr.mxu0 0.0
        %974 = vmatpush1.msra.mxu0 0.0
        %975 = vmatprep.subr.mxu0 0.0
        %976 = vmatpush1.msra.mxu0 0.0
        %977 = vmatprep.subr.mxu0 0.0
        %978 = vmatpush1.msra.mxu0 0.0
        %979 = vmatprep.subr.mxu0 0.0
        %980 = vmatpush1.msra.mxu0 0.0
        %981 = vmatprep.mubr.f32.mxu0 0.0
        %982 = vmatmul.mubr.f32.gmra.mrb[0].mxu0 %v900
        %v983 = vpop.f32.mrb[0].mxu0
        %v984 = vadd.f32 0.0, %v983
        %v985 = vpop.f32.mrb[0].mxu0
        %v986 = vadd.f32 0.0, %v985
        %987 = vmatprep.mubr.f32.mxu0 0.0
        %988 = vmatmul.mubr.f32.gmra.mrb[0].mxu0 %v903
        %v989 = vpop.f32.mrb[0].mxu0
        %v990 = vadd.f32 0.0, %v989
        %v991 = vpop.f32.mrb[0].mxu0
        %v992 = vadd.f32 0.0, %v991
        %993 = vmatprep.mubr.f32.mxu0 0.0
        %994 = vmatmul.mubr.f32.gmra.mrb[0].mxu0 %v906
        %v995 = vpop.f32.mrb[0].mxu0
        %v996 = vadd.f32 0.0, %v995
        %v997 = vpop.f32.mrb[0].mxu0
        %v998 = vadd.f32 0.0, %v997
        %999 = vmatprep.mubr.f32.mxu0 0.0
        %1000 = vmatmul.mubr.f32.gmra.mrb[0].mxu0 %v909
        %v1001 = vpop.f32.mrb[0].mxu0
        %v1002 = vadd.f32 0.0, %v1001
        %v1003 = vpop.f32.mrb[0].mxu0
        %v1004 = vadd.f32 0.0, %v1003
        %1005 = vdwg.mxu0
        %1006 = vmatprep.subr.mxu0 0.0
        %1007 = vmatpush1.msra.mxu0 %v915
        %1008 = vmatprep.subr.mxu0 0.0
        %1009 = vmatpush1.msra.mxu0 0.0
        %1010 = vmatprep.subr.mxu0 0.0
        %1011 = vmatpush1.msra.mxu0 0.0
        %1012 = vmatprep.subr.mxu0 0.0
        %1013 = vmatpush1.msra.mxu0 0.0
        %1014 = vmatprep.subr.mxu0 0.0
        %1015 = vmatpush1.msra.mxu0 0.0
        %1016 = vmatprep.subr.mxu0 0.0
        %1017 = vmatpush1.msra.mxu0 0.0
        %1018 = vmatprep.subr.mxu0 0.0
        %1019 = vmatpush1.msra.mxu0 0.0
        %1020 = vmatprep.subr.mxu0 0.0
        %1021 = vmatpush1.msra.mxu0 0.0
        %1022 = vmatprep.subr.mxu0 0.0
        %1023 = vmatpush1.msra.mxu0 0.0
        %1024 = vmatprep.subr.mxu0 0.0
        %1025 = vmatpush1.msra.mxu0 0.0
        %1026 = vmatprep.subr.mxu0 0.0
        %1027 = vmatpush1.msra.mxu0 0.0
        %1028 = vmatprep.subr.mxu0 0.0
        %1029 = vmatpush1.msra.mxu0 0.0
        %1030 = vmatprep.subr.mxu0 0.0
        %1031 = vmatpush1.msra.mxu0 0.0
        %1032 = vmatprep.subr.mxu0 0.0
        %1033 = vmatpush1.msra.mxu0 0.0
        %1034 = vmatprep.subr.mxu0 0.0
        %1035 = vmatpush1.msra.mxu0 0.0
        %1036 = vmatprep.subr.mxu0 0.0
        %1037 = vmatpush1.msra.mxu0 0.0
        %1038 = vmatprep.subr.mxu0 0.0
        %1039 = vmatpush1.msra.mxu0 0.0
        %1040 = vmatprep.subr.mxu0 0.0
        %1041 = vmatpush1.msra.mxu0 0.0
        %1042 = vmatprep.subr.mxu0 0.0
        %1043 = vmatpush1.msra.mxu0 0.0
        %1044 = vmatprep.subr.mxu0 0.0
        %1045 = vmatpush1.msra.mxu0 0.0
        %1046 = vmatprep.subr.mxu0 0.0
        %1047 = vmatpush1.msra.mxu0 0.0
        %1048 = vmatprep.subr.mxu0 0.0
        %1049 = vmatpush1.msra.mxu0 0.0
        %1050 = vmatprep.subr.mxu0 0.0
        %1051 = vmatpush1.msra.mxu0 0.0
        %1052 = vmatprep.subr.mxu0 0.0
        %1053 = vmatpush1.msra.mxu0 0.0
        %1054 = vmatprep.subr.mxu0 0.0
        %1055 = vmatpush1.msra.mxu0 0.0
        %1056 = vmatprep.subr.mxu0 0.0
        %1057 = vmatpush1.msra.mxu0 0.0
        %1058 = vmatprep.subr.mxu0 0.0
        %1059 = vmatpush1.msra.mxu0 0.0
        %1060 = vmatprep.subr.mxu0 0.0
        %1061 = vmatpush1.msra.mxu0 0.0
        %1062 = vmatprep.subr.mxu0 0.0
        %1063 = vmatpush1.msra.mxu0 0.0
        %1064 = vmatprep.subr.mxu0 0.0
        %1065 = vmatpush1.msra.mxu0 0.0
        %1066 = vmatprep.subr.mxu0 0.0
        %1067 = vmatpush1.msra.mxu0 0.0
        %1068 = vmatprep.subr.mxu0 0.0
        %1069 = vmatpush1.msra.mxu0 0.0
        %1070 = vmatprep.mubr.f32.mxu0 0.0
        %1071 = vmatmul.mubr.f32.gmra.mrb[0].mxu0 %v900
        %v1072 = vpop.f32.mrb[0].mxu0
        %v1073 = vadd.f32 0.0, %v1072
        %v1074 = vpop.f32.mrb[0].mxu0
        %1075 = vmatprep.mubr.f32.mxu0 0.0
        %1076 = vmatmul.mubr.f32.gmra.mrb[0].mxu0 %v903
        %v1077 = vpop.f32.mrb[0].mxu0
        %v1078 = vadd.f32 0.0, %v1077
        %v1079 = vpop.f32.mrb[0].mxu0
        %1080 = vmatprep.mubr.f32.mxu0 0.0
        %1081 = vmatmul.mubr.f32.gmra.mrb[0].mxu0 %v906
        %v1082 = vpop.f32.mrb[0].mxu0
        %v1083 = vadd.f32 0.0, %v1082
        %v1084 = vpop.f32.mrb[0].mxu0
        %1085 = vmatprep.mubr.f32.mxu0 0.0
        %1086 = vmatmul.mubr.f32.gmra.mrb[0].mxu0 %v909
        %v1087 = vpop.f32.mrb[0].mxu0
        %v1088 = vadd.f32 0.0, %v1087
        %v1089 = vpop.f32.mrb[0].mxu0
        %1090 = vdwg.mxu0
        %v1091 = vadd.f32 %v864, %v984
        %v1092 = vadd.f32 %v865, %v986
        %v1093 = vadd.f32 %v866, %v1073
        %v1094 = vadd.f32 %v867, %v990
        %v1095 = vadd.f32 %v868, %v992
        %v1096 = vadd.f32 %v869, %v1078
        %v1097 = vadd.f32 %v870, %v996
        %v1098 = vadd.f32 %v871, %v998
        %v1099 = vadd.f32 %v872, %v1083
        %v1100 = vadd.f32 %v873, %v1002
        %v1101 = vadd.f32 %v874, %v1004
        %v1102 = vadd.f32 %v875, %v1088
        %v1103 = vld [vmem:[#allocation2 + $0x4] sm:$0xff]
        %v1104 = vld [vmem:[#allocation2 + $0xc] sm:$0xf]
        %s1105 = scalar_lea.vmem %s2, 128
        %v1106 = vld [vmem:[%s1105] sm:$0xff]
        %v1107 = vld [vmem:[%s1105 + $0x8] sm:$0xff]
        %v1108 = vld [vmem:[%s1105 + $0x10] sm:$0xff]
        %v1109 = vld [vmem:[%s1105 + $0x18] sm:$0xff]
        %v1112 = vcombine.high %v1103, %v1103
        %v1114 = vsel %vm251, %v1106, 0
        %v1117 = vsel %vm251, %v1107, 0
        %v1120 = vsel %vm251, %v1108, 0
        %v1123 = vsel %vm251, %v1109, 0
        %v1125 = vsel %vm264, %v1103, 0
        %v1127 = vsel %vm264, %v1112, 0
        %v1129 = vsel %vm264, %v1104, 0
        %1131 = vmatprep.subr.mxu0 %v1127
        %1132 = vmatpush1.msra.mxu0 %v1125
        %1133 = vmatprep.subr.mxu0 0.0
        %1134 = vmatpush1.msra.mxu0 0.0
        %1135 = vmatprep.subr.mxu0 0.0
        %1136 = vmatpush1.msra.mxu0 0.0
        %1137 = vmatprep.subr.mxu0 0.0
        %1138 = vmatpush1.msra.mxu0 0.0
        %1139 = vmatprep.subr.mxu0 0.0
        %1140 = vmatpush1.msra.mxu0 0.0
        %1141 = vmatprep.subr.mxu0 0.0
        %1142 = vmatpush1.msra.mxu0 0.0
        %1143 = vmatprep.subr.mxu0 0.0
        %1144 = vmatpush1.msra.mxu0 0.0
        %1145 = vmatprep.subr.mxu0 0.0
        %1146 = vmatpush1.msra.mxu0 0.0
        %1147 = vmatprep.subr.mxu0 0.0
        %1148 = vmatpush1.msra.mxu0 0.0
        %1149 = vmatprep.subr.mxu0 0.0
        %1150 = vmatpush1.msra.mxu0 0.0
        %1151 = vmatprep.subr.mxu0 0.0
        %1152 = vmatpush1.msra.mxu0 0.0
        %1153 = vmatprep.subr.mxu0 0.0
        %1154 = vmatpush1.msra.mxu0 0.0
        %1155 = vmatprep.subr.mxu0 0.0
        %1156 = vmatpush1.msra.mxu0 0.0
        %1157 = vmatprep.subr.mxu0 0.0
        %1158 = vmatpush1.msra.mxu0 0.0
        %1159 = vmatprep.subr.mxu0 0.0
        %1160 = vmatpush1.msra.mxu0 0.0
        %1161 = vmatprep.subr.mxu0 0.0
        %1162 = vmatpush1.msra.mxu0 0.0
        %1163 = vmatprep.subr.mxu0 0.0
        %1164 = vmatpush1.msra.mxu0 0.0
        %1165 = vmatprep.subr.mxu0 0.0
        %1166 = vmatpush1.msra.mxu0 0.0
        %1167 = vmatprep.subr.mxu0 0.0
        %1168 = vmatpush1.msra.mxu0 0.0
        %1169 = vmatprep.subr.mxu0 0.0
        %1170 = vmatpush1.msra.mxu0 0.0
        %1171 = vmatprep.subr.mxu0 0.0
        %1172 = vmatpush1.msra.mxu0 0.0
        %1173 = vmatprep.subr.mxu0 0.0
        %1174 = vmatpush1.msra.mxu0 0.0
        %1175 = vmatprep.subr.mxu0 0.0
        %1176 = vmatpush1.msra.mxu0 0.0
        %1177 = vmatprep.subr.mxu0 0.0
        %1178 = vmatpush1.msra.mxu0 0.0
        %1179 = vmatprep.subr.mxu0 0.0
        %1180 = vmatpush1.msra.mxu0 0.0
        %1181 = vmatprep.subr.mxu0 0.0
        %1182 = vmatpush1.msra.mxu0 0.0
        %1183 = vmatprep.subr.mxu0 0.0
        %1184 = vmatpush1.msra.mxu0 0.0
        %1185 = vmatprep.subr.mxu0 0.0
        %1186 = vmatpush1.msra.mxu0 0.0
        %1187 = vmatprep.subr.mxu0 0.0
        %1188 = vmatpush1.msra.mxu0 0.0
        %1189 = vmatprep.subr.mxu0 0.0
        %1190 = vmatpush1.msra.mxu0 0.0
        %1191 = vmatprep.subr.mxu0 0.0
        %1192 = vmatpush1.msra.mxu0 0.0
        %1193 = vmatprep.subr.mxu0 0.0
        %1194 = vmatpush1.msra.mxu0 0.0
        %1195 = vmatprep.mubr.f32.mxu0 0.0
        %1196 = vmatmul.mubr.f32.gmra.mrb[0].mxu0 %v1114
        %v1197 = vpop.f32.mrb[0].mxu0
        %v1198 = vadd.f32 0.0, %v1197
        %v1199 = vpop.f32.mrb[0].mxu0
        %v1200 = vadd.f32 0.0, %v1199
        %1201 = vmatprep.mubr.f32.mxu0 0.0
        %1202 = vmatmul.mubr.f32.gmra.mrb[0].mxu0 %v1117
        %v1203 = vpop.f32.mrb[0].mxu0
        %v1204 = vadd.f32 0.0, %v1203
        %v1205 = vpop.f32.mrb[0].mxu0
        %v1206 = vadd.f32 0.0, %v1205
        %1207 = vmatprep.mubr.f32.mxu0 0.0
        %1208 = vmatmul.mubr.f32.gmra.mrb[0].mxu0 %v1120
        %v1209 = vpop.f32.mrb[0].mxu0
        %v1210 = vadd.f32 0.0, %v1209
        %v1211 = vpop.f32.mrb[0].mxu0
        %v1212 = vadd.f32 0.0, %v1211
        %1213 = vmatprep.mubr.f32.mxu0 0.0
        %1214 = vmatmul.mubr.f32.gmra.mrb[0].mxu0 %v1123
        %v1215 = vpop.f32.mrb[0].mxu0
        %v1216 = vadd.f32 0.0, %v1215
        %v1217 = vpop.f32.mrb[0].mxu0
        %v1218 = vadd.f32 0.0, %v1217
        %1219 = vdwg.mxu0
        %1220 = vmatprep.subr.mxu0 0.0
        %1221 = vmatpush1.msra.mxu0 %v1129
        %1222 = vmatprep.subr.mxu0 0.0
        %1223 = vmatpush1.msra.mxu0 0.0
        %1224 = vmatprep.subr.mxu0 0.0
        %1225 = vmatpush1.msra.mxu0 0.0
        %1226 = vmatprep.subr.mxu0 0.0
        %1227 = vmatpush1.msra.mxu0 0.0
        %1228 = vmatprep.subr.mxu0 0.0
        %1229 = vmatpush1.msra.mxu0 0.0
        %1230 = vmatprep.subr.mxu0 0.0
        %1231 = vmatpush1.msra.mxu0 0.0
        %1232 = vmatprep.subr.mxu0 0.0
        %1233 = vmatpush1.msra.mxu0 0.0
        %1234 = vmatprep.subr.mxu0 0.0
        %1235 = vmatpush1.msra.mxu0 0.0
        %1236 = vmatprep.subr.mxu0 0.0
        %1237 = vmatpush1.msra.mxu0 0.0
        %1238 = vmatprep.subr.mxu0 0.0
        %1239 = vmatpush1.msra.mxu0 0.0
        %1240 = vmatprep.subr.mxu0 0.0
        %1241 = vmatpush1.msra.mxu0 0.0
        %1242 = vmatprep.subr.mxu0 0.0
        %1243 = vmatpush1.msra.mxu0 0.0
        %1244 = vmatprep.subr.mxu0 0.0
        %1245 = vmatpush1.msra.mxu0 0.0
        %1246 = vmatprep.subr.mxu0 0.0
        %1247 = vmatpush1.msra.mxu0 0.0
        %1248 = vmatprep.subr.mxu0 0.0
        %1249 = vmatpush1.msra.mxu0 0.0
        %1250 = vmatprep.subr.mxu0 0.0
        %1251 = vmatpush1.msra.mxu0 0.0
        %1252 = vmatprep.subr.mxu0 0.0
        %1253 = vmatpush1.msra.mxu0 0.0
        %1254 = vmatprep.subr.mxu0 0.0
        %1255 = vmatpush1.msra.mxu0 0.0
        %1256 = vmatprep.subr.mxu0 0.0
        %1257 = vmatpush1.msra.mxu0 0.0
        %1258 = vmatprep.subr.mxu0 0.0
        %1259 = vmatpush1.msra.mxu0 0.0
        %1260 = vmatprep.subr.mxu0 0.0
        %1261 = vmatpush1.msra.mxu0 0.0
        %1262 = vmatprep.subr.mxu0 0.0
        %1263 = vmatpush1.msra.mxu0 0.0
        %1264 = vmatprep.subr.mxu0 0.0
        %1265 = vmatpush1.msra.mxu0 0.0
        %1266 = vmatprep.subr.mxu0 0.0
        %1267 = vmatpush1.msra.mxu0 0.0
        %1268 = vmatprep.subr.mxu0 0.0
        %1269 = vmatpush1.msra.mxu0 0.0
        %1270 = vmatprep.subr.mxu0 0.0
        %1271 = vmatpush1.msra.mxu0 0.0
        %1272 = vmatprep.subr.mxu0 0.0
        %1273 = vmatpush1.msra.mxu0 0.0
        %1274 = vmatprep.subr.mxu0 0.0
        %1275 = vmatpush1.msra.mxu0 0.0
        %1276 = vmatprep.subr.mxu0 0.0
        %1277 = vmatpush1.msra.mxu0 0.0
        %1278 = vmatprep.subr.mxu0 0.0
        %1279 = vmatpush1.msra.mxu0 0.0
        %1280 = vmatprep.subr.mxu0 0.0
        %1281 = vmatpush1.msra.mxu0 0.0
        %1282 = vmatprep.subr.mxu0 0.0
        %1283 = vmatpush1.msra.mxu0 0.0
        %1284 = vmatprep.mubr.f32.mxu0 0.0
        %1285 = vmatmul.mubr.f32.gmra.mrb[0].mxu0 %v1114
        %v1286 = vpop.f32.mrb[0].mxu0
        %v1287 = vadd.f32 0.0, %v1286
        %v1288 = vpop.f32.mrb[0].mxu0
        %1289 = vmatprep.mubr.f32.mxu0 0.0
        %1290 = vmatmul.mubr.f32.gmra.mrb[0].mxu0 %v1117
        %v1291 = vpop.f32.mrb[0].mxu0
        %v1292 = vadd.f32 0.0, %v1291
        %v1293 = vpop.f32.mrb[0].mxu0
        %1294 = vmatprep.mubr.f32.mxu0 0.0
        %1295 = vmatmul.mubr.f32.gmra.mrb[0].mxu0 %v1120
        %v1296 = vpop.f32.mrb[0].mxu0
        %v1297 = vadd.f32 0.0, %v1296
        %v1298 = vpop.f32.mrb[0].mxu0
        %1299 = vmatprep.mubr.f32.mxu0 0.0
        %1300 = vmatmul.mubr.f32.gmra.mrb[0].mxu0 %v1123
        %v1301 = vpop.f32.mrb[0].mxu0
        %v1302 = vadd.f32 0.0, %v1301
        %v1303 = vpop.f32.mrb[0].mxu0
        %1304 = vdwg.mxu0
        %v1305 = vadd.f32 %v1091, %v1198
        %v1306 = vadd.f32 %v1092, %v1200
        %v1307 = vadd.f32 %v1093, %v1287
        %v1308 = vadd.f32 %v1094, %v1204
        %v1309 = vadd.f32 %v1095, %v1206
        %v1310 = vadd.f32 %v1096, %v1292
        %v1311 = vadd.f32 %v1097, %v1210
        %v1312 = vadd.f32 %v1098, %v1212
        %v1313 = vadd.f32 %v1099, %v1297
        %v1314 = vadd.f32 %v1100, %v1216
        %v1315 = vadd.f32 %v1101, %v1218
        %v1316 = vadd.f32 %v1102, %v1302
        %v1317 = vld [vmem:[#allocation2 + $0x4] sm:$0xff]
        %v1318 = vld [vmem:[#allocation2 + $0xc] sm:$0xff]
        %s1319 = scalar_lea.vmem %s2, 160
        %v1320 = vld [vmem:[%s1319] sm:$0xff]
        %v1321 = vld [vmem:[%s1319 + $0x8] sm:$0xff]
        %v1322 = vld [vmem:[%s1319 + $0x10] sm:$0xff]
        %v1323 = vld [vmem:[%s1319 + $0x18] sm:$0xff]
        %v1326 = vcombine.high %v1317, %v1317
        %v1327 = vcombine.high %v1318, %v1318
        %1328 = vrot.lane.b32.xlu0 %v1317, 127
        %v1329 = vpop.permute.xlu0 %1328
        %1330 = vrot.lane.b32.xlu0 %v1326, 127
        %v1331 = vpop.permute.xlu0 %1330
        %1332 = vrot.lane.b32.xlu0 %v1318, 127
        %v1333 = vpop.permute.xlu0 %1332
        %1334 = vrot.lane.b32.xlu0 %v1327, 127
        %v1335 = vpop.permute.xlu0 %1334
        %vm1336 = vcmask 1039360
        %v1337 = vsel %vm1336, %v1329, %v1331
        %v1338 = vsel %vm1336, %v1331, %v1333
        %v1339 = vsel %vm1336, %v1333, %v1335
        %v1341 = vsel %vm251, %v1320, 0
        %v1344 = vsel %vm251, %v1321, 0
        %v1347 = vsel %vm251, %v1322, 0
        %v1350 = vsel %vm251, %v1323, 0
        %v1352 = vsel %vm264, %v1337, 0
        %v1354 = vsel %vm264, %v1338, 0
        %v1356 = vsel %vm264, %v1339, 0
        %1358 = vmatprep.subr.mxu0 %v1354
        %1359 = vmatpush1.msra.mxu0 %v1352
        %1360 = vmatprep.subr.mxu0 0.0
        %1361 = vmatpush1.msra.mxu0 0.0
        %1362 = vmatprep.subr.mxu0 0.0
        %1363 = vmatpush1.msra.mxu0 0.0
        %1364 = vmatprep.subr.mxu0 0.0
        %1365 = vmatpush1.msra.mxu0 0.0
        %1366 = vmatprep.subr.mxu0 0.0
        %1367 = vmatpush1.msra.mxu0 0.0
        %1368 = vmatprep.subr.mxu0 0.0
        %1369 = vmatpush1.msra.mxu0 0.0
        %1370 = vmatprep.subr.mxu0 0.0
        %1371 = vmatpush1.msra.mxu0 0.0
        %1372 = vmatprep.subr.mxu0 0.0
        %1373 = vmatpush1.msra.mxu0 0.0
        %1374 = vmatprep.subr.mxu0 0.0
        %1375 = vmatpush1.msra.mxu0 0.0
        %1376 = vmatprep.subr.mxu0 0.0
        %1377 = vmatpush1.msra.mxu0 0.0
        %1378 = vmatprep.subr.mxu0 0.0
        %1379 = vmatpush1.msra.mxu0 0.0
        %1380 = vmatprep.subr.mxu0 0.0
        %1381 = vmatpush1.msra.mxu0 0.0
        %1382 = vmatprep.subr.mxu0 0.0
        %1383 = vmatpush1.msra.mxu0 0.0
        %1384 = vmatprep.subr.mxu0 0.0
        %1385 = vmatpush1.msra.mxu0 0.0
        %1386 = vmatprep.subr.mxu0 0.0
        %1387 = vmatpush1.msra.mxu0 0.0
        %1388 = vmatprep.subr.mxu0 0.0
        %1389 = vmatpush1.msra.mxu0 0.0
        %1390 = vmatprep.subr.mxu0 0.0
        %1391 = vmatpush1.msra.mxu0 0.0
        %1392 = vmatprep.subr.mxu0 0.0
        %1393 = vmatpush1.msra.mxu0 0.0
        %1394 = vmatprep.subr.mxu0 0.0
        %1395 = vmatpush1.msra.mxu0 0.0
        %1396 = vmatprep.subr.mxu0 0.0
        %1397 = vmatpush1.msra.mxu0 0.0
        %1398 = vmatprep.subr.mxu0 0.0
        %1399 = vmatpush1.msra.mxu0 0.0
        %1400 = vmatprep.subr.mxu0 0.0
        %1401 = vmatpush1.msra.mxu0 0.0
        %1402 = vmatprep.subr.mxu0 0.0
        %1403 = vmatpush1.msra.mxu0 0.0
        %1404 = vmatprep.subr.mxu0 0.0
        %1405 = vmatpush1.msra.mxu0 0.0
        %1406 = vmatprep.subr.mxu0 0.0
        %1407 = vmatpush1.msra.mxu0 0.0
        %1408 = vmatprep.subr.mxu0 0.0
        %1409 = vmatpush1.msra.mxu0 0.0
        %1410 = vmatprep.subr.mxu0 0.0
        %1411 = vmatpush1.msra.mxu0 0.0
        %1412 = vmatprep.subr.mxu0 0.0
        %1413 = vmatpush1.msra.mxu0 0.0
        %1414 = vmatprep.subr.mxu0 0.0
        %1415 = vmatpush1.msra.mxu0 0.0
        %1416 = vmatprep.subr.mxu0 0.0
        %1417 = vmatpush1.msra.mxu0 0.0
        %1418 = vmatprep.subr.mxu0 0.0
        %1419 = vmatpush1.msra.mxu0 0.0
        %1420 = vmatprep.subr.mxu0 0.0
        %1421 = vmatpush1.msra.mxu0 0.0
        %1422 = vmatprep.mubr.f32.mxu0 0.0
        %1423 = vmatmul.mubr.f32.gmra.mrb[0].mxu0 %v1341
        %v1424 = vpop.f32.mrb[0].mxu0
        %v1425 = vadd.f32 0.0, %v1424
        %v1426 = vpop.f32.mrb[0].mxu0
        %v1427 = vadd.f32 0.0, %v1426
        %1428 = vmatprep.mubr.f32.mxu0 0.0
        %1429 = vmatmul.mubr.f32.gmra.mrb[0].mxu0 %v1344
        %v1430 = vpop.f32.mrb[0].mxu0
        %v1431 = vadd.f32 0.0, %v1430
        %v1432 = vpop.f32.mrb[0].mxu0
        %v1433 = vadd.f32 0.0, %v1432
        %1434 = vmatprep.mubr.f32.mxu0 0.0
        %1435 = vmatmul.mubr.f32.gmra.mrb[0].mxu0 %v1347
        %v1436 = vpop.f32.mrb[0].mxu0
        %v1437 = vadd.f32 0.0, %v1436
        %v1438 = vpop.f32.mrb[0].mxu0
        %v1439 = vadd.f32 0.0, %v1438
        %1440 = vmatprep.mubr.f32.mxu0 0.0
        %1441 = vmatmul.mubr.f32.gmra.mrb[0].mxu0 %v1350
        %v1442 = vpop.f32.mrb[0].mxu0
        %v1443 = vadd.f32 0.0, %v1442
        %v1444 = vpop.f32.mrb[0].mxu0
        %v1445 = vadd.f32 0.0, %v1444
        %1446 = vdwg.mxu0
        %1447 = vmatprep.subr.mxu0 0.0
        %1448 = vmatpush1.msra.mxu0 %v1356
        %1449 = vmatprep.subr.mxu0 0.0
        %1450 = vmatpush1.msra.mxu0 0.0
        %1451 = vmatprep.subr.mxu0 0.0
        %1452 = vmatpush1.msra.mxu0 0.0
        %1453 = vmatprep.subr.mxu0 0.0
        %1454 = vmatpush1.msra.mxu0 0.0
        %1455 = vmatprep.subr.mxu0 0.0
        %1456 = vmatpush1.msra.mxu0 0.0
        %1457 = vmatprep.subr.mxu0 0.0
        %1458 = vmatpush1.msra.mxu0 0.0
        %1459 = vmatprep.subr.mxu0 0.0
        %1460 = vmatpush1.msra.mxu0 0.0
        %1461 = vmatprep.subr.mxu0 0.0
        %1462 = vmatpush1.msra.mxu0 0.0
        %1463 = vmatprep.subr.mxu0 0.0
        %1464 = vmatpush1.msra.mxu0 0.0
        %1465 = vmatprep.subr.mxu0 0.0
        %1466 = vmatpush1.msra.mxu0 0.0
        %1467 = vmatprep.subr.mxu0 0.0
        %1468 = vmatpush1.msra.mxu0 0.0
        %1469 = vmatprep.subr.mxu0 0.0
        %1470 = vmatpush1.msra.mxu0 0.0
        %1471 = vmatprep.subr.mxu0 0.0
        %1472 = vmatpush1.msra.mxu0 0.0
        %1473 = vmatprep.subr.mxu0 0.0
        %1474 = vmatpush1.msra.mxu0 0.0
        %1475 = vmatprep.subr.mxu0 0.0
        %1476 = vmatpush1.msra.mxu0 0.0
        %1477 = vmatprep.subr.mxu0 0.0
        %1478 = vmatpush1.msra.mxu0 0.0
        %1479 = vmatprep.subr.mxu0 0.0
        %1480 = vmatpush1.msra.mxu0 0.0
        %1481 = vmatprep.subr.mxu0 0.0
        %1482 = vmatpush1.msra.mxu0 0.0
        %1483 = vmatprep.subr.mxu0 0.0
        %1484 = vmatpush1.msra.mxu0 0.0
        %1485 = vmatprep.subr.mxu0 0.0
        %1486 = vmatpush1.msra.mxu0 0.0
        %1487 = vmatprep.subr.mxu0 0.0
        %1488 = vmatpush1.msra.mxu0 0.0
        %1489 = vmatprep.subr.mxu0 0.0
        %1490 = vmatpush1.msra.mxu0 0.0
        %1491 = vmatprep.subr.mxu0 0.0
        %1492 = vmatpush1.msra.mxu0 0.0
        %1493 = vmatprep.subr.mxu0 0.0
        %1494 = vmatpush1.msra.mxu0 0.0
        %1495 = vmatprep.subr.mxu0 0.0
        %1496 = vmatpush1.msra.mxu0 0.0
        %1497 = vmatprep.subr.mxu0 0.0
        %1498 = vmatpush1.msra.mxu0 0.0
        %1499 = vmatprep.subr.mxu0 0.0
        %1500 = vmatpush1.msra.mxu0 0.0
        %1501 = vmatprep.subr.mxu0 0.0
        %1502 = vmatpush1.msra.mxu0 0.0
        %1503 = vmatprep.subr.mxu0 0.0
        %1504 = vmatpush1.msra.mxu0 0.0
        %1505 = vmatprep.subr.mxu0 0.0
        %1506 = vmatpush1.msra.mxu0 0.0
        %1507 = vmatprep.subr.mxu0 0.0
        %1508 = vmatpush1.msra.mxu0 0.0
        %1509 = vmatprep.subr.mxu0 0.0
        %1510 = vmatpush1.msra.mxu0 0.0
        %1511 = vmatprep.mubr.f32.mxu0 0.0
        %1512 = vmatmul.mubr.f32.gmra.mrb[0].mxu0 %v1341
        %v1513 = vpop.f32.mrb[0].mxu0
        %v1514 = vadd.f32 0.0, %v1513
        %v1515 = vpop.f32.mrb[0].mxu0
        %1516 = vmatprep.mubr.f32.mxu0 0.0
        %1517 = vmatmul.mubr.f32.gmra.mrb[0].mxu0 %v1344
        %v1518 = vpop.f32.mrb[0].mxu0
        %v1519 = vadd.f32 0.0, %v1518
        %v1520 = vpop.f32.mrb[0].mxu0
        %1521 = vmatprep.mubr.f32.mxu0 0.0
        %1522 = vmatmul.mubr.f32.gmra.mrb[0].mxu0 %v1347
        %v1523 = vpop.f32.mrb[0].mxu0
        %v1524 = vadd.f32 0.0, %v1523
        %v1525 = vpop.f32.mrb[0].mxu0
        %1526 = vmatprep.mubr.f32.mxu0 0.0
        %1527 = vmatmul.mubr.f32.gmra.mrb[0].mxu0 %v1350
        %v1528 = vpop.f32.mrb[0].mxu0
        %v1529 = vadd.f32 0.0, %v1528
        %v1530 = vpop.f32.mrb[0].mxu0
        %1531 = vdwg.mxu0
        %v1532 = vadd.f32 %v1305, %v1425
        %v1533 = vadd.f32 %v1306, %v1427
        %v1534 = vadd.f32 %v1307, %v1514
        %v1535 = vadd.f32 %v1308, %v1431
        %v1536 = vadd.f32 %v1309, %v1433
        %v1537 = vadd.f32 %v1310, %v1519
        %v1538 = vadd.f32 %v1311, %v1437
        %v1539 = vadd.f32 %v1312, %v1439
        %v1540 = vadd.f32 %v1313, %v1524
        %v1541 = vadd.f32 %v1314, %v1443
        %v1542 = vadd.f32 %v1315, %v1445
        %v1543 = vadd.f32 %v1316, %v1529
        %v1544 = vld [vmem:[#allocation2 + $0x4] sm:$0xff]
        %v1545 = vld [vmem:[#allocation2 + $0xc] sm:$0xff]
        %s1546 = scalar_lea.vmem %s2, 192
        %v1547 = vld [vmem:[%s1546] sm:$0xff]
        %v1548 = vld [vmem:[%s1546 + $0x8] sm:$0xff]
        %v1549 = vld [vmem:[%s1546 + $0x10] sm:$0xff]
        %v1550 = vld [vmem:[%s1546 + $0x18] sm:$0xff]
        %v1553 = vcombine.high %v1544, %v1544
        %v1554 = vcombine.high %v1545, %v1545
        %1555 = vrot.lane.b32.xlu0 %v1544, 111
        %v1556 = vpop.permute.xlu0 %1555
        %1557 = vrot.lane.b32.xlu0 %v1553, 111
        %v1558 = vpop.permute.xlu0 %1557
        %1559 = vrot.lane.b32.xlu0 %v1545, 111
        %v1560 = vpop.permute.xlu0 %1559
        %1561 = vrot.lane.b32.xlu0 %v1554, 111
        %v1562 = vpop.permute.xlu0 %1561
        %vm1563 = vcmask 908288
        %v1564 = vsel %vm1563, %v1556, %v1558
        %v1565 = vsel %vm1563, %v1558, %v1560
        %v1566 = vsel %vm1563, %v1560, %v1562
        %v1568 = vsel %vm251, %v1547, 0
        %v1571 = vsel %vm251, %v1548, 0
        %v1574 = vsel %vm251, %v1549, 0
        %v1577 = vsel %vm251, %v1550, 0
        %v1579 = vsel %vm264, %v1564, 0
        %v1581 = vsel %vm264, %v1565, 0
        %v1583 = vsel %vm264, %v1566, 0
        %1585 = vmatprep.subr.mxu0 %v1581
        %1586 = vmatpush1.msra.mxu0 %v1579
        %1587 = vmatprep.subr.mxu0 0.0
        %1588 = vmatpush1.msra.mxu0 0.0
        %1589 = vmatprep.subr.mxu0 0.0
        %1590 = vmatpush1.msra.mxu0 0.0
        %1591 = vmatprep.subr.mxu0 0.0
        %1592 = vmatpush1.msra.mxu0 0.0
        %1593 = vmatprep.subr.mxu0 0.0
        %1594 = vmatpush1.msra.mxu0 0.0
        %1595 = vmatprep.subr.mxu0 0.0
        %1596 = vmatpush1.msra.mxu0 0.0
        %1597 = vmatprep.subr.mxu0 0.0
        %1598 = vmatpush1.msra.mxu0 0.0
        %1599 = vmatprep.subr.mxu0 0.0
        %1600 = vmatpush1.msra.mxu0 0.0
        %1601 = vmatprep.subr.mxu0 0.0
        %1602 = vmatpush1.msra.mxu0 0.0
        %1603 = vmatprep.subr.mxu0 0.0
        %1604 = vmatpush1.msra.mxu0 0.0
        %1605 = vmatprep.subr.mxu0 0.0
        %1606 = vmatpush1.msra.mxu0 0.0
        %1607 = vmatprep.subr.mxu0 0.0
        %1608 = vmatpush1.msra.mxu0 0.0
        %1609 = vmatprep.subr.mxu0 0.0
        %1610 = vmatpush1.msra.mxu0 0.0
        %1611 = vmatprep.subr.mxu0 0.0
        %1612 = vmatpush1.msra.mxu0 0.0
        %1613 = vmatprep.subr.mxu0 0.0
        %1614 = vmatpush1.msra.mxu0 0.0
        %1615 = vmatprep.subr.mxu0 0.0
        %1616 = vmatpush1.msra.mxu0 0.0
        %1617 = vmatprep.subr.mxu0 0.0
        %1618 = vmatpush1.msra.mxu0 0.0
        %1619 = vmatprep.subr.mxu0 0.0
        %1620 = vmatpush1.msra.mxu0 0.0
        %1621 = vmatprep.subr.mxu0 0.0
        %1622 = vmatpush1.msra.mxu0 0.0
        %1623 = vmatprep.subr.mxu0 0.0
        %1624 = vmatpush1.msra.mxu0 0.0
        %1625 = vmatprep.subr.mxu0 0.0
        %1626 = vmatpush1.msra.mxu0 0.0
        %1627 = vmatprep.subr.mxu0 0.0
        %1628 = vmatpush1.msra.mxu0 0.0
        %1629 = vmatprep.subr.mxu0 0.0
        %1630 = vmatpush1.msra.mxu0 0.0
        %1631 = vmatprep.subr.mxu0 0.0
        %1632 = vmatpush1.msra.mxu0 0.0
        %1633 = vmatprep.subr.mxu0 0.0
        %1634 = vmatpush1.msra.mxu0 0.0
        %1635 = vmatprep.subr.mxu0 0.0
        %1636 = vmatpush1.msra.mxu0 0.0
        %1637 = vmatprep.subr.mxu0 0.0
        %1638 = vmatpush1.msra.mxu0 0.0
        %1639 = vmatprep.subr.mxu0 0.0
        %1640 = vmatpush1.msra.mxu0 0.0
        %1641 = vmatprep.subr.mxu0 0.0
        %1642 = vmatpush1.msra.mxu0 0.0
        %1643 = vmatprep.subr.mxu0 0.0
        %1644 = vmatpush1.msra.mxu0 0.0
        %1645 = vmatprep.subr.mxu0 0.0
        %1646 = vmatpush1.msra.mxu0 0.0
        %1647 = vmatprep.subr.mxu0 0.0
        %1648 = vmatpush1.msra.mxu0 0.0
        %1649 = vmatprep.mubr.f32.mxu0 0.0
        %1650 = vmatmul.mubr.f32.gmra.mrb[0].mxu0 %v1568
        %v1651 = vpop.f32.mrb[0].mxu0
        %v1652 = vadd.f32 0.0, %v1651
        %v1653 = vpop.f32.mrb[0].mxu0
        %v1654 = vadd.f32 0.0, %v1653
        %1655 = vmatprep.mubr.f32.mxu0 0.0
        %1656 = vmatmul.mubr.f32.gmra.mrb[0].mxu0 %v1571
        %v1657 = vpop.f32.mrb[0].mxu0
        %v1658 = vadd.f32 0.0, %v1657
        %v1659 = vpop.f32.mrb[0].mxu0
        %v1660 = vadd.f32 0.0, %v1659
        %1661 = vmatprep.mubr.f32.mxu0 0.0
        %1662 = vmatmul.mubr.f32.gmra.mrb[0].mxu0 %v1574
        %v1663 = vpop.f32.mrb[0].mxu0
        %v1664 = vadd.f32 0.0, %v1663
        %v1665 = vpop.f32.mrb[0].mxu0
        %v1666 = vadd.f32 0.0, %v1665
        %1667 = vmatprep.mubr.f32.mxu0 0.0
        %1668 = vmatmul.mubr.f32.gmra.mrb[0].mxu0 %v1577
        %v1669 = vpop.f32.mrb[0].mxu0
        %v1670 = vadd.f32 0.0, %v1669
        %v1671 = vpop.f32.mrb[0].mxu0
        %v1672 = vadd.f32 0.0, %v1671
        %1673 = vdwg.mxu0
        %1674 = vmatprep.subr.mxu0 0.0
        %1675 = vmatpush1.msra.mxu0 %v1583
        %1676 = vmatprep.subr.mxu0 0.0
        %1677 = vmatpush1.msra.mxu0 0.0
        %1678 = vmatprep.subr.mxu0 0.0
        %1679 = vmatpush1.msra.mxu0 0.0
        %1680 = vmatprep.subr.mxu0 0.0
        %1681 = vmatpush1.msra.mxu0 0.0
        %1682 = vmatprep.subr.mxu0 0.0
        %1683 = vmatpush1.msra.mxu0 0.0
        %1684 = vmatprep.subr.mxu0 0.0
        %1685 = vmatpush1.msra.mxu0 0.0
        %1686 = vmatprep.subr.mxu0 0.0
        %1687 = vmatpush1.msra.mxu0 0.0
        %1688 = vmatprep.subr.mxu0 0.0
        %1689 = vmatpush1.msra.mxu0 0.0
        %1690 = vmatprep.subr.mxu0 0.0
        %1691 = vmatpush1.msra.mxu0 0.0
        %1692 = vmatprep.subr.mxu0 0.0
        %1693 = vmatpush1.msra.mxu0 0.0
        %1694 = vmatprep.subr.mxu0 0.0
        %1695 = vmatpush1.msra.mxu0 0.0
        %1696 = vmatprep.subr.mxu0 0.0
        %1697 = vmatpush1.msra.mxu0 0.0
        %1698 = vmatprep.subr.mxu0 0.0
        %1699 = vmatpush1.msra.mxu0 0.0
        %1700 = vmatprep.subr.mxu0 0.0
        %1701 = vmatpush1.msra.mxu0 0.0
        %1702 = vmatprep.subr.mxu0 0.0
        %1703 = vmatpush1.msra.mxu0 0.0
        %1704 = vmatprep.subr.mxu0 0.0
        %1705 = vmatpush1.msra.mxu0 0.0
        %1706 = vmatprep.subr.mxu0 0.0
        %1707 = vmatpush1.msra.mxu0 0.0
        %1708 = vmatprep.subr.mxu0 0.0
        %1709 = vmatpush1.msra.mxu0 0.0
        %1710 = vmatprep.subr.mxu0 0.0
        %1711 = vmatpush1.msra.mxu0 0.0
        %1712 = vmatprep.subr.mxu0 0.0
        %1713 = vmatpush1.msra.mxu0 0.0
        %1714 = vmatprep.subr.mxu0 0.0
        %1715 = vmatpush1.msra.mxu0 0.0
        %1716 = vmatprep.subr.mxu0 0.0
        %1717 = vmatpush1.msra.mxu0 0.0
        %1718 = vmatprep.subr.mxu0 0.0
        %1719 = vmatpush1.msra.mxu0 0.0
        %1720 = vmatprep.subr.mxu0 0.0
        %1721 = vmatpush1.msra.mxu0 0.0
        %1722 = vmatprep.subr.mxu0 0.0
        %1723 = vmatpush1.msra.mxu0 0.0
        %1724 = vmatprep.subr.mxu0 0.0
        %1725 = vmatpush1.msra.mxu0 0.0
        %1726 = vmatprep.subr.mxu0 0.0
        %1727 = vmatpush1.msra.mxu0 0.0
        %1728 = vmatprep.subr.mxu0 0.0
        %1729 = vmatpush1.msra.mxu0 0.0
        %1730 = vmatprep.subr.mxu0 0.0
        %1731 = vmatpush1.msra.mxu0 0.0
        %1732 = vmatprep.subr.mxu0 0.0
        %1733 = vmatpush1.msra.mxu0 0.0
        %1734 = vmatprep.subr.mxu0 0.0
        %1735 = vmatpush1.msra.mxu0 0.0
        %1736 = vmatprep.subr.mxu0 0.0
        %1737 = vmatpush1.msra.mxu0 0.0
        %1738 = vmatprep.mubr.f32.mxu0 0.0
        %1739 = vmatmul.mubr.f32.gmra.mrb[0].mxu0 %v1568
        %v1740 = vpop.f32.mrb[0].mxu0
        %v1741 = vadd.f32 0.0, %v1740
        %v1742 = vpop.f32.mrb[0].mxu0
        %1743 = vmatprep.mubr.f32.mxu0 0.0
        %1744 = vmatmul.mubr.f32.gmra.mrb[0].mxu0 %v1571
        %v1745 = vpop.f32.mrb[0].mxu0
        %v1746 = vadd.f32 0.0, %v1745
        %v1747 = vpop.f32.mrb[0].mxu0
        %1748 = vmatprep.mubr.f32.mxu0 0.0
        %1749 = vmatmul.mubr.f32.gmra.mrb[0].mxu0 %v1574
        %v1750 = vpop.f32.mrb[0].mxu0
        %v1751 = vadd.f32 0.0, %v1750
        %v1752 = vpop.f32.mrb[0].mxu0
        %1753 = vmatprep.mubr.f32.mxu0 0.0
        %1754 = vmatmul.mubr.f32.gmra.mrb[0].mxu0 %v1577
        %v1755 = vpop.f32.mrb[0].mxu0
        %v1756 = vadd.f32 0.0, %v1755
        %v1757 = vpop.f32.mrb[0].mxu0
        %1758 = vdwg.mxu0
        %v1759 = vadd.f32 %v1532, %v1652
        %v1760 = vadd.f32 %v1533, %v1654
        %v1761 = vadd.f32 %v1534, %v1741
        %v1762 = vadd.f32 %v1535, %v1658
        %v1763 = vadd.f32 %v1536, %v1660
        %v1764 = vadd.f32 %v1537, %v1746
        %v1765 = vadd.f32 %v1538, %v1664
        %v1766 = vadd.f32 %v1539, %v1666
        %v1767 = vadd.f32 %v1540, %v1751
        %v1768 = vadd.f32 %v1541, %v1670
        %v1769 = vadd.f32 %v1542, %v1672
        %v1770 = vadd.f32 %v1543, %v1756
        %v1771 = vld [vmem:[#allocation2 + $0x4] sm:$0xff]
        %v1772 = vld [vmem:[#allocation2 + $0xc] sm:$0xff]
        %s1773 = scalar_lea.vmem %s2, 224
        %v1774 = vld [vmem:[%s1773] sm:$0xff]
        %v1775 = vld [vmem:[%s1773 + $0x8] sm:$0xff]
        %v1776 = vld [vmem:[%s1773 + $0x10] sm:$0xff]
        %v1777 = vld [vmem:[%s1773 + $0x18] sm:$0xff]
        %v1780 = vcombine.high %v1771, %v1771
        %v1781 = vcombine.high %v1772, %v1772
        %1782 = vrot.lane.b32.xlu0 %v1771, 110
        %v1783 = vpop.permute.xlu0 %1782
        %1784 = vrot.lane.b32.xlu0 %v1780, 110
        %v1785 = vpop.permute.xlu0 %1784
        %1786 = vrot.lane.b32.xlu0 %v1772, 110
        %v1787 = vpop.permute.xlu0 %1786
        %1788 = vrot.lane.b32.xlu0 %v1781, 110
        %v1789 = vpop.permute.xlu0 %1788
        %vm1790 = vcmask 900096
        %v1791 = vsel %vm1790, %v1783, %v1785
        %v1792 = vsel %vm1790, %v1785, %v1787
        %v1793 = vsel %vm1790, %v1787, %v1789
        %v1795 = vsel %vm251, %v1774, 0
        %v1798 = vsel %vm251, %v1775, 0
        %v1801 = vsel %vm251, %v1776, 0
        %v1804 = vsel %vm251, %v1777, 0
        %v1806 = vsel %vm264, %v1791, 0
        %v1808 = vsel %vm264, %v1792, 0
        %v1810 = vsel %vm264, %v1793, 0
        %1812 = vmatprep.subr.mxu0 %v1808
        %1813 = vmatpush1.msra.mxu0 %v1806
        %1814 = vmatprep.subr.mxu0 0.0
        %1815 = vmatpush1.msra.mxu0 0.0
        %1816 = vmatprep.subr.mxu0 0.0
        %1817 = vmatpush1.msra.mxu0 0.0
        %1818 = vmatprep.subr.mxu0 0.0
        %1819 = vmatpush1.msra.mxu0 0.0
        %1820 = vmatprep.subr.mxu0 0.0
        %1821 = vmatpush1.msra.mxu0 0.0
        %1822 = vmatprep.subr.mxu0 0.0
        %1823 = vmatpush1.msra.mxu0 0.0
        %1824 = vmatprep.subr.mxu0 0.0
        %1825 = vmatpush1.msra.mxu0 0.0
        %1826 = vmatprep.subr.mxu0 0.0
        %1827 = vmatpush1.msra.mxu0 0.0
        %1828 = vmatprep.subr.mxu0 0.0
        %1829 = vmatpush1.msra.mxu0 0.0
        %1830 = vmatprep.subr.mxu0 0.0
        %1831 = vmatpush1.msra.mxu0 0.0
        %1832 = vmatprep.subr.mxu0 0.0
        %1833 = vmatpush1.msra.mxu0 0.0
        %1834 = vmatprep.subr.mxu0 0.0
        %1835 = vmatpush1.msra.mxu0 0.0
        %1836 = vmatprep.subr.mxu0 0.0
        %1837 = vmatpush1.msra.mxu0 0.0
        %1838 = vmatprep.subr.mxu0 0.0
        %1839 = vmatpush1.msra.mxu0 0.0
        %1840 = vmatprep.subr.mxu0 0.0
        %1841 = vmatpush1.msra.mxu0 0.0
        %1842 = vmatprep.subr.mxu0 0.0
        %1843 = vmatpush1.msra.mxu0 0.0
        %1844 = vmatprep.subr.mxu0 0.0
        %1845 = vmatpush1.msra.mxu0 0.0
        %1846 = vmatprep.subr.mxu0 0.0
        %1847 = vmatpush1.msra.mxu0 0.0
        %1848 = vmatprep.subr.mxu0 0.0
        %1849 = vmatpush1.msra.mxu0 0.0
        %1850 = vmatprep.subr.mxu0 0.0
        %1851 = vmatpush1.msra.mxu0 0.0
        %1852 = vmatprep.subr.mxu0 0.0
        %1853 = vmatpush1.msra.mxu0 0.0
        %1854 = vmatprep.subr.mxu0 0.0
        %1855 = vmatpush1.msra.mxu0 0.0
        %1856 = vmatprep.subr.mxu0 0.0
        %1857 = vmatpush1.msra.mxu0 0.0
        %1858 = vmatprep.subr.mxu0 0.0
        %1859 = vmatpush1.msra.mxu0 0.0
        %1860 = vmatprep.subr.mxu0 0.0
        %1861 = vmatpush1.msra.mxu0 0.0
        %1862 = vmatprep.subr.mxu0 0.0
        %1863 = vmatpush1.msra.mxu0 0.0
        %1864 = vmatprep.subr.mxu0 0.0
        %1865 = vmatpush1.msra.mxu0 0.0
        %1866 = vmatprep.subr.mxu0 0.0
        %1867 = vmatpush1.msra.mxu0 0.0
        %1868 = vmatprep.subr.mxu0 0.0
        %1869 = vmatpush1.msra.mxu0 0.0
        %1870 = vmatprep.subr.mxu0 0.0
        %1871 = vmatpush1.msra.mxu0 0.0
        %1872 = vmatprep.subr.mxu0 0.0
        %1873 = vmatpush1.msra.mxu0 0.0
        %1874 = vmatprep.subr.mxu0 0.0
        %1875 = vmatpush1.msra.mxu0 0.0
        %1876 = vmatprep.mubr.f32.mxu0 0.0
        %1877 = vmatmul.mubr.f32.gmra.mrb[0].mxu0 %v1795
        %v1878 = vpop.f32.mrb[0].mxu0
        %v1879 = vadd.f32 0.0, %v1878
        %v1880 = vpop.f32.mrb[0].mxu0
        %v1881 = vadd.f32 0.0, %v1880
        %1882 = vmatprep.mubr.f32.mxu0 0.0
        %1883 = vmatmul.mubr.f32.gmra.mrb[0].mxu0 %v1798
        %v1884 = vpop.f32.mrb[0].mxu0
        %v1885 = vadd.f32 0.0, %v1884
        %v1886 = vpop.f32.mrb[0].mxu0
        %v1887 = vadd.f32 0.0, %v1886
        %1888 = vmatprep.mubr.f32.mxu0 0.0
        %1889 = vmatmul.mubr.f32.gmra.mrb[0].mxu0 %v1801
        %v1890 = vpop.f32.mrb[0].mxu0
        %v1891 = vadd.f32 0.0, %v1890
        %v1892 = vpop.f32.mrb[0].mxu0
        %v1893 = vadd.f32 0.0, %v1892
        %1894 = vmatprep.mubr.f32.mxu0 0.0
        %1895 = vmatmul.mubr.f32.gmra.mrb[0].mxu0 %v1804
        %v1896 = vpop.f32.mrb[0].mxu0
        %v1897 = vadd.f32 0.0, %v1896
        %v1898 = vpop.f32.mrb[0].mxu0
        %v1899 = vadd.f32 0.0, %v1898
        %1900 = vdwg.mxu0
        %1901 = vmatprep.subr.mxu0 0.0
        %1902 = vmatpush1.msra.mxu0 %v1810
        %1903 = vmatprep.subr.mxu0 0.0
        %1904 = vmatpush1.msra.mxu0 0.0
        %1905 = vmatprep.subr.mxu0 0.0
        %1906 = vmatpush1.msra.mxu0 0.0
        %1907 = vmatprep.subr.mxu0 0.0
        %1908 = vmatpush1.msra.mxu0 0.0
        %1909 = vmatprep.subr.mxu0 0.0
        %1910 = vmatpush1.msra.mxu0 0.0
        %1911 = vmatprep.subr.mxu0 0.0
        %1912 = vmatpush1.msra.mxu0 0.0
        %1913 = vmatprep.subr.mxu0 0.0
        %1914 = vmatpush1.msra.mxu0 0.0
        %1915 = vmatprep.subr.mxu0 0.0
        %1916 = vmatpush1.msra.mxu0 0.0
        %1917 = vmatprep.subr.mxu0 0.0
        %1918 = vmatpush1.msra.mxu0 0.0
        %1919 = vmatprep.subr.mxu0 0.0
        %1920 = vmatpush1.msra.mxu0 0.0
        %1921 = vmatprep.subr.mxu0 0.0
        %1922 = vmatpush1.msra.mxu0 0.0
        %1923 = vmatprep.subr.mxu0 0.0
        %1924 = vmatpush1.msra.mxu0 0.0
        %1925 = vmatprep.subr.mxu0 0.0
        %1926 = vmatpush1.msra.mxu0 0.0
        %1927 = vmatprep.subr.mxu0 0.0
        %1928 = vmatpush1.msra.mxu0 0.0
        %1929 = vmatprep.subr.mxu0 0.0
        %1930 = vmatpush1.msra.mxu0 0.0
        %1931 = vmatprep.subr.mxu0 0.0
        %1932 = vmatpush1.msra.mxu0 0.0
        %1933 = vmatprep.subr.mxu0 0.0
        %1934 = vmatpush1.msra.mxu0 0.0
        %1935 = vmatprep.subr.mxu0 0.0
        %1936 = vmatpush1.msra.mxu0 0.0
        %1937 = vmatprep.subr.mxu0 0.0
        %1938 = vmatpush1.msra.mxu0 0.0
        %1939 = vmatprep.subr.mxu0 0.0
        %1940 = vmatpush1.msra.mxu0 0.0
        %1941 = vmatprep.subr.mxu0 0.0
        %1942 = vmatpush1.msra.mxu0 0.0
        %1943 = vmatprep.subr.mxu0 0.0
        %1944 = vmatpush1.msra.mxu0 0.0
        %1945 = vmatprep.subr.mxu0 0.0
        %1946 = vmatpush1.msra.mxu0 0.0
        %1947 = vmatprep.subr.mxu0 0.0
        %1948 = vmatpush1.msra.mxu0 0.0
        %1949 = vmatprep.subr.mxu0 0.0
        %1950 = vmatpush1.msra.mxu0 0.0
        %1951 = vmatprep.subr.mxu0 0.0
        %1952 = vmatpush1.msra.mxu0 0.0
        %1953 = vmatprep.subr.mxu0 0.0
        %1954 = vmatpush1.msra.mxu0 0.0
        %1955 = vmatprep.subr.mxu0 0.0
        %1956 = vmatpush1.msra.mxu0 0.0
        %1957 = vmatprep.subr.mxu0 0.0
        %1958 = vmatpush1.msra.mxu0 0.0
        %1959 = vmatprep.subr.mxu0 0.0
        %1960 = vmatpush1.msra.mxu0 0.0
        %1961 = vmatprep.subr.mxu0 0.0
        %1962 = vmatpush1.msra.mxu0 0.0
        %1963 = vmatprep.subr.mxu0 0.0
        %1964 = vmatpush1.msra.mxu0 0.0
        %1965 = vmatprep.mubr.f32.mxu0 0.0
        %1966 = vmatmul.mubr.f32.gmra.mrb[0].mxu0 %v1795
        %v1967 = vpop.f32.mrb[0].mxu0
        %v1968 = vadd.f32 0.0, %v1967
        %v1969 = vpop.f32.mrb[0].mxu0
        %1970 = vmatprep.mubr.f32.mxu0 0.0
        %1971 = vmatmul.mubr.f32.gmra.mrb[0].mxu0 %v1798
        %v1972 = vpop.f32.mrb[0].mxu0
        %v1973 = vadd.f32 0.0, %v1972
        %v1974 = vpop.f32.mrb[0].mxu0
        %1975 = vmatprep.mubr.f32.mxu0 0.0
        %1976 = vmatmul.mubr.f32.gmra.mrb[0].mxu0 %v1801
        %v1977 = vpop.f32.mrb[0].mxu0
        %v1978 = vadd.f32 0.0, %v1977
        %v1979 = vpop.f32.mrb[0].mxu0
        %1980 = vmatprep.mubr.f32.mxu0 0.0
        %1981 = vmatmul.mubr.f32.gmra.mrb[0].mxu0 %v1804
        %v1982 = vpop.f32.mrb[0].mxu0
        %v1983 = vadd.f32 0.0, %v1982
        %v1984 = vpop.f32.mrb[0].mxu0
        %1985 = vdwg.mxu0
        %v1986 = vadd.f32 %v1759, %v1879
        %v1987 = vadd.f32 %v1760, %v1881
        %v1988 = vadd.f32 %v1761, %v1968
        %v1989 = vadd.f32 %v1762, %v1885
        %v1990 = vadd.f32 %v1763, %v1887
        %v1991 = vadd.f32 %v1764, %v1973
        %v1992 = vadd.f32 %v1765, %v1891
        %v1993 = vadd.f32 %v1766, %v1893
        %v1994 = vadd.f32 %v1767, %v1978
        %v1995 = vadd.f32 %v1768, %v1897
        %v1996 = vadd.f32 %v1769, %v1899
        %v1997 = vadd.f32 %v1770, %v1983
        %v1998 = vld [vmem:[#allocation2 + $0x4] sm:$0xff]
        %v1999 = vld [vmem:[#allocation2 + $0xc] sm:$0xff]
        %s2000 = scalar_lea.vmem %s2, 256
        %v2001 = vld [vmem:[%s2000] sm:$0xff]
        %v2002 = vld [vmem:[%s2000 + $0x8] sm:$0xff]
        %v2003 = vld [vmem:[%s2000 + $0x10] sm:$0xff]
        %v2004 = vld [vmem:[%s2000 + $0x18] sm:$0xff]
        %v2007 = vcombine.high %v1998, %v1998
        %v2008 = vcombine.high %v1999, %v1999
        %2009 = vrot.lane.b32.xlu0 %v1998, 109
        %v2010 = vpop.permute.xlu0 %2009
        %2011 = vrot.lane.b32.xlu0 %v2007, 109
        %v2012 = vpop.permute.xlu0 %2011
        %2013 = vrot.lane.b32.xlu0 %v1999, 109
        %v2014 = vpop.permute.xlu0 %2013
        %2015 = vrot.lane.b32.xlu0 %v2008, 109
        %v2016 = vpop.permute.xlu0 %2015
        %vm2017 = vcmask 891904
        %v2018 = vsel %vm2017, %v2010, %v2012
        %v2019 = vsel %vm2017, %v2012, %v2014
        %v2020 = vsel %vm2017, %v2014, %v2016
        %v2022 = vsel %vm251, %v2001, 0
        %v2025 = vsel %vm251, %v2002, 0
        %v2028 = vsel %vm251, %v2003, 0
        %v2031 = vsel %vm251, %v2004, 0
        %v2033 = vsel %vm264, %v2018, 0
        %v2035 = vsel %vm264, %v2019, 0
        %v2037 = vsel %vm264, %v2020, 0
        %2039 = vmatprep.subr.mxu0 %v2035
        %2040 = vmatpush1.msra.mxu0 %v2033
        %2041 = vmatprep.subr.mxu0 0.0
        %2042 = vmatpush1.msra.mxu0 0.0
        %2043 = vmatprep.subr.mxu0 0.0
        %2044 = vmatpush1.msra.mxu0 0.0
        %2045 = vmatprep.subr.mxu0 0.0
        %2046 = vmatpush1.msra.mxu0 0.0
        %2047 = vmatprep.subr.mxu0 0.0
        %2048 = vmatpush1.msra.mxu0 0.0
        %2049 = vmatprep.subr.mxu0 0.0
        %2050 = vmatpush1.msra.mxu0 0.0
        %2051 = vmatprep.subr.mxu0 0.0
        %2052 = vmatpush1.msra.mxu0 0.0
        %2053 = vmatprep.subr.mxu0 0.0
        %2054 = vmatpush1.msra.mxu0 0.0
        %2055 = vmatprep.subr.mxu0 0.0
        %2056 = vmatpush1.msra.mxu0 0.0
        %2057 = vmatprep.subr.mxu0 0.0
        %2058 = vmatpush1.msra.mxu0 0.0
        %2059 = vmatprep.subr.mxu0 0.0
        %2060 = vmatpush1.msra.mxu0 0.0
        %2061 = vmatprep.subr.mxu0 0.0
        %2062 = vmatpush1.msra.mxu0 0.0
        %2063 = vmatprep.subr.mxu0 0.0
        %2064 = vmatpush1.msra.mxu0 0.0
        %2065 = vmatprep.subr.mxu0 0.0
        %2066 = vmatpush1.msra.mxu0 0.0
        %2067 = vmatprep.subr.mxu0 0.0
        %2068 = vmatpush1.msra.mxu0 0.0
        %2069 = vmatprep.subr.mxu0 0.0
        %2070 = vmatpush1.msra.mxu0 0.0
        %2071 = vmatprep.subr.mxu0 0.0
        %2072 = vmatpush1.msra.mxu0 0.0
        %2073 = vmatprep.subr.mxu0 0.0
        %2074 = vmatpush1.msra.mxu0 0.0
        %2075 = vmatprep.subr.mxu0 0.0
        %2076 = vmatpush1.msra.mxu0 0.0
        %2077 = vmatprep.subr.mxu0 0.0
        %2078 = vmatpush1.msra.mxu0 0.0
        %2079 = vmatprep.subr.mxu0 0.0
        %2080 = vmatpush1.msra.mxu0 0.0
        %2081 = vmatprep.subr.mxu0 0.0
        %2082 = vmatpush1.msra.mxu0 0.0
        %2083 = vmatprep.subr.mxu0 0.0
        %2084 = vmatpush1.msra.mxu0 0.0
        %2085 = vmatprep.subr.mxu0 0.0
        %2086 = vmatpush1.msra.mxu0 0.0
        %2087 = vmatprep.subr.mxu0 0.0
        %2088 = vmatpush1.msra.mxu0 0.0
        %2089 = vmatprep.subr.mxu0 0.0
        %2090 = vmatpush1.msra.mxu0 0.0
        %2091 = vmatprep.subr.mxu0 0.0
        %2092 = vmatpush1.msra.mxu0 0.0
        %2093 = vmatprep.subr.mxu0 0.0
        %2094 = vmatpush1.msra.mxu0 0.0
        %2095 = vmatprep.subr.mxu0 0.0
        %2096 = vmatpush1.msra.mxu0 0.0
        %2097 = vmatprep.subr.mxu0 0.0
        %2098 = vmatpush1.msra.mxu0 0.0
        %2099 = vmatprep.subr.mxu0 0.0
        %2100 = vmatpush1.msra.mxu0 0.0
        %2101 = vmatprep.subr.mxu0 0.0
        %2102 = vmatpush1.msra.mxu0 0.0
        %2103 = vmatprep.mubr.f32.mxu0 0.0
        %2104 = vmatmul.mubr.f32.gmra.mrb[0].mxu0 %v2022
        %v2105 = vpop.f32.mrb[0].mxu0
        %v2106 = vadd.f32 0.0, %v2105
        %v2107 = vpop.f32.mrb[0].mxu0
        %v2108 = vadd.f32 0.0, %v2107
        %2109 = vmatprep.mubr.f32.mxu0 0.0
        %2110 = vmatmul.mubr.f32.gmra.mrb[0].mxu0 %v2025
        %v2111 = vpop.f32.mrb[0].mxu0
        %v2112 = vadd.f32 0.0, %v2111
        %v2113 = vpop.f32.mrb[0].mxu0
        %v2114 = vadd.f32 0.0, %v2113
        %2115 = vmatprep.mubr.f32.mxu0 0.0
        %2116 = vmatmul.mubr.f32.gmra.mrb[0].mxu0 %v2028
        %v2117 = vpop.f32.mrb[0].mxu0
        %v2118 = vadd.f32 0.0, %v2117
        %v2119 = vpop.f32.mrb[0].mxu0
        %v2120 = vadd.f32 0.0, %v2119
        %2121 = vmatprep.mubr.f32.mxu0 0.0
        %2122 = vmatmul.mubr.f32.gmra.mrb[0].mxu0 %v2031
        %v2123 = vpop.f32.mrb[0].mxu0
        %v2124 = vadd.f32 0.0, %v2123
        %v2125 = vpop.f32.mrb[0].mxu0
        %v2126 = vadd.f32 0.0, %v2125
        %2127 = vdwg.mxu0
        %2128 = vmatprep.subr.mxu0 0.0
        %2129 = vmatpush1.msra.mxu0 %v2037
        %2130 = vmatprep.subr.mxu0 0.0
        %2131 = vmatpush1.msra.mxu0 0.0
        %2132 = vmatprep.subr.mxu0 0.0
        %2133 = vmatpush1.msra.mxu0 0.0
        %2134 = vmatprep.subr.mxu0 0.0
        %2135 = vmatpush1.msra.mxu0 0.0
        %2136 = vmatprep.subr.mxu0 0.0
        %2137 = vmatpush1.msra.mxu0 0.0
        %2138 = vmatprep.subr.mxu0 0.0
        %2139 = vmatpush1.msra.mxu0 0.0
        %2140 = vmatprep.subr.mxu0 0.0
        %2141 = vmatpush1.msra.mxu0 0.0
        %2142 = vmatprep.subr.mxu0 0.0
        %2143 = vmatpush1.msra.mxu0 0.0
        %2144 = vmatprep.subr.mxu0 0.0
        %2145 = vmatpush1.msra.mxu0 0.0
        %2146 = vmatprep.subr.mxu0 0.0
        %2147 = vmatpush1.msra.mxu0 0.0
        %2148 = vmatprep.subr.mxu0 0.0
        %2149 = vmatpush1.msra.mxu0 0.0
        %2150 = vmatprep.subr.mxu0 0.0
        %2151 = vmatpush1.msra.mxu0 0.0
        %2152 = vmatprep.subr.mxu0 0.0
        %2153 = vmatpush1.msra.mxu0 0.0
        %2154 = vmatprep.subr.mxu0 0.0
        %2155 = vmatpush1.msra.mxu0 0.0
        %2156 = vmatprep.subr.mxu0 0.0
        %2157 = vmatpush1.msra.mxu0 0.0
        %2158 = vmatprep.subr.mxu0 0.0
        %2159 = vmatpush1.msra.mxu0 0.0
        %2160 = vmatprep.subr.mxu0 0.0
        %2161 = vmatpush1.msra.mxu0 0.0
        %2162 = vmatprep.subr.mxu0 0.0
        %2163 = vmatpush1.msra.mxu0 0.0
        %2164 = vmatprep.subr.mxu0 0.0
        %2165 = vmatpush1.msra.mxu0 0.0
        %2166 = vmatprep.subr.mxu0 0.0
        %2167 = vmatpush1.msra.mxu0 0.0
        %2168 = vmatprep.subr.mxu0 0.0
        %2169 = vmatpush1.msra.mxu0 0.0
        %2170 = vmatprep.subr.mxu0 0.0
        %2171 = vmatpush1.msra.mxu0 0.0
        %2172 = vmatprep.subr.mxu0 0.0
        %2173 = vmatpush1.msra.mxu0 0.0
        %2174 = vmatprep.subr.mxu0 0.0
        %2175 = vmatpush1.msra.mxu0 0.0
        %2176 = vmatprep.subr.mxu0 0.0
        %2177 = vmatpush1.msra.mxu0 0.0
        %2178 = vmatprep.subr.mxu0 0.0
        %2179 = vmatpush1.msra.mxu0 0.0
        %2180 = vmatprep.subr.mxu0 0.0
        %2181 = vmatpush1.msra.mxu0 0.0
        %2182 = vmatprep.subr.mxu0 0.0
        %2183 = vmatpush1.msra.mxu0 0.0
        %2184 = vmatprep.subr.mxu0 0.0
        %2185 = vmatpush1.msra.mxu0 0.0
        %2186 = vmatprep.subr.mxu0 0.0
        %2187 = vmatpush1.msra.mxu0 0.0
        %2188 = vmatprep.subr.mxu0 0.0
        %2189 = vmatpush1.msra.mxu0 0.0
        %2190 = vmatprep.subr.mxu0 0.0
        %2191 = vmatpush1.msra.mxu0 0.0
        %2192 = vmatprep.mubr.f32.mxu0 0.0
        %2193 = vmatmul.mubr.f32.gmra.mrb[0].mxu0 %v2022
        %v2194 = vpop.f32.mrb[0].mxu0
        %v2195 = vadd.f32 0.0, %v2194
        %v2196 = vpop.f32.mrb[0].mxu0
        %2197 = vmatprep.mubr.f32.mxu0 0.0
        %2198 = vmatmul.mubr.f32.gmra.mrb[0].mxu0 %v2025
        %v2199 = vpop.f32.mrb[0].mxu0
        %v2200 = vadd.f32 0.0, %v2199
        %v2201 = vpop.f32.mrb[0].mxu0
        %2202 = vmatprep.mubr.f32.mxu0 0.0
        %2203 = vmatmul.mubr.f32.gmra.mrb[0].mxu0 %v2028
        %v2204 = vpop.f32.mrb[0].mxu0
        %v2205 = vadd.f32 0.0, %v2204
        %v2206 = vpop.f32.mrb[0].mxu0
        %2207 = vmatprep.mubr.f32.mxu0 0.0
        %2208 = vmatmul.mubr.f32.gmra.mrb[0].mxu0 %v2031
        %v2209 = vpop.f32.mrb[0].mxu0
        %v2210 = vadd.f32 0.0, %v2209
        %v2211 = vpop.f32.mrb[0].mxu0
        %2212 = vdwg.mxu0
        %v2213 = vadd.f32 %v1986, %v2106
        %v2214 = vadd.f32 %v1987, %v2108
        %v2215 = vadd.f32 %v1988, %v2195
        %v2216 = vadd.f32 %v1989, %v2112
        %v2217 = vadd.f32 %v1990, %v2114
        %v2218 = vadd.f32 %v1991, %v2200
        %v2219 = vadd.f32 %v1992, %v2118
        %v2220 = vadd.f32 %v1993, %v2120
        %v2221 = vadd.f32 %v1994, %v2205
        %v2222 = vadd.f32 %v1995, %v2124
        %v2223 = vadd.f32 %v1996, %v2126
        %v2224 = vadd.f32 %v1997, %v2210
        %v2225 = vmax.f32 %v2213, 0.0
        %v2226 = vmax.f32 %v2214, 0.0
        %v2227 = vmax.f32 %v2215, 0.0
        %v2228 = vmax.f32 %v2216, 0.0
        %v2229 = vmax.f32 %v2217, 0.0
        %v2230 = vmax.f32 %v2218, 0.0
        %v2231 = vmax.f32 %v2219, 0.0
        %v2232 = vmax.f32 %v2220, 0.0
        %v2233 = vmax.f32 %v2221, 0.0
        %v2234 = vmax.f32 %v2222, 0.0
        %v2235 = vmax.f32 %v2223, 0.0
        %v2236 = vmax.f32 %v2224, 0.0
        %v2237 = vsel %vm219, 1, 0
        %v2238 = vlaneseq
        %v2239 = vshrl.u32 %v2238, 7
        %v2240 = vsub.s32 0, %v2239
        %v2241 = vrot.slane %v2237, %v2240
        %v2242 = vlaneseq
        %v2243 = vshrl.u32 %v2242, 7
        %v2244 = vsub.s32 1, %v2243
        %v2245 = vrot.slane %v2237, %v2244
        %v2246 = vlaneseq
        %v2247 = vshrl.u32 %v2246, 7
        %v2248 = vsub.s32 2, %v2247
        %v2249 = vrot.slane %v2237, %v2248
        %vm2250 = vcmp.eq.s32.totalorder %v2241, 1
        %vm2251 = vcmp.eq.s32.totalorder %v2245, 1
        %vm2252 = vcmp.eq.s32.totalorder %v2249, 1
        %v2253 = vsel %vm2250, %v2225, 0.0
        %v2254 = vsel %vm2251, %v2226, 0.0
        %v2255 = vsel %vm2252, %v2227, 0.0
        %v2256 = vsel %vm2250, %v2228, 0.0
        %v2257 = vsel %vm2251, %v2229, 0.0
        %v2258 = vsel %vm2252, %v2230, 0.0
        %v2259 = vsel %vm2250, %v2231, 0.0
        %v2260 = vsel %vm2251, %v2232, 0.0
        %v2261 = vsel %vm2252, %v2233, 0.0
        %v2262 = vsel %vm2250, %v2234, 0.0
        %v2263 = vsel %vm2251, %v2235, 0.0
        %v2264 = vsel %vm2252, %v2236, 0.0
        %2265 = vst [vmem:[#allocation3 + $0x8] sm:$0xff] %v2253
        %2266 = vst [vmem:[#allocation3 + $0x10] sm:$0xff] %v2254
        %2267 = vst [vmem:[#allocation3 + $0x18] sm:$0xff] %v2255
        %2268 = vst [vmem:[#allocation3 + $0x30] sm:$0xff] %v2256
        %2269 = vst [vmem:[#allocation3 + $0x38] sm:$0xff] %v2257
        %2270 = vst [vmem:[#allocation3 + $0x40] sm:$0xff] %v2258
        %2271 = vst [vmem:[#allocation3 + $0x58] sm:$0xff] %v2259
        %2272 = vst [vmem:[#allocation3 + $0x60] sm:$0xff] %v2260
        %2273 = vst [vmem:[#allocation3 + $0x68] sm:$0xff] %v2261
        %2274 = vst [vmem:[#allocation3 + $0x80] sm:$0xff] %v2262
        %2275 = vst [vmem:[#allocation3 + $0x88] sm:$0xff] %v2263
        %2276 = vst [vmem:[#allocation3 + $0x90] sm:$0xff] %v2264
        %v2277 = vld [vmem:[#allocation3] sm:$0xff]
        %v2278 = vld [vmem:[#allocation3 + $0x8] sm:$0xff]
        %v2279 = vld [vmem:[#allocation3 + $0x10] sm:$0xff]
        %v2280 = vld [vmem:[#allocation3 + $0x18] sm:$0xff]
        %v2281 = vld [vmem:[#allocation3 + $0x28] sm:$0xff]
        %v2282 = vld [vmem:[#allocation3 + $0x30] sm:$0xff]
        %v2283 = vld [vmem:[#allocation3 + $0x38] sm:$0xff]
        %v2284 = vld [vmem:[#allocation3 + $0x40] sm:$0xff]
        %v2285 = vld [vmem:[#allocation3 + $0x50] sm:$0xff]
        %v2286 = vld [vmem:[#allocation3 + $0x58] sm:$0xff]
        %v2287 = vld [vmem:[#allocation3 + $0x60] sm:$0xff]
        %v2288 = vld [vmem:[#allocation3 + $0x68] sm:$0xff]
        %v2289 = vld [vmem:[#allocation3 + $0x78] sm:$0xff]
        %v2290 = vld [vmem:[#allocation3 + $0x80] sm:$0xff]
        %v2291 = vld [vmem:[#allocation3 + $0x88] sm:$0xff]
        %v2292 = vld [vmem:[#allocation3 + $0x90] sm:$0xff]
        %v2293 = vld [vmem:[%s3] sm:$0xf]
        %s2294 = scalar_lea.vmem %s3, 4
        %v2295 = vld [vmem:[%s2294] sm:$0xf]
        %2312 = vrot.lane.b32.xlu0 %v2277, 18
        %v2313 = vpop.permute.xlu0 %2312
        %2314 = vrot.lane.b32.xlu0 %v2278, 18
        %v2315 = vpop.permute.xlu0 %2314
        %2316 = vrot.lane.b32.xlu0 %v2279, 18
        %v2317 = vpop.permute.xlu0 %2316
        %2318 = vrot.lane.b32.xlu0 %v2280, 18
        %v2319 = vpop.permute.xlu0 %2318
        %2320 = vrot.lane.b32.xlu0 %v2281, 18
        %v2321 = vpop.permute.xlu0 %2320
        %2322 = vrot.lane.b32.xlu0 %v2282, 18
        %v2323 = vpop.permute.xlu0 %2322
        %2324 = vrot.lane.b32.xlu0 %v2283, 18
        %v2325 = vpop.permute.xlu0 %2324
        %2326 = vrot.lane.b32.xlu0 %v2284, 18
        %v2327 = vpop.permute.xlu0 %2326
        %2328 = vrot.lane.b32.xlu0 %v2285, 18
        %v2329 = vpop.permute.xlu0 %2328
        %2330 = vrot.lane.b32.xlu0 %v2286, 18
        %v2331 = vpop.permute.xlu0 %2330
        %2332 = vrot.lane.b32.xlu0 %v2287, 18
        %v2333 = vpop.permute.xlu0 %2332
        %2334 = vrot.lane.b32.xlu0 %v2288, 18
        %v2335 = vpop.permute.xlu0 %2334
        %2336 = vrot.lane.b32.xlu0 %v2289, 18
        %v2337 = vpop.permute.xlu0 %2336
        %2338 = vrot.lane.b32.xlu0 %v2290, 18
        %v2339 = vpop.permute.xlu0 %2338
        %2340 = vrot.lane.b32.xlu0 %v2291, 18
        %v2341 = vpop.permute.xlu0 %2340
        %2342 = vrot.lane.b32.xlu0 %v2292, 18
        %v2343 = vpop.permute.xlu0 %2342
        %v2344 = vsel %vm247, %v2313, %v2315
        %v2345 = vsel %vm247, %v2315, %v2317
        %v2346 = vsel %vm247, %v2317, %v2319
        %v2347 = vsel %vm247, %v2321, %v2323
        %v2348 = vsel %vm247, %v2323, %v2325
        %v2349 = vsel %vm247, %v2325, %v2327
        %v2350 = vsel %vm247, %v2329, %v2331
        %v2351 = vsel %vm247, %v2331, %v2333
        %v2352 = vsel %vm247, %v2333, %v2335
        %v2353 = vsel %vm247, %v2337, %v2339
        %v2354 = vsel %vm247, %v2339, %v2341
        %v2355 = vsel %vm247, %v2341, %v2343
        %vm2368 = vcmask 261120
        %v2370 = vsel %vm2368, %v2295, 0
        %2372 = vmatprep.subr.mxu0 %v2345
        %2373 = vmatpush1.msra.mxu0 %v2344
        %2374 = vmatprep.subr.mxu0 %v2348
        %2375 = vmatpush1.msra.mxu0 %v2347
        %2376 = vmatprep.subr.mxu0 %v2351
        %2377 = vmatpush1.msra.mxu0 %v2350
        %2378 = vmatprep.subr.mxu0 %v2354
        %2379 = vmatpush1.msra.mxu0 %v2353
        %2380 = vmatprep.subr.mxu0 0.0
        %2381 = vmatpush1.msra.mxu0 0.0
        %2382 = vmatprep.subr.mxu0 0.0
        %2383 = vmatpush1.msra.mxu0 0.0
        %2384 = vmatprep.subr.mxu0 0.0
        %2385 = vmatpush1.msra.mxu0 0.0
        %2386 = vmatprep.subr.mxu0 0.0
        %2387 = vmatpush1.msra.mxu0 0.0
        %2388 = vmatprep.subr.mxu0 0.0
        %2389 = vmatpush1.msra.mxu0 0.0
        %2390 = vmatprep.subr.mxu0 0.0
        %2391 = vmatpush1.msra.mxu0 0.0
        %2392 = vmatprep.subr.mxu0 0.0
        %2393 = vmatpush1.msra.mxu0 0.0
        %2394 = vmatprep.subr.mxu0 0.0
        %2395 = vmatpush1.msra.mxu0 0.0
        %2396 = vmatprep.subr.mxu0 0.0
        %2397 = vmatpush1.msra.mxu0 0.0
        %2398 = vmatprep.subr.mxu0 0.0
        %2399 = vmatpush1.msra.mxu0 0.0
        %2400 = vmatprep.subr.mxu0 0.0
        %2401 = vmatpush1.msra.mxu0 0.0
        %2402 = vmatprep.subr.mxu0 0.0
        %2403 = vmatpush1.msra.mxu0 0.0
        %2404 = vmatprep.subr.mxu0 0.0
        %2405 = vmatpush1.msra.mxu0 0.0
        %2406 = vmatprep.subr.mxu0 0.0
        %2407 = vmatpush1.msra.mxu0 0.0
        %2408 = vmatprep.subr.mxu0 0.0
        %2409 = vmatpush1.msra.mxu0 0.0
        %2410 = vmatprep.subr.mxu0 0.0
        %2411 = vmatpush1.msra.mxu0 0.0
        %2412 = vmatprep.subr.mxu0 0.0
        %2413 = vmatpush1.msra.mxu0 0.0
        %2414 = vmatprep.subr.mxu0 0.0
        %2415 = vmatpush1.msra.mxu0 0.0
        %2416 = vmatprep.subr.mxu0 0.0
        %2417 = vmatpush1.msra.mxu0 0.0
        %2418 = vmatprep.subr.mxu0 0.0
        %2419 = vmatpush1.msra.mxu0 0.0
        %2420 = vmatprep.subr.mxu0 0.0
        %2421 = vmatpush1.msra.mxu0 0.0
        %2422 = vmatprep.subr.mxu0 0.0
        %2423 = vmatpush1.msra.mxu0 0.0
        %2424 = vmatprep.subr.mxu0 0.0
        %2425 = vmatpush1.msra.mxu0 0.0
        %2426 = vmatprep.subr.mxu0 0.0
        %2427 = vmatpush1.msra.mxu0 0.0
        %2428 = vmatprep.subr.mxu0 0.0
        %2429 = vmatpush1.msra.mxu0 0.0
        %2430 = vmatprep.subr.mxu0 0.0
        %2431 = vmatpush1.msra.mxu0 0.0
        %2432 = vmatprep.subr.mxu0 0.0
        %2433 = vmatpush1.msra.mxu0 0.0
        %2434 = vmatprep.subr.mxu0 0.0
        %2435 = vmatpush1.msra.mxu0 0.0
        %2436 = vmatprep.mubr.f32.mxu0 0.0
        %2437 = vmatmul.mubr.f32.gmra.mrb[0].mxu0 %v2370
        %v2438 = vpop.f32.mrb[0].mxu0
        %v2439 = vadd.f32 0.0, %v2438
        %v2440 = vpop.f32.mrb[0].mxu0
        %v2441 = vadd.f32 0.0, %v2440
        %2442 = vdwg.mxu0
        %2443 = vmatprep.subr.mxu0 0.0
        %2444 = vmatpush1.msra.mxu0 %v2346
        %2445 = vmatprep.subr.mxu0 0.0
        %2446 = vmatpush1.msra.mxu0 %v2349
        %2447 = vmatprep.subr.mxu0 0.0
        %2448 = vmatpush1.msra.mxu0 %v2352
        %2449 = vmatprep.subr.mxu0 0.0
        %2450 = vmatpush1.msra.mxu0 %v2355
        %2451 = vmatprep.subr.mxu0 0.0
        %2452 = vmatpush1.msra.mxu0 0.0
        %2453 = vmatprep.subr.mxu0 0.0
        %2454 = vmatpush1.msra.mxu0 0.0
        %2455 = vmatprep.subr.mxu0 0.0
        %2456 = vmatpush1.msra.mxu0 0.0
        %2457 = vmatprep.subr.mxu0 0.0
        %2458 = vmatpush1.msra.mxu0 0.0
        %2459 = vmatprep.subr.mxu0 0.0
        %2460 = vmatpush1.msra.mxu0 0.0
        %2461 = vmatprep.subr.mxu0 0.0
        %2462 = vmatpush1.msra.mxu0 0.0
        %2463 = vmatprep.subr.mxu0 0.0
        %2464 = vmatpush1.msra.mxu0 0.0
        %2465 = vmatprep.subr.mxu0 0.0
        %2466 = vmatpush1.msra.mxu0 0.0
        %2467 = vmatprep.subr.mxu0 0.0
        %2468 = vmatpush1.msra.mxu0 0.0
        %2469 = vmatprep.subr.mxu0 0.0
        %2470 = vmatpush1.msra.mxu0 0.0
        %2471 = vmatprep.subr.mxu0 0.0
        %2472 = vmatpush1.msra.mxu0 0.0
        %2473 = vmatprep.subr.mxu0 0.0
        %2474 = vmatpush1.msra.mxu0 0.0
        %2475 = vmatprep.subr.mxu0 0.0
        %2476 = vmatpush1.msra.mxu0 0.0
        %2477 = vmatprep.subr.mxu0 0.0
        %2478 = vmatpush1.msra.mxu0 0.0
        %2479 = vmatprep.subr.mxu0 0.0
        %2480 = vmatpush1.msra.mxu0 0.0
        %2481 = vmatprep.subr.mxu0 0.0
        %2482 = vmatpush1.msra.mxu0 0.0
        %2483 = vmatprep.subr.mxu0 0.0
        %2484 = vmatpush1.msra.mxu0 0.0
        %2485 = vmatprep.subr.mxu0 0.0
        %2486 = vmatpush1.msra.mxu0 0.0
        %2487 = vmatprep.subr.mxu0 0.0
        %2488 = vmatpush1.msra.mxu0 0.0
        %2489 = vmatprep.subr.mxu0 0.0
        %2490 = vmatpush1.msra.mxu0 0.0
        %2491 = vmatprep.subr.mxu0 0.0
        %2492 = vmatpush1.msra.mxu0 0.0
        %2493 = vmatprep.subr.mxu0 0.0
        %2494 = vmatpush1.msra.mxu0 0.0
        %2495 = vmatprep.subr.mxu0 0.0
        %2496 = vmatpush1.msra.mxu0 0.0
        %2497 = vmatprep.subr.mxu0 0.0
        %2498 = vmatpush1.msra.mxu0 0.0
        %2499 = vmatprep.subr.mxu0 0.0
        %2500 = vmatpush1.msra.mxu0 0.0
        %2501 = vmatprep.subr.mxu0 0.0
        %2502 = vmatpush1.msra.mxu0 0.0
        %2503 = vmatprep.subr.mxu0 0.0
        %2504 = vmatpush1.msra.mxu0 0.0
        %2505 = vmatprep.subr.mxu0 0.0
        %2506 = vmatpush1.msra.mxu0 0.0
        %2507 = vmatprep.mubr.f32.mxu0 0.0
        %2508 = vmatmul.mubr.f32.gmra.mrb[0].mxu0 %v2370
        %v2509 = vpop.f32.mrb[0].mxu0
        %v2510 = vadd.f32 0.0, %v2509
        %v2511 = vpop.f32.mrb[0].mxu0
        %2512 = vdwg.mxu0
        %2513 = vrot.lane.b32.xlu0 %v2277, 19
        %v2514 = vpop.permute.xlu0 %2513
        %2515 = vrot.lane.b32.xlu0 %v2278, 19
        %v2516 = vpop.permute.xlu0 %2515
        %2517 = vrot.lane.b32.xlu0 %v2279, 19
        %v2518 = vpop.permute.xlu0 %2517
        %2519 = vrot.lane.b32.xlu0 %v2280, 19
        %v2520 = vpop.permute.xlu0 %2519
        %2521 = vrot.lane.b32.xlu0 %v2281, 19
        %v2522 = vpop.permute.xlu0 %2521
        %2523 = vrot.lane.b32.xlu0 %v2282, 19
        %v2524 = vpop.permute.xlu0 %2523
        %2525 = vrot.lane.b32.xlu0 %v2283, 19
        %v2526 = vpop.permute.xlu0 %2525
        %2527 = vrot.lane.b32.xlu0 %v2284, 19
        %v2528 = vpop.permute.xlu0 %2527
        %2529 = vrot.lane.b32.xlu0 %v2285, 19
        %v2530 = vpop.permute.xlu0 %2529
        %2531 = vrot.lane.b32.xlu0 %v2286, 19
        %v2532 = vpop.permute.xlu0 %2531
        %2533 = vrot.lane.b32.xlu0 %v2287, 19
        %v2534 = vpop.permute.xlu0 %2533
        %2535 = vrot.lane.b32.xlu0 %v2288, 19
        %v2536 = vpop.permute.xlu0 %2535
        %2537 = vrot.lane.b32.xlu0 %v2289, 19
        %v2538 = vpop.permute.xlu0 %2537
        %2539 = vrot.lane.b32.xlu0 %v2290, 19
        %v2540 = vpop.permute.xlu0 %2539
        %2541 = vrot.lane.b32.xlu0 %v2291, 19
        %v2542 = vpop.permute.xlu0 %2541
        %2543 = vrot.lane.b32.xlu0 %v2292, 19
        %v2544 = vpop.permute.xlu0 %2543
        %v2545 = vsel %vm453, %v2514, %v2516
        %v2546 = vsel %vm453, %v2516, %v2518
        %v2547 = vsel %vm453, %v2518, %v2520
        %v2548 = vsel %vm453, %v2522, %v2524
        %v2549 = vsel %vm453, %v2524, %v2526
        %v2550 = vsel %vm453, %v2526, %v2528
        %v2551 = vsel %vm453, %v2530, %v2532
        %v2552 = vsel %vm453, %v2532, %v2534
        %v2553 = vsel %vm453, %v2534, %v2536
        %v2554 = vsel %vm453, %v2538, %v2540
        %v2555 = vsel %vm453, %v2540, %v2542
        %v2556 = vsel %vm453, %v2542, %v2544
        %v2570 = vsel %vm2368, %v2293, 0
        %2572 = vmatprep.subr.mxu0 %v2546
        %2573 = vmatpush1.msra.mxu0 %v2545
        %2574 = vmatprep.subr.mxu0 %v2549
        %2575 = vmatpush1.msra.mxu0 %v2548
        %2576 = vmatprep.subr.mxu0 %v2552
        %2577 = vmatpush1.msra.mxu0 %v2551
        %2578 = vmatprep.subr.mxu0 %v2555
        %2579 = vmatpush1.msra.mxu0 %v2554
        %2580 = vmatprep.subr.mxu0 0.0
        %2581 = vmatpush1.msra.mxu0 0.0
        %2582 = vmatprep.subr.mxu0 0.0
        %2583 = vmatpush1.msra.mxu0 0.0
        %2584 = vmatprep.subr.mxu0 0.0
        %2585 = vmatpush1.msra.mxu0 0.0
        %2586 = vmatprep.subr.mxu0 0.0
        %2587 = vmatpush1.msra.mxu0 0.0
        %2588 = vmatprep.subr.mxu0 0.0
        %2589 = vmatpush1.msra.mxu0 0.0
        %2590 = vmatprep.subr.mxu0 0.0
        %2591 = vmatpush1.msra.mxu0 0.0
        %2592 = vmatprep.subr.mxu0 0.0
        %2593 = vmatpush1.msra.mxu0 0.0
        %2594 = vmatprep.subr.mxu0 0.0
        %2595 = vmatpush1.msra.mxu0 0.0
        %2596 = vmatprep.subr.mxu0 0.0
        %2597 = vmatpush1.msra.mxu0 0.0
        %2598 = vmatprep.subr.mxu0 0.0
        %2599 = vmatpush1.msra.mxu0 0.0
        %2600 = vmatprep.subr.mxu0 0.0
        %2601 = vmatpush1.msra.mxu0 0.0
        %2602 = vmatprep.subr.mxu0 0.0
        %2603 = vmatpush1.msra.mxu0 0.0
        %2604 = vmatprep.subr.mxu0 0.0
        %2605 = vmatpush1.msra.mxu0 0.0
        %2606 = vmatprep.subr.mxu0 0.0
        %2607 = vmatpush1.msra.mxu0 0.0
        %2608 = vmatprep.subr.mxu0 0.0
        %2609 = vmatpush1.msra.mxu0 0.0
        %2610 = vmatprep.subr.mxu0 0.0
        %2611 = vmatpush1.msra.mxu0 0.0
        %2612 = vmatprep.subr.mxu0 0.0
        %2613 = vmatpush1.msra.mxu0 0.0
        %2614 = vmatprep.subr.mxu0 0.0
        %2615 = vmatpush1.msra.mxu0 0.0
        %2616 = vmatprep.subr.mxu0 0.0
        %2617 = vmatpush1.msra.mxu0 0.0
        %2618 = vmatprep.subr.mxu0 0.0
        %2619 = vmatpush1.msra.mxu0 0.0
        %2620 = vmatprep.subr.mxu0 0.0
        %2621 = vmatpush1.msra.mxu0 0.0
        %2622 = vmatprep.subr.mxu0 0.0
        %2623 = vmatpush1.msra.mxu0 0.0
        %2624 = vmatprep.subr.mxu0 0.0
        %2625 = vmatpush1.msra.mxu0 0.0
        %2626 = vmatprep.subr.mxu0 0.0
        %2627 = vmatpush1.msra.mxu0 0.0
        %2628 = vmatprep.subr.mxu0 0.0
        %2629 = vmatpush1.msra.mxu0 0.0
        %2630 = vmatprep.subr.mxu0 0.0
        %2631 = vmatpush1.msra.mxu0 0.0
        %2632 = vmatprep.subr.mxu0 0.0
        %2633 = vmatpush1.msra.mxu0 0.0
        %2634 = vmatprep.subr.mxu0 0.0
        %2635 = vmatpush1.msra.mxu0 0.0
        %2636 = vmatprep.mubr.f32.mxu0 0.0
        %2637 = vmatmul.mubr.f32.gmra.mrb[0].mxu0 %v2570
        %v2638 = vpop.f32.mrb[0].mxu0
        %v2639 = vadd.f32 %v2439, %v2638
        %v2640 = vpop.f32.mrb[0].mxu0
        %v2641 = vadd.f32 %v2441, %v2640
        %2642 = vdwg.mxu0
        %2643 = vmatprep.subr.mxu0 0.0
        %2644 = vmatpush1.msra.mxu0 %v2547
        %2645 = vmatprep.subr.mxu0 0.0
        %2646 = vmatpush1.msra.mxu0 %v2550
        %2647 = vmatprep.subr.mxu0 0.0
        %2648 = vmatpush1.msra.mxu0 %v2553
        %2649 = vmatprep.subr.mxu0 0.0
        %2650 = vmatpush1.msra.mxu0 %v2556
        %2651 = vmatprep.subr.mxu0 0.0
        %2652 = vmatpush1.msra.mxu0 0.0
        %2653 = vmatprep.subr.mxu0 0.0
        %2654 = vmatpush1.msra.mxu0 0.0
        %2655 = vmatprep.subr.mxu0 0.0
        %2656 = vmatpush1.msra.mxu0 0.0
        %2657 = vmatprep.subr.mxu0 0.0
        %2658 = vmatpush1.msra.mxu0 0.0
        %2659 = vmatprep.subr.mxu0 0.0
        %2660 = vmatpush1.msra.mxu0 0.0
        %2661 = vmatprep.subr.mxu0 0.0
        %2662 = vmatpush1.msra.mxu0 0.0
        %2663 = vmatprep.subr.mxu0 0.0
        %2664 = vmatpush1.msra.mxu0 0.0
        %2665 = vmatprep.subr.mxu0 0.0
        %2666 = vmatpush1.msra.mxu0 0.0
        %2667 = vmatprep.subr.mxu0 0.0
        %2668 = vmatpush1.msra.mxu0 0.0
        %2669 = vmatprep.subr.mxu0 0.0
        %2670 = vmatpush1.msra.mxu0 0.0
        %2671 = vmatprep.subr.mxu0 0.0
        %2672 = vmatpush1.msra.mxu0 0.0
        %2673 = vmatprep.subr.mxu0 0.0
        %2674 = vmatpush1.msra.mxu0 0.0
        %2675 = vmatprep.subr.mxu0 0.0
        %2676 = vmatpush1.msra.mxu0 0.0
        %2677 = vmatprep.subr.mxu0 0.0
        %2678 = vmatpush1.msra.mxu0 0.0
        %2679 = vmatprep.subr.mxu0 0.0
        %2680 = vmatpush1.msra.mxu0 0.0
        %2681 = vmatprep.subr.mxu0 0.0
        %2682 = vmatpush1.msra.mxu0 0.0
        %2683 = vmatprep.subr.mxu0 0.0
        %2684 = vmatpush1.msra.mxu0 0.0
        %2685 = vmatprep.subr.mxu0 0.0
        %2686 = vmatpush1.msra.mxu0 0.0
        %2687 = vmatprep.subr.mxu0 0.0
        %2688 = vmatpush1.msra.mxu0 0.0
        %2689 = vmatprep.subr.mxu0 0.0
        %2690 = vmatpush1.msra.mxu0 0.0
        %2691 = vmatprep.subr.mxu0 0.0
        %2692 = vmatpush1.msra.mxu0 0.0
        %2693 = vmatprep.subr.mxu0 0.0
        %2694 = vmatpush1.msra.mxu0 0.0
        %2695 = vmatprep.subr.mxu0 0.0
        %2696 = vmatpush1.msra.mxu0 0.0
        %2697 = vmatprep.subr.mxu0 0.0
        %2698 = vmatpush1.msra.mxu0 0.0
        %2699 = vmatprep.subr.mxu0 0.0
        %2700 = vmatpush1.msra.mxu0 0.0
        %2701 = vmatprep.subr.mxu0 0.0
        %2702 = vmatpush1.msra.mxu0 0.0
        %2703 = vmatprep.subr.mxu0 0.0
        %2704 = vmatpush1.msra.mxu0 0.0
        %2705 = vmatprep.subr.mxu0 0.0
        %2706 = vmatpush1.msra.mxu0 0.0
        %2707 = vmatprep.mubr.f32.mxu0 0.0
        %2708 = vmatmul.mubr.f32.gmra.mrb[0].mxu0 %v2570
        %v2709 = vpop.f32.mrb[0].mxu0
        %v2710 = vadd.f32 %v2510, %v2709
        %v2711 = vpop.f32.mrb[0].mxu0
        %2712 = vdwg.mxu0
        %s2713 = scalar_lea.vmem %s3, 8
        %v2714 = vld [vmem:[%s2713] sm:$0xf]
        %2715 = vrot.lane.b32.xlu0 %v2277, 17
        %v2716 = vpop.permute.xlu0 %2715
        %2717 = vrot.lane.b32.xlu0 %v2278, 17
        %v2718 = vpop.permute.xlu0 %2717
        %2719 = vrot.lane.b32.xlu0 %v2279, 17
        %v2720 = vpop.permute.xlu0 %2719
        %2721 = vrot.lane.b32.xlu0 %v2280, 17
        %v2722 = vpop.permute.xlu0 %2721
        %2723 = vrot.lane.b32.xlu0 %v2281, 17
        %v2724 = vpop.permute.xlu0 %2723
        %2725 = vrot.lane.b32.xlu0 %v2282, 17
        %v2726 = vpop.permute.xlu0 %2725
        %2727 = vrot.lane.b32.xlu0 %v2283, 17
        %v2728 = vpop.permute.xlu0 %2727
        %2729 = vrot.lane.b32.xlu0 %v2284, 17
        %v2730 = vpop.permute.xlu0 %2729
        %2731 = vrot.lane.b32.xlu0 %v2285, 17
        %v2732 = vpop.permute.xlu0 %2731
        %2733 = vrot.lane.b32.xlu0 %v2286, 17
        %v2734 = vpop.permute.xlu0 %2733
        %2735 = vrot.lane.b32.xlu0 %v2287, 17
        %v2736 = vpop.permute.xlu0 %2735
        %2737 = vrot.lane.b32.xlu0 %v2288, 17
        %v2738 = vpop.permute.xlu0 %2737
        %2739 = vrot.lane.b32.xlu0 %v2289, 17
        %v2740 = vpop.permute.xlu0 %2739
        %2741 = vrot.lane.b32.xlu0 %v2290, 17
        %v2742 = vpop.permute.xlu0 %2741
        %2743 = vrot.lane.b32.xlu0 %v2291, 17
        %v2744 = vpop.permute.xlu0 %2743
        %2745 = vrot.lane.b32.xlu0 %v2292, 17
        %v2746 = vpop.permute.xlu0 %2745
        %v2747 = vsel %vm668, %v2716, %v2718
        %v2748 = vsel %vm668, %v2718, %v2720
        %v2749 = vsel %vm668, %v2720, %v2722
        %v2750 = vsel %vm668, %v2724, %v2726
        %v2751 = vsel %vm668, %v2726, %v2728
        %v2752 = vsel %vm668, %v2728, %v2730
        %v2753 = vsel %vm668, %v2732, %v2734
        %v2754 = vsel %vm668, %v2734, %v2736
        %v2755 = vsel %vm668, %v2736, %v2738
        %v2756 = vsel %vm668, %v2740, %v2742
        %v2757 = vsel %vm668, %v2742, %v2744
        %v2758 = vsel %vm668, %v2744, %v2746
        %v2772 = vsel %vm2368, %v2714, 0
        %2774 = vmatprep.subr.mxu0 %v2748
        %2775 = vmatpush1.msra.mxu0 %v2747
        %2776 = vmatprep.subr.mxu0 %v2751
        %2777 = vmatpush1.msra.mxu0 %v2750
        %2778 = vmatprep.subr.mxu0 %v2754
        %2779 = vmatpush1.msra.mxu0 %v2753
        %2780 = vmatprep.subr.mxu0 %v2757
        %2781 = vmatpush1.msra.mxu0 %v2756
        %2782 = vmatprep.subr.mxu0 0.0
        %2783 = vmatpush1.msra.mxu0 0.0
        %2784 = vmatprep.subr.mxu0 0.0
        %2785 = vmatpush1.msra.mxu0 0.0
        %2786 = vmatprep.subr.mxu0 0.0
        %2787 = vmatpush1.msra.mxu0 0.0
        %2788 = vmatprep.subr.mxu0 0.0
        %2789 = vmatpush1.msra.mxu0 0.0
        %2790 = vmatprep.subr.mxu0 0.0
        %2791 = vmatpush1.msra.mxu0 0.0
        %2792 = vmatprep.subr.mxu0 0.0
        %2793 = vmatpush1.msra.mxu0 0.0
        %2794 = vmatprep.subr.mxu0 0.0
        %2795 = vmatpush1.msra.mxu0 0.0
        %2796 = vmatprep.subr.mxu0 0.0
        %2797 = vmatpush1.msra.mxu0 0.0
        %2798 = vmatprep.subr.mxu0 0.0
        %2799 = vmatpush1.msra.mxu0 0.0
        %2800 = vmatprep.subr.mxu0 0.0
        %2801 = vmatpush1.msra.mxu0 0.0
        %2802 = vmatprep.subr.mxu0 0.0
        %2803 = vmatpush1.msra.mxu0 0.0
        %2804 = vmatprep.subr.mxu0 0.0
        %2805 = vmatpush1.msra.mxu0 0.0
        %2806 = vmatprep.subr.mxu0 0.0
        %2807 = vmatpush1.msra.mxu0 0.0
        %2808 = vmatprep.subr.mxu0 0.0
        %2809 = vmatpush1.msra.mxu0 0.0
        %2810 = vmatprep.subr.mxu0 0.0
        %2811 = vmatpush1.msra.mxu0 0.0
        %2812 = vmatprep.subr.mxu0 0.0
        %2813 = vmatpush1.msra.mxu0 0.0
        %2814 = vmatprep.subr.mxu0 0.0
        %2815 = vmatpush1.msra.mxu0 0.0
        %2816 = vmatprep.subr.mxu0 0.0
        %2817 = vmatpush1.msra.mxu0 0.0
        %2818 = vmatprep.subr.mxu0 0.0
        %2819 = vmatpush1.msra.mxu0 0.0
        %2820 = vmatprep.subr.mxu0 0.0
        %2821 = vmatpush1.msra.mxu0 0.0
        %2822 = vmatprep.subr.mxu0 0.0
        %2823 = vmatpush1.msra.mxu0 0.0
        %2824 = vmatprep.subr.mxu0 0.0
        %2825 = vmatpush1.msra.mxu0 0.0
        %2826 = vmatprep.subr.mxu0 0.0
        %2827 = vmatpush1.msra.mxu0 0.0
        %2828 = vmatprep.subr.mxu0 0.0
        %2829 = vmatpush1.msra.mxu0 0.0
        %2830 = vmatprep.subr.mxu0 0.0
        %2831 = vmatpush1.msra.mxu0 0.0
        %2832 = vmatprep.subr.mxu0 0.0
        %2833 = vmatpush1.msra.mxu0 0.0
        %2834 = vmatprep.subr.mxu0 0.0
        %2835 = vmatpush1.msra.mxu0 0.0
        %2836 = vmatprep.subr.mxu0 0.0
        %2837 = vmatpush1.msra.mxu0 0.0
        %2838 = vmatprep.mubr.f32.mxu0 0.0
        %2839 = vmatmul.mubr.f32.gmra.mrb[0].mxu0 %v2772
        %v2840 = vpop.f32.mrb[0].mxu0
        %v2841 = vadd.f32 0.0, %v2840
        %v2842 = vpop.f32.mrb[0].mxu0
        %v2843 = vadd.f32 0.0, %v2842
        %2844 = vdwg.mxu0
        %2845 = vmatprep.subr.mxu0 0.0
        %2846 = vmatpush1.msra.mxu0 %v2749
        %2847 = vmatprep.subr.mxu0 0.0
        %2848 = vmatpush1.msra.mxu0 %v2752
        %2849 = vmatprep.subr.mxu0 0.0
        %2850 = vmatpush1.msra.mxu0 %v2755
        %2851 = vmatprep.subr.mxu0 0.0
        %2852 = vmatpush1.msra.mxu0 %v2758
        %2853 = vmatprep.subr.mxu0 0.0
        %2854 = vmatpush1.msra.mxu0 0.0
        %2855 = vmatprep.subr.mxu0 0.0
        %2856 = vmatpush1.msra.mxu0 0.0
        %2857 = vmatprep.subr.mxu0 0.0
        %2858 = vmatpush1.msra.mxu0 0.0
        %2859 = vmatprep.subr.mxu0 0.0
        %2860 = vmatpush1.msra.mxu0 0.0
        %2861 = vmatprep.subr.mxu0 0.0
        %2862 = vmatpush1.msra.mxu0 0.0
        %2863 = vmatprep.subr.mxu0 0.0
        %2864 = vmatpush1.msra.mxu0 0.0
        %2865 = vmatprep.subr.mxu0 0.0
        %2866 = vmatpush1.msra.mxu0 0.0
        %2867 = vmatprep.subr.mxu0 0.0
        %2868 = vmatpush1.msra.mxu0 0.0
        %2869 = vmatprep.subr.mxu0 0.0
        %2870 = vmatpush1.msra.mxu0 0.0
        %2871 = vmatprep.subr.mxu0 0.0
        %2872 = vmatpush1.msra.mxu0 0.0
        %2873 = vmatprep.subr.mxu0 0.0
        %2874 = vmatpush1.msra.mxu0 0.0
        %2875 = vmatprep.subr.mxu0 0.0
        %2876 = vmatpush1.msra.mxu0 0.0
        %2877 = vmatprep.subr.mxu0 0.0
        %2878 = vmatpush1.msra.mxu0 0.0
        %2879 = vmatprep.subr.mxu0 0.0
        %2880 = vmatpush1.msra.mxu0 0.0
        %2881 = vmatprep.subr.mxu0 0.0
        %2882 = vmatpush1.msra.mxu0 0.0
        %2883 = vmatprep.subr.mxu0 0.0
        %2884 = vmatpush1.msra.mxu0 0.0
        %2885 = vmatprep.subr.mxu0 0.0
        %2886 = vmatpush1.msra.mxu0 0.0
        %2887 = vmatprep.subr.mxu0 0.0
        %2888 = vmatpush1.msra.mxu0 0.0
        %2889 = vmatprep.subr.mxu0 0.0
        %2890 = vmatpush1.msra.mxu0 0.0
        %2891 = vmatprep.subr.mxu0 0.0
        %2892 = vmatpush1.msra.mxu0 0.0
        %2893 = vmatprep.subr.mxu0 0.0
        %2894 = vmatpush1.msra.mxu0 0.0
        %2895 = vmatprep.subr.mxu0 0.0
        %2896 = vmatpush1.msra.mxu0 0.0
        %2897 = vmatprep.subr.mxu0 0.0
        %2898 = vmatpush1.msra.mxu0 0.0
        %2899 = vmatprep.subr.mxu0 0.0
        %2900 = vmatpush1.msra.mxu0 0.0
        %2901 = vmatprep.subr.mxu0 0.0
        %2902 = vmatpush1.msra.mxu0 0.0
        %2903 = vmatprep.subr.mxu0 0.0
        %2904 = vmatpush1.msra.mxu0 0.0
        %2905 = vmatprep.subr.mxu0 0.0
        %2906 = vmatpush1.msra.mxu0 0.0
        %2907 = vmatprep.subr.mxu0 0.0
        %2908 = vmatpush1.msra.mxu0 0.0
        %2909 = vmatprep.mubr.f32.mxu0 0.0
        %2910 = vmatmul.mubr.f32.gmra.mrb[0].mxu0 %v2772
        %v2911 = vpop.f32.mrb[0].mxu0
        %v2912 = vadd.f32 0.0, %v2911
        %v2913 = vpop.f32.mrb[0].mxu0
        %2914 = vdwg.mxu0
        %v2915 = vadd.f32 %v2639, %v2841
        %v2916 = vadd.f32 %v2641, %v2843
        %v2917 = vadd.f32 %v2710, %v2912
        %s2918 = scalar_lea.vmem %s3, 12
        %v2919 = vld [vmem:[%s2918] sm:$0xf]
        %2920 = vrot.lane.b32.xlu0 %v2277, 1
        %v2921 = vpop.permute.xlu0 %2920
        %2922 = vrot.lane.b32.xlu0 %v2278, 1
        %v2923 = vpop.permute.xlu0 %2922
        %2924 = vrot.lane.b32.xlu0 %v2279, 1
        %v2925 = vpop.permute.xlu0 %2924
        %2926 = vrot.lane.b32.xlu0 %v2280, 1
        %v2927 = vpop.permute.xlu0 %2926
        %2928 = vrot.lane.b32.xlu0 %v2281, 1
        %v2929 = vpop.permute.xlu0 %2928
        %2930 = vrot.lane.b32.xlu0 %v2282, 1
        %v2931 = vpop.permute.xlu0 %2930
        %2932 = vrot.lane.b32.xlu0 %v2283, 1
        %v2933 = vpop.permute.xlu0 %2932
        %2934 = vrot.lane.b32.xlu0 %v2284, 1
        %v2935 = vpop.permute.xlu0 %2934
        %2936 = vrot.lane.b32.xlu0 %v2285, 1
        %v2937 = vpop.permute.xlu0 %2936
        %2938 = vrot.lane.b32.xlu0 %v2286, 1
        %v2939 = vpop.permute.xlu0 %2938
        %2940 = vrot.lane.b32.xlu0 %v2287, 1
        %v2941 = vpop.permute.xlu0 %2940
        %2942 = vrot.lane.b32.xlu0 %v2288, 1
        %v2943 = vpop.permute.xlu0 %2942
        %2944 = vrot.lane.b32.xlu0 %v2289, 1
        %v2945 = vpop.permute.xlu0 %2944
        %2946 = vrot.lane.b32.xlu0 %v2290, 1
        %v2947 = vpop.permute.xlu0 %2946
        %2948 = vrot.lane.b32.xlu0 %v2291, 1
        %v2949 = vpop.permute.xlu0 %2948
        %2950 = vrot.lane.b32.xlu0 %v2292, 1
        %v2951 = vpop.permute.xlu0 %2950
        %v2952 = vsel %vm895, %v2921, %v2923
        %v2953 = vsel %vm895, %v2923, %v2925
        %v2954 = vsel %vm895, %v2925, %v2927
        %v2955 = vsel %vm895, %v2929, %v2931
        %v2956 = vsel %vm895, %v2931, %v2933
        %v2957 = vsel %vm895, %v2933, %v2935
        %v2958 = vsel %vm895, %v2937, %v2939
        %v2959 = vsel %vm895, %v2939, %v2941
        %v2960 = vsel %vm895, %v2941, %v2943
        %v2961 = vsel %vm895, %v2945, %v2947
        %v2962 = vsel %vm895, %v2947, %v2949
        %v2963 = vsel %vm895, %v2949, %v2951
        %v2977 = vsel %vm2368, %v2919, 0
        %2979 = vmatprep.subr.mxu0 %v2953
        %2980 = vmatpush1.msra.mxu0 %v2952
        %2981 = vmatprep.subr.mxu0 %v2956
        %2982 = vmatpush1.msra.mxu0 %v2955
        %2983 = vmatprep.subr.mxu0 %v2959
        %2984 = vmatpush1.msra.mxu0 %v2958
        %2985 = vmatprep.subr.mxu0 %v2962
        %2986 = vmatpush1.msra.mxu0 %v2961
        %2987 = vmatprep.subr.mxu0 0.0
        %2988 = vmatpush1.msra.mxu0 0.0
        %2989 = vmatprep.subr.mxu0 0.0
        %2990 = vmatpush1.msra.mxu0 0.0
        %2991 = vmatprep.subr.mxu0 0.0
        %2992 = vmatpush1.msra.mxu0 0.0
        %2993 = vmatprep.subr.mxu0 0.0
        %2994 = vmatpush1.msra.mxu0 0.0
        %2995 = vmatprep.subr.mxu0 0.0
        %2996 = vmatpush1.msra.mxu0 0.0
        %2997 = vmatprep.subr.mxu0 0.0
        %2998 = vmatpush1.msra.mxu0 0.0
        %2999 = vmatprep.subr.mxu0 0.0
        %3000 = vmatpush1.msra.mxu0 0.0
        %3001 = vmatprep.subr.mxu0 0.0
        %3002 = vmatpush1.msra.mxu0 0.0
        %3003 = vmatprep.subr.mxu0 0.0
        %3004 = vmatpush1.msra.mxu0 0.0
        %3005 = vmatprep.subr.mxu0 0.0
        %3006 = vmatpush1.msra.mxu0 0.0
        %3007 = vmatprep.subr.mxu0 0.0
        %3008 = vmatpush1.msra.mxu0 0.0
        %3009 = vmatprep.subr.mxu0 0.0
        %3010 = vmatpush1.msra.mxu0 0.0
        %3011 = vmatprep.subr.mxu0 0.0
        %3012 = vmatpush1.msra.mxu0 0.0
        %3013 = vmatprep.subr.mxu0 0.0
        %3014 = vmatpush1.msra.mxu0 0.0
        %3015 = vmatprep.subr.mxu0 0.0
        %3016 = vmatpush1.msra.mxu0 0.0
        %3017 = vmatprep.subr.mxu0 0.0
        %3018 = vmatpush1.msra.mxu0 0.0
        %3019 = vmatprep.subr.mxu0 0.0
        %3020 = vmatpush1.msra.mxu0 0.0
        %3021 = vmatprep.subr.mxu0 0.0
        %3022 = vmatpush1.msra.mxu0 0.0
        %3023 = vmatprep.subr.mxu0 0.0
        %3024 = vmatpush1.msra.mxu0 0.0
        %3025 = vmatprep.subr.mxu0 0.0
        %3026 = vmatpush1.msra.mxu0 0.0
        %3027 = vmatprep.subr.mxu0 0.0
        %3028 = vmatpush1.msra.mxu0 0.0
        %3029 = vmatprep.subr.mxu0 0.0
        %3030 = vmatpush1.msra.mxu0 0.0
        %3031 = vmatprep.subr.mxu0 0.0
        %3032 = vmatpush1.msra.mxu0 0.0
        %3033 = vmatprep.subr.mxu0 0.0
        %3034 = vmatpush1.msra.mxu0 0.0
        %3035 = vmatprep.subr.mxu0 0.0
        %3036 = vmatpush1.msra.mxu0 0.0
        %3037 = vmatprep.subr.mxu0 0.0
        %3038 = vmatpush1.msra.mxu0 0.0
        %3039 = vmatprep.subr.mxu0 0.0
        %3040 = vmatpush1.msra.mxu0 0.0
        %3041 = vmatprep.subr.mxu0 0.0
        %3042 = vmatpush1.msra.mxu0 0.0
        %3043 = vmatprep.mubr.f32.mxu0 0.0
        %3044 = vmatmul.mubr.f32.gmra.mrb[0].mxu0 %v2977
        %v3045 = vpop.f32.mrb[0].mxu0
        %v3046 = vadd.f32 0.0, %v3045
        %v3047 = vpop.f32.mrb[0].mxu0
        %v3048 = vadd.f32 0.0, %v3047
        %3049 = vdwg.mxu0
        %3050 = vmatprep.subr.mxu0 0.0
        %3051 = vmatpush1.msra.mxu0 %v2954
        %3052 = vmatprep.subr.mxu0 0.0
        %3053 = vmatpush1.msra.mxu0 %v2957
        %3054 = vmatprep.subr.mxu0 0.0
        %3055 = vmatpush1.msra.mxu0 %v2960
        %3056 = vmatprep.subr.mxu0 0.0
        %3057 = vmatpush1.msra.mxu0 %v2963
        %3058 = vmatprep.subr.mxu0 0.0
        %3059 = vmatpush1.msra.mxu0 0.0
        %3060 = vmatprep.subr.mxu0 0.0
        %3061 = vmatpush1.msra.mxu0 0.0
        %3062 = vmatprep.subr.mxu0 0.0
        %3063 = vmatpush1.msra.mxu0 0.0
        %3064 = vmatprep.subr.mxu0 0.0
        %3065 = vmatpush1.msra.mxu0 0.0
        %3066 = vmatprep.subr.mxu0 0.0
        %3067 = vmatpush1.msra.mxu0 0.0
        %3068 = vmatprep.subr.mxu0 0.0
        %3069 = vmatpush1.msra.mxu0 0.0
        %3070 = vmatprep.subr.mxu0 0.0
        %3071 = vmatpush1.msra.mxu0 0.0
        %3072 = vmatprep.subr.mxu0 0.0
        %3073 = vmatpush1.msra.mxu0 0.0
        %3074 = vmatprep.subr.mxu0 0.0
        %3075 = vmatpush1.msra.mxu0 0.0
        %3076 = vmatprep.subr.mxu0 0.0
        %3077 = vmatpush1.msra.mxu0 0.0
        %3078 = vmatprep.subr.mxu0 0.0
        %3079 = vmatpush1.msra.mxu0 0.0
        %3080 = vmatprep.subr.mxu0 0.0
        %3081 = vmatpush1.msra.mxu0 0.0
        %3082 = vmatprep.subr.mxu0 0.0
        %3083 = vmatpush1.msra.mxu0 0.0
        %3084 = vmatprep.subr.mxu0 0.0
        %3085 = vmatpush1.msra.mxu0 0.0
        %3086 = vmatprep.subr.mxu0 0.0
        %3087 = vmatpush1.msra.mxu0 0.0
        %3088 = vmatprep.subr.mxu0 0.0
        %3089 = vmatpush1.msra.mxu0 0.0
        %3090 = vmatprep.subr.mxu0 0.0
        %3091 = vmatpush1.msra.mxu0 0.0
        %3092 = vmatprep.subr.mxu0 0.0
        %3093 = vmatpush1.msra.mxu0 0.0
        %3094 = vmatprep.subr.mxu0 0.0
        %3095 = vmatpush1.msra.mxu0 0.0
        %3096 = vmatprep.subr.mxu0 0.0
        %3097 = vmatpush1.msra.mxu0 0.0
        %3098 = vmatprep.subr.mxu0 0.0
        %3099 = vmatpush1.msra.mxu0 0.0
        %3100 = vmatprep.subr.mxu0 0.0
        %3101 = vmatpush1.msra.mxu0 0.0
        %3102 = vmatprep.subr.mxu0 0.0
        %3103 = vmatpush1.msra.mxu0 0.0
        %3104 = vmatprep.subr.mxu0 0.0
        %3105 = vmatpush1.msra.mxu0 0.0
        %3106 = vmatprep.subr.mxu0 0.0
        %3107 = vmatpush1.msra.mxu0 0.0
        %3108 = vmatprep.subr.mxu0 0.0
        %3109 = vmatpush1.msra.mxu0 0.0
        %3110 = vmatprep.subr.mxu0 0.0
        %3111 = vmatpush1.msra.mxu0 0.0
        %3112 = vmatprep.subr.mxu0 0.0
        %3113 = vmatpush1.msra.mxu0 0.0
        %3114 = vmatprep.mubr.f32.mxu0 0.0
        %3115 = vmatmul.mubr.f32.gmra.mrb[0].mxu0 %v2977
        %v3116 = vpop.f32.mrb[0].mxu0
        %v3117 = vadd.f32 0.0, %v3116
        %v3118 = vpop.f32.mrb[0].mxu0
        %3119 = vdwg.mxu0
        %v3120 = vadd.f32 %v2915, %v3046
        %v3121 = vadd.f32 %v2916, %v3048
        %v3122 = vadd.f32 %v2917, %v3117
        %s3123 = scalar_lea.vmem %s3, 16
        %v3124 = vld [vmem:[%s3123] sm:$0xf]
        %v3126 = vsel %vm2368, %v3124, 0
        %3128 = vmatprep.subr.mxu0 %v2279
        %3129 = vmatpush1.msra.mxu0 %v2278
        %3130 = vmatprep.subr.mxu0 %v2283
        %3131 = vmatpush1.msra.mxu0 %v2282
        %3132 = vmatprep.subr.mxu0 %v2287
        %3133 = vmatpush1.msra.mxu0 %v2286
        %3134 = vmatprep.subr.mxu0 %v2291
        %3135 = vmatpush1.msra.mxu0 %v2290
        %3136 = vmatprep.subr.mxu0 0.0
        %3137 = vmatpush1.msra.mxu0 0.0
        %3138 = vmatprep.subr.mxu0 0.0
        %3139 = vmatpush1.msra.mxu0 0.0
        %3140 = vmatprep.subr.mxu0 0.0
        %3141 = vmatpush1.msra.mxu0 0.0
        %3142 = vmatprep.subr.mxu0 0.0
        %3143 = vmatpush1.msra.mxu0 0.0
        %3144 = vmatprep.subr.mxu0 0.0
        %3145 = vmatpush1.msra.mxu0 0.0
        %3146 = vmatprep.subr.mxu0 0.0
        %3147 = vmatpush1.msra.mxu0 0.0
        %3148 = vmatprep.subr.mxu0 0.0
        %3149 = vmatpush1.msra.mxu0 0.0
        %3150 = vmatprep.subr.mxu0 0.0
        %3151 = vmatpush1.msra.mxu0 0.0
        %3152 = vmatprep.subr.mxu0 0.0
        %3153 = vmatpush1.msra.mxu0 0.0
        %3154 = vmatprep.subr.mxu0 0.0
        %3155 = vmatpush1.msra.mxu0 0.0
        %3156 = vmatprep.subr.mxu0 0.0
        %3157 = vmatpush1.msra.mxu0 0.0
        %3158 = vmatprep.subr.mxu0 0.0
        %3159 = vmatpush1.msra.mxu0 0.0
        %3160 = vmatprep.subr.mxu0 0.0
        %3161 = vmatpush1.msra.mxu0 0.0
        %3162 = vmatprep.subr.mxu0 0.0
        %3163 = vmatpush1.msra.mxu0 0.0
        %3164 = vmatprep.subr.mxu0 0.0
        %3165 = vmatpush1.msra.mxu0 0.0
        %3166 = vmatprep.subr.mxu0 0.0
        %3167 = vmatpush1.msra.mxu0 0.0
        %3168 = vmatprep.subr.mxu0 0.0
        %3169 = vmatpush1.msra.mxu0 0.0
        %3170 = vmatprep.subr.mxu0 0.0
        %3171 = vmatpush1.msra.mxu0 0.0
        %3172 = vmatprep.subr.mxu0 0.0
        %3173 = vmatpush1.msra.mxu0 0.0
        %3174 = vmatprep.subr.mxu0 0.0
        %3175 = vmatpush1.msra.mxu0 0.0
        %3176 = vmatprep.subr.mxu0 0.0
        %3177 = vmatpush1.msra.mxu0 0.0
        %3178 = vmatprep.subr.mxu0 0.0
        %3179 = vmatpush1.msra.mxu0 0.0
        %3180 = vmatprep.subr.mxu0 0.0
        %3181 = vmatpush1.msra.mxu0 0.0
        %3182 = vmatprep.subr.mxu0 0.0
        %3183 = vmatpush1.msra.mxu0 0.0
        %3184 = vmatprep.subr.mxu0 0.0
        %3185 = vmatpush1.msra.mxu0 0.0
        %3186 = vmatprep.subr.mxu0 0.0
        %3187 = vmatpush1.msra.mxu0 0.0
        %3188 = vmatprep.subr.mxu0 0.0
        %3189 = vmatpush1.msra.mxu0 0.0
        %3190 = vmatprep.subr.mxu0 0.0
        %3191 = vmatpush1.msra.mxu0 0.0
        %3192 = vmatprep.mubr.f32.mxu0 0.0
        %3193 = vmatmul.mubr.f32.gmra.mrb[0].mxu0 %v3126
        %v3194 = vpop.f32.mrb[0].mxu0
        %v3195 = vadd.f32 0.0, %v3194
        %v3196 = vpop.f32.mrb[0].mxu0
        %v3197 = vadd.f32 0.0, %v3196
        %3198 = vdwg.mxu0
        %3199 = vmatprep.subr.mxu0 0.0
        %3200 = vmatpush1.msra.mxu0 %v2280
        %3201 = vmatprep.subr.mxu0 0.0
        %3202 = vmatpush1.msra.mxu0 %v2284
        %3203 = vmatprep.subr.mxu0 0.0
        %3204 = vmatpush1.msra.mxu0 %v2288
        %3205 = vmatprep.subr.mxu0 0.0
        %3206 = vmatpush1.msra.mxu0 %v2292
        %3207 = vmatprep.subr.mxu0 0.0
        %3208 = vmatpush1.msra.mxu0 0.0
        %3209 = vmatprep.subr.mxu0 0.0
        %3210 = vmatpush1.msra.mxu0 0.0
        %3211 = vmatprep.subr.mxu0 0.0
        %3212 = vmatpush1.msra.mxu0 0.0
        %3213 = vmatprep.subr.mxu0 0.0
        %3214 = vmatpush1.msra.mxu0 0.0
        %3215 = vmatprep.subr.mxu0 0.0
        %3216 = vmatpush1.msra.mxu0 0.0
        %3217 = vmatprep.subr.mxu0 0.0
        %3218 = vmatpush1.msra.mxu0 0.0
        %3219 = vmatprep.subr.mxu0 0.0
        %3220 = vmatpush1.msra.mxu0 0.0
        %3221 = vmatprep.subr.mxu0 0.0
        %3222 = vmatpush1.msra.mxu0 0.0
        %3223 = vmatprep.subr.mxu0 0.0
        %3224 = vmatpush1.msra.mxu0 0.0
        %3225 = vmatprep.subr.mxu0 0.0
        %3226 = vmatpush1.msra.mxu0 0.0
        %3227 = vmatprep.subr.mxu0 0.0
        %3228 = vmatpush1.msra.mxu0 0.0
        %3229 = vmatprep.subr.mxu0 0.0
        %3230 = vmatpush1.msra.mxu0 0.0
        %3231 = vmatprep.subr.mxu0 0.0
        %3232 = vmatpush1.msra.mxu0 0.0
        %3233 = vmatprep.subr.mxu0 0.0
        %3234 = vmatpush1.msra.mxu0 0.0
        %3235 = vmatprep.subr.mxu0 0.0
        %3236 = vmatpush1.msra.mxu0 0.0
        %3237 = vmatprep.subr.mxu0 0.0
        %3238 = vmatpush1.msra.mxu0 0.0
        %3239 = vmatprep.subr.mxu0 0.0
        %3240 = vmatpush1.msra.mxu0 0.0
        %3241 = vmatprep.subr.mxu0 0.0
        %3242 = vmatpush1.msra.mxu0 0.0
        %3243 = vmatprep.subr.mxu0 0.0
        %3244 = vmatpush1.msra.mxu0 0.0
        %3245 = vmatprep.subr.mxu0 0.0
        %3246 = vmatpush1.msra.mxu0 0.0
        %3247 = vmatprep.subr.mxu0 0.0
        %3248 = vmatpush1.msra.mxu0 0.0
        %3249 = vmatprep.subr.mxu0 0.0
        %3250 = vmatpush1.msra.mxu0 0.0
        %3251 = vmatprep.subr.mxu0 0.0
        %3252 = vmatpush1.msra.mxu0 0.0
        %3253 = vmatprep.subr.mxu0 0.0
        %3254 = vmatpush1.msra.mxu0 0.0
        %3255 = vmatprep.subr.mxu0 0.0
        %3256 = vmatpush1.msra.mxu0 0.0
        %3257 = vmatprep.subr.mxu0 0.0
        %3258 = vmatpush1.msra.mxu0 0.0
        %3259 = vmatprep.subr.mxu0 0.0
        %3260 = vmatpush1.msra.mxu0 0.0
        %3261 = vmatprep.subr.mxu0 0.0
        %3262 = vmatpush1.msra.mxu0 0.0
        %3263 = vmatprep.mubr.f32.mxu0 0.0
        %3264 = vmatmul.mubr.f32.gmra.mrb[0].mxu0 %v3126
        %v3265 = vpop.f32.mrb[0].mxu0
        %v3266 = vadd.f32 0.0, %v3265
        %v3267 = vpop.f32.mrb[0].mxu0
        %3268 = vdwg.mxu0
        %v3269 = vadd.f32 %v3120, %v3195
        %v3270 = vadd.f32 %v3121, %v3197
        %v3271 = vadd.f32 %v3122, %v3266
        %v3272 = vld [vmem:[#allocation3 + $0x8] sm:$0xff]
        %v3273 = vld [vmem:[#allocation3 + $0x10] sm:$0xff]
        %v3274 = vld [vmem:[#allocation3 + $0x18] sm:$0xff]
        %v3275 = vld [vmem:[#allocation3 + $0x20] sm:$0xff]
        %v3276 = vld [vmem:[#allocation3 + $0x30] sm:$0xff]
        %v3277 = vld [vmem:[#allocation3 + $0x38] sm:$0xff]
        %v3278 = vld [vmem:[#allocation3 + $0x40] sm:$0xff]
        %v3279 = vld [vmem:[#allocation3 + $0x48] sm:$0xff]
        %v3280 = vld [vmem:[#allocation3 + $0x58] sm:$0xff]
        %v3281 = vld [vmem:[#allocation3 + $0x60] sm:$0xff]
        %v3282 = vld [vmem:[#allocation3 + $0x68] sm:$0xff]
        %v3283 = vld [vmem:[#allocation3 + $0x70] sm:$0xff]
        %v3284 = vld [vmem:[#allocation3 + $0x80] sm:$0xff]
        %v3285 = vld [vmem:[#allocation3 + $0x88] sm:$0xff]
        %v3286 = vld [vmem:[#allocation3 + $0x90] sm:$0xff]
        %v3287 = vld [vmem:[#allocation3 + $0x98] sm:$0xff]
        %s3288 = scalar_lea.vmem %s3, 20
        %v3289 = vld [vmem:[%s3288] sm:$0xf]
        %3306 = vrot.lane.b32.xlu0 %v3272, 127
        %v3307 = vpop.permute.xlu0 %3306
        %3308 = vrot.lane.b32.xlu0 %v3273, 127
        %v3309 = vpop.permute.xlu0 %3308
        %3310 = vrot.lane.b32.xlu0 %v3274, 127
        %v3311 = vpop.permute.xlu0 %3310
        %3312 = vrot.lane.b32.xlu0 %v3275, 127
        %v3313 = vpop.permute.xlu0 %3312
        %3314 = vrot.lane.b32.xlu0 %v3276, 127
        %v3315 = vpop.permute.xlu0 %3314
        %3316 = vrot.lane.b32.xlu0 %v3277, 127
        %v3317 = vpop.permute.xlu0 %3316
        %3318 = vrot.lane.b32.xlu0 %v3278, 127
        %v3319 = vpop.permute.xlu0 %3318
        %3320 = vrot.lane.b32.xlu0 %v3279, 127
        %v3321 = vpop.permute.xlu0 %3320
        %3322 = vrot.lane.b32.xlu0 %v3280, 127
        %v3323 = vpop.permute.xlu0 %3322
        %3324 = vrot.lane.b32.xlu0 %v3281, 127
        %v3325 = vpop.permute.xlu0 %3324
        %3326 = vrot.lane.b32.xlu0 %v3282, 127
        %v3327 = vpop.permute.xlu0 %3326
        %3328 = vrot.lane.b32.xlu0 %v3283, 127
        %v3329 = vpop.permute.xlu0 %3328
        %3330 = vrot.lane.b32.xlu0 %v3284, 127
        %v3331 = vpop.permute.xlu0 %3330
        %3332 = vrot.lane.b32.xlu0 %v3285, 127
        %v3333 = vpop.permute.xlu0 %3332
        %3334 = vrot.lane.b32.xlu0 %v3286, 127
        %v3335 = vpop.permute.xlu0 %3334
        %3336 = vrot.lane.b32.xlu0 %v3287, 127
        %v3337 = vpop.permute.xlu0 %3336
        %v3338 = vsel %vm1336, %v3307, %v3309
        %v3339 = vsel %vm1336, %v3309, %v3311
        %v3340 = vsel %vm1336, %v3311, %v3313
        %v3341 = vsel %vm1336, %v3315, %v3317
        %v3342 = vsel %vm1336, %v3317, %v3319
        %v3343 = vsel %vm1336, %v3319, %v3321
        %v3344 = vsel %vm1336, %v3323, %v3325
        %v3345 = vsel %vm1336, %v3325, %v3327
        %v3346 = vsel %vm1336, %v3327, %v3329
        %v3347 = vsel %vm1336, %v3331, %v3333
        %v3348 = vsel %vm1336, %v3333, %v3335
        %v3349 = vsel %vm1336, %v3335, %v3337
        %v3363 = vsel %vm2368, %v3289, 0
        %3365 = vmatprep.subr.mxu0 %v3339
        %3366 = vmatpush1.msra.mxu0 %v3338
        %3367 = vmatprep.subr.mxu0 %v3342
        %3368 = vmatpush1.msra.mxu0 %v3341
        %3369 = vmatprep.subr.mxu0 %v3345
        %3370 = vmatpush1.msra.mxu0 %v3344
        %3371 = vmatprep.subr.mxu0 %v3348
        %3372 = vmatpush1.msra.mxu0 %v3347
        %3373 = vmatprep.subr.mxu0 0.0
        %3374 = vmatpush1.msra.mxu0 0.0
        %3375 = vmatprep.subr.mxu0 0.0
        %3376 = vmatpush1.msra.mxu0 0.0
        %3377 = vmatprep.subr.mxu0 0.0
        %3378 = vmatpush1.msra.mxu0 0.0
        %3379 = vmatprep.subr.mxu0 0.0
        %3380 = vmatpush1.msra.mxu0 0.0
        %3381 = vmatprep.subr.mxu0 0.0
        %3382 = vmatpush1.msra.mxu0 0.0
        %3383 = vmatprep.subr.mxu0 0.0
        %3384 = vmatpush1.msra.mxu0 0.0
        %3385 = vmatprep.subr.mxu0 0.0
        %3386 = vmatpush1.msra.mxu0 0.0
        %3387 = vmatprep.subr.mxu0 0.0
        %3388 = vmatpush1.msra.mxu0 0.0
        %3389 = vmatprep.subr.mxu0 0.0
        %3390 = vmatpush1.msra.mxu0 0.0
        %3391 = vmatprep.subr.mxu0 0.0
        %3392 = vmatpush1.msra.mxu0 0.0
        %3393 = vmatprep.subr.mxu0 0.0
        %3394 = vmatpush1.msra.mxu0 0.0
        %3395 = vmatprep.subr.mxu0 0.0
        %3396 = vmatpush1.msra.mxu0 0.0
        %3397 = vmatprep.subr.mxu0 0.0
        %3398 = vmatpush1.msra.mxu0 0.0
        %3399 = vmatprep.subr.mxu0 0.0
        %3400 = vmatpush1.msra.mxu0 0.0
        %3401 = vmatprep.subr.mxu0 0.0
        %3402 = vmatpush1.msra.mxu0 0.0
        %3403 = vmatprep.subr.mxu0 0.0
        %3404 = vmatpush1.msra.mxu0 0.0
        %3405 = vmatprep.subr.mxu0 0.0
        %3406 = vmatpush1.msra.mxu0 0.0
        %3407 = vmatprep.subr.mxu0 0.0
        %3408 = vmatpush1.msra.mxu0 0.0
        %3409 = vmatprep.subr.mxu0 0.0
        %3410 = vmatpush1.msra.mxu0 0.0
        %3411 = vmatprep.subr.mxu0 0.0
        %3412 = vmatpush1.msra.mxu0 0.0
        %3413 = vmatprep.subr.mxu0 0.0
        %3414 = vmatpush1.msra.mxu0 0.0
        %3415 = vmatprep.subr.mxu0 0.0
        %3416 = vmatpush1.msra.mxu0 0.0
        %3417 = vmatprep.subr.mxu0 0.0
        %3418 = vmatpush1.msra.mxu0 0.0
        %3419 = vmatprep.subr.mxu0 0.0
        %3420 = vmatpush1.msra.mxu0 0.0
        %3421 = vmatprep.subr.mxu0 0.0
        %3422 = vmatpush1.msra.mxu0 0.0
        %3423 = vmatprep.subr.mxu0 0.0
        %3424 = vmatpush1.msra.mxu0 0.0
        %3425 = vmatprep.subr.mxu0 0.0
        %3426 = vmatpush1.msra.mxu0 0.0
        %3427 = vmatprep.subr.mxu0 0.0
        %3428 = vmatpush1.msra.mxu0 0.0
        %3429 = vmatprep.mubr.f32.mxu0 0.0
        %3430 = vmatmul.mubr.f32.gmra.mrb[0].mxu0 %v3363
        %v3431 = vpop.f32.mrb[0].mxu0
        %v3432 = vadd.f32 0.0, %v3431
        %v3433 = vpop.f32.mrb[0].mxu0
        %v3434 = vadd.f32 0.0, %v3433
        %3435 = vdwg.mxu0
        %3436 = vmatprep.subr.mxu0 0.0
        %3437 = vmatpush1.msra.mxu0 %v3340
        %3438 = vmatprep.subr.mxu0 0.0
        %3439 = vmatpush1.msra.mxu0 %v3343
        %3440 = vmatprep.subr.mxu0 0.0
        %3441 = vmatpush1.msra.mxu0 %v3346
        %3442 = vmatprep.subr.mxu0 0.0
        %3443 = vmatpush1.msra.mxu0 %v3349
        %3444 = vmatprep.subr.mxu0 0.0
        %3445 = vmatpush1.msra.mxu0 0.0
        %3446 = vmatprep.subr.mxu0 0.0
        %3447 = vmatpush1.msra.mxu0 0.0
        %3448 = vmatprep.subr.mxu0 0.0
        %3449 = vmatpush1.msra.mxu0 0.0
        %3450 = vmatprep.subr.mxu0 0.0
        %3451 = vmatpush1.msra.mxu0 0.0
        %3452 = vmatprep.subr.mxu0 0.0
        %3453 = vmatpush1.msra.mxu0 0.0
        %3454 = vmatprep.subr.mxu0 0.0
        %3455 = vmatpush1.msra.mxu0 0.0
        %3456 = vmatprep.subr.mxu0 0.0
        %3457 = vmatpush1.msra.mxu0 0.0
        %3458 = vmatprep.subr.mxu0 0.0
        %3459 = vmatpush1.msra.mxu0 0.0
        %3460 = vmatprep.subr.mxu0 0.0
        %3461 = vmatpush1.msra.mxu0 0.0
        %3462 = vmatprep.subr.mxu0 0.0
        %3463 = vmatpush1.msra.mxu0 0.0
        %3464 = vmatprep.subr.mxu0 0.0
        %3465 = vmatpush1.msra.mxu0 0.0
        %3466 = vmatprep.subr.mxu0 0.0
        %3467 = vmatpush1.msra.mxu0 0.0
        %3468 = vmatprep.subr.mxu0 0.0
        %3469 = vmatpush1.msra.mxu0 0.0
        %3470 = vmatprep.subr.mxu0 0.0
        %3471 = vmatpush1.msra.mxu0 0.0
        %3472 = vmatprep.subr.mxu0 0.0
        %3473 = vmatpush1.msra.mxu0 0.0
        %3474 = vmatprep.subr.mxu0 0.0
        %3475 = vmatpush1.msra.mxu0 0.0
        %3476 = vmatprep.subr.mxu0 0.0
        %3477 = vmatpush1.msra.mxu0 0.0
        %3478 = vmatprep.subr.mxu0 0.0
        %3479 = vmatpush1.msra.mxu0 0.0
        %3480 = vmatprep.subr.mxu0 0.0
        %3481 = vmatpush1.msra.mxu0 0.0
        %3482 = vmatprep.subr.mxu0 0.0
        %3483 = vmatpush1.msra.mxu0 0.0
        %3484 = vmatprep.subr.mxu0 0.0
        %3485 = vmatpush1.msra.mxu0 0.0
        %3486 = vmatprep.subr.mxu0 0.0
        %3487 = vmatpush1.msra.mxu0 0.0
        %3488 = vmatprep.subr.mxu0 0.0
        %3489 = vmatpush1.msra.mxu0 0.0
        %3490 = vmatprep.subr.mxu0 0.0
        %3491 = vmatpush1.msra.mxu0 0.0
        %3492 = vmatprep.subr.mxu0 0.0
        %3493 = vmatpush1.msra.mxu0 0.0
        %3494 = vmatprep.subr.mxu0 0.0
        %3495 = vmatpush1.msra.mxu0 0.0
        %3496 = vmatprep.subr.mxu0 0.0
        %3497 = vmatpush1.msra.mxu0 0.0
        %3498 = vmatprep.subr.mxu0 0.0
        %3499 = vmatpush1.msra.mxu0 0.0
        %3500 = vmatprep.mubr.f32.mxu0 0.0
        %3501 = vmatmul.mubr.f32.gmra.mrb[0].mxu0 %v3363
        %v3502 = vpop.f32.mrb[0].mxu0
        %v3503 = vadd.f32 0.0, %v3502
        %v3504 = vpop.f32.mrb[0].mxu0
        %3505 = vdwg.mxu0
        %v3506 = vadd.f32 %v3269, %v3432
        %v3507 = vadd.f32 %v3270, %v3434
        %v3508 = vadd.f32 %v3271, %v3503
        %s3509 = scalar_lea.vmem %s3, 24
        %v3510 = vld [vmem:[%s3509] sm:$0xf]
        %3511 = vrot.lane.b32.xlu0 %v3272, 111
        %v3512 = vpop.permute.xlu0 %3511
        %3513 = vrot.lane.b32.xlu0 %v3273, 111
        %v3514 = vpop.permute.xlu0 %3513
        %3515 = vrot.lane.b32.xlu0 %v3274, 111
        %v3516 = vpop.permute.xlu0 %3515
        %3517 = vrot.lane.b32.xlu0 %v3275, 111
        %v3518 = vpop.permute.xlu0 %3517
        %3519 = vrot.lane.b32.xlu0 %v3276, 111
        %v3520 = vpop.permute.xlu0 %3519
        %3521 = vrot.lane.b32.xlu0 %v3277, 111
        %v3522 = vpop.permute.xlu0 %3521
        %3523 = vrot.lane.b32.xlu0 %v3278, 111
        %v3524 = vpop.permute.xlu0 %3523
        %3525 = vrot.lane.b32.xlu0 %v3279, 111
        %v3526 = vpop.permute.xlu0 %3525
        %3527 = vrot.lane.b32.xlu0 %v3280, 111
        %v3528 = vpop.permute.xlu0 %3527
        %3529 = vrot.lane.b32.xlu0 %v3281, 111
        %v3530 = vpop.permute.xlu0 %3529
        %3531 = vrot.lane.b32.xlu0 %v3282, 111
        %v3532 = vpop.permute.xlu0 %3531
        %3533 = vrot.lane.b32.xlu0 %v3283, 111
        %v3534 = vpop.permute.xlu0 %3533
        %3535 = vrot.lane.b32.xlu0 %v3284, 111
        %v3536 = vpop.permute.xlu0 %3535
        %3537 = vrot.lane.b32.xlu0 %v3285, 111
        %v3538 = vpop.permute.xlu0 %3537
        %3539 = vrot.lane.b32.xlu0 %v3286, 111
        %v3540 = vpop.permute.xlu0 %3539
        %3541 = vrot.lane.b32.xlu0 %v3287, 111
        %v3542 = vpop.permute.xlu0 %3541
        %v3543 = vsel %vm1563, %v3512, %v3514
        %v3544 = vsel %vm1563, %v3514, %v3516
        %v3545 = vsel %vm1563, %v3516, %v3518
        %v3546 = vsel %vm1563, %v3520, %v3522
        %v3547 = vsel %vm1563, %v3522, %v3524
        %v3548 = vsel %vm1563, %v3524, %v3526
        %v3549 = vsel %vm1563, %v3528, %v3530
        %v3550 = vsel %vm1563, %v3530, %v3532
        %v3551 = vsel %vm1563, %v3532, %v3534
        %v3552 = vsel %vm1563, %v3536, %v3538
        %v3553 = vsel %vm1563, %v3538, %v3540
        %v3554 = vsel %vm1563, %v3540, %v3542
        %v3568 = vsel %vm2368, %v3510, 0
        %3570 = vmatprep.subr.mxu0 %v3544
        %3571 = vmatpush1.msra.mxu0 %v3543
        %3572 = vmatprep.subr.mxu0 %v3547
        %3573 = vmatpush1.msra.mxu0 %v3546
        %3574 = vmatprep.subr.mxu0 %v3550
        %3575 = vmatpush1.msra.mxu0 %v3549
        %3576 = vmatprep.subr.mxu0 %v3553
        %3577 = vmatpush1.msra.mxu0 %v3552
        %3578 = vmatprep.subr.mxu0 0.0
        %3579 = vmatpush1.msra.mxu0 0.0
        %3580 = vmatprep.subr.mxu0 0.0
        %3581 = vmatpush1.msra.mxu0 0.0
        %3582 = vmatprep.subr.mxu0 0.0
        %3583 = vmatpush1.msra.mxu0 0.0
        %3584 = vmatprep.subr.mxu0 0.0
        %3585 = vmatpush1.msra.mxu0 0.0
        %3586 = vmatprep.subr.mxu0 0.0
        %3587 = vmatpush1.msra.mxu0 0.0
        %3588 = vmatprep.subr.mxu0 0.0
        %3589 = vmatpush1.msra.mxu0 0.0
        %3590 = vmatprep.subr.mxu0 0.0
        %3591 = vmatpush1.msra.mxu0 0.0
        %3592 = vmatprep.subr.mxu0 0.0
        %3593 = vmatpush1.msra.mxu0 0.0
        %3594 = vmatprep.subr.mxu0 0.0
        %3595 = vmatpush1.msra.mxu0 0.0
        %3596 = vmatprep.subr.mxu0 0.0
        %3597 = vmatpush1.msra.mxu0 0.0
        %3598 = vmatprep.subr.mxu0 0.0
        %3599 = vmatpush1.msra.mxu0 0.0
        %3600 = vmatprep.subr.mxu0 0.0
        %3601 = vmatpush1.msra.mxu0 0.0
        %3602 = vmatprep.subr.mxu0 0.0
        %3603 = vmatpush1.msra.mxu0 0.0
        %3604 = vmatprep.subr.mxu0 0.0
        %3605 = vmatpush1.msra.mxu0 0.0
        %3606 = vmatprep.subr.mxu0 0.0
        %3607 = vmatpush1.msra.mxu0 0.0
        %3608 = vmatprep.subr.mxu0 0.0
        %3609 = vmatpush1.msra.mxu0 0.0
        %3610 = vmatprep.subr.mxu0 0.0
        %3611 = vmatpush1.msra.mxu0 0.0
        %3612 = vmatprep.subr.mxu0 0.0
        %3613 = vmatpush1.msra.mxu0 0.0
        %3614 = vmatprep.subr.mxu0 0.0
        %3615 = vmatpush1.msra.mxu0 0.0
        %3616 = vmatprep.subr.mxu0 0.0
        %3617 = vmatpush1.msra.mxu0 0.0
        %3618 = vmatprep.subr.mxu0 0.0
        %3619 = vmatpush1.msra.mxu0 0.0
        %3620 = vmatprep.subr.mxu0 0.0
        %3621 = vmatpush1.msra.mxu0 0.0
        %3622 = vmatprep.subr.mxu0 0.0
        %3623 = vmatpush1.msra.mxu0 0.0
        %3624 = vmatprep.subr.mxu0 0.0
        %3625 = vmatpush1.msra.mxu0 0.0
        %3626 = vmatprep.subr.mxu0 0.0
        %3627 = vmatpush1.msra.mxu0 0.0
        %3628 = vmatprep.subr.mxu0 0.0
        %3629 = vmatpush1.msra.mxu0 0.0
        %3630 = vmatprep.subr.mxu0 0.0
        %3631 = vmatpush1.msra.mxu0 0.0
        %3632 = vmatprep.subr.mxu0 0.0
        %3633 = vmatpush1.msra.mxu0 0.0
        %3634 = vmatprep.mubr.f32.mxu0 0.0
        %3635 = vmatmul.mubr.f32.gmra.mrb[0].mxu0 %v3568
        %v3636 = vpop.f32.mrb[0].mxu0
        %v3637 = vadd.f32 0.0, %v3636
        %v3638 = vpop.f32.mrb[0].mxu0
        %v3639 = vadd.f32 0.0, %v3638
        %3640 = vdwg.mxu0
        %3641 = vmatprep.subr.mxu0 0.0
        %3642 = vmatpush1.msra.mxu0 %v3545
        %3643 = vmatprep.subr.mxu0 0.0
        %3644 = vmatpush1.msra.mxu0 %v3548
        %3645 = vmatprep.subr.mxu0 0.0
        %3646 = vmatpush1.msra.mxu0 %v3551
        %3647 = vmatprep.subr.mxu0 0.0
        %3648 = vmatpush1.msra.mxu0 %v3554
        %3649 = vmatprep.subr.mxu0 0.0
        %3650 = vmatpush1.msra.mxu0 0.0
        %3651 = vmatprep.subr.mxu0 0.0
        %3652 = vmatpush1.msra.mxu0 0.0
        %3653 = vmatprep.subr.mxu0 0.0
        %3654 = vmatpush1.msra.mxu0 0.0
        %3655 = vmatprep.subr.mxu0 0.0
        %3656 = vmatpush1.msra.mxu0 0.0
        %3657 = vmatprep.subr.mxu0 0.0
        %3658 = vmatpush1.msra.mxu0 0.0
        %3659 = vmatprep.subr.mxu0 0.0
        %3660 = vmatpush1.msra.mxu0 0.0
        %3661 = vmatprep.subr.mxu0 0.0
        %3662 = vmatpush1.msra.mxu0 0.0
        %3663 = vmatprep.subr.mxu0 0.0
        %3664 = vmatpush1.msra.mxu0 0.0
        %3665 = vmatprep.subr.mxu0 0.0
        %3666 = vmatpush1.msra.mxu0 0.0
        %3667 = vmatprep.subr.mxu0 0.0
        %3668 = vmatpush1.msra.mxu0 0.0
        %3669 = vmatprep.subr.mxu0 0.0
        %3670 = vmatpush1.msra.mxu0 0.0
        %3671 = vmatprep.subr.mxu0 0.0
        %3672 = vmatpush1.msra.mxu0 0.0
        %3673 = vmatprep.subr.mxu0 0.0
        %3674 = vmatpush1.msra.mxu0 0.0
        %3675 = vmatprep.subr.mxu0 0.0
        %3676 = vmatpush1.msra.mxu0 0.0
        %3677 = vmatprep.subr.mxu0 0.0
        %3678 = vmatpush1.msra.mxu0 0.0
        %3679 = vmatprep.subr.mxu0 0.0
        %3680 = vmatpush1.msra.mxu0 0.0
        %3681 = vmatprep.subr.mxu0 0.0
        %3682 = vmatpush1.msra.mxu0 0.0
        %3683 = vmatprep.subr.mxu0 0.0
        %3684 = vmatpush1.msra.mxu0 0.0
        %3685 = vmatprep.subr.mxu0 0.0
        %3686 = vmatpush1.msra.mxu0 0.0
        %3687 = vmatprep.subr.mxu0 0.0
        %3688 = vmatpush1.msra.mxu0 0.0
        %3689 = vmatprep.subr.mxu0 0.0
        %3690 = vmatpush1.msra.mxu0 0.0
        %3691 = vmatprep.subr.mxu0 0.0
        %3692 = vmatpush1.msra.mxu0 0.0
        %3693 = vmatprep.subr.mxu0 0.0
        %3694 = vmatpush1.msra.mxu0 0.0
        %3695 = vmatprep.subr.mxu0 0.0
        %3696 = vmatpush1.msra.mxu0 0.0
        %3697 = vmatprep.subr.mxu0 0.0
        %3698 = vmatpush1.msra.mxu0 0.0
        %3699 = vmatprep.subr.mxu0 0.0
        %3700 = vmatpush1.msra.mxu0 0.0
        %3701 = vmatprep.subr.mxu0 0.0
        %3702 = vmatpush1.msra.mxu0 0.0
        %3703 = vmatprep.subr.mxu0 0.0
        %3704 = vmatpush1.msra.mxu0 0.0
        %3705 = vmatprep.mubr.f32.mxu0 0.0
        %3706 = vmatmul.mubr.f32.gmra.mrb[0].mxu0 %v3568
        %v3707 = vpop.f32.mrb[0].mxu0
        %v3708 = vadd.f32 0.0, %v3707
        %v3709 = vpop.f32.mrb[0].mxu0
        %3710 = vdwg.mxu0
        %v3711 = vadd.f32 %v3506, %v3637
        %v3712 = vadd.f32 %v3507, %v3639
        %v3713 = vadd.f32 %v3508, %v3708
        %s3714 = scalar_lea.vmem %s3, 28
        %v3715 = vld [vmem:[%s3714] sm:$0xf]
        %3716 = vrot.lane.b32.xlu0 %v3272, 110
        %v3717 = vpop.permute.xlu0 %3716
        %3718 = vrot.lane.b32.xlu0 %v3273, 110
        %v3719 = vpop.permute.xlu0 %3718
        %3720 = vrot.lane.b32.xlu0 %v3274, 110
        %v3721 = vpop.permute.xlu0 %3720
        %3722 = vrot.lane.b32.xlu0 %v3275, 110
        %v3723 = vpop.permute.xlu0 %3722
        %3724 = vrot.lane.b32.xlu0 %v3276, 110
        %v3725 = vpop.permute.xlu0 %3724
        %3726 = vrot.lane.b32.xlu0 %v3277, 110
        %v3727 = vpop.permute.xlu0 %3726
        %3728 = vrot.lane.b32.xlu0 %v3278, 110
        %v3729 = vpop.permute.xlu0 %3728
        %3730 = vrot.lane.b32.xlu0 %v3279, 110
        %v3731 = vpop.permute.xlu0 %3730
        %3732 = vrot.lane.b32.xlu0 %v3280, 110
        %v3733 = vpop.permute.xlu0 %3732
        %3734 = vrot.lane.b32.xlu0 %v3281, 110
        %v3735 = vpop.permute.xlu0 %3734
        %3736 = vrot.lane.b32.xlu0 %v3282, 110
        %v3737 = vpop.permute.xlu0 %3736
        %3738 = vrot.lane.b32.xlu0 %v3283, 110
        %v3739 = vpop.permute.xlu0 %3738
        %3740 = vrot.lane.b32.xlu0 %v3284, 110
        %v3741 = vpop.permute.xlu0 %3740
        %3742 = vrot.lane.b32.xlu0 %v3285, 110
        %v3743 = vpop.permute.xlu0 %3742
        %3744 = vrot.lane.b32.xlu0 %v3286, 110
        %v3745 = vpop.permute.xlu0 %3744
        %3746 = vrot.lane.b32.xlu0 %v3287, 110
        %v3747 = vpop.permute.xlu0 %3746
        %v3748 = vsel %vm1790, %v3717, %v3719
        %v3749 = vsel %vm1790, %v3719, %v3721
        %v3750 = vsel %vm1790, %v3721, %v3723
        %v3751 = vsel %vm1790, %v3725, %v3727
        %v3752 = vsel %vm1790, %v3727, %v3729
        %v3753 = vsel %vm1790, %v3729, %v3731
        %v3754 = vsel %vm1790, %v3733, %v3735
        %v3755 = vsel %vm1790, %v3735, %v3737
        %v3756 = vsel %vm1790, %v3737, %v3739
        %v3757 = vsel %vm1790, %v3741, %v3743
        %v3758 = vsel %vm1790, %v3743, %v3745
        %v3759 = vsel %vm1790, %v3745, %v3747
        %v3773 = vsel %vm2368, %v3715, 0
        %3775 = vmatprep.subr.mxu0 %v3749
        %3776 = vmatpush1.msra.mxu0 %v3748
        %3777 = vmatprep.subr.mxu0 %v3752
        %3778 = vmatpush1.msra.mxu0 %v3751
        %3779 = vmatprep.subr.mxu0 %v3755
        %3780 = vmatpush1.msra.mxu0 %v3754
        %3781 = vmatprep.subr.mxu0 %v3758
        %3782 = vmatpush1.msra.mxu0 %v3757
        %3783 = vmatprep.subr.mxu0 0.0
        %3784 = vmatpush1.msra.mxu0 0.0
        %3785 = vmatprep.subr.mxu0 0.0
        %3786 = vmatpush1.msra.mxu0 0.0
        %3787 = vmatprep.subr.mxu0 0.0
        %3788 = vmatpush1.msra.mxu0 0.0
        %3789 = vmatprep.subr.mxu0 0.0
        %3790 = vmatpush1.msra.mxu0 0.0
        %3791 = vmatprep.subr.mxu0 0.0
        %3792 = vmatpush1.msra.mxu0 0.0
        %3793 = vmatprep.subr.mxu0 0.0
        %3794 = vmatpush1.msra.mxu0 0.0
        %3795 = vmatprep.subr.mxu0 0.0
        %3796 = vmatpush1.msra.mxu0 0.0
        %3797 = vmatprep.subr.mxu0 0.0
        %3798 = vmatpush1.msra.mxu0 0.0
        %3799 = vmatprep.subr.mxu0 0.0
        %3800 = vmatpush1.msra.mxu0 0.0
        %3801 = vmatprep.subr.mxu0 0.0
        %3802 = vmatpush1.msra.mxu0 0.0
        %3803 = vmatprep.subr.mxu0 0.0
        %3804 = vmatpush1.msra.mxu0 0.0
        %3805 = vmatprep.subr.mxu0 0.0
        %3806 = vmatpush1.msra.mxu0 0.0
        %3807 = vmatprep.subr.mxu0 0.0
        %3808 = vmatpush1.msra.mxu0 0.0
        %3809 = vmatprep.subr.mxu0 0.0
        %3810 = vmatpush1.msra.mxu0 0.0
        %3811 = vmatprep.subr.mxu0 0.0
        %3812 = vmatpush1.msra.mxu0 0.0
        %3813 = vmatprep.subr.mxu0 0.0
        %3814 = vmatpush1.msra.mxu0 0.0
        %3815 = vmatprep.subr.mxu0 0.0
        %3816 = vmatpush1.msra.mxu0 0.0
        %3817 = vmatprep.subr.mxu0 0.0
        %3818 = vmatpush1.msra.mxu0 0.0
        %3819 = vmatprep.subr.mxu0 0.0
        %3820 = vmatpush1.msra.mxu0 0.0
        %3821 = vmatprep.subr.mxu0 0.0
        %3822 = vmatpush1.msra.mxu0 0.0
        %3823 = vmatprep.subr.mxu0 0.0
        %3824 = vmatpush1.msra.mxu0 0.0
        %3825 = vmatprep.subr.mxu0 0.0
        %3826 = vmatpush1.msra.mxu0 0.0
        %3827 = vmatprep.subr.mxu0 0.0
        %3828 = vmatpush1.msra.mxu0 0.0
        %3829 = vmatprep.subr.mxu0 0.0
        %3830 = vmatpush1.msra.mxu0 0.0
        %3831 = vmatprep.subr.mxu0 0.0
        %3832 = vmatpush1.msra.mxu0 0.0
        %3833 = vmatprep.subr.mxu0 0.0
        %3834 = vmatpush1.msra.mxu0 0.0
        %3835 = vmatprep.subr.mxu0 0.0
        %3836 = vmatpush1.msra.mxu0 0.0
        %3837 = vmatprep.subr.mxu0 0.0
        %3838 = vmatpush1.msra.mxu0 0.0
        %3839 = vmatprep.mubr.f32.mxu0 0.0
        %3840 = vmatmul.mubr.f32.gmra.mrb[0].mxu0 %v3773
        %v3841 = vpop.f32.mrb[0].mxu0
        %v3842 = vadd.f32 0.0, %v3841
        %v3843 = vpop.f32.mrb[0].mxu0
        %v3844 = vadd.f32 0.0, %v3843
        %3845 = vdwg.mxu0
        %3846 = vmatprep.subr.mxu0 0.0
        %3847 = vmatpush1.msra.mxu0 %v3750
        %3848 = vmatprep.subr.mxu0 0.0
        %3849 = vmatpush1.msra.mxu0 %v3753
        %3850 = vmatprep.subr.mxu0 0.0
        %3851 = vmatpush1.msra.mxu0 %v3756
        %3852 = vmatprep.subr.mxu0 0.0
        %3853 = vmatpush1.msra.mxu0 %v3759
        %3854 = vmatprep.subr.mxu0 0.0
        %3855 = vmatpush1.msra.mxu0 0.0
        %3856 = vmatprep.subr.mxu0 0.0
        %3857 = vmatpush1.msra.mxu0 0.0
        %3858 = vmatprep.subr.mxu0 0.0
        %3859 = vmatpush1.msra.mxu0 0.0
        %3860 = vmatprep.subr.mxu0 0.0
        %3861 = vmatpush1.msra.mxu0 0.0
        %3862 = vmatprep.subr.mxu0 0.0
        %3863 = vmatpush1.msra.mxu0 0.0
        %3864 = vmatprep.subr.mxu0 0.0
        %3865 = vmatpush1.msra.mxu0 0.0
        %3866 = vmatprep.subr.mxu0 0.0
        %3867 = vmatpush1.msra.mxu0 0.0
        %3868 = vmatprep.subr.mxu0 0.0
        %3869 = vmatpush1.msra.mxu0 0.0
        %3870 = vmatprep.subr.mxu0 0.0
        %3871 = vmatpush1.msra.mxu0 0.0
        %3872 = vmatprep.subr.mxu0 0.0
        %3873 = vmatpush1.msra.mxu0 0.0
        %3874 = vmatprep.subr.mxu0 0.0
        %3875 = vmatpush1.msra.mxu0 0.0
        %3876 = vmatprep.subr.mxu0 0.0
        %3877 = vmatpush1.msra.mxu0 0.0
        %3878 = vmatprep.subr.mxu0 0.0
        %3879 = vmatpush1.msra.mxu0 0.0
        %3880 = vmatprep.subr.mxu0 0.0
        %3881 = vmatpush1.msra.mxu0 0.0
        %3882 = vmatprep.subr.mxu0 0.0
        %3883 = vmatpush1.msra.mxu0 0.0
        %3884 = vmatprep.subr.mxu0 0.0
        %3885 = vmatpush1.msra.mxu0 0.0
        %3886 = vmatprep.subr.mxu0 0.0
        %3887 = vmatpush1.msra.mxu0 0.0
        %3888 = vmatprep.subr.mxu0 0.0
        %3889 = vmatpush1.msra.mxu0 0.0
        %3890 = vmatprep.subr.mxu0 0.0
        %3891 = vmatpush1.msra.mxu0 0.0
        %3892 = vmatprep.subr.mxu0 0.0
        %3893 = vmatpush1.msra.mxu0 0.0
        %3894 = vmatprep.subr.mxu0 0.0
        %3895 = vmatpush1.msra.mxu0 0.0
        %3896 = vmatprep.subr.mxu0 0.0
        %3897 = vmatpush1.msra.mxu0 0.0
        %3898 = vmatprep.subr.mxu0 0.0
        %3899 = vmatpush1.msra.mxu0 0.0
        %3900 = vmatprep.subr.mxu0 0.0
        %3901 = vmatpush1.msra.mxu0 0.0
        %3902 = vmatprep.subr.mxu0 0.0
        %3903 = vmatpush1.msra.mxu0 0.0
        %3904 = vmatprep.subr.mxu0 0.0
        %3905 = vmatpush1.msra.mxu0 0.0
        %3906 = vmatprep.subr.mxu0 0.0
        %3907 = vmatpush1.msra.mxu0 0.0
        %3908 = vmatprep.subr.mxu0 0.0
        %3909 = vmatpush1.msra.mxu0 0.0
        %3910 = vmatprep.mubr.f32.mxu0 0.0
        %3911 = vmatmul.mubr.f32.gmra.mrb[0].mxu0 %v3773
        %v3912 = vpop.f32.mrb[0].mxu0
        %v3913 = vadd.f32 0.0, %v3912
        %v3914 = vpop.f32.mrb[0].mxu0
        %3915 = vdwg.mxu0
        %v3916 = vadd.f32 %v3711, %v3842
        %v3917 = vadd.f32 %v3712, %v3844
        %v3918 = vadd.f32 %v3713, %v3913
        %s3919 = scalar_lea.vmem %s3, 32
        %v3920 = vld [vmem:[%s3919] sm:$0xf]
        %3921 = vrot.lane.b32.xlu0 %v3272, 109
        %v3922 = vpop.permute.xlu0 %3921
        %3923 = vrot.lane.b32.xlu0 %v3273, 109
        %v3924 = vpop.permute.xlu0 %3923
        %3925 = vrot.lane.b32.xlu0 %v3274, 109
        %v3926 = vpop.permute.xlu0 %3925
        %3927 = vrot.lane.b32.xlu0 %v3275, 109
        %v3928 = vpop.permute.xlu0 %3927
        %3929 = vrot.lane.b32.xlu0 %v3276, 109
        %v3930 = vpop.permute.xlu0 %3929
        %3931 = vrot.lane.b32.xlu0 %v3277, 109
        %v3932 = vpop.permute.xlu0 %3931
        %3933 = vrot.lane.b32.xlu0 %v3278, 109
        %v3934 = vpop.permute.xlu0 %3933
        %3935 = vrot.lane.b32.xlu0 %v3279, 109
        %v3936 = vpop.permute.xlu0 %3935
        %3937 = vrot.lane.b32.xlu0 %v3280, 109
        %v3938 = vpop.permute.xlu0 %3937
        %3939 = vrot.lane.b32.xlu0 %v3281, 109
        %v3940 = vpop.permute.xlu0 %3939
        %3941 = vrot.lane.b32.xlu0 %v3282, 109
        %v3942 = vpop.permute.xlu0 %3941
        %3943 = vrot.lane.b32.xlu0 %v3283, 109
        %v3944 = vpop.permute.xlu0 %3943
        %3945 = vrot.lane.b32.xlu0 %v3284, 109
        %v3946 = vpop.permute.xlu0 %3945
        %3947 = vrot.lane.b32.xlu0 %v3285, 109
        %v3948 = vpop.permute.xlu0 %3947
        %3949 = vrot.lane.b32.xlu0 %v3286, 109
        %v3950 = vpop.permute.xlu0 %3949
        %3951 = vrot.lane.b32.xlu0 %v3287, 109
        %v3952 = vpop.permute.xlu0 %3951
        %v3953 = vsel %vm2017, %v3922, %v3924
        %v3954 = vsel %vm2017, %v3924, %v3926
        %v3955 = vsel %vm2017, %v3926, %v3928
        %v3956 = vsel %vm2017, %v3930, %v3932
        %v3957 = vsel %vm2017, %v3932, %v3934
        %v3958 = vsel %vm2017, %v3934, %v3936
        %v3959 = vsel %vm2017, %v3938, %v3940
        %v3960 = vsel %vm2017, %v3940, %v3942
        %v3961 = vsel %vm2017, %v3942, %v3944
        %v3962 = vsel %vm2017, %v3946, %v3948
        %v3963 = vsel %vm2017, %v3948, %v3950
        %v3964 = vsel %vm2017, %v3950, %v3952
        %v3978 = vsel %vm2368, %v3920, 0
        %3980 = vmatprep.subr.mxu0 %v3954
        %3981 = vmatpush1.msra.mxu0 %v3953
        %3982 = vmatprep.subr.mxu0 %v3957
        %3983 = vmatpush1.msra.mxu0 %v3956
        %3984 = vmatprep.subr.mxu0 %v3960
        %3985 = vmatpush1.msra.mxu0 %v3959
        %3986 = vmatprep.subr.mxu0 %v3963
        %3987 = vmatpush1.msra.mxu0 %v3962
        %3988 = vmatprep.subr.mxu0 0.0
        %3989 = vmatpush1.msra.mxu0 0.0
        %3990 = vmatprep.subr.mxu0 0.0
        %3991 = vmatpush1.msra.mxu0 0.0
        %3992 = vmatprep.subr.mxu0 0.0
        %3993 = vmatpush1.msra.mxu0 0.0
        %3994 = vmatprep.subr.mxu0 0.0
        %3995 = vmatpush1.msra.mxu0 0.0
        %3996 = vmatprep.subr.mxu0 0.0
        %3997 = vmatpush1.msra.mxu0 0.0
        %3998 = vmatprep.subr.mxu0 0.0
        %3999 = vmatpush1.msra.mxu0 0.0
        %4000 = vmatprep.subr.mxu0 0.0
        %4001 = vmatpush1.msra.mxu0 0.0
        %4002 = vmatprep.subr.mxu0 0.0
        %4003 = vmatpush1.msra.mxu0 0.0
        %4004 = vmatprep.subr.mxu0 0.0
        %4005 = vmatpush1.msra.mxu0 0.0
        %4006 = vmatprep.subr.mxu0 0.0
        %4007 = vmatpush1.msra.mxu0 0.0
        %4008 = vmatprep.subr.mxu0 0.0
        %4009 = vmatpush1.msra.mxu0 0.0
        %4010 = vmatprep.subr.mxu0 0.0
        %4011 = vmatpush1.msra.mxu0 0.0
        %4012 = vmatprep.subr.mxu0 0.0
        %4013 = vmatpush1.msra.mxu0 0.0
        %4014 = vmatprep.subr.mxu0 0.0
        %4015 = vmatpush1.msra.mxu0 0.0
        %4016 = vmatprep.subr.mxu0 0.0
        %4017 = vmatpush1.msra.mxu0 0.0
        %4018 = vmatprep.subr.mxu0 0.0
        %4019 = vmatpush1.msra.mxu0 0.0
        %4020 = vmatprep.subr.mxu0 0.0
        %4021 = vmatpush1.msra.mxu0 0.0
        %4022 = vmatprep.subr.mxu0 0.0
        %4023 = vmatpush1.msra.mxu0 0.0
        %4024 = vmatprep.subr.mxu0 0.0
        %4025 = vmatpush1.msra.mxu0 0.0
        %4026 = vmatprep.subr.mxu0 0.0
        %4027 = vmatpush1.msra.mxu0 0.0
        %4028 = vmatprep.subr.mxu0 0.0
        %4029 = vmatpush1.msra.mxu0 0.0
        %4030 = vmatprep.subr.mxu0 0.0
        %4031 = vmatpush1.msra.mxu0 0.0
        %4032 = vmatprep.subr.mxu0 0.0
        %4033 = vmatpush1.msra.mxu0 0.0
        %4034 = vmatprep.subr.mxu0 0.0
        %4035 = vmatpush1.msra.mxu0 0.0
        %4036 = vmatprep.subr.mxu0 0.0
        %4037 = vmatpush1.msra.mxu0 0.0
        %4038 = vmatprep.subr.mxu0 0.0
        %4039 = vmatpush1.msra.mxu0 0.0
        %4040 = vmatprep.subr.mxu0 0.0
        %4041 = vmatpush1.msra.mxu0 0.0
        %4042 = vmatprep.subr.mxu0 0.0
        %4043 = vmatpush1.msra.mxu0 0.0
        %4044 = vmatprep.mubr.f32.mxu0 0.0
        %4045 = vmatmul.mubr.f32.gmra.mrb[0].mxu0 %v3978
        %v4046 = vpop.f32.mrb[0].mxu0
        %v4047 = vadd.f32 0.0, %v4046
        %v4048 = vpop.f32.mrb[0].mxu0
        %v4049 = vadd.f32 0.0, %v4048
        %4050 = vdwg.mxu0
        %4051 = vmatprep.subr.mxu0 0.0
        %4052 = vmatpush1.msra.mxu0 %v3955
        %4053 = vmatprep.subr.mxu0 0.0
        %4054 = vmatpush1.msra.mxu0 %v3958
        %4055 = vmatprep.subr.mxu0 0.0
        %4056 = vmatpush1.msra.mxu0 %v3961
        %4057 = vmatprep.subr.mxu0 0.0
        %4058 = vmatpush1.msra.mxu0 %v3964
        %4059 = vmatprep.subr.mxu0 0.0
        %4060 = vmatpush1.msra.mxu0 0.0
        %4061 = vmatprep.subr.mxu0 0.0
        %4062 = vmatpush1.msra.mxu0 0.0
        %4063 = vmatprep.subr.mxu0 0.0
        %4064 = vmatpush1.msra.mxu0 0.0
        %4065 = vmatprep.subr.mxu0 0.0
        %4066 = vmatpush1.msra.mxu0 0.0
        %4067 = vmatprep.subr.mxu0 0.0
        %4068 = vmatpush1.msra.mxu0 0.0
        %4069 = vmatprep.subr.mxu0 0.0
        %4070 = vmatpush1.msra.mxu0 0.0
        %4071 = vmatprep.subr.mxu0 0.0
        %4072 = vmatpush1.msra.mxu0 0.0
        %4073 = vmatprep.subr.mxu0 0.0
        %4074 = vmatpush1.msra.mxu0 0.0
        %4075 = vmatprep.subr.mxu0 0.0
        %4076 = vmatpush1.msra.mxu0 0.0
        %4077 = vmatprep.subr.mxu0 0.0
        %4078 = vmatpush1.msra.mxu0 0.0
        %4079 = vmatprep.subr.mxu0 0.0
        %4080 = vmatpush1.msra.mxu0 0.0
        %4081 = vmatprep.subr.mxu0 0.0
        %4082 = vmatpush1.msra.mxu0 0.0
        %4083 = vmatprep.subr.mxu0 0.0
        %4084 = vmatpush1.msra.mxu0 0.0
        %4085 = vmatprep.subr.mxu0 0.0
        %4086 = vmatpush1.msra.mxu0 0.0
        %4087 = vmatprep.subr.mxu0 0.0
        %4088 = vmatpush1.msra.mxu0 0.0
        %4089 = vmatprep.subr.mxu0 0.0
        %4090 = vmatpush1.msra.mxu0 0.0
        %4091 = vmatprep.subr.mxu0 0.0
        %4092 = vmatpush1.msra.mxu0 0.0
        %4093 = vmatprep.subr.mxu0 0.0
        %4094 = vmatpush1.msra.mxu0 0.0
        %4095 = vmatprep.subr.mxu0 0.0
        %4096 = vmatpush1.msra.mxu0 0.0
        %4097 = vmatprep.subr.mxu0 0.0
        %4098 = vmatpush1.msra.mxu0 0.0
        %4099 = vmatprep.subr.mxu0 0.0
        %4100 = vmatpush1.msra.mxu0 0.0
        %4101 = vmatprep.subr.mxu0 0.0
        %4102 = vmatpush1.msra.mxu0 0.0
        %4103 = vmatprep.subr.mxu0 0.0
        %4104 = vmatpush1.msra.mxu0 0.0
        %4105 = vmatprep.subr.mxu0 0.0
        %4106 = vmatpush1.msra.mxu0 0.0
        %4107 = vmatprep.subr.mxu0 0.0
        %4108 = vmatpush1.msra.mxu0 0.0
        %4109 = vmatprep.subr.mxu0 0.0
        %4110 = vmatpush1.msra.mxu0 0.0
        %4111 = vmatprep.subr.mxu0 0.0
        %4112 = vmatpush1.msra.mxu0 0.0
        %4113 = vmatprep.subr.mxu0 0.0
        %4114 = vmatpush1.msra.mxu0 0.0
        %4115 = vmatprep.mubr.f32.mxu0 0.0
        %4116 = vmatmul.mubr.f32.gmra.mrb[0].mxu0 %v3978
        %v4117 = vpop.f32.mrb[0].mxu0
        %v4118 = vadd.f32 0.0, %v4117
        %v4119 = vpop.f32.mrb[0].mxu0
        %4120 = vdwg.mxu0
        %v4121 = vadd.f32 %v3916, %v4047
        %v4122 = vadd.f32 %v3917, %v4049
        %v4123 = vadd.f32 %v3918, %v4118
        %v4126 = vcombine.low %v4121, %v4122
        %v4128 = vadd.f32 %v220, %v4126
        %v4129 = vadd.f32 %v221, %v4123
        %v4130 = vmax.f32 %v4128, 0.0
        %v4131 = vmax.f32 %v4129, 0.0
        %v4133 = vcombine.high %v4130, %v4130
        %v4135 = vsel %vm2250, %v4130, 0.0
        %v4136 = vsel %vm2251, %v4133, 0.0
        %v4137 = vsel %vm2252, %v4131, 0.0
        %v4140 = vcombine.low %v4135, %v4136
        %4142 = vst [vmem:[#allocation2 + $0x4] sm:$0xff] %v4140
        %4143 = vst [vmem:[#allocation2 + $0xc] sm:$0xf] %v4137
        %v4144 = vld [vmem:[#allocation2] sm:$0xff]
        %v4145 = vld [vmem:[#allocation2 + $0x8] sm:$0xff]
        %s4146 = scalar_lea.vmem %s2, 288
        %v4147 = vld [vmem:[%s4146] sm:$0xff]
        %v4148 = vld [vmem:[%s4146 + $0x8] sm:$0xff]
        %v4149 = vld [vmem:[%s4146 + $0x10] sm:$0xff]
        %v4150 = vld [vmem:[%s4146 + $0x18] sm:$0xff]
        %s4151 = scalar_lea.vmem %s2, 320
        %v4152 = vld [vmem:[%s4151] sm:$0xff]
        %v4153 = vld [vmem:[%s4151 + $0x8] sm:$0xff]
        %v4154 = vld [vmem:[%s4151 + $0x10] sm:$0xff]
        %v4155 = vld [vmem:[%s4151 + $0x18] sm:$0xff]
        %v4158 = vcombine.high %v4144, %v4144
        %v4159 = vcombine.high %v4145, %v4145
        %4160 = vrot.lane.b32.xlu0 %v4144, 18
        %v4161 = vpop.permute.xlu0 %4160
        %4162 = vrot.lane.b32.xlu0 %v4158, 18
        %v4163 = vpop.permute.xlu0 %4162
        %4164 = vrot.lane.b32.xlu0 %v4145, 18
        %v4165 = vpop.permute.xlu0 %4164
        %4166 = vrot.lane.b32.xlu0 %v4159, 18
        %v4167 = vpop.permute.xlu0 %4166
        %v4168 = vsel %vm247, %v4161, %v4163
        %v4169 = vsel %vm247, %v4163, %v4165
        %v4170 = vsel %vm247, %v4165, %v4167
        %v4172 = vsel %vm251, %v4152, 0
        %v4175 = vsel %vm251, %v4153, 0
        %v4178 = vsel %vm251, %v4154, 0
        %v4181 = vsel %vm251, %v4155, 0
        %v4183 = vsel %vm264, %v4168, 0
        %v4185 = vsel %vm264, %v4169, 0
        %v4187 = vsel %vm264, %v4170, 0
        %4189 = vmatprep.subr.mxu0 %v4185
        %4190 = vmatpush1.msra.mxu0 %v4183
        %4191 = vmatprep.subr.mxu0 0.0
        %4192 = vmatpush1.msra.mxu0 0.0
        %4193 = vmatprep.subr.mxu0 0.0
        %4194 = vmatpush1.msra.mxu0 0.0
        %4195 = vmatprep.subr.mxu0 0.0
        %4196 = vmatpush1.msra.mxu0 0.0
        %4197 = vmatprep.subr.mxu0 0.0
        %4198 = vmatpush1.msra.mxu0 0.0
        %4199 = vmatprep.subr.mxu0 0.0
        %4200 = vmatpush1.msra.mxu0 0.0
        %4201 = vmatprep.subr.mxu0 0.0
        %4202 = vmatpush1.msra.mxu0 0.0
        %4203 = vmatprep.subr.mxu0 0.0
        %4204 = vmatpush1.msra.mxu0 0.0
        %4205 = vmatprep.subr.mxu0 0.0
        %4206 = vmatpush1.msra.mxu0 0.0
        %4207 = vmatprep.subr.mxu0 0.0
        %4208 = vmatpush1.msra.mxu0 0.0
        %4209 = vmatprep.subr.mxu0 0.0
        %4210 = vmatpush1.msra.mxu0 0.0
        %4211 = vmatprep.subr.mxu0 0.0
        %4212 = vmatpush1.msra.mxu0 0.0
        %4213 = vmatprep.subr.mxu0 0.0
        %4214 = vmatpush1.msra.mxu0 0.0
        %4215 = vmatprep.subr.mxu0 0.0
        %4216 = vmatpush1.msra.mxu0 0.0
        %4217 = vmatprep.subr.mxu0 0.0
        %4218 = vmatpush1.msra.mxu0 0.0
        %4219 = vmatprep.subr.mxu0 0.0
        %4220 = vmatpush1.msra.mxu0 0.0
        %4221 = vmatprep.subr.mxu0 0.0
        %4222 = vmatpush1.msra.mxu0 0.0
        %4223 = vmatprep.subr.mxu0 0.0
        %4224 = vmatpush1.msra.mxu0 0.0
        %4225 = vmatprep.subr.mxu0 0.0
        %4226 = vmatpush1.msra.mxu0 0.0
        %4227 = vmatprep.subr.mxu0 0.0
        %4228 = vmatpush1.msra.mxu0 0.0
        %4229 = vmatprep.subr.mxu0 0.0
        %4230 = vmatpush1.msra.mxu0 0.0
        %4231 = vmatprep.subr.mxu0 0.0
        %4232 = vmatpush1.msra.mxu0 0.0
        %4233 = vmatprep.subr.mxu0 0.0
        %4234 = vmatpush1.msra.mxu0 0.0
        %4235 = vmatprep.subr.mxu0 0.0
        %4236 = vmatpush1.msra.mxu0 0.0
        %4237 = vmatprep.subr.mxu0 0.0
        %4238 = vmatpush1.msra.mxu0 0.0
        %4239 = vmatprep.subr.mxu0 0.0
        %4240 = vmatpush1.msra.mxu0 0.0
        %4241 = vmatprep.subr.mxu0 0.0
        %4242 = vmatpush1.msra.mxu0 0.0
        %4243 = vmatprep.subr.mxu0 0.0
        %4244 = vmatpush1.msra.mxu0 0.0
        %4245 = vmatprep.subr.mxu0 0.0
        %4246 = vmatpush1.msra.mxu0 0.0
        %4247 = vmatprep.subr.mxu0 0.0
        %4248 = vmatpush1.msra.mxu0 0.0
        %4249 = vmatprep.subr.mxu0 0.0
        %4250 = vmatpush1.msra.mxu0 0.0
        %4251 = vmatprep.subr.mxu0 0.0
        %4252 = vmatpush1.msra.mxu0 0.0
        %4253 = vmatprep.mubr.f32.mxu0 0.0
        %4254 = vmatmul.mubr.f32.gmra.mrb[0].mxu0 %v4172
        %v4255 = vpop.f32.mrb[0].mxu0
        %v4256 = vadd.f32 0.0, %v4255
        %v4257 = vpop.f32.mrb[0].mxu0
        %v4258 = vadd.f32 0.0, %v4257
        %4259 = vmatprep.mubr.f32.mxu0 0.0
        %4260 = vmatmul.mubr.f32.gmra.mrb[0].mxu0 %v4175
        %v4261 = vpop.f32.mrb[0].mxu0
        %v4262 = vadd.f32 0.0, %v4261
        %v4263 = vpop.f32.mrb[0].mxu0
        %v4264 = vadd.f32 0.0, %v4263
        %4265 = vmatprep.mubr.f32.mxu0 0.0
        %4266 = vmatmul.mubr.f32.gmra.mrb[0].mxu0 %v4178
        %v4267 = vpop.f32.mrb[0].mxu0
        %v4268 = vadd.f32 0.0, %v4267
        %v4269 = vpop.f32.mrb[0].mxu0
        %v4270 = vadd.f32 0.0, %v4269
        %4271 = vmatprep.mubr.f32.mxu0 0.0
        %4272 = vmatmul.mubr.f32.gmra.mrb[0].mxu0 %v4181
        %v4273 = vpop.f32.mrb[0].mxu0
        %v4274 = vadd.f32 0.0, %v4273
        %v4275 = vpop.f32.mrb[0].mxu0
        %v4276 = vadd.f32 0.0, %v4275
        %4277 = vdwg.mxu0
        %4278 = vmatprep.subr.mxu0 0.0
        %4279 = vmatpush1.msra.mxu0 %v4187
        %4280 = vmatprep.subr.mxu0 0.0
        %4281 = vmatpush1.msra.mxu0 0.0
        %4282 = vmatprep.subr.mxu0 0.0
        %4283 = vmatpush1.msra.mxu0 0.0
        %4284 = vmatprep.subr.mxu0 0.0
        %4285 = vmatpush1.msra.mxu0 0.0
        %4286 = vmatprep.subr.mxu0 0.0
        %4287 = vmatpush1.msra.mxu0 0.0
        %4288 = vmatprep.subr.mxu0 0.0
        %4289 = vmatpush1.msra.mxu0 0.0
        %4290 = vmatprep.subr.mxu0 0.0
        %4291 = vmatpush1.msra.mxu0 0.0
        %4292 = vmatprep.subr.mxu0 0.0
        %4293 = vmatpush1.msra.mxu0 0.0
        %4294 = vmatprep.subr.mxu0 0.0
        %4295 = vmatpush1.msra.mxu0 0.0
        %4296 = vmatprep.subr.mxu0 0.0
        %4297 = vmatpush1.msra.mxu0 0.0
        %4298 = vmatprep.subr.mxu0 0.0
        %4299 = vmatpush1.msra.mxu0 0.0
        %4300 = vmatprep.subr.mxu0 0.0
        %4301 = vmatpush1.msra.mxu0 0.0
        %4302 = vmatprep.subr.mxu0 0.0
        %4303 = vmatpush1.msra.mxu0 0.0
        %4304 = vmatprep.subr.mxu0 0.0
        %4305 = vmatpush1.msra.mxu0 0.0
        %4306 = vmatprep.subr.mxu0 0.0
        %4307 = vmatpush1.msra.mxu0 0.0
        %4308 = vmatprep.subr.mxu0 0.0
        %4309 = vmatpush1.msra.mxu0 0.0
        %4310 = vmatprep.subr.mxu0 0.0
        %4311 = vmatpush1.msra.mxu0 0.0
        %4312 = vmatprep.subr.mxu0 0.0
        %4313 = vmatpush1.msra.mxu0 0.0
        %4314 = vmatprep.subr.mxu0 0.0
        %4315 = vmatpush1.msra.mxu0 0.0
        %4316 = vmatprep.subr.mxu0 0.0
        %4317 = vmatpush1.msra.mxu0 0.0
        %4318 = vmatprep.subr.mxu0 0.0
        %4319 = vmatpush1.msra.mxu0 0.0
        %4320 = vmatprep.subr.mxu0 0.0
        %4321 = vmatpush1.msra.mxu0 0.0
        %4322 = vmatprep.subr.mxu0 0.0
        %4323 = vmatpush1.msra.mxu0 0.0
        %4324 = vmatprep.subr.mxu0 0.0
        %4325 = vmatpush1.msra.mxu0 0.0
        %4326 = vmatprep.subr.mxu0 0.0
        %4327 = vmatpush1.msra.mxu0 0.0
        %4328 = vmatprep.subr.mxu0 0.0
        %4329 = vmatpush1.msra.mxu0 0.0
        %4330 = vmatprep.subr.mxu0 0.0
        %4331 = vmatpush1.msra.mxu0 0.0
        %4332 = vmatprep.subr.mxu0 0.0
        %4333 = vmatpush1.msra.mxu0 0.0
        %4334 = vmatprep.subr.mxu0 0.0
        %4335 = vmatpush1.msra.mxu0 0.0
        %4336 = vmatprep.subr.mxu0 0.0
        %4337 = vmatpush1.msra.mxu0 0.0
        %4338 = vmatprep.subr.mxu0 0.0
        %4339 = vmatpush1.msra.mxu0 0.0
        %4340 = vmatprep.subr.mxu0 0.0
        %4341 = vmatpush1.msra.mxu0 0.0
        %4342 = vmatprep.mubr.f32.mxu0 0.0
        %4343 = vmatmul.mubr.f32.gmra.mrb[0].mxu0 %v4172
        %v4344 = vpop.f32.mrb[0].mxu0
        %v4345 = vadd.f32 0.0, %v4344
        %v4346 = vpop.f32.mrb[0].mxu0
        %4347 = vmatprep.mubr.f32.mxu0 0.0
        %4348 = vmatmul.mubr.f32.gmra.mrb[0].mxu0 %v4175
        %v4349 = vpop.f32.mrb[0].mxu0
        %v4350 = vadd.f32 0.0, %v4349
        %v4351 = vpop.f32.mrb[0].mxu0
        %4352 = vmatprep.mubr.f32.mxu0 0.0
        %4353 = vmatmul.mubr.f32.gmra.mrb[0].mxu0 %v4178
        %v4354 = vpop.f32.mrb[0].mxu0
        %v4355 = vadd.f32 0.0, %v4354
        %v4356 = vpop.f32.mrb[0].mxu0
        %4357 = vmatprep.mubr.f32.mxu0 0.0
        %4358 = vmatmul.mubr.f32.gmra.mrb[0].mxu0 %v4181
        %v4359 = vpop.f32.mrb[0].mxu0
        %v4360 = vadd.f32 0.0, %v4359
        %v4361 = vpop.f32.mrb[0].mxu0
        %4362 = vdwg.mxu0
        %4363 = vrot.lane.b32.xlu0 %v4144, 19
        %v4364 = vpop.permute.xlu0 %4363
        %4365 = vrot.lane.b32.xlu0 %v4158, 19
        %v4366 = vpop.permute.xlu0 %4365
        %4367 = vrot.lane.b32.xlu0 %v4145, 19
        %v4368 = vpop.permute.xlu0 %4367
        %4369 = vrot.lane.b32.xlu0 %v4159, 19
        %v4370 = vpop.permute.xlu0 %4369
        %v4371 = vsel %vm453, %v4364, %v4366
        %v4372 = vsel %vm453, %v4366, %v4368
        %v4373 = vsel %vm453, %v4368, %v4370
        %v4375 = vsel %vm251, %v4147, 0
        %v4378 = vsel %vm251, %v4148, 0
        %v4381 = vsel %vm251, %v4149, 0
        %v4384 = vsel %vm251, %v4150, 0
        %v4386 = vsel %vm264, %v4371, 0
        %v4388 = vsel %vm264, %v4372, 0
        %v4390 = vsel %vm264, %v4373, 0
        %4392 = vmatprep.subr.mxu0 %v4388
        %4393 = vmatpush1.msra.mxu0 %v4386
        %4394 = vmatprep.subr.mxu0 0.0
        %4395 = vmatpush1.msra.mxu0 0.0
        %4396 = vmatprep.subr.mxu0 0.0
        %4397 = vmatpush1.msra.mxu0 0.0
        %4398 = vmatprep.subr.mxu0 0.0
        %4399 = vmatpush1.msra.mxu0 0.0
        %4400 = vmatprep.subr.mxu0 0.0
        %4401 = vmatpush1.msra.mxu0 0.0
        %4402 = vmatprep.subr.mxu0 0.0
        %4403 = vmatpush1.msra.mxu0 0.0
        %4404 = vmatprep.subr.mxu0 0.0
        %4405 = vmatpush1.msra.mxu0 0.0
        %4406 = vmatprep.subr.mxu0 0.0
        %4407 = vmatpush1.msra.mxu0 0.0
        %4408 = vmatprep.subr.mxu0 0.0
        %4409 = vmatpush1.msra.mxu0 0.0
        %4410 = vmatprep.subr.mxu0 0.0
        %4411 = vmatpush1.msra.mxu0 0.0
        %4412 = vmatprep.subr.mxu0 0.0
        %4413 = vmatpush1.msra.mxu0 0.0
        %4414 = vmatprep.subr.mxu0 0.0
        %4415 = vmatpush1.msra.mxu0 0.0
        %4416 = vmatprep.subr.mxu0 0.0
        %4417 = vmatpush1.msra.mxu0 0.0
        %4418 = vmatprep.subr.mxu0 0.0
        %4419 = vmatpush1.msra.mxu0 0.0
        %4420 = vmatprep.subr.mxu0 0.0
        %4421 = vmatpush1.msra.mxu0 0.0
        %4422 = vmatprep.subr.mxu0 0.0
        %4423 = vmatpush1.msra.mxu0 0.0
        %4424 = vmatprep.subr.mxu0 0.0
        %4425 = vmatpush1.msra.mxu0 0.0
        %4426 = vmatprep.subr.mxu0 0.0
        %4427 = vmatpush1.msra.mxu0 0.0
        %4428 = vmatprep.subr.mxu0 0.0
        %4429 = vmatpush1.msra.mxu0 0.0
        %4430 = vmatprep.subr.mxu0 0.0
        %4431 = vmatpush1.msra.mxu0 0.0
        %4432 = vmatprep.subr.mxu0 0.0
        %4433 = vmatpush1.msra.mxu0 0.0
        %4434 = vmatprep.subr.mxu0 0.0
        %4435 = vmatpush1.msra.mxu0 0.0
        %4436 = vmatprep.subr.mxu0 0.0
        %4437 = vmatpush1.msra.mxu0 0.0
        %4438 = vmatprep.subr.mxu0 0.0
        %4439 = vmatpush1.msra.mxu0 0.0
        %4440 = vmatprep.subr.mxu0 0.0
        %4441 = vmatpush1.msra.mxu0 0.0
        %4442 = vmatprep.subr.mxu0 0.0
        %4443 = vmatpush1.msra.mxu0 0.0
        %4444 = vmatprep.subr.mxu0 0.0
        %4445 = vmatpush1.msra.mxu0 0.0
        %4446 = vmatprep.subr.mxu0 0.0
        %4447 = vmatpush1.msra.mxu0 0.0
        %4448 = vmatprep.subr.mxu0 0.0
        %4449 = vmatpush1.msra.mxu0 0.0
        %4450 = vmatprep.subr.mxu0 0.0
        %4451 = vmatpush1.msra.mxu0 0.0
        %4452 = vmatprep.subr.mxu0 0.0
        %4453 = vmatpush1.msra.mxu0 0.0
        %4454 = vmatprep.subr.mxu0 0.0
        %4455 = vmatpush1.msra.mxu0 0.0
        %4456 = vmatprep.mubr.f32.mxu0 0.0
        %4457 = vmatmul.mubr.f32.gmra.mrb[0].mxu0 %v4375
        %v4458 = vpop.f32.mrb[0].mxu0
        %v4459 = vadd.f32 %v4256, %v4458
        %v4460 = vpop.f32.mrb[0].mxu0
        %v4461 = vadd.f32 %v4258, %v4460
        %4462 = vmatprep.mubr.f32.mxu0 0.0
        %4463 = vmatmul.mubr.f32.gmra.mrb[0].mxu0 %v4378
        %v4464 = vpop.f32.mrb[0].mxu0
        %v4465 = vadd.f32 %v4262, %v4464
        %v4466 = vpop.f32.mrb[0].mxu0
        %v4467 = vadd.f32 %v4264, %v4466
        %4468 = vmatprep.mubr.f32.mxu0 0.0
        %4469 = vmatmul.mubr.f32.gmra.mrb[0].mxu0 %v4381
        %v4470 = vpop.f32.mrb[0].mxu0
        %v4471 = vadd.f32 %v4268, %v4470
        %v4472 = vpop.f32.mrb[0].mxu0
        %v4473 = vadd.f32 %v4270, %v4472
        %4474 = vmatprep.mubr.f32.mxu0 0.0
        %4475 = vmatmul.mubr.f32.gmra.mrb[0].mxu0 %v4384
        %v4476 = vpop.f32.mrb[0].mxu0
        %v4477 = vadd.f32 %v4274, %v4476
        %v4478 = vpop.f32.mrb[0].mxu0
        %v4479 = vadd.f32 %v4276, %v4478
        %4480 = vdwg.mxu0
        %4481 = vmatprep.subr.mxu0 0.0
        %4482 = vmatpush1.msra.mxu0 %v4390
        %4483 = vmatprep.subr.mxu0 0.0
        %4484 = vmatpush1.msra.mxu0 0.0
        %4485 = vmatprep.subr.mxu0 0.0
        %4486 = vmatpush1.msra.mxu0 0.0
        %4487 = vmatprep.subr.mxu0 0.0
        %4488 = vmatpush1.msra.mxu0 0.0
        %4489 = vmatprep.subr.mxu0 0.0
        %4490 = vmatpush1.msra.mxu0 0.0
        %4491 = vmatprep.subr.mxu0 0.0
        %4492 = vmatpush1.msra.mxu0 0.0
        %4493 = vmatprep.subr.mxu0 0.0
        %4494 = vmatpush1.msra.mxu0 0.0
        %4495 = vmatprep.subr.mxu0 0.0
        %4496 = vmatpush1.msra.mxu0 0.0
        %4497 = vmatprep.subr.mxu0 0.0
        %4498 = vmatpush1.msra.mxu0 0.0
        %4499 = vmatprep.subr.mxu0 0.0
        %4500 = vmatpush1.msra.mxu0 0.0
        %4501 = vmatprep.subr.mxu0 0.0
        %4502 = vmatpush1.msra.mxu0 0.0
        %4503 = vmatprep.subr.mxu0 0.0
        %4504 = vmatpush1.msra.mxu0 0.0
        %4505 = vmatprep.subr.mxu0 0.0
        %4506 = vmatpush1.msra.mxu0 0.0
        %4507 = vmatprep.subr.mxu0 0.0
        %4508 = vmatpush1.msra.mxu0 0.0
        %4509 = vmatprep.subr.mxu0 0.0
        %4510 = vmatpush1.msra.mxu0 0.0
        %4511 = vmatprep.subr.mxu0 0.0
        %4512 = vmatpush1.msra.mxu0 0.0
        %4513 = vmatprep.subr.mxu0 0.0
        %4514 = vmatpush1.msra.mxu0 0.0
        %4515 = vmatprep.subr.mxu0 0.0
        %4516 = vmatpush1.msra.mxu0 0.0
        %4517 = vmatprep.subr.mxu0 0.0
        %4518 = vmatpush1.msra.mxu0 0.0
        %4519 = vmatprep.subr.mxu0 0.0
        %4520 = vmatpush1.msra.mxu0 0.0
        %4521 = vmatprep.subr.mxu0 0.0
        %4522 = vmatpush1.msra.mxu0 0.0
        %4523 = vmatprep.subr.mxu0 0.0
        %4524 = vmatpush1.msra.mxu0 0.0
        %4525 = vmatprep.subr.mxu0 0.0
        %4526 = vmatpush1.msra.mxu0 0.0
        %4527 = vmatprep.subr.mxu0 0.0
        %4528 = vmatpush1.msra.mxu0 0.0
        %4529 = vmatprep.subr.mxu0 0.0
        %4530 = vmatpush1.msra.mxu0 0.0
        %4531 = vmatprep.subr.mxu0 0.0
        %4532 = vmatpush1.msra.mxu0 0.0
        %4533 = vmatprep.subr.mxu0 0.0
        %4534 = vmatpush1.msra.mxu0 0.0
        %4535 = vmatprep.subr.mxu0 0.0
        %4536 = vmatpush1.msra.mxu0 0.0
        %4537 = vmatprep.subr.mxu0 0.0
        %4538 = vmatpush1.msra.mxu0 0.0
        %4539 = vmatprep.subr.mxu0 0.0
        %4540 = vmatpush1.msra.mxu0 0.0
        %4541 = vmatprep.subr.mxu0 0.0
        %4542 = vmatpush1.msra.mxu0 0.0
        %4543 = vmatprep.subr.mxu0 0.0
        %4544 = vmatpush1.msra.mxu0 0.0
        %4545 = vmatprep.mubr.f32.mxu0 0.0
        %4546 = vmatmul.mubr.f32.gmra.mrb[0].mxu0 %v4375
        %v4547 = vpop.f32.mrb[0].mxu0
        %v4548 = vadd.f32 %v4345, %v4547
        %v4549 = vpop.f32.mrb[0].mxu0
        %4550 = vmatprep.mubr.f32.mxu0 0.0
        %4551 = vmatmul.mubr.f32.gmra.mrb[0].mxu0 %v4378
        %v4552 = vpop.f32.mrb[0].mxu0
        %v4553 = vadd.f32 %v4350, %v4552
        %v4554 = vpop.f32.mrb[0].mxu0
        %4555 = vmatprep.mubr.f32.mxu0 0.0
        %4556 = vmatmul.mubr.f32.gmra.mrb[0].mxu0 %v4381
        %v4557 = vpop.f32.mrb[0].mxu0
        %v4558 = vadd.f32 %v4355, %v4557
        %v4559 = vpop.f32.mrb[0].mxu0
        %4560 = vmatprep.mubr.f32.mxu0 0.0
        %4561 = vmatmul.mubr.f32.gmra.mrb[0].mxu0 %v4384
        %v4562 = vpop.f32.mrb[0].mxu0
        %v4563 = vadd.f32 %v4360, %v4562
        %v4564 = vpop.f32.mrb[0].mxu0
        %4565 = vdwg.mxu0
        %v4566 = vld [vmem:[#allocation2] sm:$0xff]
        %v4567 = vld [vmem:[#allocation2 + $0x8] sm:$0xff]
        %s4568 = scalar_lea.vmem %s2, 352
        %v4569 = vld [vmem:[%s4568] sm:$0xff]
        %v4570 = vld [vmem:[%s4568 + $0x8] sm:$0xff]
        %v4571 = vld [vmem:[%s4568 + $0x10] sm:$0xff]
        %v4572 = vld [vmem:[%s4568 + $0x18] sm:$0xff]
        %v4575 = vcombine.high %v4566, %v4566
        %v4576 = vcombine.high %v4567, %v4567
        %4577 = vrot.lane.b32.xlu0 %v4566, 17
        %v4578 = vpop.permute.xlu0 %4577
        %4579 = vrot.lane.b32.xlu0 %v4575, 17
        %v4580 = vpop.permute.xlu0 %4579
        %4581 = vrot.lane.b32.xlu0 %v4567, 17
        %v4582 = vpop.permute.xlu0 %4581
        %4583 = vrot.lane.b32.xlu0 %v4576, 17
        %v4584 = vpop.permute.xlu0 %4583
        %v4585 = vsel %vm668, %v4578, %v4580
        %v4586 = vsel %vm668, %v4580, %v4582
        %v4587 = vsel %vm668, %v4582, %v4584
        %v4589 = vsel %vm251, %v4569, 0
        %v4592 = vsel %vm251, %v4570, 0
        %v4595 = vsel %vm251, %v4571, 0
        %v4598 = vsel %vm251, %v4572, 0
        %v4600 = vsel %vm264, %v4585, 0
        %v4602 = vsel %vm264, %v4586, 0
        %v4604 = vsel %vm264, %v4587, 0
        %4606 = vmatprep.subr.mxu0 %v4602
        %4607 = vmatpush1.msra.mxu0 %v4600
        %4608 = vmatprep.subr.mxu0 0.0
        %4609 = vmatpush1.msra.mxu0 0.0
        %4610 = vmatprep.subr.mxu0 0.0
        %4611 = vmatpush1.msra.mxu0 0.0
        %4612 = vmatprep.subr.mxu0 0.0
        %4613 = vmatpush1.msra.mxu0 0.0
        %4614 = vmatprep.subr.mxu0 0.0
        %4615 = vmatpush1.msra.mxu0 0.0
        %4616 = vmatprep.subr.mxu0 0.0
        %4617 = vmatpush1.msra.mxu0 0.0
        %4618 = vmatprep.subr.mxu0 0.0
        %4619 = vmatpush1.msra.mxu0 0.0
        %4620 = vmatprep.subr.mxu0 0.0
        %4621 = vmatpush1.msra.mxu0 0.0
        %4622 = vmatprep.subr.mxu0 0.0
        %4623 = vmatpush1.msra.mxu0 0.0
        %4624 = vmatprep.subr.mxu0 0.0
        %4625 = vmatpush1.msra.mxu0 0.0
        %4626 = vmatprep.subr.mxu0 0.0
        %4627 = vmatpush1.msra.mxu0 0.0
        %4628 = vmatprep.subr.mxu0 0.0
        %4629 = vmatpush1.msra.mxu0 0.0
        %4630 = vmatprep.subr.mxu0 0.0
        %4631 = vmatpush1.msra.mxu0 0.0
        %4632 = vmatprep.subr.mxu0 0.0
        %4633 = vmatpush1.msra.mxu0 0.0
        %4634 = vmatprep.subr.mxu0 0.0
        %4635 = vmatpush1.msra.mxu0 0.0
        %4636 = vmatprep.subr.mxu0 0.0
        %4637 = vmatpush1.msra.mxu0 0.0
        %4638 = vmatprep.subr.mxu0 0.0
        %4639 = vmatpush1.msra.mxu0 0.0
        %4640 = vmatprep.subr.mxu0 0.0
        %4641 = vmatpush1.msra.mxu0 0.0
        %4642 = vmatprep.subr.mxu0 0.0
        %4643 = vmatpush1.msra.mxu0 0.0
        %4644 = vmatprep.subr.mxu0 0.0
        %4645 = vmatpush1.msra.mxu0 0.0
        %4646 = vmatprep.subr.mxu0 0.0
        %4647 = vmatpush1.msra.mxu0 0.0
        %4648 = vmatprep.subr.mxu0 0.0
        %4649 = vmatpush1.msra.mxu0 0.0
        %4650 = vmatprep.subr.mxu0 0.0
        %4651 = vmatpush1.msra.mxu0 0.0
        %4652 = vmatprep.subr.mxu0 0.0
        %4653 = vmatpush1.msra.mxu0 0.0
        %4654 = vmatprep.subr.mxu0 0.0
        %4655 = vmatpush1.msra.mxu0 0.0
        %4656 = vmatprep.subr.mxu0 0.0
        %4657 = vmatpush1.msra.mxu0 0.0
        %4658 = vmatprep.subr.mxu0 0.0
        %4659 = vmatpush1.msra.mxu0 0.0
        %4660 = vmatprep.subr.mxu0 0.0
        %4661 = vmatpush1.msra.mxu0 0.0
        %4662 = vmatprep.subr.mxu0 0.0
        %4663 = vmatpush1.msra.mxu0 0.0
        %4664 = vmatprep.subr.mxu0 0.0
        %4665 = vmatpush1.msra.mxu0 0.0
        %4666 = vmatprep.subr.mxu0 0.0
        %4667 = vmatpush1.msra.mxu0 0.0
        %4668 = vmatprep.subr.mxu0 0.0
        %4669 = vmatpush1.msra.mxu0 0.0
        %4670 = vmatprep.mubr.f32.mxu0 0.0
        %4671 = vmatmul.mubr.f32.gmra.mrb[0].mxu0 %v4589
        %v4672 = vpop.f32.mrb[0].mxu0
        %v4673 = vadd.f32 0.0, %v4672
        %v4674 = vpop.f32.mrb[0].mxu0
        %v4675 = vadd.f32 0.0, %v4674
        %4676 = vmatprep.mubr.f32.mxu0 0.0
        %4677 = vmatmul.mubr.f32.gmra.mrb[0].mxu0 %v4592
        %v4678 = vpop.f32.mrb[0].mxu0
        %v4679 = vadd.f32 0.0, %v4678
        %v4680 = vpop.f32.mrb[0].mxu0
        %v4681 = vadd.f32 0.0, %v4680
        %4682 = vmatprep.mubr.f32.mxu0 0.0
        %4683 = vmatmul.mubr.f32.gmra.mrb[0].mxu0 %v4595
        %v4684 = vpop.f32.mrb[0].mxu0
        %v4685 = vadd.f32 0.0, %v4684
        %v4686 = vpop.f32.mrb[0].mxu0
        %v4687 = vadd.f32 0.0, %v4686
        %4688 = vmatprep.mubr.f32.mxu0 0.0
        %4689 = vmatmul.mubr.f32.gmra.mrb[0].mxu0 %v4598
        %v4690 = vpop.f32.mrb[0].mxu0
        %v4691 = vadd.f32 0.0, %v4690
        %v4692 = vpop.f32.mrb[0].mxu0
        %v4693 = vadd.f32 0.0, %v4692
        %4694 = vdwg.mxu0
        %4695 = vmatprep.subr.mxu0 0.0
        %4696 = vmatpush1.msra.mxu0 %v4604
        %4697 = vmatprep.subr.mxu0 0.0
        %4698 = vmatpush1.msra.mxu0 0.0
        %4699 = vmatprep.subr.mxu0 0.0
        %4700 = vmatpush1.msra.mxu0 0.0
        %4701 = vmatprep.subr.mxu0 0.0
        %4702 = vmatpush1.msra.mxu0 0.0
        %4703 = vmatprep.subr.mxu0 0.0
        %4704 = vmatpush1.msra.mxu0 0.0
        %4705 = vmatprep.subr.mxu0 0.0
        %4706 = vmatpush1.msra.mxu0 0.0
        %4707 = vmatprep.subr.mxu0 0.0
        %4708 = vmatpush1.msra.mxu0 0.0
        %4709 = vmatprep.subr.mxu0 0.0
        %4710 = vmatpush1.msra.mxu0 0.0
        %4711 = vmatprep.subr.mxu0 0.0
        %4712 = vmatpush1.msra.mxu0 0.0
        %4713 = vmatprep.subr.mxu0 0.0
        %4714 = vmatpush1.msra.mxu0 0.0
        %4715 = vmatprep.subr.mxu0 0.0
        %4716 = vmatpush1.msra.mxu0 0.0
        %4717 = vmatprep.subr.mxu0 0.0
        %4718 = vmatpush1.msra.mxu0 0.0
        %4719 = vmatprep.subr.mxu0 0.0
        %4720 = vmatpush1.msra.mxu0 0.0
        %4721 = vmatprep.subr.mxu0 0.0
        %4722 = vmatpush1.msra.mxu0 0.0
        %4723 = vmatprep.subr.mxu0 0.0
        %4724 = vmatpush1.msra.mxu0 0.0
        %4725 = vmatprep.subr.mxu0 0.0
        %4726 = vmatpush1.msra.mxu0 0.0
        %4727 = vmatprep.subr.mxu0 0.0
        %4728 = vmatpush1.msra.mxu0 0.0
        %4729 = vmatprep.subr.mxu0 0.0
        %4730 = vmatpush1.msra.mxu0 0.0
        %4731 = vmatprep.subr.mxu0 0.0
        %4732 = vmatpush1.msra.mxu0 0.0
        %4733 = vmatprep.subr.mxu0 0.0
        %4734 = vmatpush1.msra.mxu0 0.0
        %4735 = vmatprep.subr.mxu0 0.0
        %4736 = vmatpush1.msra.mxu0 0.0
        %4737 = vmatprep.subr.mxu0 0.0
        %4738 = vmatpush1.msra.mxu0 0.0
        %4739 = vmatprep.subr.mxu0 0.0
        %4740 = vmatpush1.msra.mxu0 0.0
        %4741 = vmatprep.subr.mxu0 0.0
        %4742 = vmatpush1.msra.mxu0 0.0
        %4743 = vmatprep.subr.mxu0 0.0
        %4744 = vmatpush1.msra.mxu0 0.0
        %4745 = vmatprep.subr.mxu0 0.0
        %4746 = vmatpush1.msra.mxu0 0.0
        %4747 = vmatprep.subr.mxu0 0.0
        %4748 = vmatpush1.msra.mxu0 0.0
        %4749 = vmatprep.subr.mxu0 0.0
        %4750 = vmatpush1.msra.mxu0 0.0
        %4751 = vmatprep.subr.mxu0 0.0
        %4752 = vmatpush1.msra.mxu0 0.0
        %4753 = vmatprep.subr.mxu0 0.0
        %4754 = vmatpush1.msra.mxu0 0.0
        %4755 = vmatprep.subr.mxu0 0.0
        %4756 = vmatpush1.msra.mxu0 0.0
        %4757 = vmatprep.subr.mxu0 0.0
        %4758 = vmatpush1.msra.mxu0 0.0
        %4759 = vmatprep.mubr.f32.mxu0 0.0
        %4760 = vmatmul.mubr.f32.gmra.mrb[0].mxu0 %v4589
        %v4761 = vpop.f32.mrb[0].mxu0
        %v4762 = vadd.f32 0.0, %v4761
        %v4763 = vpop.f32.mrb[0].mxu0
        %4764 = vmatprep.mubr.f32.mxu0 0.0
        %4765 = vmatmul.mubr.f32.gmra.mrb[0].mxu0 %v4592
        %v4766 = vpop.f32.mrb[0].mxu0
        %v4767 = vadd.f32 0.0, %v4766
        %v4768 = vpop.f32.mrb[0].mxu0
        %4769 = vmatprep.mubr.f32.mxu0 0.0
        %4770 = vmatmul.mubr.f32.gmra.mrb[0].mxu0 %v4595
        %v4771 = vpop.f32.mrb[0].mxu0
        %v4772 = vadd.f32 0.0, %v4771
        %v4773 = vpop.f32.mrb[0].mxu0
        %4774 = vmatprep.mubr.f32.mxu0 0.0
        %4775 = vmatmul.mubr.f32.gmra.mrb[0].mxu0 %v4598
        %v4776 = vpop.f32.mrb[0].mxu0
        %v4777 = vadd.f32 0.0, %v4776
        %v4778 = vpop.f32.mrb[0].mxu0
        %4779 = vdwg.mxu0
        %v4780 = vadd.f32 %v4459, %v4673
        %v4781 = vadd.f32 %v4461, %v4675
        %v4782 = vadd.f32 %v4548, %v4762
        %v4783 = vadd.f32 %v4465, %v4679
        %v4784 = vadd.f32 %v4467, %v4681
        %v4785 = vadd.f32 %v4553, %v4767
        %v4786 = vadd.f32 %v4471, %v4685
        %v4787 = vadd.f32 %v4473, %v4687
        %v4788 = vadd.f32 %v4558, %v4772
        %v4789 = vadd.f32 %v4477, %v4691
        %v4790 = vadd.f32 %v4479, %v4693
        %v4791 = vadd.f32 %v4563, %v4777
        %v4792 = vld [vmem:[#allocation2] sm:$0xff]
        %v4793 = vld [vmem:[#allocation2 + $0x8] sm:$0xff]
        %s4794 = scalar_lea.vmem %s2, 384
        %v4795 = vld [vmem:[%s4794] sm:$0xff]
        %v4796 = vld [vmem:[%s4794 + $0x8] sm:$0xff]
        %v4797 = vld [vmem:[%s4794 + $0x10] sm:$0xff]
        %v4798 = vld [vmem:[%s4794 + $0x18] sm:$0xff]
        %v4801 = vcombine.high %v4792, %v4792
        %v4802 = vcombine.high %v4793, %v4793
        %4803 = vrot.lane.b32.xlu0 %v4792, 1
        %v4804 = vpop.permute.xlu0 %4803
        %4805 = vrot.lane.b32.xlu0 %v4801, 1
        %v4806 = vpop.permute.xlu0 %4805
        %4807 = vrot.lane.b32.xlu0 %v4793, 1
        %v4808 = vpop.permute.xlu0 %4807
        %4809 = vrot.lane.b32.xlu0 %v4802, 1
        %v4810 = vpop.permute.xlu0 %4809
        %v4811 = vsel %vm895, %v4804, %v4806
        %v4812 = vsel %vm895, %v4806, %v4808
        %v4813 = vsel %vm895, %v4808, %v4810
        %v4815 = vsel %vm251, %v4795, 0
        %v4818 = vsel %vm251, %v4796, 0
        %v4821 = vsel %vm251, %v4797, 0
        %v4824 = vsel %vm251, %v4798, 0
        %v4826 = vsel %vm264, %v4811, 0
        %v4828 = vsel %vm264, %v4812, 0
        %v4830 = vsel %vm264, %v4813, 0
        %4832 = vmatprep.subr.mxu0 %v4828
        %4833 = vmatpush1.msra.mxu0 %v4826
        %4834 = vmatprep.subr.mxu0 0.0
        %4835 = vmatpush1.msra.mxu0 0.0
        %4836 = vmatprep.subr.mxu0 0.0
        %4837 = vmatpush1.msra.mxu0 0.0
        %4838 = vmatprep.subr.mxu0 0.0
        %4839 = vmatpush1.msra.mxu0 0.0
        %4840 = vmatprep.subr.mxu0 0.0
        %4841 = vmatpush1.msra.mxu0 0.0
        %4842 = vmatprep.subr.mxu0 0.0
        %4843 = vmatpush1.msra.mxu0 0.0
        %4844 = vmatprep.subr.mxu0 0.0
        %4845 = vmatpush1.msra.mxu0 0.0
        %4846 = vmatprep.subr.mxu0 0.0
        %4847 = vmatpush1.msra.mxu0 0.0
        %4848 = vmatprep.subr.mxu0 0.0
        %4849 = vmatpush1.msra.mxu0 0.0
        %4850 = vmatprep.subr.mxu0 0.0
        %4851 = vmatpush1.msra.mxu0 0.0
        %4852 = vmatprep.subr.mxu0 0.0
        %4853 = vmatpush1.msra.mxu0 0.0
        %4854 = vmatprep.subr.mxu0 0.0
        %4855 = vmatpush1.msra.mxu0 0.0
        %4856 = vmatprep.subr.mxu0 0.0
        %4857 = vmatpush1.msra.mxu0 0.0
        %4858 = vmatprep.subr.mxu0 0.0
        %4859 = vmatpush1.msra.mxu0 0.0
        %4860 = vmatprep.subr.mxu0 0.0
        %4861 = vmatpush1.msra.mxu0 0.0
        %4862 = vmatprep.subr.mxu0 0.0
        %4863 = vmatpush1.msra.mxu0 0.0
        %4864 = vmatprep.subr.mxu0 0.0
        %4865 = vmatpush1.msra.mxu0 0.0
        %4866 = vmatprep.subr.mxu0 0.0
        %4867 = vmatpush1.msra.mxu0 0.0
        %4868 = vmatprep.subr.mxu0 0.0
        %4869 = vmatpush1.msra.mxu0 0.0
        %4870 = vmatprep.subr.mxu0 0.0
        %4871 = vmatpush1.msra.mxu0 0.0
        %4872 = vmatprep.subr.mxu0 0.0
        %4873 = vmatpush1.msra.mxu0 0.0
        %4874 = vmatprep.subr.mxu0 0.0
        %4875 = vmatpush1.msra.mxu0 0.0
        %4876 = vmatprep.subr.mxu0 0.0
        %4877 = vmatpush1.msra.mxu0 0.0
        %4878 = vmatprep.subr.mxu0 0.0
        %4879 = vmatpush1.msra.mxu0 0.0
        %4880 = vmatprep.subr.mxu0 0.0
        %4881 = vmatpush1.msra.mxu0 0.0
        %4882 = vmatprep.subr.mxu0 0.0
        %4883 = vmatpush1.msra.mxu0 0.0
        %4884 = vmatprep.subr.mxu0 0.0
        %4885 = vmatpush1.msra.mxu0 0.0
        %4886 = vmatprep.subr.mxu0 0.0
        %4887 = vmatpush1.msra.mxu0 0.0
        %4888 = vmatprep.subr.mxu0 0.0
        %4889 = vmatpush1.msra.mxu0 0.0
        %4890 = vmatprep.subr.mxu0 0.0
        %4891 = vmatpush1.msra.mxu0 0.0
        %4892 = vmatprep.subr.mxu0 0.0
        %4893 = vmatpush1.msra.mxu0 0.0
        %4894 = vmatprep.subr.mxu0 0.0
        %4895 = vmatpush1.msra.mxu0 0.0
        %4896 = vmatprep.mubr.f32.mxu0 0.0
        %4897 = vmatmul.mubr.f32.gmra.mrb[0].mxu0 %v4815
        %v4898 = vpop.f32.mrb[0].mxu0
        %v4899 = vadd.f32 0.0, %v4898
        %v4900 = vpop.f32.mrb[0].mxu0
        %v4901 = vadd.f32 0.0, %v4900
        %4902 = vmatprep.mubr.f32.mxu0 0.0
        %4903 = vmatmul.mubr.f32.gmra.mrb[0].mxu0 %v4818
        %v4904 = vpop.f32.mrb[0].mxu0
        %v4905 = vadd.f32 0.0, %v4904
        %v4906 = vpop.f32.mrb[0].mxu0
        %v4907 = vadd.f32 0.0, %v4906
        %4908 = vmatprep.mubr.f32.mxu0 0.0
        %4909 = vmatmul.mubr.f32.gmra.mrb[0].mxu0 %v4821
        %v4910 = vpop.f32.mrb[0].mxu0
        %v4911 = vadd.f32 0.0, %v4910
        %v4912 = vpop.f32.mrb[0].mxu0
        %v4913 = vadd.f32 0.0, %v4912
        %4914 = vmatprep.mubr.f32.mxu0 0.0
        %4915 = vmatmul.mubr.f32.gmra.mrb[0].mxu0 %v4824
        %v4916 = vpop.f32.mrb[0].mxu0
        %v4917 = vadd.f32 0.0, %v4916
        %v4918 = vpop.f32.mrb[0].mxu0
        %v4919 = vadd.f32 0.0, %v4918
        %4920 = vdwg.mxu0
        %4921 = vmatprep.subr.mxu0 0.0
        %4922 = vmatpush1.msra.mxu0 %v4830
        %4923 = vmatprep.subr.mxu0 0.0
        %4924 = vmatpush1.msra.mxu0 0.0
        %4925 = vmatprep.subr.mxu0 0.0
        %4926 = vmatpush1.msra.mxu0 0.0
        %4927 = vmatprep.subr.mxu0 0.0
        %4928 = vmatpush1.msra.mxu0 0.0
        %4929 = vmatprep.subr.mxu0 0.0
        %4930 = vmatpush1.msra.mxu0 0.0
        %4931 = vmatprep.subr.mxu0 0.0
        %4932 = vmatpush1.msra.mxu0 0.0
        %4933 = vmatprep.subr.mxu0 0.0
        %4934 = vmatpush1.msra.mxu0 0.0
        %4935 = vmatprep.subr.mxu0 0.0
        %4936 = vmatpush1.msra.mxu0 0.0
        %4937 = vmatprep.subr.mxu0 0.0
        %4938 = vmatpush1.msra.mxu0 0.0
        %4939 = vmatprep.subr.mxu0 0.0
        %4940 = vmatpush1.msra.mxu0 0.0
        %4941 = vmatprep.subr.mxu0 0.0
        %4942 = vmatpush1.msra.mxu0 0.0
        %4943 = vmatprep.subr.mxu0 0.0
        %4944 = vmatpush1.msra.mxu0 0.0
        %4945 = vmatprep.subr.mxu0 0.0
        %4946 = vmatpush1.msra.mxu0 0.0
        %4947 = vmatprep.subr.mxu0 0.0
        %4948 = vmatpush1.msra.mxu0 0.0
        %4949 = vmatprep.subr.mxu0 0.0
        %4950 = vmatpush1.msra.mxu0 0.0
        %4951 = vmatprep.subr.mxu0 0.0
        %4952 = vmatpush1.msra.mxu0 0.0
        %4953 = vmatprep.subr.mxu0 0.0
        %4954 = vmatpush1.msra.mxu0 0.0
        %4955 = vmatprep.subr.mxu0 0.0
        %4956 = vmatpush1.msra.mxu0 0.0
        %4957 = vmatprep.subr.mxu0 0.0
        %4958 = vmatpush1.msra.mxu0 0.0
        %4959 = vmatprep.subr.mxu0 0.0
        %4960 = vmatpush1.msra.mxu0 0.0
        %4961 = vmatprep.subr.mxu0 0.0
        %4962 = vmatpush1.msra.mxu0 0.0
        %4963 = vmatprep.subr.mxu0 0.0
        %4964 = vmatpush1.msra.mxu0 0.0
        %4965 = vmatprep.subr.mxu0 0.0
        %4966 = vmatpush1.msra.mxu0 0.0
        %4967 = vmatprep.subr.mxu0 0.0
        %4968 = vmatpush1.msra.mxu0 0.0
        %4969 = vmatprep.subr.mxu0 0.0
        %4970 = vmatpush1.msra.mxu0 0.0
        %4971 = vmatprep.subr.mxu0 0.0
        %4972 = vmatpush1.msra.mxu0 0.0
        %4973 = vmatprep.subr.mxu0 0.0
        %4974 = vmatpush1.msra.mxu0 0.0
        %4975 = vmatprep.subr.mxu0 0.0
        %4976 = vmatpush1.msra.mxu0 0.0
        %4977 = vmatprep.subr.mxu0 0.0
        %4978 = vmatpush1.msra.mxu0 0.0
        %4979 = vmatprep.subr.mxu0 0.0
        %4980 = vmatpush1.msra.mxu0 0.0
        %4981 = vmatprep.subr.mxu0 0.0
        %4982 = vmatpush1.msra.mxu0 0.0
        %4983 = vmatprep.subr.mxu0 0.0
        %4984 = vmatpush1.msra.mxu0 0.0
        %4985 = vmatprep.mubr.f32.mxu0 0.0
        %4986 = vmatmul.mubr.f32.gmra.mrb[0].mxu0 %v4815
        %v4987 = vpop.f32.mrb[0].mxu0
        %v4988 = vadd.f32 0.0, %v4987
        %v4989 = vpop.f32.mrb[0].mxu0
        %4990 = vmatprep.mubr.f32.mxu0 0.0
        %4991 = vmatmul.mubr.f32.gmra.mrb[0].mxu0 %v4818
        %v4992 = vpop.f32.mrb[0].mxu0
        %v4993 = vadd.f32 0.0, %v4992
        %v4994 = vpop.f32.mrb[0].mxu0
        %4995 = vmatprep.mubr.f32.mxu0 0.0
        %4996 = vmatmul.mubr.f32.gmra.mrb[0].mxu0 %v4821
        %v4997 = vpop.f32.mrb[0].mxu0
        %v4998 = vadd.f32 0.0, %v4997
        %v4999 = vpop.f32.mrb[0].mxu0
        %5000 = vmatprep.mubr.f32.mxu0 0.0
        %5001 = vmatmul.mubr.f32.gmra.mrb[0].mxu0 %v4824
        %v5002 = vpop.f32.mrb[0].mxu0
        %v5003 = vadd.f32 0.0, %v5002
        %v5004 = vpop.f32.mrb[0].mxu0
        %5005 = vdwg.mxu0
        %v5006 = vadd.f32 %v4780, %v4899
        %v5007 = vadd.f32 %v4781, %v4901
        %v5008 = vadd.f32 %v4782, %v4988
        %v5009 = vadd.f32 %v4783, %v4905
        %v5010 = vadd.f32 %v4784, %v4907
        %v5011 = vadd.f32 %v4785, %v4993
        %v5012 = vadd.f32 %v4786, %v4911
        %v5013 = vadd.f32 %v4787, %v4913
        %v5014 = vadd.f32 %v4788, %v4998
        %v5015 = vadd.f32 %v4789, %v4917
        %v5016 = vadd.f32 %v4790, %v4919
        %v5017 = vadd.f32 %v4791, %v5003
        %v5018 = vld [vmem:[#allocation2 + $0x4] sm:$0xff]
        %v5019 = vld [vmem:[#allocation2 + $0xc] sm:$0xf]
        %s5020 = scalar_lea.vmem %s2, 416
        %v5021 = vld [vmem:[%s5020] sm:$0xff]
        %v5022 = vld [vmem:[%s5020 + $0x8] sm:$0xff]
        %v5023 = vld [vmem:[%s5020 + $0x10] sm:$0xff]
        %v5024 = vld [vmem:[%s5020 + $0x18] sm:$0xff]
        %v5027 = vcombine.high %v5018, %v5018
        %v5029 = vsel %vm251, %v5021, 0
        %v5032 = vsel %vm251, %v5022, 0
        %v5035 = vsel %vm251, %v5023, 0
        %v5038 = vsel %vm251, %v5024, 0
        %v5040 = vsel %vm264, %v5018, 0
        %v5042 = vsel %vm264, %v5027, 0
        %v5044 = vsel %vm264, %v5019, 0
        %5046 = vmatprep.subr.mxu0 %v5042
        %5047 = vmatpush1.msra.mxu0 %v5040
        %5048 = vmatprep.subr.mxu0 0.0
        %5049 = vmatpush1.msra.mxu0 0.0
        %5050 = vmatprep.subr.mxu0 0.0
        %5051 = vmatpush1.msra.mxu0 0.0
        %5052 = vmatprep.subr.mxu0 0.0
        %5053 = vmatpush1.msra.mxu0 0.0
        %5054 = vmatprep.subr.mxu0 0.0
        %5055 = vmatpush1.msra.mxu0 0.0
        %5056 = vmatprep.subr.mxu0 0.0
        %5057 = vmatpush1.msra.mxu0 0.0
        %5058 = vmatprep.subr.mxu0 0.0
        %5059 = vmatpush1.msra.mxu0 0.0
        %5060 = vmatprep.subr.mxu0 0.0
        %5061 = vmatpush1.msra.mxu0 0.0
        %5062 = vmatprep.subr.mxu0 0.0
        %5063 = vmatpush1.msra.mxu0 0.0
        %5064 = vmatprep.subr.mxu0 0.0
        %5065 = vmatpush1.msra.mxu0 0.0
        %5066 = vmatprep.subr.mxu0 0.0
        %5067 = vmatpush1.msra.mxu0 0.0
        %5068 = vmatprep.subr.mxu0 0.0
        %5069 = vmatpush1.msra.mxu0 0.0
        %5070 = vmatprep.subr.mxu0 0.0
        %5071 = vmatpush1.msra.mxu0 0.0
        %5072 = vmatprep.subr.mxu0 0.0
        %5073 = vmatpush1.msra.mxu0 0.0
        %5074 = vmatprep.subr.mxu0 0.0
        %5075 = vmatpush1.msra.mxu0 0.0
        %5076 = vmatprep.subr.mxu0 0.0
        %5077 = vmatpush1.msra.mxu0 0.0
        %5078 = vmatprep.subr.mxu0 0.0
        %5079 = vmatpush1.msra.mxu0 0.0
        %5080 = vmatprep.subr.mxu0 0.0
        %5081 = vmatpush1.msra.mxu0 0.0
        %5082 = vmatprep.subr.mxu0 0.0
        %5083 = vmatpush1.msra.mxu0 0.0
        %5084 = vmatprep.subr.mxu0 0.0
        %5085 = vmatpush1.msra.mxu0 0.0
        %5086 = vmatprep.subr.mxu0 0.0
        %5087 = vmatpush1.msra.mxu0 0.0
        %5088 = vmatprep.subr.mxu0 0.0
        %5089 = vmatpush1.msra.mxu0 0.0
        %5090 = vmatprep.subr.mxu0 0.0
        %5091 = vmatpush1.msra.mxu0 0.0
        %5092 = vmatprep.subr.mxu0 0.0
        %5093 = vmatpush1.msra.mxu0 0.0
        %5094 = vmatprep.subr.mxu0 0.0
        %5095 = vmatpush1.msra.mxu0 0.0
        %5096 = vmatprep.subr.mxu0 0.0
        %5097 = vmatpush1.msra.mxu0 0.0
        %5098 = vmatprep.subr.mxu0 0.0
        %5099 = vmatpush1.msra.mxu0 0.0
        %5100 = vmatprep.subr.mxu0 0.0
        %5101 = vmatpush1.msra.mxu0 0.0
        %5102 = vmatprep.subr.mxu0 0.0
        %5103 = vmatpush1.msra.mxu0 0.0
        %5104 = vmatprep.subr.mxu0 0.0
        %5105 = vmatpush1.msra.mxu0 0.0
        %5106 = vmatprep.subr.mxu0 0.0
        %5107 = vmatpush1.msra.mxu0 0.0
        %5108 = vmatprep.subr.mxu0 0.0
        %5109 = vmatpush1.msra.mxu0 0.0
        %5110 = vmatprep.mubr.f32.mxu0 0.0
        %5111 = vmatmul.mubr.f32.gmra.mrb[0].mxu0 %v5029
        %v5112 = vpop.f32.mrb[0].mxu0
        %v5113 = vadd.f32 0.0, %v5112
        %v5114 = vpop.f32.mrb[0].mxu0
        %v5115 = vadd.f32 0.0, %v5114
        %5116 = vmatprep.mubr.f32.mxu0 0.0
        %5117 = vmatmul.mubr.f32.gmra.mrb[0].mxu0 %v5032
        %v5118 = vpop.f32.mrb[0].mxu0
        %v5119 = vadd.f32 0.0, %v5118
        %v5120 = vpop.f32.mrb[0].mxu0
        %v5121 = vadd.f32 0.0, %v5120
        %5122 = vmatprep.mubr.f32.mxu0 0.0
        %5123 = vmatmul.mubr.f32.gmra.mrb[0].mxu0 %v5035
        %v5124 = vpop.f32.mrb[0].mxu0
        %v5125 = vadd.f32 0.0, %v5124
        %v5126 = vpop.f32.mrb[0].mxu0
        %v5127 = vadd.f32 0.0, %v5126
        %5128 = vmatprep.mubr.f32.mxu0 0.0
        %5129 = vmatmul.mubr.f32.gmra.mrb[0].mxu0 %v5038
        %v5130 = vpop.f32.mrb[0].mxu0
        %v5131 = vadd.f32 0.0, %v5130
        %v5132 = vpop.f32.mrb[0].mxu0
        %v5133 = vadd.f32 0.0, %v5132
        %5134 = vdwg.mxu0
        %5135 = vmatprep.subr.mxu0 0.0
        %5136 = vmatpush1.msra.mxu0 %v5044
        %5137 = vmatprep.subr.mxu0 0.0
        %5138 = vmatpush1.msra.mxu0 0.0
        %5139 = vmatprep.subr.mxu0 0.0
        %5140 = vmatpush1.msra.mxu0 0.0
        %5141 = vmatprep.subr.mxu0 0.0
        %5142 = vmatpush1.msra.mxu0 0.0
        %5143 = vmatprep.subr.mxu0 0.0
        %5144 = vmatpush1.msra.mxu0 0.0
        %5145 = vmatprep.subr.mxu0 0.0
        %5146 = vmatpush1.msra.mxu0 0.0
        %5147 = vmatprep.subr.mxu0 0.0
        %5148 = vmatpush1.msra.mxu0 0.0
        %5149 = vmatprep.subr.mxu0 0.0
        %5150 = vmatpush1.msra.mxu0 0.0
        %5151 = vmatprep.subr.mxu0 0.0
        %5152 = vmatpush1.msra.mxu0 0.0
        %5153 = vmatprep.subr.mxu0 0.0
        %5154 = vmatpush1.msra.mxu0 0.0
        %5155 = vmatprep.subr.mxu0 0.0
        %5156 = vmatpush1.msra.mxu0 0.0
        %5157 = vmatprep.subr.mxu0 0.0
        %5158 = vmatpush1.msra.mxu0 0.0
        %5159 = vmatprep.subr.mxu0 0.0
        %5160 = vmatpush1.msra.mxu0 0.0
        %5161 = vmatprep.subr.mxu0 0.0
        %5162 = vmatpush1.msra.mxu0 0.0
        %5163 = vmatprep.subr.mxu0 0.0
        %5164 = vmatpush1.msra.mxu0 0.0
        %5165 = vmatprep.subr.mxu0 0.0
        %5166 = vmatpush1.msra.mxu0 0.0
        %5167 = vmatprep.subr.mxu0 0.0
        %5168 = vmatpush1.msra.mxu0 0.0
        %5169 = vmatprep.subr.mxu0 0.0
        %5170 = vmatpush1.msra.mxu0 0.0
        %5171 = vmatprep.subr.mxu0 0.0
        %5172 = vmatpush1.msra.mxu0 0.0
        %5173 = vmatprep.subr.mxu0 0.0
        %5174 = vmatpush1.msra.mxu0 0.0
        %5175 = vmatprep.subr.mxu0 0.0
        %5176 = vmatpush1.msra.mxu0 0.0
        %5177 = vmatprep.subr.mxu0 0.0
        %5178 = vmatpush1.msra.mxu0 0.0
        %5179 = vmatprep.subr.mxu0 0.0
        %5180 = vmatpush1.msra.mxu0 0.0
        %5181 = vmatprep.subr.mxu0 0.0
        %5182 = vmatpush1.msra.mxu0 0.0
        %5183 = vmatprep.subr.mxu0 0.0
        %5184 = vmatpush1.msra.mxu0 0.0
        %5185 = vmatprep.subr.mxu0 0.0
        %5186 = vmatpush1.msra.mxu0 0.0
        %5187 = vmatprep.subr.mxu0 0.0
        %5188 = vmatpush1.msra.mxu0 0.0
        %5189 = vmatprep.subr.mxu0 0.0
        %5190 = vmatpush1.msra.mxu0 0.0
        %5191 = vmatprep.subr.mxu0 0.0
        %5192 = vmatpush1.msra.mxu0 0.0
        %5193 = vmatprep.subr.mxu0 0.0
        %5194 = vmatpush1.msra.mxu0 0.0
        %5195 = vmatprep.subr.mxu0 0.0
        %5196 = vmatpush1.msra.mxu0 0.0
        %5197 = vmatprep.subr.mxu0 0.0
        %5198 = vmatpush1.msra.mxu0 0.0
        %5199 = vmatprep.mubr.f32.mxu0 0.0
        %5200 = vmatmul.mubr.f32.gmra.mrb[0].mxu0 %v5029
        %v5201 = vpop.f32.mrb[0].mxu0
        %v5202 = vadd.f32 0.0, %v5201
        %v5203 = vpop.f32.mrb[0].mxu0
        %5204 = vmatprep.mubr.f32.mxu0 0.0
        %5205 = vmatmul.mubr.f32.gmra.mrb[0].mxu0 %v5032
        %v5206 = vpop.f32.mrb[0].mxu0
        %v5207 = vadd.f32 0.0, %v5206
        %v5208 = vpop.f32.mrb[0].mxu0
        %5209 = vmatprep.mubr.f32.mxu0 0.0
        %5210 = vmatmul.mubr.f32.gmra.mrb[0].mxu0 %v5035
        %v5211 = vpop.f32.mrb[0].mxu0
        %v5212 = vadd.f32 0.0, %v5211
        %v5213 = vpop.f32.mrb[0].mxu0
        %5214 = vmatprep.mubr.f32.mxu0 0.0
        %5215 = vmatmul.mubr.f32.gmra.mrb[0].mxu0 %v5038
        %v5216 = vpop.f32.mrb[0].mxu0
        %v5217 = vadd.f32 0.0, %v5216
        %v5218 = vpop.f32.mrb[0].mxu0
        %5219 = vdwg.mxu0
        %v5220 = vadd.f32 %v5006, %v5113
        %v5221 = vadd.f32 %v5007, %v5115
        %v5222 = vadd.f32 %v5008, %v5202
        %v5223 = vadd.f32 %v5009, %v5119
        %v5224 = vadd.f32 %v5010, %v5121
        %v5225 = vadd.f32 %v5011, %v5207
        %v5226 = vadd.f32 %v5012, %v5125
        %v5227 = vadd.f32 %v5013, %v5127
        %v5228 = vadd.f32 %v5014, %v5212
        %v5229 = vadd.f32 %v5015, %v5131
        %v5230 = vadd.f32 %v5016, %v5133
        %v5231 = vadd.f32 %v5017, %v5217
        %v5232 = vld [vmem:[#allocation2 + $0x4] sm:$0xff]
        %v5233 = vld [vmem:[#allocation2 + $0xc] sm:$0xff]
        %s5234 = scalar_lea.vmem %s2, 448
        %v5235 = vld [vmem:[%s5234] sm:$0xff]
        %v5236 = vld [vmem:[%s5234 + $0x8] sm:$0xff]
        %v5237 = vld [vmem:[%s5234 + $0x10] sm:$0xff]
        %v5238 = vld [vmem:[%s5234 + $0x18] sm:$0xff]
        %v5241 = vcombine.high %v5232, %v5232
        %v5242 = vcombine.high %v5233, %v5233
        %5243 = vrot.lane.b32.xlu0 %v5232, 127
        %v5244 = vpop.permute.xlu0 %5243
        %5245 = vrot.lane.b32.xlu0 %v5241, 127
        %v5246 = vpop.permute.xlu0 %5245
        %5247 = vrot.lane.b32.xlu0 %v5233, 127
        %v5248 = vpop.permute.xlu0 %5247
        %5249 = vrot.lane.b32.xlu0 %v5242, 127
        %v5250 = vpop.permute.xlu0 %5249
        %v5251 = vsel %vm1336, %v5244, %v5246
        %v5252 = vsel %vm1336, %v5246, %v5248
        %v5253 = vsel %vm1336, %v5248, %v5250
        %v5255 = vsel %vm251, %v5235, 0
        %v5258 = vsel %vm251, %v5236, 0
        %v5261 = vsel %vm251, %v5237, 0
        %v5264 = vsel %vm251, %v5238, 0
        %v5266 = vsel %vm264, %v5251, 0
        %v5268 = vsel %vm264, %v5252, 0
        %v5270 = vsel %vm264, %v5253, 0
        %5272 = vmatprep.subr.mxu0 %v5268
        %5273 = vmatpush1.msra.mxu0 %v5266
        %5274 = vmatprep.subr.mxu0 0.0
        %5275 = vmatpush1.msra.mxu0 0.0
        %5276 = vmatprep.subr.mxu0 0.0
        %5277 = vmatpush1.msra.mxu0 0.0
        %5278 = vmatprep.subr.mxu0 0.0
        %5279 = vmatpush1.msra.mxu0 0.0
        %5280 = vmatprep.subr.mxu0 0.0
        %5281 = vmatpush1.msra.mxu0 0.0
        %5282 = vmatprep.subr.mxu0 0.0
        %5283 = vmatpush1.msra.mxu0 0.0
        %5284 = vmatprep.subr.mxu0 0.0
        %5285 = vmatpush1.msra.mxu0 0.0
        %5286 = vmatprep.subr.mxu0 0.0
        %5287 = vmatpush1.msra.mxu0 0.0
        %5288 = vmatprep.subr.mxu0 0.0
        %5289 = vmatpush1.msra.mxu0 0.0
        %5290 = vmatprep.subr.mxu0 0.0
        %5291 = vmatpush1.msra.mxu0 0.0
        %5292 = vmatprep.subr.mxu0 0.0
        %5293 = vmatpush1.msra.mxu0 0.0
        %5294 = vmatprep.subr.mxu0 0.0
        %5295 = vmatpush1.msra.mxu0 0.0
        %5296 = vmatprep.subr.mxu0 0.0
        %5297 = vmatpush1.msra.mxu0 0.0
        %5298 = vmatprep.subr.mxu0 0.0
        %5299 = vmatpush1.msra.mxu0 0.0
        %5300 = vmatprep.subr.mxu0 0.0
        %5301 = vmatpush1.msra.mxu0 0.0
        %5302 = vmatprep.subr.mxu0 0.0
        %5303 = vmatpush1.msra.mxu0 0.0
        %5304 = vmatprep.subr.mxu0 0.0
        %5305 = vmatpush1.msra.mxu0 0.0
        %5306 = vmatprep.subr.mxu0 0.0
        %5307 = vmatpush1.msra.mxu0 0.0
        %5308 = vmatprep.subr.mxu0 0.0
        %5309 = vmatpush1.msra.mxu0 0.0
        %5310 = vmatprep.subr.mxu0 0.0
        %5311 = vmatpush1.msra.mxu0 0.0
        %5312 = vmatprep.subr.mxu0 0.0
        %5313 = vmatpush1.msra.mxu0 0.0
        %5314 = vmatprep.subr.mxu0 0.0
        %5315 = vmatpush1.msra.mxu0 0.0
        %5316 = vmatprep.subr.mxu0 0.0
        %5317 = vmatpush1.msra.mxu0 0.0
        %5318 = vmatprep.subr.mxu0 0.0
        %5319 = vmatpush1.msra.mxu0 0.0
        %5320 = vmatprep.subr.mxu0 0.0
        %5321 = vmatpush1.msra.mxu0 0.0
        %5322 = vmatprep.subr.mxu0 0.0
        %5323 = vmatpush1.msra.mxu0 0.0
        %5324 = vmatprep.subr.mxu0 0.0
        %5325 = vmatpush1.msra.mxu0 0.0
        %5326 = vmatprep.subr.mxu0 0.0
        %5327 = vmatpush1.msra.mxu0 0.0
        %5328 = vmatprep.subr.mxu0 0.0
        %5329 = vmatpush1.msra.mxu0 0.0
        %5330 = vmatprep.subr.mxu0 0.0
        %5331 = vmatpush1.msra.mxu0 0.0
        %5332 = vmatprep.subr.mxu0 0.0
        %5333 = vmatpush1.msra.mxu0 0.0
        %5334 = vmatprep.subr.mxu0 0.0
        %5335 = vmatpush1.msra.mxu0 0.0
        %5336 = vmatprep.mubr.f32.mxu0 0.0
        %5337 = vmatmul.mubr.f32.gmra.mrb[0].mxu0 %v5255
        %v5338 = vpop.f32.mrb[0].mxu0
        %v5339 = vadd.f32 0.0, %v5338
        %v5340 = vpop.f32.mrb[0].mxu0
        %v5341 = vadd.f32 0.0, %v5340
        %5342 = vmatprep.mubr.f32.mxu0 0.0
        %5343 = vmatmul.mubr.f32.gmra.mrb[0].mxu0 %v5258
        %v5344 = vpop.f32.mrb[0].mxu0
        %v5345 = vadd.f32 0.0, %v5344
        %v5346 = vpop.f32.mrb[0].mxu0
        %v5347 = vadd.f32 0.0, %v5346
        %5348 = vmatprep.mubr.f32.mxu0 0.0
        %5349 = vmatmul.mubr.f32.gmra.mrb[0].mxu0 %v5261
        %v5350 = vpop.f32.mrb[0].mxu0
        %v5351 = vadd.f32 0.0, %v5350
        %v5352 = vpop.f32.mrb[0].mxu0
        %v5353 = vadd.f32 0.0, %v5352
        %5354 = vmatprep.mubr.f32.mxu0 0.0
        %5355 = vmatmul.mubr.f32.gmra.mrb[0].mxu0 %v5264
        %v5356 = vpop.f32.mrb[0].mxu0
        %v5357 = vadd.f32 0.0, %v5356
        %v5358 = vpop.f32.mrb[0].mxu0
        %v5359 = vadd.f32 0.0, %v5358
        %5360 = vdwg.mxu0
        %5361 = vmatprep.subr.mxu0 0.0
        %5362 = vmatpush1.msra.mxu0 %v5270
        %5363 = vmatprep.subr.mxu0 0.0
        %5364 = vmatpush1.msra.mxu0 0.0
        %5365 = vmatprep.subr.mxu0 0.0
        %5366 = vmatpush1.msra.mxu0 0.0
        %5367 = vmatprep.subr.mxu0 0.0
        %5368 = vmatpush1.msra.mxu0 0.0
        %5369 = vmatprep.subr.mxu0 0.0
        %5370 = vmatpush1.msra.mxu0 0.0
        %5371 = vmatprep.subr.mxu0 0.0
        %5372 = vmatpush1.msra.mxu0 0.0
        %5373 = vmatprep.subr.mxu0 0.0
        %5374 = vmatpush1.msra.mxu0 0.0
        %5375 = vmatprep.subr.mxu0 0.0
        %5376 = vmatpush1.msra.mxu0 0.0
        %5377 = vmatprep.subr.mxu0 0.0
        %5378 = vmatpush1.msra.mxu0 0.0
        %5379 = vmatprep.subr.mxu0 0.0
        %5380 = vmatpush1.msra.mxu0 0.0
        %5381 = vmatprep.subr.mxu0 0.0
        %5382 = vmatpush1.msra.mxu0 0.0
        %5383 = vmatprep.subr.mxu0 0.0
        %5384 = vmatpush1.msra.mxu0 0.0
        %5385 = vmatprep.subr.mxu0 0.0
        %5386 = vmatpush1.msra.mxu0 0.0
        %5387 = vmatprep.subr.mxu0 0.0
        %5388 = vmatpush1.msra.mxu0 0.0
        %5389 = vmatprep.subr.mxu0 0.0
        %5390 = vmatpush1.msra.mxu0 0.0
        %5391 = vmatprep.subr.mxu0 0.0
        %5392 = vmatpush1.msra.mxu0 0.0
        %5393 = vmatprep.subr.mxu0 0.0
        %5394 = vmatpush1.msra.mxu0 0.0
        %5395 = vmatprep.subr.mxu0 0.0
        %5396 = vmatpush1.msra.mxu0 0.0
        %5397 = vmatprep.subr.mxu0 0.0
        %5398 = vmatpush1.msra.mxu0 0.0
        %5399 = vmatprep.subr.mxu0 0.0
        %5400 = vmatpush1.msra.mxu0 0.0
        %5401 = vmatprep.subr.mxu0 0.0
        %5402 = vmatpush1.msra.mxu0 0.0
        %5403 = vmatprep.subr.mxu0 0.0
        %5404 = vmatpush1.msra.mxu0 0.0
        %5405 = vmatprep.subr.mxu0 0.0
        %5406 = vmatpush1.msra.mxu0 0.0
        %5407 = vmatprep.subr.mxu0 0.0
        %5408 = vmatpush1.msra.mxu0 0.0
        %5409 = vmatprep.subr.mxu0 0.0
        %5410 = vmatpush1.msra.mxu0 0.0
        %5411 = vmatprep.subr.mxu0 0.0
        %5412 = vmatpush1.msra.mxu0 0.0
        %5413 = vmatprep.subr.mxu0 0.0
        %5414 = vmatpush1.msra.mxu0 0.0
        %5415 = vmatprep.subr.mxu0 0.0
        %5416 = vmatpush1.msra.mxu0 0.0
        %5417 = vmatprep.subr.mxu0 0.0
        %5418 = vmatpush1.msra.mxu0 0.0
        %5419 = vmatprep.subr.mxu0 0.0
        %5420 = vmatpush1.msra.mxu0 0.0
        %5421 = vmatprep.subr.mxu0 0.0
        %5422 = vmatpush1.msra.mxu0 0.0
        %5423 = vmatprep.subr.mxu0 0.0
        %5424 = vmatpush1.msra.mxu0 0.0
        %5425 = vmatprep.mubr.f32.mxu0 0.0
        %5426 = vmatmul.mubr.f32.gmra.mrb[0].mxu0 %v5255
        %v5427 = vpop.f32.mrb[0].mxu0
        %v5428 = vadd.f32 0.0, %v5427
        %v5429 = vpop.f32.mrb[0].mxu0
        %5430 = vmatprep.mubr.f32.mxu0 0.0
        %5431 = vmatmul.mubr.f32.gmra.mrb[0].mxu0 %v5258
        %v5432 = vpop.f32.mrb[0].mxu0
        %v5433 = vadd.f32 0.0, %v5432
        %v5434 = vpop.f32.mrb[0].mxu0
        %5435 = vmatprep.mubr.f32.mxu0 0.0
        %5436 = vmatmul.mubr.f32.gmra.mrb[0].mxu0 %v5261
        %v5437 = vpop.f32.mrb[0].mxu0
        %v5438 = vadd.f32 0.0, %v5437
        %v5439 = vpop.f32.mrb[0].mxu0
        %5440 = vmatprep.mubr.f32.mxu0 0.0
        %5441 = vmatmul.mubr.f32.gmra.mrb[0].mxu0 %v5264
        %v5442 = vpop.f32.mrb[0].mxu0
        %v5443 = vadd.f32 0.0, %v5442
        %v5444 = vpop.f32.mrb[0].mxu0
        %5445 = vdwg.mxu0
        %v5446 = vadd.f32 %v5220, %v5339
        %v5447 = vadd.f32 %v5221, %v5341
        %v5448 = vadd.f32 %v5222, %v5428
        %v5449 = vadd.f32 %v5223, %v5345
        %v5450 = vadd.f32 %v5224, %v5347
        %v5451 = vadd.f32 %v5225, %v5433
        %v5452 = vadd.f32 %v5226, %v5351
        %v5453 = vadd.f32 %v5227, %v5353
        %v5454 = vadd.f32 %v5228, %v5438
        %v5455 = vadd.f32 %v5229, %v5357
        %v5456 = vadd.f32 %v5230, %v5359
        %v5457 = vadd.f32 %v5231, %v5443
        %v5458 = vld [vmem:[#allocation2 + $0x4] sm:$0xff]
        %v5459 = vld [vmem:[#allocation2 + $0xc] sm:$0xff]
        %s5460 = scalar_lea.vmem %s2, 480
        %v5461 = vld [vmem:[%s5460] sm:$0xff]
        %v5462 = vld [vmem:[%s5460 + $0x8] sm:$0xff]
        %v5463 = vld [vmem:[%s5460 + $0x10] sm:$0xff]
        %v5464 = vld [vmem:[%s5460 + $0x18] sm:$0xff]
        %v5467 = vcombine.high %v5458, %v5458
        %v5468 = vcombine.high %v5459, %v5459
        %5469 = vrot.lane.b32.xlu0 %v5458, 111
        %v5470 = vpop.permute.xlu0 %5469
        %5471 = vrot.lane.b32.xlu0 %v5467, 111
        %v5472 = vpop.permute.xlu0 %5471
        %5473 = vrot.lane.b32.xlu0 %v5459, 111
        %v5474 = vpop.permute.xlu0 %5473
        %5475 = vrot.lane.b32.xlu0 %v5468, 111
        %v5476 = vpop.permute.xlu0 %5475
        %v5477 = vsel %vm1563, %v5470, %v5472
        %v5478 = vsel %vm1563, %v5472, %v5474
        %v5479 = vsel %vm1563, %v5474, %v5476
        %v5481 = vsel %vm251, %v5461, 0
        %v5484 = vsel %vm251, %v5462, 0
        %v5487 = vsel %vm251, %v5463, 0
        %v5490 = vsel %vm251, %v5464, 0
        %v5492 = vsel %vm264, %v5477, 0
        %v5494 = vsel %vm264, %v5478, 0
        %v5496 = vsel %vm264, %v5479, 0
        %5498 = vmatprep.subr.mxu0 %v5494
        %5499 = vmatpush1.msra.mxu0 %v5492
        %5500 = vmatprep.subr.mxu0 0.0
        %5501 = vmatpush1.msra.mxu0 0.0
        %5502 = vmatprep.subr.mxu0 0.0
        %5503 = vmatpush1.msra.mxu0 0.0
        %5504 = vmatprep.subr.mxu0 0.0
        %5505 = vmatpush1.msra.mxu0 0.0
        %5506 = vmatprep.subr.mxu0 0.0
        %5507 = vmatpush1.msra.mxu0 0.0
        %5508 = vmatprep.subr.mxu0 0.0
        %5509 = vmatpush1.msra.mxu0 0.0
        %5510 = vmatprep.subr.mxu0 0.0
        %5511 = vmatpush1.msra.mxu0 0.0
        %5512 = vmatprep.subr.mxu0 0.0
        %5513 = vmatpush1.msra.mxu0 0.0
        %5514 = vmatprep.subr.mxu0 0.0
        %5515 = vmatpush1.msra.mxu0 0.0
        %5516 = vmatprep.subr.mxu0 0.0
        %5517 = vmatpush1.msra.mxu0 0.0
        %5518 = vmatprep.subr.mxu0 0.0
        %5519 = vmatpush1.msra.mxu0 0.0
        %5520 = vmatprep.subr.mxu0 0.0
        %5521 = vmatpush1.msra.mxu0 0.0
        %5522 = vmatprep.subr.mxu0 0.0
        %5523 = vmatpush1.msra.mxu0 0.0
        %5524 = vmatprep.subr.mxu0 0.0
        %5525 = vmatpush1.msra.mxu0 0.0
        %5526 = vmatprep.subr.mxu0 0.0
        %5527 = vmatpush1.msra.mxu0 0.0
        %5528 = vmatprep.subr.mxu0 0.0
        %5529 = vmatpush1.msra.mxu0 0.0
        %5530 = vmatprep.subr.mxu0 0.0
        %5531 = vmatpush1.msra.mxu0 0.0
        %5532 = vmatprep.subr.mxu0 0.0
        %5533 = vmatpush1.msra.mxu0 0.0
        %5534 = vmatprep.subr.mxu0 0.0
        %5535 = vmatpush1.msra.mxu0 0.0
        %5536 = vmatprep.subr.mxu0 0.0
        %5537 = vmatpush1.msra.mxu0 0.0
        %5538 = vmatprep.subr.mxu0 0.0
        %5539 = vmatpush1.msra.mxu0 0.0
        %5540 = vmatprep.subr.mxu0 0.0
        %5541 = vmatpush1.msra.mxu0 0.0
        %5542 = vmatprep.subr.mxu0 0.0
        %5543 = vmatpush1.msra.mxu0 0.0
        %5544 = vmatprep.subr.mxu0 0.0
        %5545 = vmatpush1.msra.mxu0 0.0
        %5546 = vmatprep.subr.mxu0 0.0
        %5547 = vmatpush1.msra.mxu0 0.0
        %5548 = vmatprep.subr.mxu0 0.0
        %5549 = vmatpush1.msra.mxu0 0.0
        %5550 = vmatprep.subr.mxu0 0.0
        %5551 = vmatpush1.msra.mxu0 0.0
        %5552 = vmatprep.subr.mxu0 0.0
        %5553 = vmatpush1.msra.mxu0 0.0
        %5554 = vmatprep.subr.mxu0 0.0
        %5555 = vmatpush1.msra.mxu0 0.0
        %5556 = vmatprep.subr.mxu0 0.0
        %5557 = vmatpush1.msra.mxu0 0.0
        %5558 = vmatprep.subr.mxu0 0.0
        %5559 = vmatpush1.msra.mxu0 0.0
        %5560 = vmatprep.subr.mxu0 0.0
        %5561 = vmatpush1.msra.mxu0 0.0
        %5562 = vmatprep.mubr.f32.mxu0 0.0
        %5563 = vmatmul.mubr.f32.gmra.mrb[0].mxu0 %v5481
        %v5564 = vpop.f32.mrb[0].mxu0
        %v5565 = vadd.f32 0.0, %v5564
        %v5566 = vpop.f32.mrb[0].mxu0
        %v5567 = vadd.f32 0.0, %v5566
        %5568 = vmatprep.mubr.f32.mxu0 0.0
        %5569 = vmatmul.mubr.f32.gmra.mrb[0].mxu0 %v5484
        %v5570 = vpop.f32.mrb[0].mxu0
        %v5571 = vadd.f32 0.0, %v5570
        %v5572 = vpop.f32.mrb[0].mxu0
        %v5573 = vadd.f32 0.0, %v5572
        %5574 = vmatprep.mubr.f32.mxu0 0.0
        %5575 = vmatmul.mubr.f32.gmra.mrb[0].mxu0 %v5487
        %v5576 = vpop.f32.mrb[0].mxu0
        %v5577 = vadd.f32 0.0, %v5576
        %v5578 = vpop.f32.mrb[0].mxu0
        %v5579 = vadd.f32 0.0, %v5578
        %5580 = vmatprep.mubr.f32.mxu0 0.0
        %5581 = vmatmul.mubr.f32.gmra.mrb[0].mxu0 %v5490
        %v5582 = vpop.f32.mrb[0].mxu0
        %v5583 = vadd.f32 0.0, %v5582
        %v5584 = vpop.f32.mrb[0].mxu0
        %v5585 = vadd.f32 0.0, %v5584
        %5586 = vdwg.mxu0
        %5587 = vmatprep.subr.mxu0 0.0
        %5588 = vmatpush1.msra.mxu0 %v5496
        %5589 = vmatprep.subr.mxu0 0.0
        %5590 = vmatpush1.msra.mxu0 0.0
        %5591 = vmatprep.subr.mxu0 0.0
        %5592 = vmatpush1.msra.mxu0 0.0
        %5593 = vmatprep.subr.mxu0 0.0
        %5594 = vmatpush1.msra.mxu0 0.0
        %5595 = vmatprep.subr.mxu0 0.0
        %5596 = vmatpush1.msra.mxu0 0.0
        %5597 = vmatprep.subr.mxu0 0.0
        %5598 = vmatpush1.msra.mxu0 0.0
        %5599 = vmatprep.subr.mxu0 0.0
        %5600 = vmatpush1.msra.mxu0 0.0
        %5601 = vmatprep.subr.mxu0 0.0
        %5602 = vmatpush1.msra.mxu0 0.0
        %5603 = vmatprep.subr.mxu0 0.0
        %5604 = vmatpush1.msra.mxu0 0.0
        %5605 = vmatprep.subr.mxu0 0.0
        %5606 = vmatpush1.msra.mxu0 0.0
        %5607 = vmatprep.subr.mxu0 0.0
        %5608 = vmatpush1.msra.mxu0 0.0
        %5609 = vmatprep.subr.mxu0 0.0
        %5610 = vmatpush1.msra.mxu0 0.0
        %5611 = vmatprep.subr.mxu0 0.0
        %5612 = vmatpush1.msra.mxu0 0.0
        %5613 = vmatprep.subr.mxu0 0.0
        %5614 = vmatpush1.msra.mxu0 0.0
        %5615 = vmatprep.subr.mxu0 0.0
        %5616 = vmatpush1.msra.mxu0 0.0
        %5617 = vmatprep.subr.mxu0 0.0
        %5618 = vmatpush1.msra.mxu0 0.0
        %5619 = vmatprep.subr.mxu0 0.0
        %5620 = vmatpush1.msra.mxu0 0.0
        %5621 = vmatprep.subr.mxu0 0.0
        %5622 = vmatpush1.msra.mxu0 0.0
        %5623 = vmatprep.subr.mxu0 0.0
        %5624 = vmatpush1.msra.mxu0 0.0
        %5625 = vmatprep.subr.mxu0 0.0
        %5626 = vmatpush1.msra.mxu0 0.0
        %5627 = vmatprep.subr.mxu0 0.0
        %5628 = vmatpush1.msra.mxu0 0.0
        %5629 = vmatprep.subr.mxu0 0.0
        %5630 = vmatpush1.msra.mxu0 0.0
        %5631 = vmatprep.subr.mxu0 0.0
        %5632 = vmatpush1.msra.mxu0 0.0
        %5633 = vmatprep.subr.mxu0 0.0
        %5634 = vmatpush1.msra.mxu0 0.0
        %5635 = vmatprep.subr.mxu0 0.0
        %5636 = vmatpush1.msra.mxu0 0.0
        %5637 = vmatprep.subr.mxu0 0.0
        %5638 = vmatpush1.msra.mxu0 0.0
        %5639 = vmatprep.subr.mxu0 0.0
        %5640 = vmatpush1.msra.mxu0 0.0
        %5641 = vmatprep.subr.mxu0 0.0
        %5642 = vmatpush1.msra.mxu0 0.0
        %5643 = vmatprep.subr.mxu0 0.0
        %5644 = vmatpush1.msra.mxu0 0.0
        %5645 = vmatprep.subr.mxu0 0.0
        %5646 = vmatpush1.msra.mxu0 0.0
        %5647 = vmatprep.subr.mxu0 0.0
        %5648 = vmatpush1.msra.mxu0 0.0
        %5649 = vmatprep.subr.mxu0 0.0
        %5650 = vmatpush1.msra.mxu0 0.0
        %5651 = vmatprep.mubr.f32.mxu0 0.0
        %5652 = vmatmul.mubr.f32.gmra.mrb[0].mxu0 %v5481
        %v5653 = vpop.f32.mrb[0].mxu0
        %v5654 = vadd.f32 0.0, %v5653
        %v5655 = vpop.f32.mrb[0].mxu0
        %5656 = vmatprep.mubr.f32.mxu0 0.0
        %5657 = vmatmul.mubr.f32.gmra.mrb[0].mxu0 %v5484
        %v5658 = vpop.f32.mrb[0].mxu0
        %v5659 = vadd.f32 0.0, %v5658
        %v5660 = vpop.f32.mrb[0].mxu0
        %5661 = vmatprep.mubr.f32.mxu0 0.0
        %5662 = vmatmul.mubr.f32.gmra.mrb[0].mxu0 %v5487
        %v5663 = vpop.f32.mrb[0].mxu0
        %v5664 = vadd.f32 0.0, %v5663
        %v5665 = vpop.f32.mrb[0].mxu0
        %5666 = vmatprep.mubr.f32.mxu0 0.0
        %5667 = vmatmul.mubr.f32.gmra.mrb[0].mxu0 %v5490
        %v5668 = vpop.f32.mrb[0].mxu0
        %v5669 = vadd.f32 0.0, %v5668
        %v5670 = vpop.f32.mrb[0].mxu0
        %5671 = vdwg.mxu0
        %v5672 = vadd.f32 %v5446, %v5565
        %v5673 = vadd.f32 %v5447, %v5567
        %v5674 = vadd.f32 %v5448, %v5654
        %v5675 = vadd.f32 %v5449, %v5571
        %v5676 = vadd.f32 %v5450, %v5573
        %v5677 = vadd.f32 %v5451, %v5659
        %v5678 = vadd.f32 %v5452, %v5577
        %v5679 = vadd.f32 %v5453, %v5579
        %v5680 = vadd.f32 %v5454, %v5664
        %v5681 = vadd.f32 %v5455, %v5583
        %v5682 = vadd.f32 %v5456, %v5585
        %v5683 = vadd.f32 %v5457, %v5669
        %v5684 = vld [vmem:[#allocation2 + $0x4] sm:$0xff]
        %v5685 = vld [vmem:[#allocation2 + $0xc] sm:$0xff]
        %s5686 = scalar_lea.vmem %s2, 512
        %v5687 = vld [vmem:[%s5686] sm:$0xff]
        %v5688 = vld [vmem:[%s5686 + $0x8] sm:$0xff]
        %v5689 = vld [vmem:[%s5686 + $0x10] sm:$0xff]
        %v5690 = vld [vmem:[%s5686 + $0x18] sm:$0xff]
        %v5693 = vcombine.high %v5684, %v5684
        %v5694 = vcombine.high %v5685, %v5685
        %5695 = vrot.lane.b32.xlu0 %v5684, 110
        %v5696 = vpop.permute.xlu0 %5695
        %5697 = vrot.lane.b32.xlu0 %v5693, 110
        %v5698 = vpop.permute.xlu0 %5697
        %5699 = vrot.lane.b32.xlu0 %v5685, 110
        %v5700 = vpop.permute.xlu0 %5699
        %5701 = vrot.lane.b32.xlu0 %v5694, 110
        %v5702 = vpop.permute.xlu0 %5701
        %v5703 = vsel %vm1790, %v5696, %v5698
        %v5704 = vsel %vm1790, %v5698, %v5700
        %v5705 = vsel %vm1790, %v5700, %v5702
        %v5707 = vsel %vm251, %v5687, 0
        %v5710 = vsel %vm251, %v5688, 0
        %v5713 = vsel %vm251, %v5689, 0
        %v5716 = vsel %vm251, %v5690, 0
        %v5718 = vsel %vm264, %v5703, 0
        %v5720 = vsel %vm264, %v5704, 0
        %v5722 = vsel %vm264, %v5705, 0
        %5724 = vmatprep.subr.mxu0 %v5720
        %5725 = vmatpush1.msra.mxu0 %v5718
        %5726 = vmatprep.subr.mxu0 0.0
        %5727 = vmatpush1.msra.mxu0 0.0
        %5728 = vmatprep.subr.mxu0 0.0
        %5729 = vmatpush1.msra.mxu0 0.0
        %5730 = vmatprep.subr.mxu0 0.0
        %5731 = vmatpush1.msra.mxu0 0.0
        %5732 = vmatprep.subr.mxu0 0.0
        %5733 = vmatpush1.msra.mxu0 0.0
        %5734 = vmatprep.subr.mxu0 0.0
        %5735 = vmatpush1.msra.mxu0 0.0
        %5736 = vmatprep.subr.mxu0 0.0
        %5737 = vmatpush1.msra.mxu0 0.0
        %5738 = vmatprep.subr.mxu0 0.0
        %5739 = vmatpush1.msra.mxu0 0.0
        %5740 = vmatprep.subr.mxu0 0.0
        %5741 = vmatpush1.msra.mxu0 0.0
        %5742 = vmatprep.subr.mxu0 0.0
        %5743 = vmatpush1.msra.mxu0 0.0
        %5744 = vmatprep.subr.mxu0 0.0
        %5745 = vmatpush1.msra.mxu0 0.0
        %5746 = vmatprep.subr.mxu0 0.0
        %5747 = vmatpush1.msra.mxu0 0.0
        %5748 = vmatprep.subr.mxu0 0.0
        %5749 = vmatpush1.msra.mxu0 0.0
        %5750 = vmatprep.subr.mxu0 0.0
        %5751 = vmatpush1.msra.mxu0 0.0
        %5752 = vmatprep.subr.mxu0 0.0
        %5753 = vmatpush1.msra.mxu0 0.0
        %5754 = vmatprep.subr.mxu0 0.0
        %5755 = vmatpush1.msra.mxu0 0.0
        %5756 = vmatprep.subr.mxu0 0.0
        %5757 = vmatpush1.msra.mxu0 0.0
        %5758 = vmatprep.subr.mxu0 0.0
        %5759 = vmatpush1.msra.mxu0 0.0
        %5760 = vmatprep.subr.mxu0 0.0
        %5761 = vmatpush1.msra.mxu0 0.0
        %5762 = vmatprep.subr.mxu0 0.0
        %5763 = vmatpush1.msra.mxu0 0.0
        %5764 = vmatprep.subr.mxu0 0.0
        %5765 = vmatpush1.msra.mxu0 0.0
        %5766 = vmatprep.subr.mxu0 0.0
        %5767 = vmatpush1.msra.mxu0 0.0
        %5768 = vmatprep.subr.mxu0 0.0
        %5769 = vmatpush1.msra.mxu0 0.0
        %5770 = vmatprep.subr.mxu0 0.0
        %5771 = vmatpush1.msra.mxu0 0.0
        %5772 = vmatprep.subr.mxu0 0.0
        %5773 = vmatpush1.msra.mxu0 0.0
        %5774 = vmatprep.subr.mxu0 0.0
        %5775 = vmatpush1.msra.mxu0 0.0
        %5776 = vmatprep.subr.mxu0 0.0
        %5777 = vmatpush1.msra.mxu0 0.0
        %5778 = vmatprep.subr.mxu0 0.0
        %5779 = vmatpush1.msra.mxu0 0.0
        %5780 = vmatprep.subr.mxu0 0.0
        %5781 = vmatpush1.msra.mxu0 0.0
        %5782 = vmatprep.subr.mxu0 0.0
        %5783 = vmatpush1.msra.mxu0 0.0
        %5784 = vmatprep.subr.mxu0 0.0
        %5785 = vmatpush1.msra.mxu0 0.0
        %5786 = vmatprep.subr.mxu0 0.0
        %5787 = vmatpush1.msra.mxu0 0.0
        %5788 = vmatprep.mubr.f32.mxu0 0.0
        %5789 = vmatmul.mubr.f32.gmra.mrb[0].mxu0 %v5707
        %v5790 = vpop.f32.mrb[0].mxu0
        %v5791 = vadd.f32 0.0, %v5790
        %v5792 = vpop.f32.mrb[0].mxu0
        %v5793 = vadd.f32 0.0, %v5792
        %5794 = vmatprep.mubr.f32.mxu0 0.0
        %5795 = vmatmul.mubr.f32.gmra.mrb[0].mxu0 %v5710
        %v5796 = vpop.f32.mrb[0].mxu0
        %v5797 = vadd.f32 0.0, %v5796
        %v5798 = vpop.f32.mrb[0].mxu0
        %v5799 = vadd.f32 0.0, %v5798
        %5800 = vmatprep.mubr.f32.mxu0 0.0
        %5801 = vmatmul.mubr.f32.gmra.mrb[0].mxu0 %v5713
        %v5802 = vpop.f32.mrb[0].mxu0
        %v5803 = vadd.f32 0.0, %v5802
        %v5804 = vpop.f32.mrb[0].mxu0
        %v5805 = vadd.f32 0.0, %v5804
        %5806 = vmatprep.mubr.f32.mxu0 0.0
        %5807 = vmatmul.mubr.f32.gmra.mrb[0].mxu0 %v5716
        %v5808 = vpop.f32.mrb[0].mxu0
        %v5809 = vadd.f32 0.0, %v5808
        %v5810 = vpop.f32.mrb[0].mxu0
        %v5811 = vadd.f32 0.0, %v5810
        %5812 = vdwg.mxu0
        %5813 = vmatprep.subr.mxu0 0.0
        %5814 = vmatpush1.msra.mxu0 %v5722
        %5815 = vmatprep.subr.mxu0 0.0
        %5816 = vmatpush1.msra.mxu0 0.0
        %5817 = vmatprep.subr.mxu0 0.0
        %5818 = vmatpush1.msra.mxu0 0.0
        %5819 = vmatprep.subr.mxu0 0.0
        %5820 = vmatpush1.msra.mxu0 0.0
        %5821 = vmatprep.subr.mxu0 0.0
        %5822 = vmatpush1.msra.mxu0 0.0
        %5823 = vmatprep.subr.mxu0 0.0
        %5824 = vmatpush1.msra.mxu0 0.0
        %5825 = vmatprep.subr.mxu0 0.0
        %5826 = vmatpush1.msra.mxu0 0.0
        %5827 = vmatprep.subr.mxu0 0.0
        %5828 = vmatpush1.msra.mxu0 0.0
        %5829 = vmatprep.subr.mxu0 0.0
        %5830 = vmatpush1.msra.mxu0 0.0
        %5831 = vmatprep.subr.mxu0 0.0
        %5832 = vmatpush1.msra.mxu0 0.0
        %5833 = vmatprep.subr.mxu0 0.0
        %5834 = vmatpush1.msra.mxu0 0.0
        %5835 = vmatprep.subr.mxu0 0.0
        %5836 = vmatpush1.msra.mxu0 0.0
        %5837 = vmatprep.subr.mxu0 0.0
        %5838 = vmatpush1.msra.mxu0 0.0
        %5839 = vmatprep.subr.mxu0 0.0
        %5840 = vmatpush1.msra.mxu0 0.0
        %5841 = vmatprep.subr.mxu0 0.0
        %5842 = vmatpush1.msra.mxu0 0.0
        %5843 = vmatprep.subr.mxu0 0.0
        %5844 = vmatpush1.msra.mxu0 0.0
        %5845 = vmatprep.subr.mxu0 0.0
        %5846 = vmatpush1.msra.mxu0 0.0
        %5847 = vmatprep.subr.mxu0 0.0
        %5848 = vmatpush1.msra.mxu0 0.0
        %5849 = vmatprep.subr.mxu0 0.0
        %5850 = vmatpush1.msra.mxu0 0.0
        %5851 = vmatprep.subr.mxu0 0.0
        %5852 = vmatpush1.msra.mxu0 0.0
        %5853 = vmatprep.subr.mxu0 0.0
        %5854 = vmatpush1.msra.mxu0 0.0
        %5855 = vmatprep.subr.mxu0 0.0
        %5856 = vmatpush1.msra.mxu0 0.0
        %5857 = vmatprep.subr.mxu0 0.0
        %5858 = vmatpush1.msra.mxu0 0.0
        %5859 = vmatprep.subr.mxu0 0.0
        %5860 = vmatpush1.msra.mxu0 0.0
        %5861 = vmatprep.subr.mxu0 0.0
        %5862 = vmatpush1.msra.mxu0 0.0
        %5863 = vmatprep.subr.mxu0 0.0
        %5864 = vmatpush1.msra.mxu0 0.0
        %5865 = vmatprep.subr.mxu0 0.0
        %5866 = vmatpush1.msra.mxu0 0.0
        %5867 = vmatprep.subr.mxu0 0.0
        %5868 = vmatpush1.msra.mxu0 0.0
        %5869 = vmatprep.subr.mxu0 0.0
        %5870 = vmatpush1.msra.mxu0 0.0
        %5871 = vmatprep.subr.mxu0 0.0
        %5872 = vmatpush1.msra.mxu0 0.0
        %5873 = vmatprep.subr.mxu0 0.0
        %5874 = vmatpush1.msra.mxu0 0.0
        %5875 = vmatprep.subr.mxu0 0.0
        %5876 = vmatpush1.msra.mxu0 0.0
        %5877 = vmatprep.mubr.f32.mxu0 0.0
        %5878 = vmatmul.mubr.f32.gmra.mrb[0].mxu0 %v5707
        %v5879 = vpop.f32.mrb[0].mxu0
        %v5880 = vadd.f32 0.0, %v5879
        %v5881 = vpop.f32.mrb[0].mxu0
        %5882 = vmatprep.mubr.f32.mxu0 0.0
        %5883 = vmatmul.mubr.f32.gmra.mrb[0].mxu0 %v5710
        %v5884 = vpop.f32.mrb[0].mxu0
        %v5885 = vadd.f32 0.0, %v5884
        %v5886 = vpop.f32.mrb[0].mxu0
        %5887 = vmatprep.mubr.f32.mxu0 0.0
        %5888 = vmatmul.mubr.f32.gmra.mrb[0].mxu0 %v5713
        %v5889 = vpop.f32.mrb[0].mxu0
        %v5890 = vadd.f32 0.0, %v5889
        %v5891 = vpop.f32.mrb[0].mxu0
        %5892 = vmatprep.mubr.f32.mxu0 0.0
        %5893 = vmatmul.mubr.f32.gmra.mrb[0].mxu0 %v5716
        %v5894 = vpop.f32.mrb[0].mxu0
        %v5895 = vadd.f32 0.0, %v5894
        %v5896 = vpop.f32.mrb[0].mxu0
        %5897 = vdwg.mxu0
        %v5898 = vadd.f32 %v5672, %v5791
        %v5899 = vadd.f32 %v5673, %v5793
        %v5900 = vadd.f32 %v5674, %v5880
        %v5901 = vadd.f32 %v5675, %v5797
        %v5902 = vadd.f32 %v5676, %v5799
        %v5903 = vadd.f32 %v5677, %v5885
        %v5904 = vadd.f32 %v5678, %v5803
        %v5905 = vadd.f32 %v5679, %v5805
        %v5906 = vadd.f32 %v5680, %v5890
        %v5907 = vadd.f32 %v5681, %v5809
        %v5908 = vadd.f32 %v5682, %v5811
        %v5909 = vadd.f32 %v5683, %v5895
        %v5910 = vld [vmem:[#allocation2 + $0x4] sm:$0xff]
        %v5911 = vld [vmem:[#allocation2 + $0xc] sm:$0xff]
        %s5912 = scalar_lea.vmem %s2, 544
        %v5913 = vld [vmem:[%s5912] sm:$0xff]
        %v5914 = vld [vmem:[%s5912 + $0x8] sm:$0xff]
        %v5915 = vld [vmem:[%s5912 + $0x10] sm:$0xff]
        %v5916 = vld [vmem:[%s5912 + $0x18] sm:$0xff]
        %v5919 = vcombine.high %v5910, %v5910
        %v5920 = vcombine.high %v5911, %v5911
        %5921 = vrot.lane.b32.xlu0 %v5910, 109
        %v5922 = vpop.permute.xlu0 %5921
        %5923 = vrot.lane.b32.xlu0 %v5919, 109
        %v5924 = vpop.permute.xlu0 %5923
        %5925 = vrot.lane.b32.xlu0 %v5911, 109
        %v5926 = vpop.permute.xlu0 %5925
        %5927 = vrot.lane.b32.xlu0 %v5920, 109
        %v5928 = vpop.permute.xlu0 %5927
        %v5929 = vsel %vm2017, %v5922, %v5924
        %v5930 = vsel %vm2017, %v5924, %v5926
        %v5931 = vsel %vm2017, %v5926, %v5928
        %v5933 = vsel %vm251, %v5913, 0
        %v5936 = vsel %vm251, %v5914, 0
        %v5939 = vsel %vm251, %v5915, 0
        %v5942 = vsel %vm251, %v5916, 0
        %v5944 = vsel %vm264, %v5929, 0
        %v5946 = vsel %vm264, %v5930, 0
        %v5948 = vsel %vm264, %v5931, 0
        %5950 = vmatprep.subr.mxu0 %v5946
        %5951 = vmatpush1.msra.mxu0 %v5944
        %5952 = vmatprep.subr.mxu0 0.0
        %5953 = vmatpush1.msra.mxu0 0.0
        %5954 = vmatprep.subr.mxu0 0.0
        %5955 = vmatpush1.msra.mxu0 0.0
        %5956 = vmatprep.subr.mxu0 0.0
        %5957 = vmatpush1.msra.mxu0 0.0
        %5958 = vmatprep.subr.mxu0 0.0
        %5959 = vmatpush1.msra.mxu0 0.0
        %5960 = vmatprep.subr.mxu0 0.0
        %5961 = vmatpush1.msra.mxu0 0.0
        %5962 = vmatprep.subr.mxu0 0.0
        %5963 = vmatpush1.msra.mxu0 0.0
        %5964 = vmatprep.subr.mxu0 0.0
        %5965 = vmatpush1.msra.mxu0 0.0
        %5966 = vmatprep.subr.mxu0 0.0
        %5967 = vmatpush1.msra.mxu0 0.0
        %5968 = vmatprep.subr.mxu0 0.0
        %5969 = vmatpush1.msra.mxu0 0.0
        %5970 = vmatprep.subr.mxu0 0.0
        %5971 = vmatpush1.msra.mxu0 0.0
        %5972 = vmatprep.subr.mxu0 0.0
        %5973 = vmatpush1.msra.mxu0 0.0
        %5974 = vmatprep.subr.mxu0 0.0
        %5975 = vmatpush1.msra.mxu0 0.0
        %5976 = vmatprep.subr.mxu0 0.0
        %5977 = vmatpush1.msra.mxu0 0.0
        %5978 = vmatprep.subr.mxu0 0.0
        %5979 = vmatpush1.msra.mxu0 0.0
        %5980 = vmatprep.subr.mxu0 0.0
        %5981 = vmatpush1.msra.mxu0 0.0
        %5982 = vmatprep.subr.mxu0 0.0
        %5983 = vmatpush1.msra.mxu0 0.0
        %5984 = vmatprep.subr.mxu0 0.0
        %5985 = vmatpush1.msra.mxu0 0.0
        %5986 = vmatprep.subr.mxu0 0.0
        %5987 = vmatpush1.msra.mxu0 0.0
        %5988 = vmatprep.subr.mxu0 0.0
        %5989 = vmatpush1.msra.mxu0 0.0
        %5990 = vmatprep.subr.mxu0 0.0
        %5991 = vmatpush1.msra.mxu0 0.0
        %5992 = vmatprep.subr.mxu0 0.0
        %5993 = vmatpush1.msra.mxu0 0.0
        %5994 = vmatprep.subr.mxu0 0.0
        %5995 = vmatpush1.msra.mxu0 0.0
        %5996 = vmatprep.subr.mxu0 0.0
        %5997 = vmatpush1.msra.mxu0 0.0
        %5998 = vmatprep.subr.mxu0 0.0
        %5999 = vmatpush1.msra.mxu0 0.0
        %6000 = vmatprep.subr.mxu0 0.0
        %6001 = vmatpush1.msra.mxu0 0.0
        %6002 = vmatprep.subr.mxu0 0.0
        %6003 = vmatpush1.msra.mxu0 0.0
        %6004 = vmatprep.subr.mxu0 0.0
        %6005 = vmatpush1.msra.mxu0 0.0
        %6006 = vmatprep.subr.mxu0 0.0
        %6007 = vmatpush1.msra.mxu0 0.0
        %6008 = vmatprep.subr.mxu0 0.0
        %6009 = vmatpush1.msra.mxu0 0.0
        %6010 = vmatprep.subr.mxu0 0.0
        %6011 = vmatpush1.msra.mxu0 0.0
        %6012 = vmatprep.subr.mxu0 0.0
        %6013 = vmatpush1.msra.mxu0 0.0
        %6014 = vmatprep.mubr.f32.mxu0 0.0
        %6015 = vmatmul.mubr.f32.gmra.mrb[0].mxu0 %v5933
        %v6016 = vpop.f32.mrb[0].mxu0
        %v6017 = vadd.f32 0.0, %v6016
        %v6018 = vpop.f32.mrb[0].mxu0
        %v6019 = vadd.f32 0.0, %v6018
        %6020 = vmatprep.mubr.f32.mxu0 0.0
        %6021 = vmatmul.mubr.f32.gmra.mrb[0].mxu0 %v5936
        %v6022 = vpop.f32.mrb[0].mxu0
        %v6023 = vadd.f32 0.0, %v6022
        %v6024 = vpop.f32.mrb[0].mxu0
        %v6025 = vadd.f32 0.0, %v6024
        %6026 = vmatprep.mubr.f32.mxu0 0.0
        %6027 = vmatmul.mubr.f32.gmra.mrb[0].mxu0 %v5939
        %v6028 = vpop.f32.mrb[0].mxu0
        %v6029 = vadd.f32 0.0, %v6028
        %v6030 = vpop.f32.mrb[0].mxu0
        %v6031 = vadd.f32 0.0, %v6030
        %6032 = vmatprep.mubr.f32.mxu0 0.0
        %6033 = vmatmul.mubr.f32.gmra.mrb[0].mxu0 %v5942
        %v6034 = vpop.f32.mrb[0].mxu0
        %v6035 = vadd.f32 0.0, %v6034
        %v6036 = vpop.f32.mrb[0].mxu0
        %v6037 = vadd.f32 0.0, %v6036
        %6038 = vdwg.mxu0
        %6039 = vmatprep.subr.mxu0 0.0
        %6040 = vmatpush1.msra.mxu0 %v5948
        %6041 = vmatprep.subr.mxu0 0.0
        %6042 = vmatpush1.msra.mxu0 0.0
        %6043 = vmatprep.subr.mxu0 0.0
        %6044 = vmatpush1.msra.mxu0 0.0
        %6045 = vmatprep.subr.mxu0 0.0
        %6046 = vmatpush1.msra.mxu0 0.0
        %6047 = vmatprep.subr.mxu0 0.0
        %6048 = vmatpush1.msra.mxu0 0.0
        %6049 = vmatprep.subr.mxu0 0.0
        %6050 = vmatpush1.msra.mxu0 0.0
        %6051 = vmatprep.subr.mxu0 0.0
        %6052 = vmatpush1.msra.mxu0 0.0
        %6053 = vmatprep.subr.mxu0 0.0
        %6054 = vmatpush1.msra.mxu0 0.0
        %6055 = vmatprep.subr.mxu0 0.0
        %6056 = vmatpush1.msra.mxu0 0.0
        %6057 = vmatprep.subr.mxu0 0.0
        %6058 = vmatpush1.msra.mxu0 0.0
        %6059 = vmatprep.subr.mxu0 0.0
        %6060 = vmatpush1.msra.mxu0 0.0
        %6061 = vmatprep.subr.mxu0 0.0
        %6062 = vmatpush1.msra.mxu0 0.0
        %6063 = vmatprep.subr.mxu0 0.0
        %6064 = vmatpush1.msra.mxu0 0.0
        %6065 = vmatprep.subr.mxu0 0.0
        %6066 = vmatpush1.msra.mxu0 0.0
        %6067 = vmatprep.subr.mxu0 0.0
        %6068 = vmatpush1.msra.mxu0 0.0
        %6069 = vmatprep.subr.mxu0 0.0
        %6070 = vmatpush1.msra.mxu0 0.0
        %6071 = vmatprep.subr.mxu0 0.0
        %6072 = vmatpush1.msra.mxu0 0.0
        %6073 = vmatprep.subr.mxu0 0.0
        %6074 = vmatpush1.msra.mxu0 0.0
        %6075 = vmatprep.subr.mxu0 0.0
        %6076 = vmatpush1.msra.mxu0 0.0
        %6077 = vmatprep.subr.mxu0 0.0
        %6078 = vmatpush1.msra.mxu0 0.0
        %6079 = vmatprep.subr.mxu0 0.0
        %6080 = vmatpush1.msra.mxu0 0.0
        %6081 = vmatprep.subr.mxu0 0.0
        %6082 = vmatpush1.msra.mxu0 0.0
        %6083 = vmatprep.subr.mxu0 0.0
        %6084 = vmatpush1.msra.mxu0 0.0
        %6085 = vmatprep.subr.mxu0 0.0
        %6086 = vmatpush1.msra.mxu0 0.0
        %6087 = vmatprep.subr.mxu0 0.0
        %6088 = vmatpush1.msra.mxu0 0.0
        %6089 = vmatprep.subr.mxu0 0.0
        %6090 = vmatpush1.msra.mxu0 0.0
        %6091 = vmatprep.subr.mxu0 0.0
        %6092 = vmatpush1.msra.mxu0 0.0
        %6093 = vmatprep.subr.mxu0 0.0
        %6094 = vmatpush1.msra.mxu0 0.0
        %6095 = vmatprep.subr.mxu0 0.0
        %6096 = vmatpush1.msra.mxu0 0.0
        %6097 = vmatprep.subr.mxu0 0.0
        %6098 = vmatpush1.msra.mxu0 0.0
        %6099 = vmatprep.subr.mxu0 0.0
        %6100 = vmatpush1.msra.mxu0 0.0
        %6101 = vmatprep.subr.mxu0 0.0
        %6102 = vmatpush1.msra.mxu0 0.0
        %6103 = vmatprep.mubr.f32.mxu0 0.0
        %6104 = vmatmul.mubr.f32.gmra.mrb[0].mxu0 %v5933
        %v6105 = vpop.f32.mrb[0].mxu0
        %v6106 = vadd.f32 0.0, %v6105
        %v6107 = vpop.f32.mrb[0].mxu0
        %6108 = vmatprep.mubr.f32.mxu0 0.0
        %6109 = vmatmul.mubr.f32.gmra.mrb[0].mxu0 %v5936
        %v6110 = vpop.f32.mrb[0].mxu0
        %v6111 = vadd.f32 0.0, %v6110
        %v6112 = vpop.f32.mrb[0].mxu0
        %6113 = vmatprep.mubr.f32.mxu0 0.0
        %6114 = vmatmul.mubr.f32.gmra.mrb[0].mxu0 %v5939
        %v6115 = vpop.f32.mrb[0].mxu0
        %v6116 = vadd.f32 0.0, %v6115
        %v6117 = vpop.f32.mrb[0].mxu0
        %6118 = vmatprep.mubr.f32.mxu0 0.0
        %6119 = vmatmul.mubr.f32.gmra.mrb[0].mxu0 %v5942
        %v6120 = vpop.f32.mrb[0].mxu0
        %v6121 = vadd.f32 0.0, %v6120
        %v6122 = vpop.f32.mrb[0].mxu0
        %6123 = vdwg.mxu0
        %v6124 = vadd.f32 %v5898, %v6017
        %v6125 = vadd.f32 %v5899, %v6019
        %v6126 = vadd.f32 %v5900, %v6106
        %v6127 = vadd.f32 %v5901, %v6023
        %v6128 = vadd.f32 %v5902, %v6025
        %v6129 = vadd.f32 %v5903, %v6111
        %v6130 = vadd.f32 %v5904, %v6029
        %v6131 = vadd.f32 %v5905, %v6031
        %v6132 = vadd.f32 %v5906, %v6116
        %v6133 = vadd.f32 %v5907, %v6035
        %v6134 = vadd.f32 %v5908, %v6037
        %v6135 = vadd.f32 %v5909, %v6121
        %v6136 = vmax.f32 %v6124, 0.0
        %v6137 = vmax.f32 %v6125, 0.0
        %v6138 = vmax.f32 %v6126, 0.0
        %v6139 = vmax.f32 %v6127, 0.0
        %v6140 = vmax.f32 %v6128, 0.0
        %v6141 = vmax.f32 %v6129, 0.0
        %v6142 = vmax.f32 %v6130, 0.0
        %v6143 = vmax.f32 %v6131, 0.0
        %v6144 = vmax.f32 %v6132, 0.0
        %v6145 = vmax.f32 %v6133, 0.0
        %v6146 = vmax.f32 %v6134, 0.0
        %v6147 = vmax.f32 %v6135, 0.0
        %v6148 = vsel %vm2250, %v6136, 0.0
        %v6149 = vsel %vm2251, %v6137, 0.0
        %v6150 = vsel %vm2252, %v6138, 0.0
        %v6151 = vsel %vm2250, %v6139, 0.0
        %v6152 = vsel %vm2251, %v6140, 0.0
        %v6153 = vsel %vm2252, %v6141, 0.0
        %v6154 = vsel %vm2250, %v6142, 0.0
        %v6155 = vsel %vm2251, %v6143, 0.0
        %v6156 = vsel %vm2252, %v6144, 0.0
        %v6157 = vsel %vm2250, %v6145, 0.0
        %v6158 = vsel %vm2251, %v6146, 0.0
        %v6159 = vsel %vm2252, %v6147, 0.0
        %6160 = vst [vmem:[#allocation3 + $0x8] sm:$0xff] %v6148
        %6161 = vst [vmem:[#allocation3 + $0x10] sm:$0xff] %v6149
        %6162 = vst [vmem:[#allocation3 + $0x18] sm:$0xff] %v6150
        %6163 = vst [vmem:[#allocation3 + $0x30] sm:$0xff] %v6151
        %6164 = vst [vmem:[#allocation3 + $0x38] sm:$0xff] %v6152
        %6165 = vst [vmem:[#allocation3 + $0x40] sm:$0xff] %v6153
        %6166 = vst [vmem:[#allocation3 + $0x58] sm:$0xff] %v6154
        %6167 = vst [vmem:[#allocation3 + $0x60] sm:$0xff] %v6155
        %6168 = vst [vmem:[#allocation3 + $0x68] sm:$0xff] %v6156
        %6169 = vst [vmem:[#allocation3 + $0x80] sm:$0xff] %v6157
        %6170 = vst [vmem:[#allocation3 + $0x88] sm:$0xff] %v6158
        %6171 = vst [vmem:[#allocation3 + $0x90] sm:$0xff] %v6159
        %v6172 = vld [vmem:[#allocation3] sm:$0xff]
        %v6173 = vld [vmem:[#allocation3 + $0x8] sm:$0xff]
        %v6174 = vld [vmem:[#allocation3 + $0x10] sm:$0xff]
        %v6175 = vld [vmem:[#allocation3 + $0x18] sm:$0xff]
        %v6176 = vld [vmem:[#allocation3 + $0x28] sm:$0xff]
        %v6177 = vld [vmem:[#allocation3 + $0x30] sm:$0xff]
        %v6178 = vld [vmem:[#allocation3 + $0x38] sm:$0xff]
        %v6179 = vld [vmem:[#allocation3 + $0x40] sm:$0xff]
        %v6180 = vld [vmem:[#allocation3 + $0x50] sm:$0xff]
        %v6181 = vld [vmem:[#allocation3 + $0x58] sm:$0xff]
        %v6182 = vld [vmem:[#allocation3 + $0x60] sm:$0xff]
        %v6183 = vld [vmem:[#allocation3 + $0x68] sm:$0xff]
        %v6184 = vld [vmem:[#allocation3 + $0x78] sm:$0xff]
        %v6185 = vld [vmem:[#allocation3 + $0x80] sm:$0xff]
        %v6186 = vld [vmem:[#allocation3 + $0x88] sm:$0xff]
        %v6187 = vld [vmem:[#allocation3 + $0x90] sm:$0xff]
        %s6188 = scalar_lea.vmem %s3, 36
        %v6189 = vld [vmem:[%s6188] sm:$0xf]
        %s6190 = scalar_lea.vmem %s3, 40
        %v6191 = vld [vmem:[%s6190] sm:$0xf]
        %6208 = vrot.lane.b32.xlu0 %v6172, 18
        %v6209 = vpop.permute.xlu0 %6208
        %6210 = vrot.lane.b32.xlu0 %v6173, 18
        %v6211 = vpop.permute.xlu0 %6210
        %6212 = vrot.lane.b32.xlu0 %v6174, 18
        %v6213 = vpop.permute.xlu0 %6212
        %6214 = vrot.lane.b32.xlu0 %v6175, 18
        %v6215 = vpop.permute.xlu0 %6214
        %6216 = vrot.lane.b32.xlu0 %v6176, 18
        %v6217 = vpop.permute.xlu0 %6216
        %6218 = vrot.lane.b32.xlu0 %v6177, 18
        %v6219 = vpop.permute.xlu0 %6218
        %6220 = vrot.lane.b32.xlu0 %v6178, 18
        %v6221 = vpop.permute.xlu0 %6220
        %6222 = vrot.lane.b32.xlu0 %v6179, 18
        %v6223 = vpop.permute.xlu0 %6222
        %6224 = vrot.lane.b32.xlu0 %v6180, 18
        %v6225 = vpop.permute.xlu0 %6224
        %6226 = vrot.lane.b32.xlu0 %v6181, 18
        %v6227 = vpop.permute.xlu0 %6226
        %6228 = vrot.lane.b32.xlu0 %v6182, 18
        %v6229 = vpop.permute.xlu0 %6228
        %6230 = vrot.lane.b32.xlu0 %v6183, 18
        %v6231 = vpop.permute.xlu0 %6230
        %6232 = vrot.lane.b32.xlu0 %v6184, 18
        %v6233 = vpop.permute.xlu0 %6232
        %6234 = vrot.lane.b32.xlu0 %v6185, 18
        %v6235 = vpop.permute.xlu0 %6234
        %6236 = vrot.lane.b32.xlu0 %v6186, 18
        %v6237 = vpop.permute.xlu0 %6236
        %6238 = vrot.lane.b32.xlu0 %v6187, 18
        %v6239 = vpop.permute.xlu0 %6238
        %v6240 = vsel %vm247, %v6209, %v6211
        %v6241 = vsel %vm247, %v6211, %v6213
        %v6242 = vsel %vm247, %v6213, %v6215
        %v6243 = vsel %vm247, %v6217, %v6219
        %v6244 = vsel %vm247, %v6219, %v6221
        %v6245 = vsel %vm247, %v6221, %v6223
        %v6246 = vsel %vm247, %v6225, %v6227
        %v6247 = vsel %vm247, %v6227, %v6229
        %v6248 = vsel %vm247, %v6229, %v6231
        %v6249 = vsel %vm247, %v6233, %v6235
        %v6250 = vsel %vm247, %v6235, %v6237
        %v6251 = vsel %vm247, %v6237, %v6239
        %v6265 = vsel %vm2368, %v6191, 0
        %6267 = vmatprep.subr.mxu0 %v6241
        %6268 = vmatpush1.msra.mxu0 %v6240
        %6269 = vmatprep.subr.mxu0 %v6244
        %6270 = vmatpush1.msra.mxu0 %v6243
        %6271 = vmatprep.subr.mxu0 %v6247
        %6272 = vmatpush1.msra.mxu0 %v6246
        %6273 = vmatprep.subr.mxu0 %v6250
        %6274 = vmatpush1.msra.mxu0 %v6249
        %6275 = vmatprep.subr.mxu0 0.0
        %6276 = vmatpush1.msra.mxu0 0.0
        %6277 = vmatprep.subr.mxu0 0.0
        %6278 = vmatpush1.msra.mxu0 0.0
        %6279 = vmatprep.subr.mxu0 0.0
        %6280 = vmatpush1.msra.mxu0 0.0
        %6281 = vmatprep.subr.mxu0 0.0
        %6282 = vmatpush1.msra.mxu0 0.0
        %6283 = vmatprep.subr.mxu0 0.0
        %6284 = vmatpush1.msra.mxu0 0.0
        %6285 = vmatprep.subr.mxu0 0.0
        %6286 = vmatpush1.msra.mxu0 0.0
        %6287 = vmatprep.subr.mxu0 0.0
        %6288 = vmatpush1.msra.mxu0 0.0
        %6289 = vmatprep.subr.mxu0 0.0
        %6290 = vmatpush1.msra.mxu0 0.0
        %6291 = vmatprep.subr.mxu0 0.0
        %6292 = vmatpush1.msra.mxu0 0.0
        %6293 = vmatprep.subr.mxu0 0.0
        %6294 = vmatpush1.msra.mxu0 0.0
        %6295 = vmatprep.subr.mxu0 0.0
        %6296 = vmatpush1.msra.mxu0 0.0
        %6297 = vmatprep.subr.mxu0 0.0
        %6298 = vmatpush1.msra.mxu0 0.0
        %6299 = vmatprep.subr.mxu0 0.0
        %6300 = vmatpush1.msra.mxu0 0.0
        %6301 = vmatprep.subr.mxu0 0.0
        %6302 = vmatpush1.msra.mxu0 0.0
        %6303 = vmatprep.subr.mxu0 0.0
        %6304 = vmatpush1.msra.mxu0 0.0
        %6305 = vmatprep.subr.mxu0 0.0
        %6306 = vmatpush1.msra.mxu0 0.0
        %6307 = vmatprep.subr.mxu0 0.0
        %6308 = vmatpush1.msra.mxu0 0.0
        %6309 = vmatprep.subr.mxu0 0.0
        %6310 = vmatpush1.msra.mxu0 0.0
        %6311 = vmatprep.subr.mxu0 0.0
        %6312 = vmatpush1.msra.mxu0 0.0
        %6313 = vmatprep.subr.mxu0 0.0
        %6314 = vmatpush1.msra.mxu0 0.0
        %6315 = vmatprep.subr.mxu0 0.0
        %6316 = vmatpush1.msra.mxu0 0.0
        %6317 = vmatprep.subr.mxu0 0.0
        %6318 = vmatpush1.msra.mxu0 0.0
        %6319 = vmatprep.subr.mxu0 0.0
        %6320 = vmatpush1.msra.mxu0 0.0
        %6321 = vmatprep.subr.mxu0 0.0
        %6322 = vmatpush1.msra.mxu0 0.0
        %6323 = vmatprep.subr.mxu0 0.0
        %6324 = vmatpush1.msra.mxu0 0.0
        %6325 = vmatprep.subr.mxu0 0.0
        %6326 = vmatpush1.msra.mxu0 0.0
        %6327 = vmatprep.subr.mxu0 0.0
        %6328 = vmatpush1.msra.mxu0 0.0
        %6329 = vmatprep.subr.mxu0 0.0
        %6330 = vmatpush1.msra.mxu0 0.0
        %6331 = vmatprep.mubr.f32.mxu0 0.0
        %6332 = vmatmul.mubr.f32.gmra.mrb[0].mxu0 %v6265
        %v6333 = vpop.f32.mrb[0].mxu0
        %v6334 = vadd.f32 0.0, %v6333
        %v6335 = vpop.f32.mrb[0].mxu0
        %v6336 = vadd.f32 0.0, %v6335
        %6337 = vdwg.mxu0
        %6338 = vmatprep.subr.mxu0 0.0
        %6339 = vmatpush1.msra.mxu0 %v6242
        %6340 = vmatprep.subr.mxu0 0.0
        %6341 = vmatpush1.msra.mxu0 %v6245
        %6342 = vmatprep.subr.mxu0 0.0
        %6343 = vmatpush1.msra.mxu0 %v6248
        %6344 = vmatprep.subr.mxu0 0.0
        %6345 = vmatpush1.msra.mxu0 %v6251
        %6346 = vmatprep.subr.mxu0 0.0
        %6347 = vmatpush1.msra.mxu0 0.0
        %6348 = vmatprep.subr.mxu0 0.0
        %6349 = vmatpush1.msra.mxu0 0.0
        %6350 = vmatprep.subr.mxu0 0.0
        %6351 = vmatpush1.msra.mxu0 0.0
        %6352 = vmatprep.subr.mxu0 0.0
        %6353 = vmatpush1.msra.mxu0 0.0
        %6354 = vmatprep.subr.mxu0 0.0
        %6355 = vmatpush1.msra.mxu0 0.0
        %6356 = vmatprep.subr.mxu0 0.0
        %6357 = vmatpush1.msra.mxu0 0.0
        %6358 = vmatprep.subr.mxu0 0.0
        %6359 = vmatpush1.msra.mxu0 0.0
        %6360 = vmatprep.subr.mxu0 0.0
        %6361 = vmatpush1.msra.mxu0 0.0
        %6362 = vmatprep.subr.mxu0 0.0
        %6363 = vmatpush1.msra.mxu0 0.0
        %6364 = vmatprep.subr.mxu0 0.0
        %6365 = vmatpush1.msra.mxu0 0.0
        %6366 = vmatprep.subr.mxu0 0.0
        %6367 = vmatpush1.msra.mxu0 0.0
        %6368 = vmatprep.subr.mxu0 0.0
        %6369 = vmatpush1.msra.mxu0 0.0
        %6370 = vmatprep.subr.mxu0 0.0
        %6371 = vmatpush1.msra.mxu0 0.0
        %6372 = vmatprep.subr.mxu0 0.0
        %6373 = vmatpush1.msra.mxu0 0.0
        %6374 = vmatprep.subr.mxu0 0.0
        %6375 = vmatpush1.msra.mxu0 0.0
        %6376 = vmatprep.subr.mxu0 0.0
        %6377 = vmatpush1.msra.mxu0 0.0
        %6378 = vmatprep.subr.mxu0 0.0
        %6379 = vmatpush1.msra.mxu0 0.0
        %6380 = vmatprep.subr.mxu0 0.0
        %6381 = vmatpush1.msra.mxu0 0.0
        %6382 = vmatprep.subr.mxu0 0.0
        %6383 = vmatpush1.msra.mxu0 0.0
        %6384 = vmatprep.subr.mxu0 0.0
        %6385 = vmatpush1.msra.mxu0 0.0
        %6386 = vmatprep.subr.mxu0 0.0
        %6387 = vmatpush1.msra.mxu0 0.0
        %6388 = vmatprep.subr.mxu0 0.0
        %6389 = vmatpush1.msra.mxu0 0.0
        %6390 = vmatprep.subr.mxu0 0.0
        %6391 = vmatpush1.msra.mxu0 0.0
        %6392 = vmatprep.subr.mxu0 0.0
        %6393 = vmatpush1.msra.mxu0 0.0
        %6394 = vmatprep.subr.mxu0 0.0
        %6395 = vmatpush1.msra.mxu0 0.0
        %6396 = vmatprep.subr.mxu0 0.0
        %6397 = vmatpush1.msra.mxu0 0.0
        %6398 = vmatprep.subr.mxu0 0.0
        %6399 = vmatpush1.msra.mxu0 0.0
        %6400 = vmatprep.subr.mxu0 0.0
        %6401 = vmatpush1.msra.mxu0 0.0
        %6402 = vmatprep.mubr.f32.mxu0 0.0
        %6403 = vmatmul.mubr.f32.gmra.mrb[0].mxu0 %v6265
        %v6404 = vpop.f32.mrb[0].mxu0
        %v6405 = vadd.f32 0.0, %v6404
        %v6406 = vpop.f32.mrb[0].mxu0
        %6407 = vdwg.mxu0
        %6408 = vrot.lane.b32.xlu0 %v6172, 19
        %v6409 = vpop.permute.xlu0 %6408
        %6410 = vrot.lane.b32.xlu0 %v6173, 19
        %v6411 = vpop.permute.xlu0 %6410
        %6412 = vrot.lane.b32.xlu0 %v6174, 19
        %v6413 = vpop.permute.xlu0 %6412
        %6414 = vrot.lane.b32.xlu0 %v6175, 19
        %v6415 = vpop.permute.xlu0 %6414
        %6416 = vrot.lane.b32.xlu0 %v6176, 19
        %v6417 = vpop.permute.xlu0 %6416
        %6418 = vrot.lane.b32.xlu0 %v6177, 19
        %v6419 = vpop.permute.xlu0 %6418
        %6420 = vrot.lane.b32.xlu0 %v6178, 19
        %v6421 = vpop.permute.xlu0 %6420
        %6422 = vrot.lane.b32.xlu0 %v6179, 19
        %v6423 = vpop.permute.xlu0 %6422
        %6424 = vrot.lane.b32.xlu0 %v6180, 19
        %v6425 = vpop.permute.xlu0 %6424
        %6426 = vrot.lane.b32.xlu0 %v6181, 19
        %v6427 = vpop.permute.xlu0 %6426
        %6428 = vrot.lane.b32.xlu0 %v6182, 19
        %v6429 = vpop.permute.xlu0 %6428
        %6430 = vrot.lane.b32.xlu0 %v6183, 19
        %v6431 = vpop.permute.xlu0 %6430
        %6432 = vrot.lane.b32.xlu0 %v6184, 19
        %v6433 = vpop.permute.xlu0 %6432
        %6434 = vrot.lane.b32.xlu0 %v6185, 19
        %v6435 = vpop.permute.xlu0 %6434
        %6436 = vrot.lane.b32.xlu0 %v6186, 19
        %v6437 = vpop.permute.xlu0 %6436
        %6438 = vrot.lane.b32.xlu0 %v6187, 19
        %v6439 = vpop.permute.xlu0 %6438
        %v6440 = vsel %vm453, %v6409, %v6411
        %v6441 = vsel %vm453, %v6411, %v6413
        %v6442 = vsel %vm453, %v6413, %v6415
        %v6443 = vsel %vm453, %v6417, %v6419
        %v6444 = vsel %vm453, %v6419, %v6421
        %v6445 = vsel %vm453, %v6421, %v6423
        %v6446 = vsel %vm453, %v6425, %v6427
        %v6447 = vsel %vm453, %v6427, %v6429
        %v6448 = vsel %vm453, %v6429, %v6431
        %v6449 = vsel %vm453, %v6433, %v6435
        %v6450 = vsel %vm453, %v6435, %v6437
        %v6451 = vsel %vm453, %v6437, %v6439
        %v6465 = vsel %vm2368, %v6189, 0
        %6467 = vmatprep.subr.mxu0 %v6441
        %6468 = vmatpush1.msra.mxu0 %v6440
        %6469 = vmatprep.subr.mxu0 %v6444
        %6470 = vmatpush1.msra.mxu0 %v6443
        %6471 = vmatprep.subr.mxu0 %v6447
        %6472 = vmatpush1.msra.mxu0 %v6446
        %6473 = vmatprep.subr.mxu0 %v6450
        %6474 = vmatpush1.msra.mxu0 %v6449
        %6475 = vmatprep.subr.mxu0 0.0
        %6476 = vmatpush1.msra.mxu0 0.0
        %6477 = vmatprep.subr.mxu0 0.0
        %6478 = vmatpush1.msra.mxu0 0.0
        %6479 = vmatprep.subr.mxu0 0.0
        %6480 = vmatpush1.msra.mxu0 0.0
        %6481 = vmatprep.subr.mxu0 0.0
        %6482 = vmatpush1.msra.mxu0 0.0
        %6483 = vmatprep.subr.mxu0 0.0
        %6484 = vmatpush1.msra.mxu0 0.0
        %6485 = vmatprep.subr.mxu0 0.0
        %6486 = vmatpush1.msra.mxu0 0.0
        %6487 = vmatprep.subr.mxu0 0.0
        %6488 = vmatpush1.msra.mxu0 0.0
        %6489 = vmatprep.subr.mxu0 0.0
        %6490 = vmatpush1.msra.mxu0 0.0
        %6491 = vmatprep.subr.mxu0 0.0
        %6492 = vmatpush1.msra.mxu0 0.0
        %6493 = vmatprep.subr.mxu0 0.0
        %6494 = vmatpush1.msra.mxu0 0.0
        %6495 = vmatprep.subr.mxu0 0.0
        %6496 = vmatpush1.msra.mxu0 0.0
        %6497 = vmatprep.subr.mxu0 0.0
        %6498 = vmatpush1.msra.mxu0 0.0
        %6499 = vmatprep.subr.mxu0 0.0
        %6500 = vmatpush1.msra.mxu0 0.0
        %6501 = vmatprep.subr.mxu0 0.0
        %6502 = vmatpush1.msra.mxu0 0.0
        %6503 = vmatprep.subr.mxu0 0.0
        %6504 = vmatpush1.msra.mxu0 0.0
        %6505 = vmatprep.subr.mxu0 0.0
        %6506 = vmatpush1.msra.mxu0 0.0
        %6507 = vmatprep.subr.mxu0 0.0
        %6508 = vmatpush1.msra.mxu0 0.0
        %6509 = vmatprep.subr.mxu0 0.0
        %6510 = vmatpush1.msra.mxu0 0.0
        %6511 = vmatprep.subr.mxu0 0.0
        %6512 = vmatpush1.msra.mxu0 0.0
        %6513 = vmatprep.subr.mxu0 0.0
        %6514 = vmatpush1.msra.mxu0 0.0
        %6515 = vmatprep.subr.mxu0 0.0
        %6516 = vmatpush1.msra.mxu0 0.0
        %6517 = vmatprep.subr.mxu0 0.0
        %6518 = vmatpush1.msra.mxu0 0.0
        %6519 = vmatprep.subr.mxu0 0.0
        %6520 = vmatpush1.msra.mxu0 0.0
        %6521 = vmatprep.subr.mxu0 0.0
        %6522 = vmatpush1.msra.mxu0 0.0
        %6523 = vmatprep.subr.mxu0 0.0
        %6524 = vmatpush1.msra.mxu0 0.0
        %6525 = vmatprep.subr.mxu0 0.0
        %6526 = vmatpush1.msra.mxu0 0.0
        %6527 = vmatprep.subr.mxu0 0.0
        %6528 = vmatpush1.msra.mxu0 0.0
        %6529 = vmatprep.subr.mxu0 0.0
        %6530 = vmatpush1.msra.mxu0 0.0
        %6531 = vmatprep.mubr.f32.mxu0 0.0
        %6532 = vmatmul.mubr.f32.gmra.mrb[0].mxu0 %v6465
        %v6533 = vpop.f32.mrb[0].mxu0
        %v6534 = vadd.f32 %v6334, %v6533
        %v6535 = vpop.f32.mrb[0].mxu0
        %v6536 = vadd.f32 %v6336, %v6535
        %6537 = vdwg.mxu0
        %6538 = vmatprep.subr.mxu0 0.0
        %6539 = vmatpush1.msra.mxu0 %v6442
        %6540 = vmatprep.subr.mxu0 0.0
        %6541 = vmatpush1.msra.mxu0 %v6445
        %6542 = vmatprep.subr.mxu0 0.0
        %6543 = vmatpush1.msra.mxu0 %v6448
        %6544 = vmatprep.subr.mxu0 0.0
        %6545 = vmatpush1.msra.mxu0 %v6451
        %6546 = vmatprep.subr.mxu0 0.0
        %6547 = vmatpush1.msra.mxu0 0.0
        %6548 = vmatprep.subr.mxu0 0.0
        %6549 = vmatpush1.msra.mxu0 0.0
        %6550 = vmatprep.subr.mxu0 0.0
        %6551 = vmatpush1.msra.mxu0 0.0
        %6552 = vmatprep.subr.mxu0 0.0
        %6553 = vmatpush1.msra.mxu0 0.0
        %6554 = vmatprep.subr.mxu0 0.0
        %6555 = vmatpush1.msra.mxu0 0.0
        %6556 = vmatprep.subr.mxu0 0.0
        %6557 = vmatpush1.msra.mxu0 0.0
        %6558 = vmatprep.subr.mxu0 0.0
        %6559 = vmatpush1.msra.mxu0 0.0
        %6560 = vmatprep.subr.mxu0 0.0
        %6561 = vmatpush1.msra.mxu0 0.0
        %6562 = vmatprep.subr.mxu0 0.0
        %6563 = vmatpush1.msra.mxu0 0.0
        %6564 = vmatprep.subr.mxu0 0.0
        %6565 = vmatpush1.msra.mxu0 0.0
        %6566 = vmatprep.subr.mxu0 0.0
        %6567 = vmatpush1.msra.mxu0 0.0
        %6568 = vmatprep.subr.mxu0 0.0
        %6569 = vmatpush1.msra.mxu0 0.0
        %6570 = vmatprep.subr.mxu0 0.0
        %6571 = vmatpush1.msra.mxu0 0.0
        %6572 = vmatprep.subr.mxu0 0.0
        %6573 = vmatpush1.msra.mxu0 0.0
        %6574 = vmatprep.subr.mxu0 0.0
        %6575 = vmatpush1.msra.mxu0 0.0
        %6576 = vmatprep.subr.mxu0 0.0
        %6577 = vmatpush1.msra.mxu0 0.0
        %6578 = vmatprep.subr.mxu0 0.0
        %6579 = vmatpush1.msra.mxu0 0.0
        %6580 = vmatprep.subr.mxu0 0.0
        %6581 = vmatpush1.msra.mxu0 0.0
        %6582 = vmatprep.subr.mxu0 0.0
        %6583 = vmatpush1.msra.mxu0 0.0
        %6584 = vmatprep.subr.mxu0 0.0
        %6585 = vmatpush1.msra.mxu0 0.0
        %6586 = vmatprep.subr.mxu0 0.0
        %6587 = vmatpush1.msra.mxu0 0.0
        %6588 = vmatprep.subr.mxu0 0.0
        %6589 = vmatpush1.msra.mxu0 0.0
        %6590 = vmatprep.subr.mxu0 0.0
        %6591 = vmatpush1.msra.mxu0 0.0
        %6592 = vmatprep.subr.mxu0 0.0
        %6593 = vmatpush1.msra.mxu0 0.0
        %6594 = vmatprep.subr.mxu0 0.0
        %6595 = vmatpush1.msra.mxu0 0.0
        %6596 = vmatprep.subr.mxu0 0.0
        %6597 = vmatpush1.msra.mxu0 0.0
        %6598 = vmatprep.subr.mxu0 0.0
        %6599 = vmatpush1.msra.mxu0 0.0
        %6600 = vmatprep.subr.mxu0 0.0
        %6601 = vmatpush1.msra.mxu0 0.0
        %6602 = vmatprep.mubr.f32.mxu0 0.0
        %6603 = vmatmul.mubr.f32.gmra.mrb[0].mxu0 %v6465
        %v6604 = vpop.f32.mrb[0].mxu0
        %v6605 = vadd.f32 %v6405, %v6604
        %v6606 = vpop.f32.mrb[0].mxu0
        %6607 = vdwg.mxu0
        %s6608 = scalar_lea.vmem %s3, 44
        %v6609 = vld [vmem:[%s6608] sm:$0xf]
        %6610 = vrot.lane.b32.xlu0 %v6172, 17
        %v6611 = vpop.permute.xlu0 %6610
        %6612 = vrot.lane.b32.xlu0 %v6173, 17
        %v6613 = vpop.permute.xlu0 %6612
        %6614 = vrot.lane.b32.xlu0 %v6174, 17
        %v6615 = vpop.permute.xlu0 %6614
        %6616 = vrot.lane.b32.xlu0 %v6175, 17
        %v6617 = vpop.permute.xlu0 %6616
        %6618 = vrot.lane.b32.xlu0 %v6176, 17
        %v6619 = vpop.permute.xlu0 %6618
        %6620 = vrot.lane.b32.xlu0 %v6177, 17
        %v6621 = vpop.permute.xlu0 %6620
        %6622 = vrot.lane.b32.xlu0 %v6178, 17
        %v6623 = vpop.permute.xlu0 %6622
        %6624 = vrot.lane.b32.xlu0 %v6179, 17
        %v6625 = vpop.permute.xlu0 %6624
        %6626 = vrot.lane.b32.xlu0 %v6180, 17
        %v6627 = vpop.permute.xlu0 %6626
        %6628 = vrot.lane.b32.xlu0 %v6181, 17
        %v6629 = vpop.permute.xlu0 %6628
        %6630 = vrot.lane.b32.xlu0 %v6182, 17
        %v6631 = vpop.permute.xlu0 %6630
        %6632 = vrot.lane.b32.xlu0 %v6183, 17
        %v6633 = vpop.permute.xlu0 %6632
        %6634 = vrot.lane.b32.xlu0 %v6184, 17
        %v6635 = vpop.permute.xlu0 %6634
        %6636 = vrot.lane.b32.xlu0 %v6185, 17
        %v6637 = vpop.permute.xlu0 %6636
        %6638 = vrot.lane.b32.xlu0 %v6186, 17
        %v6639 = vpop.permute.xlu0 %6638
        %6640 = vrot.lane.b32.xlu0 %v6187, 17
        %v6641 = vpop.permute.xlu0 %6640
        %v6642 = vsel %vm668, %v6611, %v6613
        %v6643 = vsel %vm668, %v6613, %v6615
        %v6644 = vsel %vm668, %v6615, %v6617
        %v6645 = vsel %vm668, %v6619, %v6621
        %v6646 = vsel %vm668, %v6621, %v6623
        %v6647 = vsel %vm668, %v6623, %v6625
        %v6648 = vsel %vm668, %v6627, %v6629
        %v6649 = vsel %vm668, %v6629, %v6631
        %v6650 = vsel %vm668, %v6631, %v6633
        %v6651 = vsel %vm668, %v6635, %v6637
        %v6652 = vsel %vm668, %v6637, %v6639
        %v6653 = vsel %vm668, %v6639, %v6641
        %v6667 = vsel %vm2368, %v6609, 0
        %6669 = vmatprep.subr.mxu0 %v6643
        %6670 = vmatpush1.msra.mxu0 %v6642
        %6671 = vmatprep.subr.mxu0 %v6646
        %6672 = vmatpush1.msra.mxu0 %v6645
        %6673 = vmatprep.subr.mxu0 %v6649
        %6674 = vmatpush1.msra.mxu0 %v6648
        %6675 = vmatprep.subr.mxu0 %v6652
        %6676 = vmatpush1.msra.mxu0 %v6651
        %6677 = vmatprep.subr.mxu0 0.0
        %6678 = vmatpush1.msra.mxu0 0.0
        %6679 = vmatprep.subr.mxu0 0.0
        %6680 = vmatpush1.msra.mxu0 0.0
        %6681 = vmatprep.subr.mxu0 0.0
        %6682 = vmatpush1.msra.mxu0 0.0
        %6683 = vmatprep.subr.mxu0 0.0
        %6684 = vmatpush1.msra.mxu0 0.0
        %6685 = vmatprep.subr.mxu0 0.0
        %6686 = vmatpush1.msra.mxu0 0.0
        %6687 = vmatprep.subr.mxu0 0.0
        %6688 = vmatpush1.msra.mxu0 0.0
        %6689 = vmatprep.subr.mxu0 0.0
        %6690 = vmatpush1.msra.mxu0 0.0
        %6691 = vmatprep.subr.mxu0 0.0
        %6692 = vmatpush1.msra.mxu0 0.0
        %6693 = vmatprep.subr.mxu0 0.0
        %6694 = vmatpush1.msra.mxu0 0.0
        %6695 = vmatprep.subr.mxu0 0.0
        %6696 = vmatpush1.msra.mxu0 0.0
        %6697 = vmatprep.subr.mxu0 0.0
        %6698 = vmatpush1.msra.mxu0 0.0
        %6699 = vmatprep.subr.mxu0 0.0
        %6700 = vmatpush1.msra.mxu0 0.0
        %6701 = vmatprep.subr.mxu0 0.0
        %6702 = vmatpush1.msra.mxu0 0.0
        %6703 = vmatprep.subr.mxu0 0.0
        %6704 = vmatpush1.msra.mxu0 0.0
        %6705 = vmatprep.subr.mxu0 0.0
        %6706 = vmatpush1.msra.mxu0 0.0
        %6707 = vmatprep.subr.mxu0 0.0
        %6708 = vmatpush1.msra.mxu0 0.0
        %6709 = vmatprep.subr.mxu0 0.0
        %6710 = vmatpush1.msra.mxu0 0.0
        %6711 = vmatprep.subr.mxu0 0.0
        %6712 = vmatpush1.msra.mxu0 0.0
        %6713 = vmatprep.subr.mxu0 0.0
        %6714 = vmatpush1.msra.mxu0 0.0
        %6715 = vmatprep.subr.mxu0 0.0
        %6716 = vmatpush1.msra.mxu0 0.0
        %6717 = vmatprep.subr.mxu0 0.0
        %6718 = vmatpush1.msra.mxu0 0.0
        %6719 = vmatprep.subr.mxu0 0.0
        %6720 = vmatpush1.msra.mxu0 0.0
        %6721 = vmatprep.subr.mxu0 0.0
        %6722 = vmatpush1.msra.mxu0 0.0
        %6723 = vmatprep.subr.mxu0 0.0
        %6724 = vmatpush1.msra.mxu0 0.0
        %6725 = vmatprep.subr.mxu0 0.0
        %6726 = vmatpush1.msra.mxu0 0.0
        %6727 = vmatprep.subr.mxu0 0.0
        %6728 = vmatpush1.msra.mxu0 0.0
        %6729 = vmatprep.subr.mxu0 0.0
        %6730 = vmatpush1.msra.mxu0 0.0
        %6731 = vmatprep.subr.mxu0 0.0
        %6732 = vmatpush1.msra.mxu0 0.0
        %6733 = vmatprep.mubr.f32.mxu0 0.0
        %6734 = vmatmul.mubr.f32.gmra.mrb[0].mxu0 %v6667
        %v6735 = vpop.f32.mrb[0].mxu0
        %v6736 = vadd.f32 0.0, %v6735
        %v6737 = vpop.f32.mrb[0].mxu0
        %v6738 = vadd.f32 0.0, %v6737
        %6739 = vdwg.mxu0
        %6740 = vmatprep.subr.mxu0 0.0
        %6741 = vmatpush1.msra.mxu0 %v6644
        %6742 = vmatprep.subr.mxu0 0.0
        %6743 = vmatpush1.msra.mxu0 %v6647
        %6744 = vmatprep.subr.mxu0 0.0
        %6745 = vmatpush1.msra.mxu0 %v6650
        %6746 = vmatprep.subr.mxu0 0.0
        %6747 = vmatpush1.msra.mxu0 %v6653
        %6748 = vmatprep.subr.mxu0 0.0
        %6749 = vmatpush1.msra.mxu0 0.0
        %6750 = vmatprep.subr.mxu0 0.0
        %6751 = vmatpush1.msra.mxu0 0.0
        %6752 = vmatprep.subr.mxu0 0.0
        %6753 = vmatpush1.msra.mxu0 0.0
        %6754 = vmatprep.subr.mxu0 0.0
        %6755 = vmatpush1.msra.mxu0 0.0
        %6756 = vmatprep.subr.mxu0 0.0
        %6757 = vmatpush1.msra.mxu0 0.0
        %6758 = vmatprep.subr.mxu0 0.0
        %6759 = vmatpush1.msra.mxu0 0.0
        %6760 = vmatprep.subr.mxu0 0.0
        %6761 = vmatpush1.msra.mxu0 0.0
        %6762 = vmatprep.subr.mxu0 0.0
        %6763 = vmatpush1.msra.mxu0 0.0
        %6764 = vmatprep.subr.mxu0 0.0
        %6765 = vmatpush1.msra.mxu0 0.0
        %6766 = vmatprep.subr.mxu0 0.0
        %6767 = vmatpush1.msra.mxu0 0.0
        %6768 = vmatprep.subr.mxu0 0.0
        %6769 = vmatpush1.msra.mxu0 0.0
        %6770 = vmatprep.subr.mxu0 0.0
        %6771 = vmatpush1.msra.mxu0 0.0
        %6772 = vmatprep.subr.mxu0 0.0
        %6773 = vmatpush1.msra.mxu0 0.0
        %6774 = vmatprep.subr.mxu0 0.0
        %6775 = vmatpush1.msra.mxu0 0.0
        %6776 = vmatprep.subr.mxu0 0.0
        %6777 = vmatpush1.msra.mxu0 0.0
        %6778 = vmatprep.subr.mxu0 0.0
        %6779 = vmatpush1.msra.mxu0 0.0
        %6780 = vmatprep.subr.mxu0 0.0
        %6781 = vmatpush1.msra.mxu0 0.0
        %6782 = vmatprep.subr.mxu0 0.0
        %6783 = vmatpush1.msra.mxu0 0.0
        %6784 = vmatprep.subr.mxu0 0.0
        %6785 = vmatpush1.msra.mxu0 0.0
        %6786 = vmatprep.subr.mxu0 0.0
        %6787 = vmatpush1.msra.mxu0 0.0
        %6788 = vmatprep.subr.mxu0 0.0
        %6789 = vmatpush1.msra.mxu0 0.0
        %6790 = vmatprep.subr.mxu0 0.0
        %6791 = vmatpush1.msra.mxu0 0.0
        %6792 = vmatprep.subr.mxu0 0.0
        %6793 = vmatpush1.msra.mxu0 0.0
        %6794 = vmatprep.subr.mxu0 0.0
        %6795 = vmatpush1.msra.mxu0 0.0
        %6796 = vmatprep.subr.mxu0 0.0
        %6797 = vmatpush1.msra.mxu0 0.0
        %6798 = vmatprep.subr.mxu0 0.0
        %6799 = vmatpush1.msra.mxu0 0.0
        %6800 = vmatprep.subr.mxu0 0.0
        %6801 = vmatpush1.msra.mxu0 0.0
        %6802 = vmatprep.subr.mxu0 0.0
        %6803 = vmatpush1.msra.mxu0 0.0
        %6804 = vmatprep.mubr.f32.mxu0 0.0
        %6805 = vmatmul.mubr.f32.gmra.mrb[0].mxu0 %v6667
        %v6806 = vpop.f32.mrb[0].mxu0
        %v6807 = vadd.f32 0.0, %v6806
        %v6808 = vpop.f32.mrb[0].mxu0
        %6809 = vdwg.mxu0
        %v6810 = vadd.f32 %v6534, %v6736
        %v6811 = vadd.f32 %v6536, %v6738
        %v6812 = vadd.f32 %v6605, %v6807
        %s6813 = scalar_lea.vmem %s3, 48
        %v6814 = vld [vmem:[%s6813] sm:$0xf]
        %6815 = vrot.lane.b32.xlu0 %v6172, 1
        %v6816 = vpop.permute.xlu0 %6815
        %6817 = vrot.lane.b32.xlu0 %v6173, 1
        %v6818 = vpop.permute.xlu0 %6817
        %6819 = vrot.lane.b32.xlu0 %v6174, 1
        %v6820 = vpop.permute.xlu0 %6819
        %6821 = vrot.lane.b32.xlu0 %v6175, 1
        %v6822 = vpop.permute.xlu0 %6821
        %6823 = vrot.lane.b32.xlu0 %v6176, 1
        %v6824 = vpop.permute.xlu0 %6823
        %6825 = vrot.lane.b32.xlu0 %v6177, 1
        %v6826 = vpop.permute.xlu0 %6825
        %6827 = vrot.lane.b32.xlu0 %v6178, 1
        %v6828 = vpop.permute.xlu0 %6827
        %6829 = vrot.lane.b32.xlu0 %v6179, 1
        %v6830 = vpop.permute.xlu0 %6829
        %6831 = vrot.lane.b32.xlu0 %v6180, 1
        %v6832 = vpop.permute.xlu0 %6831
        %6833 = vrot.lane.b32.xlu0 %v6181, 1
        %v6834 = vpop.permute.xlu0 %6833
        %6835 = vrot.lane.b32.xlu0 %v6182, 1
        %v6836 = vpop.permute.xlu0 %6835
        %6837 = vrot.lane.b32.xlu0 %v6183, 1
        %v6838 = vpop.permute.xlu0 %6837
        %6839 = vrot.lane.b32.xlu0 %v6184, 1
        %v6840 = vpop.permute.xlu0 %6839
        %6841 = vrot.lane.b32.xlu0 %v6185, 1
        %v6842 = vpop.permute.xlu0 %6841
        %6843 = vrot.lane.b32.xlu0 %v6186, 1
        %v6844 = vpop.permute.xlu0 %6843
        %6845 = vrot.lane.b32.xlu0 %v6187, 1
        %v6846 = vpop.permute.xlu0 %6845
        %v6847 = vsel %vm895, %v6816, %v6818
        %v6848 = vsel %vm895, %v6818, %v6820
        %v6849 = vsel %vm895, %v6820, %v6822
        %v6850 = vsel %vm895, %v6824, %v6826
        %v6851 = vsel %vm895, %v6826, %v6828
        %v6852 = vsel %vm895, %v6828, %v6830
        %v6853 = vsel %vm895, %v6832, %v6834
        %v6854 = vsel %vm895, %v6834, %v6836
        %v6855 = vsel %vm895, %v6836, %v6838
        %v6856 = vsel %vm895, %v6840, %v6842
        %v6857 = vsel %vm895, %v6842, %v6844
        %v6858 = vsel %vm895, %v6844, %v6846
        %v6872 = vsel %vm2368, %v6814, 0
        %6874 = vmatprep.subr.mxu0 %v6848
        %6875 = vmatpush1.msra.mxu0 %v6847
        %6876 = vmatprep.subr.mxu0 %v6851
        %6877 = vmatpush1.msra.mxu0 %v6850
        %6878 = vmatprep.subr.mxu0 %v6854
        %6879 = vmatpush1.msra.mxu0 %v6853
        %6880 = vmatprep.subr.mxu0 %v6857
        %6881 = vmatpush1.msra.mxu0 %v6856
        %6882 = vmatprep.subr.mxu0 0.0
        %6883 = vmatpush1.msra.mxu0 0.0
        %6884 = vmatprep.subr.mxu0 0.0
        %6885 = vmatpush1.msra.mxu0 0.0
        %6886 = vmatprep.subr.mxu0 0.0
        %6887 = vmatpush1.msra.mxu0 0.0
        %6888 = vmatprep.subr.mxu0 0.0
        %6889 = vmatpush1.msra.mxu0 0.0
        %6890 = vmatprep.subr.mxu0 0.0
        %6891 = vmatpush1.msra.mxu0 0.0
        %6892 = vmatprep.subr.mxu0 0.0
        %6893 = vmatpush1.msra.mxu0 0.0
        %6894 = vmatprep.subr.mxu0 0.0
        %6895 = vmatpush1.msra.mxu0 0.0
        %6896 = vmatprep.subr.mxu0 0.0
        %6897 = vmatpush1.msra.mxu0 0.0
        %6898 = vmatprep.subr.mxu0 0.0
        %6899 = vmatpush1.msra.mxu0 0.0
        %6900 = vmatprep.subr.mxu0 0.0
        %6901 = vmatpush1.msra.mxu0 0.0
        %6902 = vmatprep.subr.mxu0 0.0
        %6903 = vmatpush1.msra.mxu0 0.0
        %6904 = vmatprep.subr.mxu0 0.0
        %6905 = vmatpush1.msra.mxu0 0.0
        %6906 = vmatprep.subr.mxu0 0.0
        %6907 = vmatpush1.msra.mxu0 0.0
        %6908 = vmatprep.subr.mxu0 0.0
        %6909 = vmatpush1.msra.mxu0 0.0
        %6910 = vmatprep.subr.mxu0 0.0
        %6911 = vmatpush1.msra.mxu0 0.0
        %6912 = vmatprep.subr.mxu0 0.0
        %6913 = vmatpush1.msra.mxu0 0.0
        %6914 = vmatprep.subr.mxu0 0.0
        %6915 = vmatpush1.msra.mxu0 0.0
        %6916 = vmatprep.subr.mxu0 0.0
        %6917 = vmatpush1.msra.mxu0 0.0
        %6918 = vmatprep.subr.mxu0 0.0
        %6919 = vmatpush1.msra.mxu0 0.0
        %6920 = vmatprep.subr.mxu0 0.0
        %6921 = vmatpush1.msra.mxu0 0.0
        %6922 = vmatprep.subr.mxu0 0.0
        %6923 = vmatpush1.msra.mxu0 0.0
        %6924 = vmatprep.subr.mxu0 0.0
        %6925 = vmatpush1.msra.mxu0 0.0
        %6926 = vmatprep.subr.mxu0 0.0
        %6927 = vmatpush1.msra.mxu0 0.0
        %6928 = vmatprep.subr.mxu0 0.0
        %6929 = vmatpush1.msra.mxu0 0.0
        %6930 = vmatprep.subr.mxu0 0.0
        %6931 = vmatpush1.msra.mxu0 0.0
        %6932 = vmatprep.subr.mxu0 0.0
        %6933 = vmatpush1.msra.mxu0 0.0
        %6934 = vmatprep.subr.mxu0 0.0
        %6935 = vmatpush1.msra.mxu0 0.0
        %6936 = vmatprep.subr.mxu0 0.0
        %6937 = vmatpush1.msra.mxu0 0.0
        %6938 = vmatprep.mubr.f32.mxu0 0.0
        %6939 = vmatmul.mubr.f32.gmra.mrb[0].mxu0 %v6872
        %v6940 = vpop.f32.mrb[0].mxu0
        %v6941 = vadd.f32 0.0, %v6940
        %v6942 = vpop.f32.mrb[0].mxu0
        %v6943 = vadd.f32 0.0, %v6942
        %6944 = vdwg.mxu0
        %6945 = vmatprep.subr.mxu0 0.0
        %6946 = vmatpush1.msra.mxu0 %v6849
        %6947 = vmatprep.subr.mxu0 0.0
        %6948 = vmatpush1.msra.mxu0 %v6852
        %6949 = vmatprep.subr.mxu0 0.0
        %6950 = vmatpush1.msra.mxu0 %v6855
        %6951 = vmatprep.subr.mxu0 0.0
        %6952 = vmatpush1.msra.mxu0 %v6858
        %6953 = vmatprep.subr.mxu0 0.0
        %6954 = vmatpush1.msra.mxu0 0.0
        %6955 = vmatprep.subr.mxu0 0.0
        %6956 = vmatpush1.msra.mxu0 0.0
        %6957 = vmatprep.subr.mxu0 0.0
        %6958 = vmatpush1.msra.mxu0 0.0
        %6959 = vmatprep.subr.mxu0 0.0
        %6960 = vmatpush1.msra.mxu0 0.0
        %6961 = vmatprep.subr.mxu0 0.0
        %6962 = vmatpush1.msra.mxu0 0.0
        %6963 = vmatprep.subr.mxu0 0.0
        %6964 = vmatpush1.msra.mxu0 0.0
        %6965 = vmatprep.subr.mxu0 0.0
        %6966 = vmatpush1.msra.mxu0 0.0
        %6967 = vmatprep.subr.mxu0 0.0
        %6968 = vmatpush1.msra.mxu0 0.0
        %6969 = vmatprep.subr.mxu0 0.0
        %6970 = vmatpush1.msra.mxu0 0.0
        %6971 = vmatprep.subr.mxu0 0.0
        %6972 = vmatpush1.msra.mxu0 0.0
        %6973 = vmatprep.subr.mxu0 0.0
        %6974 = vmatpush1.msra.mxu0 0.0
        %6975 = vmatprep.subr.mxu0 0.0
        %6976 = vmatpush1.msra.mxu0 0.0
        %6977 = vmatprep.subr.mxu0 0.0
        %6978 = vmatpush1.msra.mxu0 0.0
        %6979 = vmatprep.subr.mxu0 0.0
        %6980 = vmatpush1.msra.mxu0 0.0
        %6981 = vmatprep.subr.mxu0 0.0
        %6982 = vmatpush1.msra.mxu0 0.0
        %6983 = vmatprep.subr.mxu0 0.0
        %6984 = vmatpush1.msra.mxu0 0.0
        %6985 = vmatprep.subr.mxu0 0.0
        %6986 = vmatpush1.msra.mxu0 0.0
        %6987 = vmatprep.subr.mxu0 0.0
        %6988 = vmatpush1.msra.mxu0 0.0
        %6989 = vmatprep.subr.mxu0 0.0
        %6990 = vmatpush1.msra.mxu0 0.0
        %6991 = vmatprep.subr.mxu0 0.0
        %6992 = vmatpush1.msra.mxu0 0.0
        %6993 = vmatprep.subr.mxu0 0.0
        %6994 = vmatpush1.msra.mxu0 0.0
        %6995 = vmatprep.subr.mxu0 0.0
        %6996 = vmatpush1.msra.mxu0 0.0
        %6997 = vmatprep.subr.mxu0 0.0
        %6998 = vmatpush1.msra.mxu0 0.0
        %6999 = vmatprep.subr.mxu0 0.0
        %7000 = vmatpush1.msra.mxu0 0.0
        %7001 = vmatprep.subr.mxu0 0.0
        %7002 = vmatpush1.msra.mxu0 0.0
        %7003 = vmatprep.subr.mxu0 0.0
        %7004 = vmatpush1.msra.mxu0 0.0
        %7005 = vmatprep.subr.mxu0 0.0
        %7006 = vmatpush1.msra.mxu0 0.0
        %7007 = vmatprep.subr.mxu0 0.0
        %7008 = vmatpush1.msra.mxu0 0.0
        %7009 = vmatprep.mubr.f32.mxu0 0.0
        %7010 = vmatmul.mubr.f32.gmra.mrb[0].mxu0 %v6872
        %v7011 = vpop.f32.mrb[0].mxu0
        %v7012 = vadd.f32 0.0, %v7011
        %v7013 = vpop.f32.mrb[0].mxu0
        %7014 = vdwg.mxu0
        %v7015 = vadd.f32 %v6810, %v6941
        %v7016 = vadd.f32 %v6811, %v6943
        %v7017 = vadd.f32 %v6812, %v7012
        %s7018 = scalar_lea.vmem %s3, 52
        %v7019 = vld [vmem:[%s7018] sm:$0xf]
        %v7021 = vsel %vm2368, %v7019, 0
        %7023 = vmatprep.subr.mxu0 %v6174
        %7024 = vmatpush1.msra.mxu0 %v6173
        %7025 = vmatprep.subr.mxu0 %v6178
        %7026 = vmatpush1.msra.mxu0 %v6177
        %7027 = vmatprep.subr.mxu0 %v6182
        %7028 = vmatpush1.msra.mxu0 %v6181
        %7029 = vmatprep.subr.mxu0 %v6186
        %7030 = vmatpush1.msra.mxu0 %v6185
        %7031 = vmatprep.subr.mxu0 0.0
        %7032 = vmatpush1.msra.mxu0 0.0
        %7033 = vmatprep.subr.mxu0 0.0
        %7034 = vmatpush1.msra.mxu0 0.0
        %7035 = vmatprep.subr.mxu0 0.0
        %7036 = vmatpush1.msra.mxu0 0.0
        %7037 = vmatprep.subr.mxu0 0.0
        %7038 = vmatpush1.msra.mxu0 0.0
        %7039 = vmatprep.subr.mxu0 0.0
        %7040 = vmatpush1.msra.mxu0 0.0
        %7041 = vmatprep.subr.mxu0 0.0
        %7042 = vmatpush1.msra.mxu0 0.0
        %7043 = vmatprep.subr.mxu0 0.0
        %7044 = vmatpush1.msra.mxu0 0.0
        %7045 = vmatprep.subr.mxu0 0.0
        %7046 = vmatpush1.msra.mxu0 0.0
        %7047 = vmatprep.subr.mxu0 0.0
        %7048 = vmatpush1.msra.mxu0 0.0
        %7049 = vmatprep.subr.mxu0 0.0
        %7050 = vmatpush1.msra.mxu0 0.0
        %7051 = vmatprep.subr.mxu0 0.0
        %7052 = vmatpush1.msra.mxu0 0.0
        %7053 = vmatprep.subr.mxu0 0.0
        %7054 = vmatpush1.msra.mxu0 0.0
        %7055 = vmatprep.subr.mxu0 0.0
        %7056 = vmatpush1.msra.mxu0 0.0
        %7057 = vmatprep.subr.mxu0 0.0
        %7058 = vmatpush1.msra.mxu0 0.0
        %7059 = vmatprep.subr.mxu0 0.0
        %7060 = vmatpush1.msra.mxu0 0.0
        %7061 = vmatprep.subr.mxu0 0.0
        %7062 = vmatpush1.msra.mxu0 0.0
        %7063 = vmatprep.subr.mxu0 0.0
        %7064 = vmatpush1.msra.mxu0 0.0
        %7065 = vmatprep.subr.mxu0 0.0
        %7066 = vmatpush1.msra.mxu0 0.0
        %7067 = vmatprep.subr.mxu0 0.0
        %7068 = vmatpush1.msra.mxu0 0.0
        %7069 = vmatprep.subr.mxu0 0.0
        %7070 = vmatpush1.msra.mxu0 0.0
        %7071 = vmatprep.subr.mxu0 0.0
        %7072 = vmatpush1.msra.mxu0 0.0
        %7073 = vmatprep.subr.mxu0 0.0
        %7074 = vmatpush1.msra.mxu0 0.0
        %7075 = vmatprep.subr.mxu0 0.0
        %7076 = vmatpush1.msra.mxu0 0.0
        %7077 = vmatprep.subr.mxu0 0.0
        %7078 = vmatpush1.msra.mxu0 0.0
        %7079 = vmatprep.subr.mxu0 0.0
        %7080 = vmatpush1.msra.mxu0 0.0
        %7081 = vmatprep.subr.mxu0 0.0
        %7082 = vmatpush1.msra.mxu0 0.0
        %7083 = vmatprep.subr.mxu0 0.0
        %7084 = vmatpush1.msra.mxu0 0.0
        %7085 = vmatprep.subr.mxu0 0.0
        %7086 = vmatpush1.msra.mxu0 0.0
        %7087 = vmatprep.mubr.f32.mxu0 0.0
        %7088 = vmatmul.mubr.f32.gmra.mrb[0].mxu0 %v7021
        %v7089 = vpop.f32.mrb[0].mxu0
        %v7090 = vadd.f32 0.0, %v7089
        %v7091 = vpop.f32.mrb[0].mxu0
        %v7092 = vadd.f32 0.0, %v7091
        %7093 = vdwg.mxu0
        %7094 = vmatprep.subr.mxu0 0.0
        %7095 = vmatpush1.msra.mxu0 %v6175
        %7096 = vmatprep.subr.mxu0 0.0
        %7097 = vmatpush1.msra.mxu0 %v6179
        %7098 = vmatprep.subr.mxu0 0.0
        %7099 = vmatpush1.msra.mxu0 %v6183
        %7100 = vmatprep.subr.mxu0 0.0
        %7101 = vmatpush1.msra.mxu0 %v6187
        %7102 = vmatprep.subr.mxu0 0.0
        %7103 = vmatpush1.msra.mxu0 0.0
        %7104 = vmatprep.subr.mxu0 0.0
        %7105 = vmatpush1.msra.mxu0 0.0
        %7106 = vmatprep.subr.mxu0 0.0
        %7107 = vmatpush1.msra.mxu0 0.0
        %7108 = vmatprep.subr.mxu0 0.0
        %7109 = vmatpush1.msra.mxu0 0.0
        %7110 = vmatprep.subr.mxu0 0.0
        %7111 = vmatpush1.msra.mxu0 0.0
        %7112 = vmatprep.subr.mxu0 0.0
        %7113 = vmatpush1.msra.mxu0 0.0
        %7114 = vmatprep.subr.mxu0 0.0
        %7115 = vmatpush1.msra.mxu0 0.0
        %7116 = vmatprep.subr.mxu0 0.0
        %7117 = vmatpush1.msra.mxu0 0.0
        %7118 = vmatprep.subr.mxu0 0.0
        %7119 = vmatpush1.msra.mxu0 0.0
        %7120 = vmatprep.subr.mxu0 0.0
        %7121 = vmatpush1.msra.mxu0 0.0
        %7122 = vmatprep.subr.mxu0 0.0
        %7123 = vmatpush1.msra.mxu0 0.0
        %7124 = vmatprep.subr.mxu0 0.0
        %7125 = vmatpush1.msra.mxu0 0.0
        %7126 = vmatprep.subr.mxu0 0.0
        %7127 = vmatpush1.msra.mxu0 0.0
        %7128 = vmatprep.subr.mxu0 0.0
        %7129 = vmatpush1.msra.mxu0 0.0
        %7130 = vmatprep.subr.mxu0 0.0
        %7131 = vmatpush1.msra.mxu0 0.0
        %7132 = vmatprep.subr.mxu0 0.0
        %7133 = vmatpush1.msra.mxu0 0.0
        %7134 = vmatprep.subr.mxu0 0.0
        %7135 = vmatpush1.msra.mxu0 0.0
        %7136 = vmatprep.subr.mxu0 0.0
        %7137 = vmatpush1.msra.mxu0 0.0
        %7138 = vmatprep.subr.mxu0 0.0
        %7139 = vmatpush1.msra.mxu0 0.0
        %7140 = vmatprep.subr.mxu0 0.0
        %7141 = vmatpush1.msra.mxu0 0.0
        %7142 = vmatprep.subr.mxu0 0.0
        %7143 = vmatpush1.msra.mxu0 0.0
        %7144 = vmatprep.subr.mxu0 0.0
        %7145 = vmatpush1.msra.mxu0 0.0
        %7146 = vmatprep.subr.mxu0 0.0
        %7147 = vmatpush1.msra.mxu0 0.0
        %7148 = vmatprep.subr.mxu0 0.0
        %7149 = vmatpush1.msra.mxu0 0.0
        %7150 = vmatprep.subr.mxu0 0.0
        %7151 = vmatpush1.msra.mxu0 0.0
        %7152 = vmatprep.subr.mxu0 0.0
        %7153 = vmatpush1.msra.mxu0 0.0
        %7154 = vmatprep.subr.mxu0 0.0
        %7155 = vmatpush1.msra.mxu0 0.0
        %7156 = vmatprep.subr.mxu0 0.0
        %7157 = vmatpush1.msra.mxu0 0.0
        %7158 = vmatprep.mubr.f32.mxu0 0.0
        %7159 = vmatmul.mubr.f32.gmra.mrb[0].mxu0 %v7021
        %v7160 = vpop.f32.mrb[0].mxu0
        %v7161 = vadd.f32 0.0, %v7160
        %v7162 = vpop.f32.mrb[0].mxu0
        %7163 = vdwg.mxu0
        %v7164 = vadd.f32 %v7015, %v7090
        %v7165 = vadd.f32 %v7016, %v7092
        %v7166 = vadd.f32 %v7017, %v7161
        %v7167 = vld [vmem:[#allocation3 + $0x8] sm:$0xff]
        %v7168 = vld [vmem:[#allocation3 + $0x10] sm:$0xff]
        %v7169 = vld [vmem:[#allocation3 + $0x18] sm:$0xff]
        %v7170 = vld [vmem:[#allocation3 + $0x20] sm:$0xff]
        %v7171 = vld [vmem:[#allocation3 + $0x30] sm:$0xff]
        %v7172 = vld [vmem:[#allocation3 + $0x38] sm:$0xff]
        %v7173 = vld [vmem:[#allocation3 + $0x40] sm:$0xff]
        %v7174 = vld [vmem:[#allocation3 + $0x48] sm:$0xff]
        %v7175 = vld [vmem:[#allocation3 + $0x58] sm:$0xff]
        %v7176 = vld [vmem:[#allocation3 + $0x60] sm:$0xff]
        %v7177 = vld [vmem:[#allocation3 + $0x68] sm:$0xff]
        %v7178 = vld [vmem:[#allocation3 + $0x70] sm:$0xff]
        %v7179 = vld [vmem:[#allocation3 + $0x80] sm:$0xff]
        %v7180 = vld [vmem:[#allocation3 + $0x88] sm:$0xff]
        %v7181 = vld [vmem:[#allocation3 + $0x90] sm:$0xff]
        %v7182 = vld [vmem:[#allocation3 + $0x98] sm:$0xff]
        %s7183 = scalar_lea.vmem %s3, 56
        %v7184 = vld [vmem:[%s7183] sm:$0xf]
        %7201 = vrot.lane.b32.xlu0 %v7167, 127
        %v7202 = vpop.permute.xlu0 %7201
        %7203 = vrot.lane.b32.xlu0 %v7168, 127
        %v7204 = vpop.permute.xlu0 %7203
        %7205 = vrot.lane.b32.xlu0 %v7169, 127
        %v7206 = vpop.permute.xlu0 %7205
        %7207 = vrot.lane.b32.xlu0 %v7170, 127
        %v7208 = vpop.permute.xlu0 %7207
        %7209 = vrot.lane.b32.xlu0 %v7171, 127
        %v7210 = vpop.permute.xlu0 %7209
        %7211 = vrot.lane.b32.xlu0 %v7172, 127
        %v7212 = vpop.permute.xlu0 %7211
        %7213 = vrot.lane.b32.xlu0 %v7173, 127
        %v7214 = vpop.permute.xlu0 %7213
        %7215 = vrot.lane.b32.xlu0 %v7174, 127
        %v7216 = vpop.permute.xlu0 %7215
        %7217 = vrot.lane.b32.xlu0 %v7175, 127
        %v7218 = vpop.permute.xlu0 %7217
        %7219 = vrot.lane.b32.xlu0 %v7176, 127
        %v7220 = vpop.permute.xlu0 %7219
        %7221 = vrot.lane.b32.xlu0 %v7177, 127
        %v7222 = vpop.permute.xlu0 %7221
        %7223 = vrot.lane.b32.xlu0 %v7178, 127
        %v7224 = vpop.permute.xlu0 %7223
        %7225 = vrot.lane.b32.xlu0 %v7179, 127
        %v7226 = vpop.permute.xlu0 %7225
        %7227 = vrot.lane.b32.xlu0 %v7180, 127
        %v7228 = vpop.permute.xlu0 %7227
        %7229 = vrot.lane.b32.xlu0 %v7181, 127
        %v7230 = vpop.permute.xlu0 %7229
        %7231 = vrot.lane.b32.xlu0 %v7182, 127
        %v7232 = vpop.permute.xlu0 %7231
        %v7233 = vsel %vm1336, %v7202, %v7204
        %v7234 = vsel %vm1336, %v7204, %v7206
        %v7235 = vsel %vm1336, %v7206, %v7208
        %v7236 = vsel %vm1336, %v7210, %v7212
        %v7237 = vsel %vm1336, %v7212, %v7214
        %v7238 = vsel %vm1336, %v7214, %v7216
        %v7239 = vsel %vm1336, %v7218, %v7220
        %v7240 = vsel %vm1336, %v7220, %v7222
        %v7241 = vsel %vm1336, %v7222, %v7224
        %v7242 = vsel %vm1336, %v7226, %v7228
        %v7243 = vsel %vm1336, %v7228, %v7230
        %v7244 = vsel %vm1336, %v7230, %v7232
        %v7258 = vsel %vm2368, %v7184, 0
        %7260 = vmatprep.subr.mxu0 %v7234
        %7261 = vmatpush1.msra.mxu0 %v7233
        %7262 = vmatprep.subr.mxu0 %v7237
        %7263 = vmatpush1.msra.mxu0 %v7236
        %7264 = vmatprep.subr.mxu0 %v7240
        %7265 = vmatpush1.msra.mxu0 %v7239
        %7266 = vmatprep.subr.mxu0 %v7243
        %7267 = vmatpush1.msra.mxu0 %v7242
        %7268 = vmatprep.subr.mxu0 0.0
        %7269 = vmatpush1.msra.mxu0 0.0
        %7270 = vmatprep.subr.mxu0 0.0
        %7271 = vmatpush1.msra.mxu0 0.0
        %7272 = vmatprep.subr.mxu0 0.0
        %7273 = vmatpush1.msra.mxu0 0.0
        %7274 = vmatprep.subr.mxu0 0.0
        %7275 = vmatpush1.msra.mxu0 0.0
        %7276 = vmatprep.subr.mxu0 0.0
        %7277 = vmatpush1.msra.mxu0 0.0
        %7278 = vmatprep.subr.mxu0 0.0
        %7279 = vmatpush1.msra.mxu0 0.0
        %7280 = vmatprep.subr.mxu0 0.0
        %7281 = vmatpush1.msra.mxu0 0.0
        %7282 = vmatprep.subr.mxu0 0.0
        %7283 = vmatpush1.msra.mxu0 0.0
        %7284 = vmatprep.subr.mxu0 0.0
        %7285 = vmatpush1.msra.mxu0 0.0
        %7286 = vmatprep.subr.mxu0 0.0
        %7287 = vmatpush1.msra.mxu0 0.0
        %7288 = vmatprep.subr.mxu0 0.0
        %7289 = vmatpush1.msra.mxu0 0.0
        %7290 = vmatprep.subr.mxu0 0.0
        %7291 = vmatpush1.msra.mxu0 0.0
        %7292 = vmatprep.subr.mxu0 0.0
        %7293 = vmatpush1.msra.mxu0 0.0
        %7294 = vmatprep.subr.mxu0 0.0
        %7295 = vmatpush1.msra.mxu0 0.0
        %7296 = vmatprep.subr.mxu0 0.0
        %7297 = vmatpush1.msra.mxu0 0.0
        %7298 = vmatprep.subr.mxu0 0.0
        %7299 = vmatpush1.msra.mxu0 0.0
        %7300 = vmatprep.subr.mxu0 0.0
        %7301 = vmatpush1.msra.mxu0 0.0
        %7302 = vmatprep.subr.mxu0 0.0
        %7303 = vmatpush1.msra.mxu0 0.0
        %7304 = vmatprep.subr.mxu0 0.0
        %7305 = vmatpush1.msra.mxu0 0.0
        %7306 = vmatprep.subr.mxu0 0.0
        %7307 = vmatpush1.msra.mxu0 0.0
        %7308 = vmatprep.subr.mxu0 0.0
        %7309 = vmatpush1.msra.mxu0 0.0
        %7310 = vmatprep.subr.mxu0 0.0
        %7311 = vmatpush1.msra.mxu0 0.0
        %7312 = vmatprep.subr.mxu0 0.0
        %7313 = vmatpush1.msra.mxu0 0.0
        %7314 = vmatprep.subr.mxu0 0.0
        %7315 = vmatpush1.msra.mxu0 0.0
        %7316 = vmatprep.subr.mxu0 0.0
        %7317 = vmatpush1.msra.mxu0 0.0
        %7318 = vmatprep.subr.mxu0 0.0
        %7319 = vmatpush1.msra.mxu0 0.0
        %7320 = vmatprep.subr.mxu0 0.0
        %7321 = vmatpush1.msra.mxu0 0.0
        %7322 = vmatprep.subr.mxu0 0.0
        %7323 = vmatpush1.msra.mxu0 0.0
        %7324 = vmatprep.mubr.f32.mxu0 0.0
        %7325 = vmatmul.mubr.f32.gmra.mrb[0].mxu0 %v7258
        %v7326 = vpop.f32.mrb[0].mxu0
        %v7327 = vadd.f32 0.0, %v7326
        %v7328 = vpop.f32.mrb[0].mxu0
        %v7329 = vadd.f32 0.0, %v7328
        %7330 = vdwg.mxu0
        %7331 = vmatprep.subr.mxu0 0.0
        %7332 = vmatpush1.msra.mxu0 %v7235
        %7333 = vmatprep.subr.mxu0 0.0
        %7334 = vmatpush1.msra.mxu0 %v7238
        %7335 = vmatprep.subr.mxu0 0.0
        %7336 = vmatpush1.msra.mxu0 %v7241
        %7337 = vmatprep.subr.mxu0 0.0
        %7338 = vmatpush1.msra.mxu0 %v7244
        %7339 = vmatprep.subr.mxu0 0.0
        %7340 = vmatpush1.msra.mxu0 0.0
        %7341 = vmatprep.subr.mxu0 0.0
        %7342 = vmatpush1.msra.mxu0 0.0
        %7343 = vmatprep.subr.mxu0 0.0
        %7344 = vmatpush1.msra.mxu0 0.0
        %7345 = vmatprep.subr.mxu0 0.0
        %7346 = vmatpush1.msra.mxu0 0.0
        %7347 = vmatprep.subr.mxu0 0.0
        %7348 = vmatpush1.msra.mxu0 0.0
        %7349 = vmatprep.subr.mxu0 0.0
        %7350 = vmatpush1.msra.mxu0 0.0
        %7351 = vmatprep.subr.mxu0 0.0
        %7352 = vmatpush1.msra.mxu0 0.0
        %7353 = vmatprep.subr.mxu0 0.0
        %7354 = vmatpush1.msra.mxu0 0.0
        %7355 = vmatprep.subr.mxu0 0.0
        %7356 = vmatpush1.msra.mxu0 0.0
        %7357 = vmatprep.subr.mxu0 0.0
        %7358 = vmatpush1.msra.mxu0 0.0
        %7359 = vmatprep.subr.mxu0 0.0
        %7360 = vmatpush1.msra.mxu0 0.0
        %7361 = vmatprep.subr.mxu0 0.0
        %7362 = vmatpush1.msra.mxu0 0.0
        %7363 = vmatprep.subr.mxu0 0.0
        %7364 = vmatpush1.msra.mxu0 0.0
        %7365 = vmatprep.subr.mxu0 0.0
        %7366 = vmatpush1.msra.mxu0 0.0
        %7367 = vmatprep.subr.mxu0 0.0
        %7368 = vmatpush1.msra.mxu0 0.0
        %7369 = vmatprep.subr.mxu0 0.0
        %7370 = vmatpush1.msra.mxu0 0.0
        %7371 = vmatprep.subr.mxu0 0.0
        %7372 = vmatpush1.msra.mxu0 0.0
        %7373 = vmatprep.subr.mxu0 0.0
        %7374 = vmatpush1.msra.mxu0 0.0
        %7375 = vmatprep.subr.mxu0 0.0
        %7376 = vmatpush1.msra.mxu0 0.0
        %7377 = vmatprep.subr.mxu0 0.0
        %7378 = vmatpush1.msra.mxu0 0.0
        %7379 = vmatprep.subr.mxu0 0.0
        %7380 = vmatpush1.msra.mxu0 0.0
        %7381 = vmatprep.subr.mxu0 0.0
        %7382 = vmatpush1.msra.mxu0 0.0
        %7383 = vmatprep.subr.mxu0 0.0
        %7384 = vmatpush1.msra.mxu0 0.0
        %7385 = vmatprep.subr.mxu0 0.0
        %7386 = vmatpush1.msra.mxu0 0.0
        %7387 = vmatprep.subr.mxu0 0.0
        %7388 = vmatpush1.msra.mxu0 0.0
        %7389 = vmatprep.subr.mxu0 0.0
        %7390 = vmatpush1.msra.mxu0 0.0
        %7391 = vmatprep.subr.mxu0 0.0
        %7392 = vmatpush1.msra.mxu0 0.0
        %7393 = vmatprep.subr.mxu0 0.0
        %7394 = vmatpush1.msra.mxu0 0.0
        %7395 = vmatprep.mubr.f32.mxu0 0.0
        %7396 = vmatmul.mubr.f32.gmra.mrb[0].mxu0 %v7258
        %v7397 = vpop.f32.mrb[0].mxu0
        %v7398 = vadd.f32 0.0, %v7397
        %v7399 = vpop.f32.mrb[0].mxu0
        %7400 = vdwg.mxu0
        %v7401 = vadd.f32 %v7164, %v7327
        %v7402 = vadd.f32 %v7165, %v7329
        %v7403 = vadd.f32 %v7166, %v7398
        %s7404 = scalar_lea.vmem %s3, 60
        %v7405 = vld [vmem:[%s7404] sm:$0xf]
        %7406 = vrot.lane.b32.xlu0 %v7167, 111
        %v7407 = vpop.permute.xlu0 %7406
        %7408 = vrot.lane.b32.xlu0 %v7168, 111
        %v7409 = vpop.permute.xlu0 %7408
        %7410 = vrot.lane.b32.xlu0 %v7169, 111
        %v7411 = vpop.permute.xlu0 %7410
        %7412 = vrot.lane.b32.xlu0 %v7170, 111
        %v7413 = vpop.permute.xlu0 %7412
        %7414 = vrot.lane.b32.xlu0 %v7171, 111
        %v7415 = vpop.permute.xlu0 %7414
        %7416 = vrot.lane.b32.xlu0 %v7172, 111
        %v7417 = vpop.permute.xlu0 %7416
        %7418 = vrot.lane.b32.xlu0 %v7173, 111
        %v7419 = vpop.permute.xlu0 %7418
        %7420 = vrot.lane.b32.xlu0 %v7174, 111
        %v7421 = vpop.permute.xlu0 %7420
        %7422 = vrot.lane.b32.xlu0 %v7175, 111
        %v7423 = vpop.permute.xlu0 %7422
        %7424 = vrot.lane.b32.xlu0 %v7176, 111
        %v7425 = vpop.permute.xlu0 %7424
        %7426 = vrot.lane.b32.xlu0 %v7177, 111
        %v7427 = vpop.permute.xlu0 %7426
        %7428 = vrot.lane.b32.xlu0 %v7178, 111
        %v7429 = vpop.permute.xlu0 %7428
        %7430 = vrot.lane.b32.xlu0 %v7179, 111
        %v7431 = vpop.permute.xlu0 %7430
        %7432 = vrot.lane.b32.xlu0 %v7180, 111
        %v7433 = vpop.permute.xlu0 %7432
        %7434 = vrot.lane.b32.xlu0 %v7181, 111
        %v7435 = vpop.permute.xlu0 %7434
        %7436 = vrot.lane.b32.xlu0 %v7182, 111
        %v7437 = vpop.permute.xlu0 %7436
        %v7438 = vsel %vm1563, %v7407, %v7409
        %v7439 = vsel %vm1563, %v7409, %v7411
        %v7440 = vsel %vm1563, %v7411, %v7413
        %v7441 = vsel %vm1563, %v7415, %v7417
        %v7442 = vsel %vm1563, %v7417, %v7419
        %v7443 = vsel %vm1563, %v7419, %v7421
        %v7444 = vsel %vm1563, %v7423, %v7425
        %v7445 = vsel %vm1563, %v7425, %v7427
        %v7446 = vsel %vm1563, %v7427, %v7429
        %v7447 = vsel %vm1563, %v7431, %v7433
        %v7448 = vsel %vm1563, %v7433, %v7435
        %v7449 = vsel %vm1563, %v7435, %v7437
        %v7463 = vsel %vm2368, %v7405, 0
        %7465 = vmatprep.subr.mxu0 %v7439
        %7466 = vmatpush1.msra.mxu0 %v7438
        %7467 = vmatprep.subr.mxu0 %v7442
        %7468 = vmatpush1.msra.mxu0 %v7441
        %7469 = vmatprep.subr.mxu0 %v7445
        %7470 = vmatpush1.msra.mxu0 %v7444
        %7471 = vmatprep.subr.mxu0 %v7448
        %7472 = vmatpush1.msra.mxu0 %v7447
        %7473 = vmatprep.subr.mxu0 0.0
        %7474 = vmatpush1.msra.mxu0 0.0
        %7475 = vmatprep.subr.mxu0 0.0
        %7476 = vmatpush1.msra.mxu0 0.0
        %7477 = vmatprep.subr.mxu0 0.0
        %7478 = vmatpush1.msra.mxu0 0.0
        %7479 = vmatprep.subr.mxu0 0.0
        %7480 = vmatpush1.msra.mxu0 0.0
        %7481 = vmatprep.subr.mxu0 0.0
        %7482 = vmatpush1.msra.mxu0 0.0
        %7483 = vmatprep.subr.mxu0 0.0
        %7484 = vmatpush1.msra.mxu0 0.0
        %7485 = vmatprep.subr.mxu0 0.0
        %7486 = vmatpush1.msra.mxu0 0.0
        %7487 = vmatprep.subr.mxu0 0.0
        %7488 = vmatpush1.msra.mxu0 0.0
        %7489 = vmatprep.subr.mxu0 0.0
        %7490 = vmatpush1.msra.mxu0 0.0
        %7491 = vmatprep.subr.mxu0 0.0
        %7492 = vmatpush1.msra.mxu0 0.0
        %7493 = vmatprep.subr.mxu0 0.0
        %7494 = vmatpush1.msra.mxu0 0.0
        %7495 = vmatprep.subr.mxu0 0.0
        %7496 = vmatpush1.msra.mxu0 0.0
        %7497 = vmatprep.subr.mxu0 0.0
        %7498 = vmatpush1.msra.mxu0 0.0
        %7499 = vmatprep.subr.mxu0 0.0
        %7500 = vmatpush1.msra.mxu0 0.0
        %7501 = vmatprep.subr.mxu0 0.0
        %7502 = vmatpush1.msra.mxu0 0.0
        %7503 = vmatprep.subr.mxu0 0.0
        %7504 = vmatpush1.msra.mxu0 0.0
        %7505 = vmatprep.subr.mxu0 0.0
        %7506 = vmatpush1.msra.mxu0 0.0
        %7507 = vmatprep.subr.mxu0 0.0
        %7508 = vmatpush1.msra.mxu0 0.0
        %7509 = vmatprep.subr.mxu0 0.0
        %7510 = vmatpush1.msra.mxu0 0.0
        %7511 = vmatprep.subr.mxu0 0.0
        %7512 = vmatpush1.msra.mxu0 0.0
        %7513 = vmatprep.subr.mxu0 0.0
        %7514 = vmatpush1.msra.mxu0 0.0
        %7515 = vmatprep.subr.mxu0 0.0
        %7516 = vmatpush1.msra.mxu0 0.0
        %7517 = vmatprep.subr.mxu0 0.0
        %7518 = vmatpush1.msra.mxu0 0.0
        %7519 = vmatprep.subr.mxu0 0.0
        %7520 = vmatpush1.msra.mxu0 0.0
        %7521 = vmatprep.subr.mxu0 0.0
        %7522 = vmatpush1.msra.mxu0 0.0
        %7523 = vmatprep.subr.mxu0 0.0
        %7524 = vmatpush1.msra.mxu0 0.0
        %7525 = vmatprep.subr.mxu0 0.0
        %7526 = vmatpush1.msra.mxu0 0.0
        %7527 = vmatprep.subr.mxu0 0.0
        %7528 = vmatpush1.msra.mxu0 0.0
        %7529 = vmatprep.mubr.f32.mxu0 0.0
        %7530 = vmatmul.mubr.f32.gmra.mrb[0].mxu0 %v7463
        %v7531 = vpop.f32.mrb[0].mxu0
        %v7532 = vadd.f32 0.0, %v7531
        %v7533 = vpop.f32.mrb[0].mxu0
        %v7534 = vadd.f32 0.0, %v7533
        %7535 = vdwg.mxu0
        %7536 = vmatprep.subr.mxu0 0.0
        %7537 = vmatpush1.msra.mxu0 %v7440
        %7538 = vmatprep.subr.mxu0 0.0
        %7539 = vmatpush1.msra.mxu0 %v7443
        %7540 = vmatprep.subr.mxu0 0.0
        %7541 = vmatpush1.msra.mxu0 %v7446
        %7542 = vmatprep.subr.mxu0 0.0
        %7543 = vmatpush1.msra.mxu0 %v7449
        %7544 = vmatprep.subr.mxu0 0.0
        %7545 = vmatpush1.msra.mxu0 0.0
        %7546 = vmatprep.subr.mxu0 0.0
        %7547 = vmatpush1.msra.mxu0 0.0
        %7548 = vmatprep.subr.mxu0 0.0
        %7549 = vmatpush1.msra.mxu0 0.0
        %7550 = vmatprep.subr.mxu0 0.0
        %7551 = vmatpush1.msra.mxu0 0.0
        %7552 = vmatprep.subr.mxu0 0.0
        %7553 = vmatpush1.msra.mxu0 0.0
        %7554 = vmatprep.subr.mxu0 0.0
        %7555 = vmatpush1.msra.mxu0 0.0
        %7556 = vmatprep.subr.mxu0 0.0
        %7557 = vmatpush1.msra.mxu0 0.0
        %7558 = vmatprep.subr.mxu0 0.0
        %7559 = vmatpush1.msra.mxu0 0.0
        %7560 = vmatprep.subr.mxu0 0.0
        %7561 = vmatpush1.msra.mxu0 0.0
        %7562 = vmatprep.subr.mxu0 0.0
        %7563 = vmatpush1.msra.mxu0 0.0
        %7564 = vmatprep.subr.mxu0 0.0
        %7565 = vmatpush1.msra.mxu0 0.0
        %7566 = vmatprep.subr.mxu0 0.0
        %7567 = vmatpush1.msra.mxu0 0.0
        %7568 = vmatprep.subr.mxu0 0.0
        %7569 = vmatpush1.msra.mxu0 0.0
        %7570 = vmatprep.subr.mxu0 0.0
        %7571 = vmatpush1.msra.mxu0 0.0
        %7572 = vmatprep.subr.mxu0 0.0
        %7573 = vmatpush1.msra.mxu0 0.0
        %7574 = vmatprep.subr.mxu0 0.0
        %7575 = vmatpush1.msra.mxu0 0.0
        %7576 = vmatprep.subr.mxu0 0.0
        %7577 = vmatpush1.msra.mxu0 0.0
        %7578 = vmatprep.subr.mxu0 0.0
        %7579 = vmatpush1.msra.mxu0 0.0
        %7580 = vmatprep.subr.mxu0 0.0
        %7581 = vmatpush1.msra.mxu0 0.0
        %7582 = vmatprep.subr.mxu0 0.0
        %7583 = vmatpush1.msra.mxu0 0.0
        %7584 = vmatprep.subr.mxu0 0.0
        %7585 = vmatpush1.msra.mxu0 0.0
        %7586 = vmatprep.subr.mxu0 0.0
        %7587 = vmatpush1.msra.mxu0 0.0
        %7588 = vmatprep.subr.mxu0 0.0
        %7589 = vmatpush1.msra.mxu0 0.0
        %7590 = vmatprep.subr.mxu0 0.0
        %7591 = vmatpush1.msra.mxu0 0.0
        %7592 = vmatprep.subr.mxu0 0.0
        %7593 = vmatpush1.msra.mxu0 0.0
        %7594 = vmatprep.subr.mxu0 0.0
        %7595 = vmatpush1.msra.mxu0 0.0
        %7596 = vmatprep.subr.mxu0 0.0
        %7597 = vmatpush1.msra.mxu0 0.0
        %7598 = vmatprep.subr.mxu0 0.0
        %7599 = vmatpush1.msra.mxu0 0.0
        %7600 = vmatprep.mubr.f32.mxu0 0.0
        %7601 = vmatmul.mubr.f32.gmra.mrb[0].mxu0 %v7463
        %v7602 = vpop.f32.mrb[0].mxu0
        %v7603 = vadd.f32 0.0, %v7602
        %v7604 = vpop.f32.mrb[0].mxu0
        %7605 = vdwg.mxu0
        %v7606 = vadd.f32 %v7401, %v7532
        %v7607 = vadd.f32 %v7402, %v7534
        %v7608 = vadd.f32 %v7403, %v7603
        %s7609 = scalar_lea.vmem %s3, 64
        %v7610 = vld [vmem:[%s7609] sm:$0xf]
        %7611 = vrot.lane.b32.xlu0 %v7167, 110
        %v7612 = vpop.permute.xlu0 %7611
        %7613 = vrot.lane.b32.xlu0 %v7168, 110
        %v7614 = vpop.permute.xlu0 %7613
        %7615 = vrot.lane.b32.xlu0 %v7169, 110
        %v7616 = vpop.permute.xlu0 %7615
        %7617 = vrot.lane.b32.xlu0 %v7170, 110
        %v7618 = vpop.permute.xlu0 %7617
        %7619 = vrot.lane.b32.xlu0 %v7171, 110
        %v7620 = vpop.permute.xlu0 %7619
        %7621 = vrot.lane.b32.xlu0 %v7172, 110
        %v7622 = vpop.permute.xlu0 %7621
        %7623 = vrot.lane.b32.xlu0 %v7173, 110
        %v7624 = vpop.permute.xlu0 %7623
        %7625 = vrot.lane.b32.xlu0 %v7174, 110
        %v7626 = vpop.permute.xlu0 %7625
        %7627 = vrot.lane.b32.xlu0 %v7175, 110
        %v7628 = vpop.permute.xlu0 %7627
        %7629 = vrot.lane.b32.xlu0 %v7176, 110
        %v7630 = vpop.permute.xlu0 %7629
        %7631 = vrot.lane.b32.xlu0 %v7177, 110
        %v7632 = vpop.permute.xlu0 %7631
        %7633 = vrot.lane.b32.xlu0 %v7178, 110
        %v7634 = vpop.permute.xlu0 %7633
        %7635 = vrot.lane.b32.xlu0 %v7179, 110
        %v7636 = vpop.permute.xlu0 %7635
        %7637 = vrot.lane.b32.xlu0 %v7180, 110
        %v7638 = vpop.permute.xlu0 %7637
        %7639 = vrot.lane.b32.xlu0 %v7181, 110
        %v7640 = vpop.permute.xlu0 %7639
        %7641 = vrot.lane.b32.xlu0 %v7182, 110
        %v7642 = vpop.permute.xlu0 %7641
        %v7643 = vsel %vm1790, %v7612, %v7614
        %v7644 = vsel %vm1790, %v7614, %v7616
        %v7645 = vsel %vm1790, %v7616, %v7618
        %v7646 = vsel %vm1790, %v7620, %v7622
        %v7647 = vsel %vm1790, %v7622, %v7624
        %v7648 = vsel %vm1790, %v7624, %v7626
        %v7649 = vsel %vm1790, %v7628, %v7630
        %v7650 = vsel %vm1790, %v7630, %v7632
        %v7651 = vsel %vm1790, %v7632, %v7634
        %v7652 = vsel %vm1790, %v7636, %v7638
        %v7653 = vsel %vm1790, %v7638, %v7640
        %v7654 = vsel %vm1790, %v7640, %v7642
        %v7668 = vsel %vm2368, %v7610, 0
        %7670 = vmatprep.subr.mxu0 %v7644
        %7671 = vmatpush1.msra.mxu0 %v7643
        %7672 = vmatprep.subr.mxu0 %v7647
        %7673 = vmatpush1.msra.mxu0 %v7646
        %7674 = vmatprep.subr.mxu0 %v7650
        %7675 = vmatpush1.msra.mxu0 %v7649
        %7676 = vmatprep.subr.mxu0 %v7653
        %7677 = vmatpush1.msra.mxu0 %v7652
        %7678 = vmatprep.subr.mxu0 0.0
        %7679 = vmatpush1.msra.mxu0 0.0
        %7680 = vmatprep.subr.mxu0 0.0
        %7681 = vmatpush1.msra.mxu0 0.0
        %7682 = vmatprep.subr.mxu0 0.0
        %7683 = vmatpush1.msra.mxu0 0.0
        %7684 = vmatprep.subr.mxu0 0.0
        %7685 = vmatpush1.msra.mxu0 0.0
        %7686 = vmatprep.subr.mxu0 0.0
        %7687 = vmatpush1.msra.mxu0 0.0
        %7688 = vmatprep.subr.mxu0 0.0
        %7689 = vmatpush1.msra.mxu0 0.0
        %7690 = vmatprep.subr.mxu0 0.0
        %7691 = vmatpush1.msra.mxu0 0.0
        %7692 = vmatprep.subr.mxu0 0.0
        %7693 = vmatpush1.msra.mxu0 0.0
        %7694 = vmatprep.subr.mxu0 0.0
        %7695 = vmatpush1.msra.mxu0 0.0
        %7696 = vmatprep.subr.mxu0 0.0
        %7697 = vmatpush1.msra.mxu0 0.0
        %7698 = vmatprep.subr.mxu0 0.0
        %7699 = vmatpush1.msra.mxu0 0.0
        %7700 = vmatprep.subr.mxu0 0.0
        %7701 = vmatpush1.msra.mxu0 0.0
        %7702 = vmatprep.subr.mxu0 0.0
        %7703 = vmatpush1.msra.mxu0 0.0
        %7704 = vmatprep.subr.mxu0 0.0
        %7705 = vmatpush1.msra.mxu0 0.0
        %7706 = vmatprep.subr.mxu0 0.0
        %7707 = vmatpush1.msra.mxu0 0.0
        %7708 = vmatprep.subr.mxu0 0.0
        %7709 = vmatpush1.msra.mxu0 0.0
        %7710 = vmatprep.subr.mxu0 0.0
        %7711 = vmatpush1.msra.mxu0 0.0
        %7712 = vmatprep.subr.mxu0 0.0
        %7713 = vmatpush1.msra.mxu0 0.0
        %7714 = vmatprep.subr.mxu0 0.0
        %7715 = vmatpush1.msra.mxu0 0.0
        %7716 = vmatprep.subr.mxu0 0.0
        %7717 = vmatpush1.msra.mxu0 0.0
        %7718 = vmatprep.subr.mxu0 0.0
        %7719 = vmatpush1.msra.mxu0 0.0
        %7720 = vmatprep.subr.mxu0 0.0
        %7721 = vmatpush1.msra.mxu0 0.0
        %7722 = vmatprep.subr.mxu0 0.0
        %7723 = vmatpush1.msra.mxu0 0.0
        %7724 = vmatprep.subr.mxu0 0.0
        %7725 = vmatpush1.msra.mxu0 0.0
        %7726 = vmatprep.subr.mxu0 0.0
        %7727 = vmatpush1.msra.mxu0 0.0
        %7728 = vmatprep.subr.mxu0 0.0
        %7729 = vmatpush1.msra.mxu0 0.0
        %7730 = vmatprep.subr.mxu0 0.0
        %7731 = vmatpush1.msra.mxu0 0.0
        %7732 = vmatprep.subr.mxu0 0.0
        %7733 = vmatpush1.msra.mxu0 0.0
        %7734 = vmatprep.mubr.f32.mxu0 0.0
        %7735 = vmatmul.mubr.f32.gmra.mrb[0].mxu0 %v7668
        %v7736 = vpop.f32.mrb[0].mxu0
        %v7737 = vadd.f32 0.0, %v7736
        %v7738 = vpop.f32.mrb[0].mxu0
        %v7739 = vadd.f32 0.0, %v7738
        %7740 = vdwg.mxu0
        %7741 = vmatprep.subr.mxu0 0.0
        %7742 = vmatpush1.msra.mxu0 %v7645
        %7743 = vmatprep.subr.mxu0 0.0
        %7744 = vmatpush1.msra.mxu0 %v7648
        %7745 = vmatprep.subr.mxu0 0.0
        %7746 = vmatpush1.msra.mxu0 %v7651
        %7747 = vmatprep.subr.mxu0 0.0
        %7748 = vmatpush1.msra.mxu0 %v7654
        %7749 = vmatprep.subr.mxu0 0.0
        %7750 = vmatpush1.msra.mxu0 0.0
        %7751 = vmatprep.subr.mxu0 0.0
        %7752 = vmatpush1.msra.mxu0 0.0
        %7753 = vmatprep.subr.mxu0 0.0
        %7754 = vmatpush1.msra.mxu0 0.0
        %7755 = vmatprep.subr.mxu0 0.0
        %7756 = vmatpush1.msra.mxu0 0.0
        %7757 = vmatprep.subr.mxu0 0.0
        %7758 = vmatpush1.msra.mxu0 0.0
        %7759 = vmatprep.subr.mxu0 0.0
        %7760 = vmatpush1.msra.mxu0 0.0
        %7761 = vmatprep.subr.mxu0 0.0
        %7762 = vmatpush1.msra.mxu0 0.0
        %7763 = vmatprep.subr.mxu0 0.0
        %7764 = vmatpush1.msra.mxu0 0.0
        %7765 = vmatprep.subr.mxu0 0.0
        %7766 = vmatpush1.msra.mxu0 0.0
        %7767 = vmatprep.subr.mxu0 0.0
        %7768 = vmatpush1.msra.mxu0 0.0
        %7769 = vmatprep.subr.mxu0 0.0
        %7770 = vmatpush1.msra.mxu0 0.0
        %7771 = vmatprep.subr.mxu0 0.0
        %7772 = vmatpush1.msra.mxu0 0.0
        %7773 = vmatprep.subr.mxu0 0.0
        %7774 = vmatpush1.msra.mxu0 0.0
        %7775 = vmatprep.subr.mxu0 0.0
        %7776 = vmatpush1.msra.mxu0 0.0
        %7777 = vmatprep.subr.mxu0 0.0
        %7778 = vmatpush1.msra.mxu0 0.0
        %7779 = vmatprep.subr.mxu0 0.0
        %7780 = vmatpush1.msra.mxu0 0.0
        %7781 = vmatprep.subr.mxu0 0.0
        %7782 = vmatpush1.msra.mxu0 0.0
        %7783 = vmatprep.subr.mxu0 0.0
        %7784 = vmatpush1.msra.mxu0 0.0
        %7785 = vmatprep.subr.mxu0 0.0
        %7786 = vmatpush1.msra.mxu0 0.0
        %7787 = vmatprep.subr.mxu0 0.0
        %7788 = vmatpush1.msra.mxu0 0.0
        %7789 = vmatprep.subr.mxu0 0.0
        %7790 = vmatpush1.msra.mxu0 0.0
        %7791 = vmatprep.subr.mxu0 0.0
        %7792 = vmatpush1.msra.mxu0 0.0
        %7793 = vmatprep.subr.mxu0 0.0
        %7794 = vmatpush1.msra.mxu0 0.0
        %7795 = vmatprep.subr.mxu0 0.0
        %7796 = vmatpush1.msra.mxu0 0.0
        %7797 = vmatprep.subr.mxu0 0.0
        %7798 = vmatpush1.msra.mxu0 0.0
        %7799 = vmatprep.subr.mxu0 0.0
        %7800 = vmatpush1.msra.mxu0 0.0
        %7801 = vmatprep.subr.mxu0 0.0
        %7802 = vmatpush1.msra.mxu0 0.0
        %7803 = vmatprep.subr.mxu0 0.0
        %7804 = vmatpush1.msra.mxu0 0.0
        %7805 = vmatprep.mubr.f32.mxu0 0.0
        %7806 = vmatmul.mubr.f32.gmra.mrb[0].mxu0 %v7668
        %v7807 = vpop.f32.mrb[0].mxu0
        %v7808 = vadd.f32 0.0, %v7807
        %v7809 = vpop.f32.mrb[0].mxu0
        %7810 = vdwg.mxu0
        %v7811 = vadd.f32 %v7606, %v7737
        %v7812 = vadd.f32 %v7607, %v7739
        %v7813 = vadd.f32 %v7608, %v7808
        %s7814 = scalar_lea.vmem %s3, 68
        %v7815 = vld [vmem:[%s7814] sm:$0xf]
        %7816 = vrot.lane.b32.xlu0 %v7167, 109
        %v7817 = vpop.permute.xlu0 %7816
        %7818 = vrot.lane.b32.xlu0 %v7168, 109
        %v7819 = vpop.permute.xlu0 %7818
        %7820 = vrot.lane.b32.xlu0 %v7169, 109
        %v7821 = vpop.permute.xlu0 %7820
        %7822 = vrot.lane.b32.xlu0 %v7170, 109
        %v7823 = vpop.permute.xlu0 %7822
        %7824 = vrot.lane.b32.xlu0 %v7171, 109
        %v7825 = vpop.permute.xlu0 %7824
        %7826 = vrot.lane.b32.xlu0 %v7172, 109
        %v7827 = vpop.permute.xlu0 %7826
        %7828 = vrot.lane.b32.xlu0 %v7173, 109
        %v7829 = vpop.permute.xlu0 %7828
        %7830 = vrot.lane.b32.xlu0 %v7174, 109
        %v7831 = vpop.permute.xlu0 %7830
        %7832 = vrot.lane.b32.xlu0 %v7175, 109
        %v7833 = vpop.permute.xlu0 %7832
        %7834 = vrot.lane.b32.xlu0 %v7176, 109
        %v7835 = vpop.permute.xlu0 %7834
        %7836 = vrot.lane.b32.xlu0 %v7177, 109
        %v7837 = vpop.permute.xlu0 %7836
        %7838 = vrot.lane.b32.xlu0 %v7178, 109
        %v7839 = vpop.permute.xlu0 %7838
        %7840 = vrot.lane.b32.xlu0 %v7179, 109
        %v7841 = vpop.permute.xlu0 %7840
        %7842 = vrot.lane.b32.xlu0 %v7180, 109
        %v7843 = vpop.permute.xlu0 %7842
        %7844 = vrot.lane.b32.xlu0 %v7181, 109
        %v7845 = vpop.permute.xlu0 %7844
        %7846 = vrot.lane.b32.xlu0 %v7182, 109
        %v7847 = vpop.permute.xlu0 %7846
        %v7848 = vsel %vm2017, %v7817, %v7819
        %v7849 = vsel %vm2017, %v7819, %v7821
        %v7850 = vsel %vm2017, %v7821, %v7823
        %v7851 = vsel %vm2017, %v7825, %v7827
        %v7852 = vsel %vm2017, %v7827, %v7829
        %v7853 = vsel %vm2017, %v7829, %v7831
        %v7854 = vsel %vm2017, %v7833, %v7835
        %v7855 = vsel %vm2017, %v7835, %v7837
        %v7856 = vsel %vm2017, %v7837, %v7839
        %v7857 = vsel %vm2017, %v7841, %v7843
        %v7858 = vsel %vm2017, %v7843, %v7845
        %v7859 = vsel %vm2017, %v7845, %v7847
        %v7873 = vsel %vm2368, %v7815, 0
        %7875 = vmatprep.subr.mxu0 %v7849
        %7876 = vmatpush1.msra.mxu0 %v7848
        %7877 = vmatprep.subr.mxu0 %v7852
        %7878 = vmatpush1.msra.mxu0 %v7851
        %7879 = vmatprep.subr.mxu0 %v7855
        %7880 = vmatpush1.msra.mxu0 %v7854
        %7881 = vmatprep.subr.mxu0 %v7858
        %7882 = vmatpush1.msra.mxu0 %v7857
        %7883 = vmatprep.subr.mxu0 0.0
        %7884 = vmatpush1.msra.mxu0 0.0
        %7885 = vmatprep.subr.mxu0 0.0
        %7886 = vmatpush1.msra.mxu0 0.0
        %7887 = vmatprep.subr.mxu0 0.0
        %7888 = vmatpush1.msra.mxu0 0.0
        %7889 = vmatprep.subr.mxu0 0.0
        %7890 = vmatpush1.msra.mxu0 0.0
        %7891 = vmatprep.subr.mxu0 0.0
        %7892 = vmatpush1.msra.mxu0 0.0
        %7893 = vmatprep.subr.mxu0 0.0
        %7894 = vmatpush1.msra.mxu0 0.0
        %7895 = vmatprep.subr.mxu0 0.0
        %7896 = vmatpush1.msra.mxu0 0.0
        %7897 = vmatprep.subr.mxu0 0.0
        %7898 = vmatpush1.msra.mxu0 0.0
        %7899 = vmatprep.subr.mxu0 0.0
        %7900 = vmatpush1.msra.mxu0 0.0
        %7901 = vmatprep.subr.mxu0 0.0
        %7902 = vmatpush1.msra.mxu0 0.0
        %7903 = vmatprep.subr.mxu0 0.0
        %7904 = vmatpush1.msra.mxu0 0.0
        %7905 = vmatprep.subr.mxu0 0.0
        %7906 = vmatpush1.msra.mxu0 0.0
        %7907 = vmatprep.subr.mxu0 0.0
        %7908 = vmatpush1.msra.mxu0 0.0
        %7909 = vmatprep.subr.mxu0 0.0
        %7910 = vmatpush1.msra.mxu0 0.0
        %7911 = vmatprep.subr.mxu0 0.0
        %7912 = vmatpush1.msra.mxu0 0.0
        %7913 = vmatprep.subr.mxu0 0.0
        %7914 = vmatpush1.msra.mxu0 0.0
        %7915 = vmatprep.subr.mxu0 0.0
        %7916 = vmatpush1.msra.mxu0 0.0
        %7917 = vmatprep.subr.mxu0 0.0
        %7918 = vmatpush1.msra.mxu0 0.0
        %7919 = vmatprep.subr.mxu0 0.0
        %7920 = vmatpush1.msra.mxu0 0.0
        %7921 = vmatprep.subr.mxu0 0.0
        %7922 = vmatpush1.msra.mxu0 0.0
        %7923 = vmatprep.subr.mxu0 0.0
        %7924 = vmatpush1.msra.mxu0 0.0
        %7925 = vmatprep.subr.mxu0 0.0
        %7926 = vmatpush1.msra.mxu0 0.0
        %7927 = vmatprep.subr.mxu0 0.0
        %7928 = vmatpush1.msra.mxu0 0.0
        %7929 = vmatprep.subr.mxu0 0.0
        %7930 = vmatpush1.msra.mxu0 0.0
        %7931 = vmatprep.subr.mxu0 0.0
        %7932 = vmatpush1.msra.mxu0 0.0
        %7933 = vmatprep.subr.mxu0 0.0
        %7934 = vmatpush1.msra.mxu0 0.0
        %7935 = vmatprep.subr.mxu0 0.0
        %7936 = vmatpush1.msra.mxu0 0.0
        %7937 = vmatprep.subr.mxu0 0.0
        %7938 = vmatpush1.msra.mxu0 0.0
        %7939 = vmatprep.mubr.f32.mxu0 0.0
        %7940 = vmatmul.mubr.f32.gmra.mrb[0].mxu0 %v7873
        %v7941 = vpop.f32.mrb[0].mxu0
        %v7942 = vadd.f32 0.0, %v7941
        %v7943 = vpop.f32.mrb[0].mxu0
        %v7944 = vadd.f32 0.0, %v7943
        %7945 = vdwg.mxu0
        %7946 = vmatprep.subr.mxu0 0.0
        %7947 = vmatpush1.msra.mxu0 %v7850
        %7948 = vmatprep.subr.mxu0 0.0
        %7949 = vmatpush1.msra.mxu0 %v7853
        %7950 = vmatprep.subr.mxu0 0.0
        %7951 = vmatpush1.msra.mxu0 %v7856
        %7952 = vmatprep.subr.mxu0 0.0
        %7953 = vmatpush1.msra.mxu0 %v7859
        %7954 = vmatprep.subr.mxu0 0.0
        %7955 = vmatpush1.msra.mxu0 0.0
        %7956 = vmatprep.subr.mxu0 0.0
        %7957 = vmatpush1.msra.mxu0 0.0
        %7958 = vmatprep.subr.mxu0 0.0
        %7959 = vmatpush1.msra.mxu0 0.0
        %7960 = vmatprep.subr.mxu0 0.0
        %7961 = vmatpush1.msra.mxu0 0.0
        %7962 = vmatprep.subr.mxu0 0.0
        %7963 = vmatpush1.msra.mxu0 0.0
        %7964 = vmatprep.subr.mxu0 0.0
        %7965 = vmatpush1.msra.mxu0 0.0
        %7966 = vmatprep.subr.mxu0 0.0
        %7967 = vmatpush1.msra.mxu0 0.0
        %7968 = vmatprep.subr.mxu0 0.0
        %7969 = vmatpush1.msra.mxu0 0.0
        %7970 = vmatprep.subr.mxu0 0.0
        %7971 = vmatpush1.msra.mxu0 0.0
        %7972 = vmatprep.subr.mxu0 0.0
        %7973 = vmatpush1.msra.mxu0 0.0
        %7974 = vmatprep.subr.mxu0 0.0
        %7975 = vmatpush1.msra.mxu0 0.0
        %7976 = vmatprep.subr.mxu0 0.0
        %7977 = vmatpush1.msra.mxu0 0.0
        %7978 = vmatprep.subr.mxu0 0.0
        %7979 = vmatpush1.msra.mxu0 0.0
        %7980 = vmatprep.subr.mxu0 0.0
        %7981 = vmatpush1.msra.mxu0 0.0
        %7982 = vmatprep.subr.mxu0 0.0
        %7983 = vmatpush1.msra.mxu0 0.0
        %7984 = vmatprep.subr.mxu0 0.0
        %7985 = vmatpush1.msra.mxu0 0.0
        %7986 = vmatprep.subr.mxu0 0.0
        %7987 = vmatpush1.msra.mxu0 0.0
        %7988 = vmatprep.subr.mxu0 0.0
        %7989 = vmatpush1.msra.mxu0 0.0
        %7990 = vmatprep.subr.mxu0 0.0
        %7991 = vmatpush1.msra.mxu0 0.0
        %7992 = vmatprep.subr.mxu0 0.0
        %7993 = vmatpush1.msra.mxu0 0.0
        %7994 = vmatprep.subr.mxu0 0.0
        %7995 = vmatpush1.msra.mxu0 0.0
        %7996 = vmatprep.subr.mxu0 0.0
        %7997 = vmatpush1.msra.mxu0 0.0
        %7998 = vmatprep.subr.mxu0 0.0
        %7999 = vmatpush1.msra.mxu0 0.0
        %8000 = vmatprep.subr.mxu0 0.0
        %8001 = vmatpush1.msra.mxu0 0.0
        %8002 = vmatprep.subr.mxu0 0.0
        %8003 = vmatpush1.msra.mxu0 0.0
        %8004 = vmatprep.subr.mxu0 0.0
        %8005 = vmatpush1.msra.mxu0 0.0
        %8006 = vmatprep.subr.mxu0 0.0
        %8007 = vmatpush1.msra.mxu0 0.0
        %8008 = vmatprep.subr.mxu0 0.0
        %8009 = vmatpush1.msra.mxu0 0.0
        %8010 = vmatprep.mubr.f32.mxu0 0.0
        %8011 = vmatmul.mubr.f32.gmra.mrb[0].mxu0 %v7873
        %v8012 = vpop.f32.mrb[0].mxu0
        %v8013 = vadd.f32 0.0, %v8012
        %v8014 = vpop.f32.mrb[0].mxu0
        %8015 = vdwg.mxu0
        %v8016 = vadd.f32 %v7811, %v7942
        %v8017 = vadd.f32 %v7812, %v7944
        %v8018 = vadd.f32 %v7813, %v8013
        %v8019 = vadd.f32 %v4135, %v8016
        %v8020 = vadd.f32 %v4136, %v8017
        %v8021 = vadd.f32 %v4137, %v8018
        %v8022 = vmax.f32 %v8019, 0.0
        %v8023 = vmax.f32 %v8020, 0.0
        %v8024 = vmax.f32 %v8021, 0.0
        %v8025 = vsel %vm2250, %v8022, 0.0
        %v8026 = vsel %vm2251, %v8023, 0.0
        %v8027 = vsel %vm2252, %v8024, 0.0
        %v8030 = vcombine.low %v8025, %v8026
        %8032 = vst [vmem:[%s205] sm:$0xff] %v8030
        %8033 = vst [vmem:[%s205 + $0x8] sm:$0xf] %v8027
        %s8034 = sand.u32 %s120, 1
        %s8035 = scalar_lea.sflag [#allocation5], %s8034
        %s8036 = sand.u32 %s120, 1
        %s8037 = smul.addr %s8036, 12
        %s8038 = scalar_lea.vmem [#allocation4], %s8037
        // Predicated region
        $region37: #{tpu_custom_call.1} parent=35 // pred_check
          %p8039 = pneg %p130
        $region38: #{tpu_custom_call.1} parent=35 // pred_check_branch
          %8041 = sbr.rel (%p8039) target = $region40
        $region39: #{tpu_custom_call.1} parent=35 // pred_region
          %s8042 = smul.u32 3, %s18
          %s8044 = ssub.s32 192, 192
          %8045 = vsyncadd %s8035, %s8044
          %s8046 = smul.addr %s8042, 64
          %s8047 = scalar_lea.hbm %s4, %s8046
          %s8049 = sshll.u32 %s8038, 4
          %s8050 = int_to_ptr.vmem [resolvable:$true] %s8049
          %8052 = dma.vmem_to_hbm [thread:$0]  %s8050, 192, %s8047, %s8035
        $region40: #{tpu_custom_call.1} parent=35 // pred_fallthru
          _
      $region36: #{tpu_custom_call.1} parent=5 // pred_fallthru
        _
      %p8053 = scmp.le.s32.totalorder 2, %s13
      // Predicated region
      $region41: #{tpu_custom_call.1} parent=5 // pred_check
        %p8054 = pneg %p8053
      $region42: #{tpu_custom_call.1} parent=5 // pred_check_branch
        %8056 = sbr.rel (%p8054) target = $region44
      $region43: #{tpu_custom_call.1} parent=5 // pred_region
        %s8057 = ssub.s32 %s13, 2
        // Predicated region
        $region45: #{tpu_custom_call.1} parent=43 // pred_check
          %p8058 = pneg %p136
        $region46: #{tpu_custom_call.1} parent=43 // pred_check_branch
          %8060 = sbr.rel (%p8058) target = $region48
        $region47: #{tpu_custom_call.1} parent=43 // pred_region
          %s8061 = sand.u32 %s121, 1
          %s8062 = scalar_lea.sflag [#allocation5], %s8061
          %s8063 = sand.u32 %s121, 1
          %s8064 = smul.addr %s8063, 12
          %s8065 = scalar_lea.vmem [#allocation4], %s8064
          %8066 = dma.done %s8062, 192
        $region48: #{tpu_custom_call.1} parent=43 // pred_fallthru
          _
      $region44: #{tpu_custom_call.1} parent=5 // pred_fallthru
        _
    $region6: #{tpu_custom_call.1} parent=1 // loop_footer
      %s17 = sadd.s32 1, %s13
    $region7: #{tpu_custom_call.1} parent=1 // loop_footer_branch
      %12 = sbr.rel target = $region3
    $region8: #{tpu_custom_call.1} parent=1 // loop_exit
      _
    %8067 = vsyncpa [#allocation5], 1
    %s8068 = scalar_lea.sflag [#allocation5], 1
    %8069 = vsyncpa %s8068, 1

</llo_original>
